<compile_context>
chip_gen: v5e
topology: v5e:2x2
jax: 0.10.0
libtpu: 0.0.40
codegen_flags: <defaults>
</compile_context>

<pallas_src>
import functools

import jax
import jax.numpy as jnp
import numpy as np
from jax.experimental import pallas as pl
from jax.experimental.pallas import tpu as pltpu


# ---------------------------------------------------------------------------
# Kernel
# ---------------------------------------------------------------------------
def _sfcn_kernel(x_ref, w1_ref, w2_ref, w3_ref, o_ref, s1_ref, s2_ref,
                 *, H, W, TB, CMID, T1, T2):
    """Fused conv1 -> conv2 -> conv3 (+ReLU) for one batch tile.

    Layouts ("W folded into lanes"):
      x_ref : (TB, H+6, W*Cin)     conv1 input, pre-padded by 3 rows top/bottom.
      wN_ref: (7, K, W*CMID)       banded weights: one (K, N) matmul per kernel
                                   row; kx taps, the W axis and the W zero
                                   padding are folded into the band pattern.
      o_ref : (TB, H, W*CMID)      output (lane-dense, N = W*CMID).
      s1/s2 : (TB, T+H+8, W*CMID)  inter-layer activations with zero row halos.
    """
    M = TB * H
    N = W * CMID

    # Zero only the halo row strips (the interior is fully overwritten below).
    # Re-done every grid step so the kernel stays correct when the batch grid
    # is split across TensorCores ("parallel"): scratch is per-core and
    # uninitialized on each core's first step.
    s1_ref[:, :T1, :] = jnp.zeros((TB, T1, N), s1_ref.dtype)
    s1_ref[:, T1 + H:, :] = jnp.zeros(
        (TB, s1_ref.shape[1] - T1 - H, N), s1_ref.dtype)
    s2_ref[:, :T2, :] = jnp.zeros((TB, T2, N), s2_ref.dtype)
    s2_ref[:, T2 + H:, :] = jnp.zeros(
        (TB, s2_ref.shape[1] - T2 - H, N), s2_ref.dtype)

    def conv_banded(read_rows, w_ref):
        """7 deep-K MXU matmuls (one per kernel row), f32 accumulation."""
        acc = jnp.zeros((M, N), jnp.float32)
        for i in range(7):
            win = read_rows(i)                      # (TB, H, K)
            k = win.shape[-1]
            acc = acc + jnp.dot(win.reshape(M, k), w_ref[i],
                                preferred_element_type=jnp.float32)
        return acc

    # conv1 (dil=1) + ReLU -> s1 interior (sublane-aligned store at row T1).
    a1 = conv_banded(lambda i: x_ref[:, i:i + H, :], w1_ref)
    s1_ref[:, T1:T1 + H, :] = (
        jnp.maximum(a1, 0.0).reshape(TB, H, N).astype(s1_ref.dtype))

    # conv2 (dil=1) + ReLU -> s2 interior.
    a2 = conv_banded(lambda i: s1_ref[:, T1 - 3 + i:T1 - 3 + i + H, :], w2_ref)
    s2_ref[:, T2:T2 + H, :] = (
        jnp.maximum(a2, 0.0).reshape(TB, H, N).astype(s2_ref.dtype))

    # conv3 (dil=2, via the band pattern) + ReLU -> output (lane-dense store).
    a3 = conv_banded(lambda i: s2_ref[:, T2 - 6 + 2 * i:T2 - 6 + 2 * i + H, :],
                     w3_ref)
    o_ref[...] = jnp.maximum(a3, 0.0).reshape(TB, H, N).astype(o_ref.dtype)


# ---------------------------------------------------------------------------
# Host-side helpers
# ---------------------------------------------------------------------------
def _banded_weight(wt, width, dil, dtype):
    """OIHW (Cout, Cin, 7, 7) -> (7, W*Cin, W*Cout) banded matrices.

    b[i, x_in*Cin + ci, x_out*Cout + co] = wt[co, ci, i, j]
        where x_in = x_out + (j - 3) * dil and 0 <= x_in < W (else 0),
    so one matmul with b[i] applies all 7 column taps of kernel row i to a
    full image row, with the W zero padding folded into the band.
    """
    cout, cin = wt.shape[0], wt.shape[1]
    j = jnp.arange(7)[:, None, None]
    q = jnp.arange(width)[None, :, None]        # x_out
    p = jnp.arange(width)[None, None, :]        # x_in
    sel = (p == q + (j - 3) * dil).astype(jnp.float32)          # (7, W, W)
    band = jnp.einsum('jqp,ockj->kpcqo', sel, wt.astype(jnp.float32))
    return band.reshape(7, width * cin, width * cout).astype(dtype)


def _round_up(x, m):
    return (x + m - 1) // m * m


def _vmem_tile_bytes(shape, dtype):
    """Bytes of a VMEM buffer including (sublane, lane) layout padding."""
    item = np.dtype(dtype).itemsize
    sublane = 8 * max(1, 4 // item)             # 8 rows for f32, 16 for bf16
    lead = 1
    for d in shape[:-2]:
        lead *= int(d)
    rows = _round_up(int(shape[-2]), sublane)
    lanes = _round_up(int(shape[-1]), 128)
    return lead * rows * lanes * item


def _vmem_capacity_bytes():
    try:
        cap = getattr(pltpu.get_tpu_info(), "vmem_capacity_bytes", None)
        if cap:
            return int(cap)
    except Exception:
        pass
    return 64 * 1024 * 1024                     # conservative: v7x per-TC VMEM


# ---------------------------------------------------------------------------
# Forward pass
# ---------------------------------------------------------------------------
def sfcn_forward(x, w1, w2, w3, *, act_dtype=jnp.bfloat16, out_dtype=jnp.float32):
    """SFCN forward pass.

    Args:
      x : (B, Cin, H, W)  NCHW input (PyTorch layout).
      w1: (18, Cin, 7, 7) OIHW conv1 weight.
      w2: (18, 18, 7, 7)  OIHW conv2 weight.
      w3: (18, 18, 7, 7)  OIHW conv3 weight (dilation 2).
      act_dtype: storage / MXU dtype for activations & weights (accumulation
        is always f32).  bfloat16 (default) halves VMEM and load/store traffic
        and is the native MXU input dtype; pass jnp.float32 for exact f32.
    Returns:
      (B, 18, H, W) output in NCHW, dtype `out_dtype`.
    """
    b, cin, h, w = x.shape
    cmid = w1.shape[0]
    n = w * cmid

    # Banded weights (precomputable once per model; rebuilt per call here).
    w1b = _banded_weight(w1, w, 1, act_dtype)
    w2b = _banded_weight(w2, w, 1, act_dtype)
    w3b = _banded_weight(w3, w, 2, act_dtype)

    # conv1 input: NCHW -> (B, H+6, W*Cin), zero-padded 3 rows top/bottom.
    xp = jnp.transpose(x, (0, 2, 3, 1)).astype(jnp.float32)
    xp = jnp.pad(xp, ((0, 0), (3, 3), (0, 0), (0, 0)))
    xp = xp.reshape(b, h + 6, w * cin).astype(act_dtype)

    # Scratch geometry: top halo rounded up to 8 rows so interior stores are
    # sublane-aligned; bottom halo rounded up to 8 as well.
    T1, T2 = 8, 8
    hs1 = T1 + h + 8            # conv2 needs >= 3 halo rows each side (dil=1)
    hs2 = T2 + h + 8            # conv3 needs >= 6 halo rows each side (dil=2)

    # Batch-tile selection from a *padded* VMEM footprint.
    vmem_limit = min(96 * 1024 * 1024, _vmem_capacity_bytes() // 2)
    budget = int(0.85 * vmem_limit)

    w_bytes = 2 * (_vmem_tile_bytes((7, w * cin, n), act_dtype)
                   + 2 * _vmem_tile_bytes((7, n, n), act_dtype))

    def footprint(tb):
        fb = w_bytes
        fb += 2 * _vmem_tile_bytes((tb, h + 6, w * cin), act_dtype)  # in, dbl buf
        fb += 2 * _vmem_tile_bytes((tb, h, n), out_dtype)            # out, dbl buf
        fb += _vmem_tile_bytes((tb, hs1, n), act_dtype)              # s1
        fb += _vmem_tile_bytes((tb, hs2, n), act_dtype)              # s2
        fb += 3 * _vmem_tile_bytes((tb * h, n), jnp.float32)         # acc / windows
        return fb

    tb_cap = b if b == 1 else pl.cdiv(b, 2)   # keep >= 2 grid steps (megacore)
    tb = 1
    for cand in range(2, tb_cap + 1):
        if footprint(cand) <= budget:
            tb = cand
        else:
            break

    grid_b = pl.cdiv(b, tb)
    b_pad = grid_b * tb
    if b_pad != b:                              # no OOB batch planes in any step
        xp = jnp.pad(xp, ((0, b_pad - b), (0, 0), (0, 0)))

    kernel = functools.partial(_sfcn_kernel, H=h, W=w, TB=tb, CMID=cmid,
                               T1=T1, T2=T2)

    out = pl.pallas_call(
        kernel,
        out_shape=jax.ShapeDtypeStruct((b_pad, h, n), out_dtype),
        grid=(grid_b,),
        in_specs=[
            pl.BlockSpec((tb, h + 6, w * cin), lambda i: (i, 0, 0)),
            pl.BlockSpec((7, w * cin, n), lambda i: (0, 0, 0)),
            pl.BlockSpec((7, n, n), lambda i: (0, 0, 0)),
            pl.BlockSpec((7, n, n), lambda i: (0, 0, 0)),
        ],
        out_specs=pl.BlockSpec((tb, h, n), lambda i: (i, 0, 0)),
        scratch_shapes=[
            pltpu.VMEM((tb, hs1, n), act_dtype),   # conv1 output + row halos
            pltpu.VMEM((tb, hs2, n), act_dtype),   # conv2 output + row halos
        ],
        compiler_params=pltpu.CompilerParams(
            dimension_semantics=("parallel",),
            vmem_limit_bytes=int(vmem_limit),
        ),
    )(xp, w1b, w2b, w3b)

    out = out[:b].reshape(b, h, w, cmid)
    # NHWC -> NCHW to match the PyTorch module's output layout.
    # TODO(synk): keep the lane-dense (B, H, W*18) layout downstream to avoid
    # this extra HBM pass when the consumer does not require NCHW.
    return jnp.transpose(out, (0, 3, 1, 2))


# ---------------------------------------------------------------------------
# Pure-JAX reference (XLA conv) matching the PyTorch SFCN forward
# ---------------------------------------------------------------------------
def _reference(x, w1, w2, w3):
    def conv_relu(x_, w_, dil):
        p = 3 * dil
        y = jax.lax.conv_general_dilated(
            x_.astype(jnp.float32), w_.astype(jnp.float32),
            window_strides=(1, 1), padding=((p, p), (p, p)),
            rhs_dilation=(dil, dil),
            dimension_numbers=("NCHW", "OIHW", "NCHW"))
        return jnp.maximum(y, 0.0)

    y = conv_relu(x, w1, 1)
    y = conv_relu(y, w2, 1)
    return conv_relu(y, w3, 2)


if __name__ == "__main__":
    key = jax.random.PRNGKey(0)
    k1, k2, k3, kx = jax.random.split(key, 4)

    b, cin, h, w = 2, 3, 16, 16
    cmid = 18

    def init_w(k, cout, cin_):
        # Kaiming-like scale so activations stay O(1) through the stack.
        scale = (2.0 / (7 * 7 * cin_)) ** 0.5
        return scale * jax.random.normal(k, (cout, cin_, 7, 7), dtype=jnp.float32)

    x = jax.random.normal(kx, (b, cin, h, w), dtype=jnp.float32)
    w1 = init_w(k1, cmid, cin)
    w2 = init_w(k2, cmid, cmid)
    w3 = init_w(k3, cmid, cmid)

    ref = _reference(x, w1, w2, w3)

    # f32 path: validates the banded-matmul formulation exactly.
    out_f32 = jax.block_until_ready(
        jax.jit(functools.partial(sfcn_forward, act_dtype=jnp.float32))(
            x, w1, w2, w3))
    ok_f32 = (out_f32.shape == (b, cmid, h, w)
              and out_f32.dtype == jnp.float32
              and bool(jnp.allclose(out_f32, ref, atol=2e-3, rtol=2e-3)))

    # bf16 storage / MXU path (the performance default).  Tolerance reflects
    # bf16 quantization of activations + weights across 3 chained layers with
    # f32 accumulation (expected error ~1e-2 absolute at worst).
    out_bf16 = jax.block_until_ready(jax.jit(sfcn_forward)(x, w1, w2, w3))
    ok_bf16 = (out_bf16.shape == (b, cmid, h, w)
               and bool(jnp.allclose(out_bf16, ref, atol=5e-2, rtol=5e-2)))

    if ok_f32 and ok_bf16:
        print("KERNEL_OK")
    else:
        err_f32 = float(jnp.max(jnp.abs(out_f32 - ref)))
        err_b16 = float(jnp.max(jnp.abs(out_bf16 - ref)))
        print(f"f32 max err={err_f32:.3e}  bf16 max err={err_b16:.3e}")
        print("KERNEL_MISMATCH")
</pallas_src>

<mosaic_0001>
module attributes {stable_mosaic.version = 11 : i64} {
  func.func @_sfcn_kernel(%arg0: i32, %arg1: memref<1x22x48xf32, #tpu.memory_space<vmem>>, %arg2: memref<7x48x288xf32, #tpu.memory_space<vmem>>, %arg3: memref<7x288x288xf32, #tpu.memory_space<vmem>>, %arg4: memref<7x288x288xf32, #tpu.memory_space<vmem>>, %arg5: memref<1x16x288xf32, #tpu.memory_space<vmem>>, %arg6: memref<1x32x288xf32, #tpu.memory_space<vmem>>, %arg7: memref<1x32x288xf32, #tpu.memory_space<vmem>>) attributes {dimension_semantics = [#tpu.dimension_semantics<parallel>], iteration_bounds = array<i64: 2>, scalar_prefetch = 0 : i64, scratch_operands = 2 : i64, tpu.core_type = #tpu.core_type<tc>, window_params = [{transform_indices = @transform_0, window_bounds = array<i64: 1, 22, 48>}, {pipeline_mode = #tpu.pipeline_mode<synchronous>, transform_indices = @transform_1, window_bounds = array<i64: 7, 48, 288>}, {pipeline_mode = #tpu.pipeline_mode<synchronous>, transform_indices = @transform_2, window_bounds = array<i64: 7, 288, 288>}, {pipeline_mode = #tpu.pipeline_mode<synchronous>, transform_indices = @transform_3, window_bounds = array<i64: 7, 288, 288>}, {transform_indices = @transform_4, window_bounds = array<i64: 1, 16, 288>}]} {
    %cst = arith.constant 0.000000e+00 : f32
    %0 = vector.broadcast %cst : f32 to vector<1x8x288xf32>
    %c0 = arith.constant 0 : index
    %c0_0 = arith.constant 0 : index
    %c0_1 = arith.constant 0 : index
    %1 = vector.load %arg6[%c0, %c0_0, %c0_1] : memref<1x32x288xf32, #tpu.memory_space<vmem>>, vector<1x8x288xf32>
    tpu.vector_store %arg6[%c0, %c0_0, %c0_1], %0 {strides = array<i32>} : memref<1x32x288xf32, #tpu.memory_space<vmem>>, vector<1x8x288xf32>,
    %cst_2 = arith.constant 0.000000e+00 : f32
    %2 = vector.broadcast %cst_2 : f32 to vector<1x8x288xf32>
    %c0_3 = arith.constant 0 : index
    %c24 = arith.constant 24 : index
    %c0_4 = arith.constant 0 : index
    %3 = vector.load %arg6[%c0_3, %c24, %c0_4] : memref<1x32x288xf32, #tpu.memory_space<vmem>>, vector<1x8x288xf32>
    tpu.vector_store %arg6[%c0_3, %c24, %c0_4], %2 {strides = array<i32>} : memref<1x32x288xf32, #tpu.memory_space<vmem>>, vector<1x8x288xf32>,
    %cst_5 = arith.constant 0.000000e+00 : f32
    %4 = vector.broadcast %cst_5 : f32 to vector<1x8x288xf32>
    %c0_6 = arith.constant 0 : index
    %c0_7 = arith.constant 0 : index
    %c0_8 = arith.constant 0 : index
    %5 = vector.load %arg7[%c0_6, %c0_7, %c0_8] : memref<1x32x288xf32, #tpu.memory_space<vmem>>, vector<1x8x288xf32>
    tpu.vector_store %arg7[%c0_6, %c0_7, %c0_8], %4 {strides = array<i32>} : memref<1x32x288xf32, #tpu.memory_space<vmem>>, vector<1x8x288xf32>,
    %cst_9 = arith.constant 0.000000e+00 : f32
    %6 = vector.broadcast %cst_9 : f32 to vector<1x8x288xf32>
    %c0_10 = arith.constant 0 : index
    %c24_11 = arith.constant 24 : index
    %c0_12 = arith.constant 0 : index
    %7 = vector.load %arg7[%c0_10, %c24_11, %c0_12] : memref<1x32x288xf32, #tpu.memory_space<vmem>>, vector<1x8x288xf32>
    tpu.vector_store %arg7[%c0_10, %c24_11, %c0_12], %6 {strides = array<i32>} : memref<1x32x288xf32, #tpu.memory_space<vmem>>, vector<1x8x288xf32>,
    %cst_13 = arith.constant 0.000000e+00 : f32
    %8 = vector.broadcast %cst_13 : f32 to vector<16x288xf32>
    %c0_14 = arith.constant 0 : index
    %c0_15 = arith.constant 0 : index
    %c0_16 = arith.constant 0 : index
    %9 = vector.load %arg1[%c0_14, %c0_15, %c0_16] : memref<1x22x48xf32, #tpu.memory_space<vmem>>, vector<1x16x48xf32>
    %10 = vector.shape_cast %9 : vector<1x16x48xf32> to vector<16x48xf32>
    %c0_17 = arith.constant 0 : index
    %c0_18 = arith.constant 0 : index
    %c0_19 = arith.constant 0 : index
    %11 = vector.load %arg2[%c0_17, %c0_18, %c0_19] : memref<7x48x288xf32, #tpu.memory_space<vmem>>, vector<1x48x288xf32>
    %12 = vector.shape_cast %11 : vector<1x48x288xf32> to vector<48x288xf32>
    %cst_20 = arith.constant dense<0.000000e+00> : vector<16x288xf32>
    %13 = tpu.matmul %10, %12, %cst_20 {dimension_numbers = #tpu.dot_dimension_numbers<[1], [0], [0], [1], [0, 0, 1, 1], [], []>} : vector<16x48xf32>, vector<48x288xf32>, vector<16x288xf32> -> vector<16x288xf32>
    %14 = arith.addf %8, %13 : vector<16x288xf32>
    %c0_21 = arith.constant 0 : index
    %c1 = arith.constant 1 : index
    %c0_22 = arith.constant 0 : index
    %15 = vector.load %arg1[%c0_21, %c1, %c0_22] : memref<1x22x48xf32, #tpu.memory_space<vmem>>, vector<1x16x48xf32>
    %16 = vector.shape_cast %15 : vector<1x16x48xf32> to vector<16x48xf32>
    %c1_23 = arith.constant 1 : index
    %c0_24 = arith.constant 0 : index
    %c0_25 = arith.constant 0 : index
    %17 = vector.load %arg2[%c1_23, %c0_24, %c0_25] : memref<7x48x288xf32, #tpu.memory_space<vmem>>, vector<1x48x288xf32>
    %18 = vector.shape_cast %17 : vector<1x48x288xf32> to vector<48x288xf32>
    %cst_26 = arith.constant dense<0.000000e+00> : vector<16x288xf32>
    %19 = tpu.matmul %16, %18, %cst_26 {dimension_numbers = #tpu.dot_dimension_numbers<[1], [0], [0], [1], [0, 0, 1, 1], [], []>} : vector<16x48xf32>, vector<48x288xf32>, vector<16x288xf32> -> vector<16x288xf32>
    %20 = arith.addf %14, %19 : vector<16x288xf32>
    %c0_27 = arith.constant 0 : index
    %c2 = arith.constant 2 : index
    %c0_28 = arith.constant 0 : index
    %21 = vector.load %arg1[%c0_27, %c2, %c0_28] : memref<1x22x48xf32, #tpu.memory_space<vmem>>, vector<1x16x48xf32>
    %22 = vector.shape_cast %21 : vector<1x16x48xf32> to vector<16x48xf32>
    %c2_29 = arith.constant 2 : index
    %c0_30 = arith.constant 0 : index
    %c0_31 = arith.constant 0 : index
    %23 = vector.load %arg2[%c2_29, %c0_30, %c0_31] : memref<7x48x288xf32, #tpu.memory_space<vmem>>, vector<1x48x288xf32>
    %24 = vector.shape_cast %23 : vector<1x48x288xf32> to vector<48x288xf32>
    %cst_32 = arith.constant dense<0.000000e+00> : vector<16x288xf32>
    %25 = tpu.matmul %22, %24, %cst_32 {dimension_numbers = #tpu.dot_dimension_numbers<[1], [0], [0], [1], [0, 0, 1, 1], [], []>} : vector<16x48xf32>, vector<48x288xf32>, vector<16x288xf32> -> vector<16x288xf32>
    %26 = arith.addf %20, %25 : vector<16x288xf32>
    %c0_33 = arith.constant 0 : index
    %c3 = arith.constant 3 : index
    %c0_34 = arith.constant 0 : index
    %27 = vector.load %arg1[%c0_33, %c3, %c0_34] : memref<1x22x48xf32, #tpu.memory_space<vmem>>, vector<1x16x48xf32>
    %28 = vector.shape_cast %27 : vector<1x16x48xf32> to vector<16x48xf32>
    %c3_35 = arith.constant 3 : index
    %c0_36 = arith.constant 0 : index
    %c0_37 = arith.constant 0 : index
    %29 = vector.load %arg2[%c3_35, %c0_36, %c0_37] : memref<7x48x288xf32, #tpu.memory_space<vmem>>, vector<1x48x288xf32>
    %30 = vector.shape_cast %29 : vector<1x48x288xf32> to vector<48x288xf32>
    %cst_38 = arith.constant dense<0.000000e+00> : vector<16x288xf32>
    %31 = tpu.matmul %28, %30, %cst_38 {dimension_numbers = #tpu.dot_dimension_numbers<[1], [0], [0], [1], [0, 0, 1, 1], [], []>} : vector<16x48xf32>, vector<48x288xf32>, vector<16x288xf32> -> vector<16x288xf32>
    %32 = arith.addf %26, %31 : vector<16x288xf32>
    %c0_39 = arith.constant 0 : index
    %c4 = arith.constant 4 : index
    %c0_40 = arith.constant 0 : index
    %33 = vector.load %arg1[%c0_39, %c4, %c0_40] : memref<1x22x48xf32, #tpu.memory_space<vmem>>, vector<1x16x48xf32>
    %34 = vector.shape_cast %33 : vector<1x16x48xf32> to vector<16x48xf32>
    %c4_41 = arith.constant 4 : index
    %c0_42 = arith.constant 0 : index
    %c0_43 = arith.constant 0 : index
    %35 = vector.load %arg2[%c4_41, %c0_42, %c0_43] : memref<7x48x288xf32, #tpu.memory_space<vmem>>, vector<1x48x288xf32>
    %36 = vector.shape_cast %35 : vector<1x48x288xf32> to vector<48x288xf32>
    %cst_44 = arith.constant dense<0.000000e+00> : vector<16x288xf32>
    %37 = tpu.matmul %34, %36, %cst_44 {dimension_numbers = #tpu.dot_dimension_numbers<[1], [0], [0], [1], [0, 0, 1, 1], [], []>} : vector<16x48xf32>, vector<48x288xf32>, vector<16x288xf32> -> vector<16x288xf32>
    %38 = arith.addf %32, %37 : vector<16x288xf32>
    %c0_45 = arith.constant 0 : index
    %c5 = arith.constant 5 : index
    %c0_46 = arith.constant 0 : index
    %39 = vector.load %arg1[%c0_45, %c5, %c0_46] : memref<1x22x48xf32, #tpu.memory_space<vmem>>, vector<1x16x48xf32>
    %40 = vector.shape_cast %39 : vector<1x16x48xf32> to vector<16x48xf32>
    %c5_47 = arith.constant 5 : index
    %c0_48 = arith.constant 0 : index
    %c0_49 = arith.constant 0 : index
    %41 = vector.load %arg2[%c5_47, %c0_48, %c0_49] : memref<7x48x288xf32, #tpu.memory_space<vmem>>, vector<1x48x288xf32>
    %42 = vector.shape_cast %41 : vector<1x48x288xf32> to vector<48x288xf32>
    %cst_50 = arith.constant dense<0.000000e+00> : vector<16x288xf32>
    %43 = tpu.matmul %40, %42, %cst_50 {dimension_numbers = #tpu.dot_dimension_numbers<[1], [0], [0], [1], [0, 0, 1, 1], [], []>} : vector<16x48xf32>, vector<48x288xf32>, vector<16x288xf32> -> vector<16x288xf32>
    %44 = arith.addf %38, %43 : vector<16x288xf32>
    %c0_51 = arith.constant 0 : index
    %c6 = arith.constant 6 : index
    %c0_52 = arith.constant 0 : index
    %45 = vector.load %arg1[%c0_51, %c6, %c0_52] : memref<1x22x48xf32, #tpu.memory_space<vmem>>, vector<1x16x48xf32>
    %46 = vector.shape_cast %45 : vector<1x16x48xf32> to vector<16x48xf32>
    %c6_53 = arith.constant 6 : index
    %c0_54 = arith.constant 0 : index
    %c0_55 = arith.constant 0 : index
    %47 = vector.load %arg2[%c6_53, %c0_54, %c0_55] : memref<7x48x288xf32, #tpu.memory_space<vmem>>, vector<1x48x288xf32>
    %48 = vector.shape_cast %47 : vector<1x48x288xf32> to vector<48x288xf32>
    %cst_56 = arith.constant dense<0.000000e+00> : vector<16x288xf32>
    %49 = tpu.matmul %46, %48, %cst_56 {dimension_numbers = #tpu.dot_dimension_numbers<[1], [0], [0], [1], [0, 0, 1, 1], [], []>} : vector<16x48xf32>, vector<48x288xf32>, vector<16x288xf32> -> vector<16x288xf32>
    %50 = arith.addf %44, %49 : vector<16x288xf32>
    %cst_57 = arith.constant 0.000000e+00 : f32
    %51 = vector.broadcast %cst_57 : f32 to vector<16x288xf32>
    %52 = arith.maximumf %50, %51 : vector<16x288xf32>
    %53 = vector.shape_cast %52 : vector<16x288xf32> to vector<1x16x288xf32>
    %c0_58 = arith.constant 0 : index
    %c8 = arith.constant 8 : index
    %c0_59 = arith.constant 0 : index
    %54 = vector.load %arg6[%c0_58, %c8, %c0_59] : memref<1x32x288xf32, #tpu.memory_space<vmem>>, vector<1x16x288xf32>
    tpu.vector_store %arg6[%c0_58, %c8, %c0_59], %53 {strides = array<i32>} : memref<1x32x288xf32, #tpu.memory_space<vmem>>, vector<1x16x288xf32>,
    %cst_60 = arith.constant 0.000000e+00 : f32
    %55 = vector.broadcast %cst_60 : f32 to vector<16x288xf32>
    %c0_61 = arith.constant 0 : index
    %c5_62 = arith.constant 5 : index
    %c0_63 = arith.constant 0 : index
    %56 = vector.load %arg6[%c0_61, %c5_62, %c0_63] : memref<1x32x288xf32, #tpu.memory_space<vmem>>, vector<1x16x288xf32>
    %57 = vector.shape_cast %56 : vector<1x16x288xf32> to vector<16x288xf32>
    %c0_64 = arith.constant 0 : index
    %c0_65 = arith.constant 0 : index
    %c0_66 = arith.constant 0 : index
    %58 = vector.load %arg3[%c0_64, %c0_65, %c0_66] : memref<7x288x288xf32, #tpu.memory_space<vmem>>, vector<1x288x288xf32>
    %59 = vector.shape_cast %58 : vector<1x288x288xf32> to vector<288x288xf32>
    %cst_67 = arith.constant dense<0.000000e+00> : vector<16x288xf32>
    %60 = tpu.matmul %57, %59, %cst_67 {dimension_numbers = #tpu.dot_dimension_numbers<[1], [0], [0], [1], [0, 0, 1, 1], [], []>} : vector<16x288xf32>, vector<288x288xf32>, vector<16x288xf32> -> vector<16x288xf32>
    %61 = arith.addf %55, %60 : vector<16x288xf32>
    %c0_68 = arith.constant 0 : index
    %c6_69 = arith.constant 6 : index
    %c0_70 = arith.constant 0 : index
    %62 = vector.load %arg6[%c0_68, %c6_69, %c0_70] : memref<1x32x288xf32, #tpu.memory_space<vmem>>, vector<1x16x288xf32>
    %63 = vector.shape_cast %62 : vector<1x16x288xf32> to vector<16x288xf32>
    %c1_71 = arith.constant 1 : index
    %c0_72 = arith.constant 0 : index
    %c0_73 = arith.constant 0 : index
    %64 = vector.load %arg3[%c1_71, %c0_72, %c0_73] : memref<7x288x288xf32, #tpu.memory_space<vmem>>, vector<1x288x288xf32>
    %65 = vector.shape_cast %64 : vector<1x288x288xf32> to vector<288x288xf32>
    %cst_74 = arith.constant dense<0.000000e+00> : vector<16x288xf32>
    %66 = tpu.matmul %63, %65, %cst_74 {dimension_numbers = #tpu.dot_dimension_numbers<[1], [0], [0], [1], [0, 0, 1, 1], [], []>} : vector<16x288xf32>, vector<288x288xf32>, vector<16x288xf32> -> vector<16x288xf32>
    %67 = arith.addf %61, %66 : vector<16x288xf32>
    %c0_75 = arith.constant 0 : index
    %c7 = arith.constant 7 : index
    %c0_76 = arith.constant 0 : index
    %68 = vector.load %arg6[%c0_75, %c7, %c0_76] : memref<1x32x288xf32, #tpu.memory_space<vmem>>, vector<1x16x288xf32>
    %69 = vector.shape_cast %68 : vector<1x16x288xf32> to vector<16x288xf32>
    %c2_77 = arith.constant 2 : index
    %c0_78 = arith.constant 0 : index
    %c0_79 = arith.constant 0 : index
    %70 = vector.load %arg3[%c2_77, %c0_78, %c0_79] : memref<7x288x288xf32, #tpu.memory_space<vmem>>, vector<1x288x288xf32>
    %71 = vector.shape_cast %70 : vector<1x288x288xf32> to vector<288x288xf32>
    %cst_80 = arith.constant dense<0.000000e+00> : vector<16x288xf32>
    %72 = tpu.matmul %69, %71, %cst_80 {dimension_numbers = #tpu.dot_dimension_numbers<[1], [0], [0], [1], [0, 0, 1, 1], [], []>} : vector<16x288xf32>, vector<288x288xf32>, vector<16x288xf32> -> vector<16x288xf32>
    %73 = arith.addf %67, %72 : vector<16x288xf32>
    %c0_81 = arith.constant 0 : index
    %c8_82 = arith.constant 8 : index
    %c0_83 = arith.constant 0 : index
    %74 = vector.load %arg6[%c0_81, %c8_82, %c0_83] : memref<1x32x288xf32, #tpu.memory_space<vmem>>, vector<1x16x288xf32>
    %75 = vector.shape_cast %74 : vector<1x16x288xf32> to vector<16x288xf32>
    %c3_84 = arith.constant 3 : index
    %c0_85 = arith.constant 0 : index
    %c0_86 = arith.constant 0 : index
    %76 = vector.load %arg3[%c3_84, %c0_85, %c0_86] : memref<7x288x288xf32, #tpu.memory_space<vmem>>, vector<1x288x288xf32>
    %77 = vector.shape_cast %76 : vector<1x288x288xf32> to vector<288x288xf32>
    %cst_87 = arith.constant dense<0.000000e+00> : vector<16x288xf32>
    %78 = tpu.matmul %75, %77, %cst_87 {dimension_numbers = #tpu.dot_dimension_numbers<[1], [0], [0], [1], [0, 0, 1, 1], [], []>} : vector<16x288xf32>, vector<288x288xf32>, vector<16x288xf32> -> vector<16x288xf32>
    %79 = arith.addf %73, %78 : vector<16x288xf32>
    %c0_88 = arith.constant 0 : index
    %c9 = arith.constant 9 : index
    %c0_89 = arith.constant 0 : index
    %80 = vector.load %arg6[%c0_88, %c9, %c0_89] : memref<1x32x288xf32, #tpu.memory_space<vmem>>, vector<1x16x288xf32>
    %81 = vector.shape_cast %80 : vector<1x16x288xf32> to vector<16x288xf32>
    %c4_90 = arith.constant 4 : index
    %c0_91 = arith.constant 0 : index
    %c0_92 = arith.constant 0 : index
    %82 = vector.load %arg3[%c4_90, %c0_91, %c0_92] : memref<7x288x288xf32, #tpu.memory_space<vmem>>, vector<1x288x288xf32>
    %83 = vector.shape_cast %82 : vector<1x288x288xf32> to vector<288x288xf32>
    %cst_93 = arith.constant dense<0.000000e+00> : vector<16x288xf32>
    %84 = tpu.matmul %81, %83, %cst_93 {dimension_numbers = #tpu.dot_dimension_numbers<[1], [0], [0], [1], [0, 0, 1, 1], [], []>} : vector<16x288xf32>, vector<288x288xf32>, vector<16x288xf32> -> vector<16x288xf32>
    %85 = arith.addf %79, %84 : vector<16x288xf32>
    %c0_94 = arith.constant 0 : index
    %c10 = arith.constant 10 : index
    %c0_95 = arith.constant 0 : index
    %86 = vector.load %arg6[%c0_94, %c10, %c0_95] : memref<1x32x288xf32, #tpu.memory_space<vmem>>, vector<1x16x288xf32>
    %87 = vector.shape_cast %86 : vector<1x16x288xf32> to vector<16x288xf32>
    %c5_96 = arith.constant 5 : index
    %c0_97 = arith.constant 0 : index
    %c0_98 = arith.constant 0 : index
    %88 = vector.load %arg3[%c5_96, %c0_97, %c0_98] : memref<7x288x288xf32, #tpu.memory_space<vmem>>, vector<1x288x288xf32>
    %89 = vector.shape_cast %88 : vector<1x288x288xf32> to vector<288x288xf32>
    %cst_99 = arith.constant dense<0.000000e+00> : vector<16x288xf32>
    %90 = tpu.matmul %87, %89, %cst_99 {dimension_numbers = #tpu.dot_dimension_numbers<[1], [0], [0], [1], [0, 0, 1, 1], [], []>} : vector<16x288xf32>, vector<288x288xf32>, vector<16x288xf32> -> vector<16x288xf32>
    %91 = arith.addf %85, %90 : vector<16x288xf32>
    %c0_100 = arith.constant 0 : index
    %c11 = arith.constant 11 : index
    %c0_101 = arith.constant 0 : index
    %92 = vector.load %arg6[%c0_100, %c11, %c0_101] : memref<1x32x288xf32, #tpu.memory_space<vmem>>, vector<1x16x288xf32>
    %93 = vector.shape_cast %92 : vector<1x16x288xf32> to vector<16x288xf32>
    %c6_102 = arith.constant 6 : index
    %c0_103 = arith.constant 0 : index
    %c0_104 = arith.constant 0 : index
    %94 = vector.load %arg3[%c6_102, %c0_103, %c0_104] : memref<7x288x288xf32, #tpu.memory_space<vmem>>, vector<1x288x288xf32>
    %95 = vector.shape_cast %94 : vector<1x288x288xf32> to vector<288x288xf32>
    %cst_105 = arith.constant dense<0.000000e+00> : vector<16x288xf32>
    %96 = tpu.matmul %93, %95, %cst_105 {dimension_numbers = #tpu.dot_dimension_numbers<[1], [0], [0], [1], [0, 0, 1, 1], [], []>} : vector<16x288xf32>, vector<288x288xf32>, vector<16x288xf32> -> vector<16x288xf32>
    %97 = arith.addf %91, %96 : vector<16x288xf32>
    %cst_106 = arith.constant 0.000000e+00 : f32
    %98 = vector.broadcast %cst_106 : f32 to vector<16x288xf32>
    %99 = arith.maximumf %97, %98 : vector<16x288xf32>
    %100 = vector.shape_cast %99 : vector<16x288xf32> to vector<1x16x288xf32>
    %c0_107 = arith.constant 0 : index
    %c8_108 = arith.constant 8 : index
    %c0_109 = arith.constant 0 : index
    %101 = vector.load %arg7[%c0_107, %c8_108, %c0_109] : memref<1x32x288xf32, #tpu.memory_space<vmem>>, vector<1x16x288xf32>
    tpu.vector_store %arg7[%c0_107, %c8_108, %c0_109], %100 {strides = array<i32>} : memref<1x32x288xf32, #tpu.memory_space<vmem>>, vector<1x16x288xf32>,
    %cst_110 = arith.constant 0.000000e+00 : f32
    %102 = vector.broadcast %cst_110 : f32 to vector<16x288xf32>
    %c0_111 = arith.constant 0 : index
    %c2_112 = arith.constant 2 : index
    %c0_113 = arith.constant 0 : index
    %103 = vector.load %arg7[%c0_111, %c2_112, %c0_113] : memref<1x32x288xf32, #tpu.memory_space<vmem>>, vector<1x16x288xf32>
    %104 = vector.shape_cast %103 : vector<1x16x288xf32> to vector<16x288xf32>
    %c0_114 = arith.constant 0 : index
    %c0_115 = arith.constant 0 : index
    %c0_116 = arith.constant 0 : index
    %105 = vector.load %arg4[%c0_114, %c0_115, %c0_116] : memref<7x288x288xf32, #tpu.memory_space<vmem>>, vector<1x288x288xf32>
    %106 = vector.shape_cast %105 : vector<1x288x288xf32> to vector<288x288xf32>
    %cst_117 = arith.constant dense<0.000000e+00> : vector<16x288xf32>
    %107 = tpu.matmul %104, %106, %cst_117 {dimension_numbers = #tpu.dot_dimension_numbers<[1], [0], [0], [1], [0, 0, 1, 1], [], []>} : vector<16x288xf32>, vector<288x288xf32>, vector<16x288xf32> -> vector<16x288xf32>
    %108 = arith.addf %102, %107 : vector<16x288xf32>
    %c0_118 = arith.constant 0 : index
    %c4_119 = arith.constant 4 : index
    %c0_120 = arith.constant 0 : index
    %109 = vector.load %arg7[%c0_118, %c4_119, %c0_120] : memref<1x32x288xf32, #tpu.memory_space<vmem>>, vector<1x16x288xf32>
    %110 = vector.shape_cast %109 : vector<1x16x288xf32> to vector<16x288xf32>
    %c1_121 = arith.constant 1 : index
    %c0_122 = arith.constant 0 : index
    %c0_123 = arith.constant 0 : index
    %111 = vector.load %arg4[%c1_121, %c0_122, %c0_123] : memref<7x288x288xf32, #tpu.memory_space<vmem>>, vector<1x288x288xf32>
    %112 = vector.shape_cast %111 : vector<1x288x288xf32> to vector<288x288xf32>
    %cst_124 = arith.constant dense<0.000000e+00> : vector<16x288xf32>
    %113 = tpu.matmul %110, %112, %cst_124 {dimension_numbers = #tpu.dot_dimension_numbers<[1], [0], [0], [1], [0, 0, 1, 1], [], []>} : vector<16x288xf32>, vector<288x288xf32>, vector<16x288xf32> -> vector<16x288xf32>
    %114 = arith.addf %108, %113 : vector<16x288xf32>
    %c0_125 = arith.constant 0 : index
    %c6_126 = arith.constant 6 : index
    %c0_127 = arith.constant 0 : index
    %115 = vector.load %arg7[%c0_125, %c6_126, %c0_127] : memref<1x32x288xf32, #tpu.memory_space<vmem>>, vector<1x16x288xf32>
    %116 = vector.shape_cast %115 : vector<1x16x288xf32> to vector<16x288xf32>
    %c2_128 = arith.constant 2 : index
    %c0_129 = arith.constant 0 : index
    %c0_130 = arith.constant 0 : index
    %117 = vector.load %arg4[%c2_128, %c0_129, %c0_130] : memref<7x288x288xf32, #tpu.memory_space<vmem>>, vector<1x288x288xf32>
    %118 = vector.shape_cast %117 : vector<1x288x288xf32> to vector<288x288xf32>
    %cst_131 = arith.constant dense<0.000000e+00> : vector<16x288xf32>
    %119 = tpu.matmul %116, %118, %cst_131 {dimension_numbers = #tpu.dot_dimension_numbers<[1], [0], [0], [1], [0, 0, 1, 1], [], []>} : vector<16x288xf32>, vector<288x288xf32>, vector<16x288xf32> -> vector<16x288xf32>
    %120 = arith.addf %114, %119 : vector<16x288xf32>
    %c0_132 = arith.constant 0 : index
    %c8_133 = arith.constant 8 : index
    %c0_134 = arith.constant 0 : index
    %121 = vector.load %arg7[%c0_132, %c8_133, %c0_134] : memref<1x32x288xf32, #tpu.memory_space<vmem>>, vector<1x16x288xf32>
    %122 = vector.shape_cast %121 : vector<1x16x288xf32> to vector<16x288xf32>
    %c3_135 = arith.constant 3 : index
    %c0_136 = arith.constant 0 : index
    %c0_137 = arith.constant 0 : index
    %123 = vector.load %arg4[%c3_135, %c0_136, %c0_137] : memref<7x288x288xf32, #tpu.memory_space<vmem>>, vector<1x288x288xf32>
    %124 = vector.shape_cast %123 : vector<1x288x288xf32> to vector<288x288xf32>
    %cst_138 = arith.constant dense<0.000000e+00> : vector<16x288xf32>
    %125 = tpu.matmul %122, %124, %cst_138 {dimension_numbers = #tpu.dot_dimension_numbers<[1], [0], [0], [1], [0, 0, 1, 1], [], []>} : vector<16x288xf32>, vector<288x288xf32>, vector<16x288xf32> -> vector<16x288xf32>
    %126 = arith.addf %120, %125 : vector<16x288xf32>
    %c0_139 = arith.constant 0 : index
    %c10_140 = arith.constant 10 : index
    %c0_141 = arith.constant 0 : index
    %127 = vector.load %arg7[%c0_139, %c10_140, %c0_141] : memref<1x32x288xf32, #tpu.memory_space<vmem>>, vector<1x16x288xf32>
    %128 = vector.shape_cast %127 : vector<1x16x288xf32> to vector<16x288xf32>
    %c4_142 = arith.constant 4 : index
    %c0_143 = arith.constant 0 : index
    %c0_144 = arith.constant 0 : index
    %129 = vector.load %arg4[%c4_142, %c0_143, %c0_144] : memref<7x288x288xf32, #tpu.memory_space<vmem>>, vector<1x288x288xf32>
    %130 = vector.shape_cast %129 : vector<1x288x288xf32> to vector<288x288xf32>
    %cst_145 = arith.constant dense<0.000000e+00> : vector<16x288xf32>
    %131 = tpu.matmul %128, %130, %cst_145 {dimension_numbers = #tpu.dot_dimension_numbers<[1], [0], [0], [1], [0, 0, 1, 1], [], []>} : vector<16x288xf32>, vector<288x288xf32>, vector<16x288xf32> -> vector<16x288xf32>
    %132 = arith.addf %126, %131 : vector<16x288xf32>
    %c0_146 = arith.constant 0 : index
    %c12 = arith.constant 12 : index
    %c0_147 = arith.constant 0 : index
    %133 = vector.load %arg7[%c0_146, %c12, %c0_147] : memref<1x32x288xf32, #tpu.memory_space<vmem>>, vector<1x16x288xf32>
    %134 = vector.shape_cast %133 : vector<1x16x288xf32> to vector<16x288xf32>
    %c5_148 = arith.constant 5 : index
    %c0_149 = arith.constant 0 : index
    %c0_150 = arith.constant 0 : index
    %135 = vector.load %arg4[%c5_148, %c0_149, %c0_150] : memref<7x288x288xf32, #tpu.memory_space<vmem>>, vector<1x288x288xf32>
    %136 = vector.shape_cast %135 : vector<1x288x288xf32> to vector<288x288xf32>
    %cst_151 = arith.constant dense<0.000000e+00> : vector<16x288xf32>
    %137 = tpu.matmul %134, %136, %cst_151 {dimension_numbers = #tpu.dot_dimension_numbers<[1], [0], [0], [1], [0, 0, 1, 1], [], []>} : vector<16x288xf32>, vector<288x288xf32>, vector<16x288xf32> -> vector<16x288xf32>
    %138 = arith.addf %132, %137 : vector<16x288xf32>
    %c0_152 = arith.constant 0 : index
    %c14 = arith.constant 14 : index
    %c0_153 = arith.constant 0 : index
    %139 = vector.load %arg7[%c0_152, %c14, %c0_153] : memref<1x32x288xf32, #tpu.memory_space<vmem>>, vector<1x16x288xf32>
    %140 = vector.shape_cast %139 : vector<1x16x288xf32> to vector<16x288xf32>
    %c6_154 = arith.constant 6 : index
    %c0_155 = arith.constant 0 : index
    %c0_156 = arith.constant 0 : index
    %141 = vector.load %arg4[%c6_154, %c0_155, %c0_156] : memref<7x288x288xf32, #tpu.memory_space<vmem>>, vector<1x288x288xf32>
    %142 = vector.shape_cast %141 : vector<1x288x288xf32> to vector<288x288xf32>
    %cst_157 = arith.constant dense<0.000000e+00> : vector<16x288xf32>
    %143 = tpu.matmul %140, %142, %cst_157 {dimension_numbers = #tpu.dot_dimension_numbers<[1], [0], [0], [1], [0, 0, 1, 1], [], []>} : vector<16x288xf32>, vector<288x288xf32>, vector<16x288xf32> -> vector<16x288xf32>
    %144 = arith.addf %138, %143 : vector<16x288xf32>
    %cst_158 = arith.constant 0.000000e+00 : f32
    %145 = vector.broadcast %cst_158 : f32 to vector<16x288xf32>
    %146 = arith.maximumf %144, %145 : vector<16x288xf32>
    %147 = vector.shape_cast %146 : vector<16x288xf32> to vector<1x16x288xf32>
    %c0_159 = arith.constant 0 : index
    %c0_160 = arith.constant 0 : index
    %c0_161 = arith.constant 0 : index
    %148 = vector.load %arg5[%c0_159, %c0_160, %c0_161] : memref<1x16x288xf32, #tpu.memory_space<vmem>>, vector<1x16x288xf32>
    tpu.vector_store %arg5[%c0_159, %c0_160, %c0_161], %147 {strides = array<i32>} : memref<1x16x288xf32, #tpu.memory_space<vmem>>, vector<1x16x288xf32>,
    return
  }
  func.func @transform_0(%arg0: i32) -> (i32, i32, i32) {
    %c0_i32 = arith.constant 0 : i32
    %c0_i32_0 = arith.constant 0 : i32
    %c0_i32_1 = arith.constant 0 : i32
    return %arg0, %c0_i32, %c0_i32_0 : i32, i32, i32
  }
  func.func @transform_1(%arg0: i32) -> (i32, i32, i32) {
    %c0_i32 = arith.constant 0 : i32
    %c0_i32_0 = arith.constant 0 : i32
    %c0_i32_1 = arith.constant 0 : i32
    %c0_i32_2 = arith.constant 0 : i32
    return %c0_i32, %c0_i32_0, %c0_i32_1 : i32, i32, i32
  }
  func.func @transform_2(%arg0: i32) -> (i32, i32, i32) {
    %c0_i32 = arith.constant 0 : i32
    %c0_i32_0 = arith.constant 0 : i32
    %c0_i32_1 = arith.constant 0 : i32
    %c0_i32_2 = arith.constant 0 : i32
    return %c0_i32, %c0_i32_0, %c0_i32_1 : i32, i32, i32
  }
  func.func @transform_3(%arg0: i32) -> (i32, i32, i32) {
    %c0_i32 = arith.constant 0 : i32
    %c0_i32_0 = arith.constant 0 : i32
    %c0_i32_1 = arith.constant 0 : i32
    %c0_i32_2 = arith.constant 0 : i32
    return %c0_i32, %c0_i32_0, %c0_i32_1 : i32, i32, i32
  }
  func.func @transform_4(%arg0: i32) -> (i32, i32, i32) {
    %c0_i32 = arith.constant 0 : i32
    %c0_i32_0 = arith.constant 0 : i32
    %c0_i32_1 = arith.constant 0 : i32
    return %arg0, %c0_i32, %c0_i32_0 : i32, i32, i32
  }
}

</mosaic_0001>

<llo_original>
// kernel: sfcn_forward.1
$region0: #{sfcn_forward.1}
  #allocation0 [shape = 'u32[]', space=smem, size = 0x4, offset = 0x4, fixed_abs, tag = 'smem constant byte address 0x4 - core index']
  #allocation1 [shape = 'u32[72,128]{1,0:T(1,128)}', space=vmem, size = 0x9000, scoped, tag = 'internal scratch']
  #allocation2 [shape = 'f32[1,32,288]{2,1,0:T(8,128)}', space=vmem, size = 0xc000, scoped, tag = 'scratch operand']
  #allocation3 [shape = 'f32[1,32,288]{2,1,0:T(8,128)}', space=vmem, size = 0xc000, scoped, tag = 'scratch operand']
  %s0 = inlined_call_operand.vmem [shape: f32[2,22,48], index: 0, kind: input, shape index: {}]
  %s1 = inlined_call_operand.vmem [shape: f32[7,48,288], index: 1, kind: input, shape index: {}]
  %s2 = inlined_call_operand.vmem [shape: f32[7,288,288], index: 2, kind: input, shape index: {}]
  %s3 = inlined_call_operand.vmem [shape: f32[7,288,288], index: 3, kind: input, shape index: {}]
  %s4 = inlined_call_operand.vmem [shape: f32[2,16,288], index: 4, kind: output, shape index: {}]
  %s5 = sld [smem:[#allocation0]]
  $region49: #{sfcn_forward.1} parent=0
    _
  %s7 = ssub.s32 1, %s5
  %s8 = scalar_select 0, %s7, %s5
  loop: start=0, step=1, limit=4
  $region2: #{sfcn_forward.1} parent=0 // loop_pre_header
    _
  $region3: #{sfcn_forward.1} parent=0 // loop_header
    %s10 = sphi 0, %s14
    %p11 = scmp.ge.s32.totalorder %s10, 4
    %s20 = sphi 0, %s22
    %s23 = sphi 0, %s20
    %s24 = sphi 0, %s23
    %s40 = sphi 0, %s24
    %s44 = sphi 0, %s44
    %s46 = sphi 0, %s44
    %s47 = sphi 0, %s46
    %s61 = sphi 0, %s47
    %s65 = sphi 0, %s65
    %s67 = sphi 0, %s65
    %s68 = sphi 0, %s67
    %s82 = sphi 0, %s68
    %s86 = sphi 0, %s86
    %s88 = sphi 0, %s86
    %s89 = sphi 0, %s88
    %s103 = sphi 0, %s89
    %s109 = sphi 0, %s111
    %s112 = sphi 0, %s109
    %s113 = sphi 0, %s112
    %s129 = sphi 0, %s113
  $region4: #{sfcn_forward.1} parent=0 // loop_header_branch
    %13 = sbr.rel (%p11) target = $region8
  $region5: #{sfcn_forward.1} parent=0 // loop_body
    %s15 = ssub.s32 %s10, 1
    %s16 = ssub.s32 %s10, 2
    %s17 = sadd.s32 %s10, 1
    %s18 = ssub.s32 %s10, %s17
    %p19 = scmp.eq.s32.totalorder %s18, 0
    %s21 = sadd.s32 %s20, 1
    %s22 = scalar_select %p19, %s20, %s21
    %p25 = pneg %p19
    %p26 = scmp.eq.s32.totalorder %s10, 1
    %p27 = por %p25, %p26
    %p28 = scmp.ne.s32.totalorder %s20, %s23
    %p29 = scmp.eq.s32.totalorder %s10, 0
    %p30 = por %p28, %p29
    %p31 = scmp.ne.s32.totalorder %s20, %s23
    %p32 = scmp.eq.s32.totalorder %s15, 1
    %p33 = por %p31, %p32
    %p34 = scmp.ne.s32.totalorder %s23, %s24
    %p35 = scmp.eq.s32.totalorder %s15, 0
    %p36 = por %p34, %p35
    %p37 = scmp.ne.s32.totalorder %s23, %s24
    %p38 = scmp.eq.s32.totalorder %s16, 1
    %p39 = por %p37, %p38
    %p41 = scmp.ne.s32.totalorder %s24, %s40
    %p42 = scmp.eq.s32.totalorder %s16, 0
    %p43 = por %p41, %p42
    %s45 = sadd.s32 %s44, 1
    %p48 = scmp.eq.s32.totalorder %s10, 1
    %p49 = scmp.ne.s32.totalorder %s44, %s46
    %p50 = scmp.eq.s32.totalorder %s10, 0
    %p51 = por %p49, %p50
    %p52 = scmp.ne.s32.totalorder %s44, %s46
    %p53 = scmp.eq.s32.totalorder %s15, 1
    %p54 = por %p52, %p53
    %p55 = scmp.ne.s32.totalorder %s46, %s47
    %p56 = scmp.eq.s32.totalorder %s15, 0
    %p57 = por %p55, %p56
    %p58 = scmp.ne.s32.totalorder %s46, %s47
    %p59 = scmp.eq.s32.totalorder %s16, 1
    %p60 = por %p58, %p59
    %p62 = scmp.ne.s32.totalorder %s47, %s61
    %p63 = scmp.eq.s32.totalorder %s16, 0
    %p64 = por %p62, %p63
    %s66 = sadd.s32 %s65, 1
    %p69 = scmp.eq.s32.totalorder %s10, 1
    %p70 = scmp.ne.s32.totalorder %s65, %s67
    %p71 = scmp.eq.s32.totalorder %s10, 0
    %p72 = por %p70, %p71
    %p73 = scmp.ne.s32.totalorder %s65, %s67
    %p74 = scmp.eq.s32.totalorder %s15, 1
    %p75 = por %p73, %p74
    %p76 = scmp.ne.s32.totalorder %s67, %s68
    %p77 = scmp.eq.s32.totalorder %s15, 0
    %p78 = por %p76, %p77
    %p79 = scmp.ne.s32.totalorder %s67, %s68
    %p80 = scmp.eq.s32.totalorder %s16, 1
    %p81 = por %p79, %p80
    %p83 = scmp.ne.s32.totalorder %s68, %s82
    %p84 = scmp.eq.s32.totalorder %s16, 0
    %p85 = por %p83, %p84
    %s87 = sadd.s32 %s86, 1
    %p90 = scmp.eq.s32.totalorder %s10, 1
    %p91 = scmp.ne.s32.totalorder %s86, %s88
    %p92 = scmp.eq.s32.totalorder %s10, 0
    %p93 = por %p91, %p92
    %p94 = scmp.ne.s32.totalorder %s86, %s88
    %p95 = scmp.eq.s32.totalorder %s15, 1
    %p96 = por %p94, %p95
    %p97 = scmp.ne.s32.totalorder %s88, %s89
    %p98 = scmp.eq.s32.totalorder %s15, 0
    %p99 = por %p97, %p98
    %p100 = scmp.ne.s32.totalorder %s88, %s89
    %p101 = scmp.eq.s32.totalorder %s16, 1
    %p102 = por %p100, %p101
    %p104 = scmp.ne.s32.totalorder %s89, %s103
    %p105 = scmp.eq.s32.totalorder %s16, 0
    %p106 = por %p104, %p105
    %s107 = ssub.s32 %s10, %s17
    %p108 = scmp.eq.s32.totalorder %s107, 0
    %s110 = sadd.s32 %s109, 1
    %s111 = scalar_select %p108, %s109, %s110
    %p114 = pneg %p108
    %p115 = scmp.eq.s32.totalorder %s10, 1
    %p116 = por %p114, %p115
    %p117 = scmp.ne.s32.totalorder %s109, %s112
    %p118 = scmp.eq.s32.totalorder %s10, 0
    %p119 = por %p117, %p118
    %p120 = scmp.ne.s32.totalorder %s109, %s112
    %p121 = scmp.eq.s32.totalorder %s15, 1
    %p122 = por %p120, %p121
    %p123 = scmp.ne.s32.totalorder %s112, %s113
    %p124 = scmp.eq.s32.totalorder %s15, 0
    %p125 = por %p123, %p124
    %p126 = scmp.ne.s32.totalorder %s112, %s113
    %p127 = scmp.eq.s32.totalorder %s16, 1
    %p128 = por %p126, %p127
    %p130 = scmp.ne.s32.totalorder %s113, %s129
    %p131 = scmp.eq.s32.totalorder %s16, 0
    %p132 = por %p130, %p131
    %p133 = scmp.le.s32.totalorder 1, %s10
    %p134 = scmp.lt.s32.totalorder %s10, 3
    %p135 = pnand %p133, %p134
    %p136 = pneg %p135
    // Predicated region
    $region9: #{sfcn_forward.1} parent=5 // pred_check
      _
    $region10: #{sfcn_forward.1} parent=5 // pred_check_branch
      %138 = sbr.rel (%p135) target = $region12
    $region11: #{sfcn_forward.1} parent=5 // pred_region
      %s139 = ssub.s32 %s10, 1
      // Predicated region
      $region13: #{sfcn_forward.1} parent=11 // pred_check
        %p140 = pneg %p57
      $region14: #{sfcn_forward.1} parent=11 // pred_check_branch
        %142 = sbr.rel (%p140) target = $region16
      $region15: #{sfcn_forward.1} parent=11 // pred_region
        _
      $region16: #{sfcn_forward.1} parent=11 // pred_fallthru
        _
      // Predicated region
      $region17: #{sfcn_forward.1} parent=11 // pred_check
        %p143 = pneg %p78
      $region18: #{sfcn_forward.1} parent=11 // pred_check_branch
        %145 = sbr.rel (%p143) target = $region20
      $region19: #{sfcn_forward.1} parent=11 // pred_region
        _
      $region20: #{sfcn_forward.1} parent=11 // pred_fallthru
        _
      // Predicated region
      $region21: #{sfcn_forward.1} parent=11 // pred_check
        %p146 = pneg %p99
      $region22: #{sfcn_forward.1} parent=11 // pred_check_branch
        %148 = sbr.rel (%p146) target = $region24
      $region23: #{sfcn_forward.1} parent=11 // pred_region
        _
      $region24: #{sfcn_forward.1} parent=11 // pred_fallthru
        _
    $region12: #{sfcn_forward.1} parent=5 // pred_fallthru
      _
    %p149 = scmp.lt.s32.totalorder %s10, 2
    // Predicated region
    $region25: #{sfcn_forward.1} parent=5 // pred_check
      %p150 = pneg %p149
    $region26: #{sfcn_forward.1} parent=5 // pred_check_branch
      %152 = sbr.rel (%p150) target = $region28
    $region27: #{sfcn_forward.1} parent=5 // pred_region
      // Predicated region
      $region29: #{sfcn_forward.1} parent=27 // pred_check
        %p153 = pneg %p30
      $region30: #{sfcn_forward.1} parent=27 // pred_check_branch
        %155 = sbr.rel (%p153) target = $region32
      $region31: #{sfcn_forward.1} parent=27 // pred_region
        %p156 = scmp.lt.s32.totalorder %s10, 1
        %s157 = scalar_select %p156, %s10, 1
        %s158 = smul.addr %s157, 3
        %s159 = smul.addr %s158, 8
        %s160 = scalar_lea.vmem %s0, %s159
      $region32: #{sfcn_forward.1} parent=27 // pred_fallthru
        _
    $region28: #{sfcn_forward.1} parent=5 // pred_fallthru
      _
    %p161 = scmp.le.s32.totalorder 1, %s10
    %p162 = scmp.lt.s32.totalorder %s10, 3
    %p163 = pnand %p161, %p162
    %p164 = pneg %p163
    // Predicated region
    $region33: #{sfcn_forward.1} parent=5 // pred_check
      _
    $region34: #{sfcn_forward.1} parent=5 // pred_check_branch
      %166 = sbr.rel (%p163) target = $region36
    $region35: #{sfcn_forward.1} parent=5 // pred_region
      %s167 = ssub.s32 %s10, 1
      %p168 = scmp.lt.s32.totalorder %s15, 1
      %s169 = scalar_select %p168, %s15, 1
      %s170 = smul.addr %s169, 3
      %s171 = smul.addr %s170, 8
      %s172 = scalar_lea.vmem %s0, %s171
      %p173 = pneg %p36
      %p174 = pneg %p33
      %p175 = pneg %p57
      %p176 = pneg %p54
      %p177 = pneg %p78
      %p178 = pneg %p75
      %p179 = pneg %p99
      %p180 = pneg %p96
      %p181 = pneg %p125
      %p182 = pneg %p122
      %p183 = scmp.lt.s32.totalorder %s15, 1
      %s184 = scalar_select %p183, %s15, 1
      %s185 = smul.addr %s184, 6
      %s186 = smul.addr %s185, 8
      %s187 = scalar_lea.vmem %s4, %s186
      %p188 = scmp.lt.s32.totalorder %s15, 1
      %s189 = scalar_select %p188, %s15, 1
      %s190 = smul.addr %s189, 3
      %s191 = smul.addr %s190, 8
      %s192 = scalar_lea.vmem %s0, %s191
      %p193 = scmp.lt.s32.totalorder %s15, 1
      %s194 = scalar_select %p193, %s15, 1
      %s195 = smul.addr %s194, 6
      %s196 = smul.addr %s195, 8
      %s197 = scalar_lea.vmem %s4, %s196
      %198 = vst [vmem:[#allocation2] sm:$0xff] 0.0
      %199 = vst [vmem:[#allocation2 + $0x8] sm:$0xff] 0.0
      %vm200 = vcmask 261120
      %201 = vst.msk [vmem:[#allocation2 + $0x10] sm:$0xff] %vm200, 0.0
      %202 = vst [vmem:[#allocation2 + $0x48] sm:$0xff] 0.0
      %203 = vst [vmem:[#allocation2 + $0x50] sm:$0xff] 0.0
      %204 = vst.msk [vmem:[#allocation2 + $0x58] sm:$0xff] %vm200, 0.0
      %205 = vst [vmem:[#allocation3] sm:$0xff] 0.0
      %206 = vst [vmem:[#allocation3 + $0x8] sm:$0xff] 0.0
      %207 = vst.msk [vmem:[#allocation3 + $0x10] sm:$0xff] %vm200, 0.0
      %208 = vst [vmem:[#allocation3 + $0x48] sm:$0xff] 0.0
      %209 = vst [vmem:[#allocation3 + $0x50] sm:$0xff] 0.0
      %210 = vst.msk [vmem:[#allocation3 + $0x58] sm:$0xff] %vm200, 0.0
      %v211 = vld [vmem:[%s192] sm:$0xff]
      %v212 = vld [vmem:[%s192 + $0x8] sm:$0xff]
      %v213 = vld [vmem:[%s1] sm:$0xff]
      %v214 = vld [vmem:[%s1 + $0x8] sm:$0xff]
      %v215 = vld [vmem:[%s1 + $0x10] sm:$0xff]
      %v216 = vld [vmem:[%s1 + $0x18] sm:$0xff]
      %v217 = vld [vmem:[%s1 + $0x20] sm:$0xff]
      %v218 = vld [vmem:[%s1 + $0x28] sm:$0xff]
      %v219 = vld [vmem:[%s1 + $0x30] sm:$0xff]
      %v220 = vld [vmem:[%s1 + $0x38] sm:$0xff]
      %v221 = vld [vmem:[%s1 + $0x40] sm:$0xff]
      %v222 = vld [vmem:[%s1 + $0x48] sm:$0xff]
      %v223 = vld [vmem:[%s1 + $0x50] sm:$0xff]
      %v224 = vld [vmem:[%s1 + $0x58] sm:$0xff]
      %v225 = vld [vmem:[%s1 + $0x60] sm:$0xff]
      %v226 = vld [vmem:[%s1 + $0x68] sm:$0xff]
      %v227 = vld [vmem:[%s1 + $0x70] sm:$0xff]
      %v228 = vld [vmem:[%s1 + $0x78] sm:$0xff]
      %v229 = vld [vmem:[%s1 + $0x80] sm:$0xff]
      %v230 = vld [vmem:[%s1 + $0x88] sm:$0xff]
      %v231 = vld [vmem:[%s192 + $0x1] sm:$0xff]
      %v232 = vld [vmem:[%s192 + $0x9] sm:$0xff]
      %s233 = scalar_lea.vmem %s1, 144
      %v234 = vld [vmem:[%s233] sm:$0xff]
      %v235 = vld [vmem:[%s233 + $0x8] sm:$0xff]
      %v236 = vld [vmem:[%s233 + $0x10] sm:$0xff]
      %v237 = vld [vmem:[%s233 + $0x18] sm:$0xff]
      %v238 = vld [vmem:[%s233 + $0x20] sm:$0xff]
      %v239 = vld [vmem:[%s233 + $0x28] sm:$0xff]
      %v240 = vld [vmem:[%s233 + $0x30] sm:$0xff]
      %v241 = vld [vmem:[%s233 + $0x38] sm:$0xff]
      %v242 = vld [vmem:[%s233 + $0x40] sm:$0xff]
      %v243 = vld [vmem:[%s233 + $0x48] sm:$0xff]
      %v244 = vld [vmem:[%s233 + $0x50] sm:$0xff]
      %v245 = vld [vmem:[%s233 + $0x58] sm:$0xff]
      %v246 = vld [vmem:[%s233 + $0x60] sm:$0xff]
      %v247 = vld [vmem:[%s233 + $0x68] sm:$0xff]
      %v248 = vld [vmem:[%s233 + $0x70] sm:$0xff]
      %v249 = vld [vmem:[%s233 + $0x78] sm:$0xff]
      %v250 = vld [vmem:[%s233 + $0x80] sm:$0xff]
      %v251 = vld [vmem:[%s233 + $0x88] sm:$0xff]
      %vm252 = vcmask 392192
      %v254 = vsel %vm252, %v231, 0
      %v257 = vsel %vm252, %v232, 0
      %259 = vmatpush.msra.mxu0 0.0
      %260 = vmatpush.msra.mxu0 0.0
      %261 = vmatpush.msra.mxu0 0.0
      %262 = vmatpush.msra.mxu0 0.0
      %263 = vmatpush.msra.mxu0 0.0
      %264 = vmatpush.msra.mxu0 0.0
      %265 = vmatpush.msra.mxu0 0.0
      %266 = vmatpush.msra.mxu0 0.0
      %267 = vmatpush.msra.mxu0 0.0
      %268 = vmatpush.msra.mxu0 0.0
      %269 = vmatpush.msra.mxu0 %v249
      %270 = vmatpush.msra.mxu0 %v246
      %271 = vmatpush.msra.mxu0 %v243
      %272 = vmatpush.msra.mxu0 %v240
      %273 = vmatpush.msra.mxu0 %v237
      %274 = vmatpush.msra.mxu0 %v234
      %275 = vmatmul.f32.gmra.mxu0 %v254
      %v276 = vpop.f32.mrf.mxu0
      %v277 = vadd.f32 0.0, %v276
      %278 = vmatmul.f32.gmra.mxu0 %v257
      %v279 = vpop.f32.mrf.mxu0
      %v280 = vadd.f32 0.0, %v279
      %281 = vdwg.mxu0
      %282 = vmatpush.msra.mxu0 0.0
      %283 = vmatpush.msra.mxu0 0.0
      %284 = vmatpush.msra.mxu0 0.0
      %285 = vmatpush.msra.mxu0 0.0
      %286 = vmatpush.msra.mxu0 0.0
      %287 = vmatpush.msra.mxu0 0.0
      %288 = vmatpush.msra.mxu0 0.0
      %289 = vmatpush.msra.mxu0 0.0
      %290 = vmatpush.msra.mxu0 0.0
      %291 = vmatpush.msra.mxu0 0.0
      %292 = vmatpush.msra.mxu0 %v250
      %293 = vmatpush.msra.mxu0 %v247
      %294 = vmatpush.msra.mxu0 %v244
      %295 = vmatpush.msra.mxu0 %v241
      %296 = vmatpush.msra.mxu0 %v238
      %297 = vmatpush.msra.mxu0 %v235
      %298 = vmatmul.f32.gmra.mxu0 %v254
      %v299 = vpop.f32.mrf.mxu0
      %v300 = vadd.f32 0.0, %v299
      %301 = vmatmul.f32.gmra.mxu0 %v257
      %v302 = vpop.f32.mrf.mxu0
      %v303 = vadd.f32 0.0, %v302
      %304 = vdwg.mxu0
      %305 = vmatpush.msra.mxu0 0.0
      %306 = vmatpush.msra.mxu0 0.0
      %307 = vmatpush.msra.mxu0 0.0
      %308 = vmatpush.msra.mxu0 0.0
      %309 = vmatpush.msra.mxu0 0.0
      %310 = vmatpush.msra.mxu0 0.0
      %311 = vmatpush.msra.mxu0 0.0
      %312 = vmatpush.msra.mxu0 0.0
      %313 = vmatpush.msra.mxu0 0.0
      %314 = vmatpush.msra.mxu0 0.0
      %315 = vmatpush.msra.mxu0 %v251
      %316 = vmatpush.msra.mxu0 %v248
      %317 = vmatpush.msra.mxu0 %v245
      %318 = vmatpush.msra.mxu0 %v242
      %319 = vmatpush.msra.mxu0 %v239
      %320 = vmatpush.msra.mxu0 %v236
      %321 = vmatmul.f32.gmra.mxu0 %v254
      %v322 = vpop.f32.mrf.mxu0
      %v323 = vadd.f32 0.0, %v322
      %324 = vmatmul.f32.gmra.mxu0 %v257
      %v325 = vpop.f32.mrf.mxu0
      %v326 = vadd.f32 0.0, %v325
      %327 = vdwg.mxu0
      %v329 = vsel %vm252, %v211, 0
      %v332 = vsel %vm252, %v212, 0
      %334 = vmatpush.msra.mxu0 0.0
      %335 = vmatpush.msra.mxu0 0.0
      %336 = vmatpush.msra.mxu0 0.0
      %337 = vmatpush.msra.mxu0 0.0
      %338 = vmatpush.msra.mxu0 0.0
      %339 = vmatpush.msra.mxu0 0.0
      %340 = vmatpush.msra.mxu0 0.0
      %341 = vmatpush.msra.mxu0 0.0
      %342 = vmatpush.msra.mxu0 0.0
      %343 = vmatpush.msra.mxu0 0.0
      %344 = vmatpush.msra.mxu0 %v228
      %345 = vmatpush.msra.mxu0 %v225
      %346 = vmatpush.msra.mxu0 %v222
      %347 = vmatpush.msra.mxu0 %v219
      %348 = vmatpush.msra.mxu0 %v216
      %349 = vmatpush.msra.mxu0 %v213
      %350 = vmatmul.f32.gmra.mxu0 %v329
      %v351 = vpop.f32.mrf.mxu0
      %v352 = vadd.f32 %v277, %v351
      %353 = vmatmul.f32.gmra.mxu0 %v332
      %v354 = vpop.f32.mrf.mxu0
      %v355 = vadd.f32 %v280, %v354
      %356 = vdwg.mxu0
      %357 = vmatpush.msra.mxu0 0.0
      %358 = vmatpush.msra.mxu0 0.0
      %359 = vmatpush.msra.mxu0 0.0
      %360 = vmatpush.msra.mxu0 0.0
      %361 = vmatpush.msra.mxu0 0.0
      %362 = vmatpush.msra.mxu0 0.0
      %363 = vmatpush.msra.mxu0 0.0
      %364 = vmatpush.msra.mxu0 0.0
      %365 = vmatpush.msra.mxu0 0.0
      %366 = vmatpush.msra.mxu0 0.0
      %367 = vmatpush.msra.mxu0 %v229
      %368 = vmatpush.msra.mxu0 %v226
      %369 = vmatpush.msra.mxu0 %v223
      %370 = vmatpush.msra.mxu0 %v220
      %371 = vmatpush.msra.mxu0 %v217
      %372 = vmatpush.msra.mxu0 %v214
      %373 = vmatmul.f32.gmra.mxu0 %v329
      %v374 = vpop.f32.mrf.mxu0
      %v375 = vadd.f32 %v300, %v374
      %376 = vmatmul.f32.gmra.mxu0 %v332
      %v377 = vpop.f32.mrf.mxu0
      %v378 = vadd.f32 %v303, %v377
      %379 = vdwg.mxu0
      %380 = vmatpush.msra.mxu0 0.0
      %381 = vmatpush.msra.mxu0 0.0
      %382 = vmatpush.msra.mxu0 0.0
      %383 = vmatpush.msra.mxu0 0.0
      %384 = vmatpush.msra.mxu0 0.0
      %385 = vmatpush.msra.mxu0 0.0
      %386 = vmatpush.msra.mxu0 0.0
      %387 = vmatpush.msra.mxu0 0.0
      %388 = vmatpush.msra.mxu0 0.0
      %389 = vmatpush.msra.mxu0 0.0
      %390 = vmatpush.msra.mxu0 %v230
      %391 = vmatpush.msra.mxu0 %v227
      %392 = vmatpush.msra.mxu0 %v224
      %393 = vmatpush.msra.mxu0 %v221
      %394 = vmatpush.msra.mxu0 %v218
      %395 = vmatpush.msra.mxu0 %v215
      %396 = vmatmul.f32.gmra.mxu0 %v329
      %v397 = vpop.f32.mrf.mxu0
      %v398 = vadd.f32 %v323, %v397
      %399 = vmatmul.f32.gmra.mxu0 %v332
      %v400 = vpop.f32.mrf.mxu0
      %v401 = vadd.f32 %v326, %v400
      %402 = vdwg.mxu0
      %v403 = vld [vmem:[%s192 + $0x2] sm:$0xff]
      %v404 = vld [vmem:[%s192 + $0xa] sm:$0xff]
      %s405 = scalar_lea.vmem %s1, 288
      %v406 = vld [vmem:[%s405] sm:$0xff]
      %v407 = vld [vmem:[%s405 + $0x8] sm:$0xff]
      %v408 = vld [vmem:[%s405 + $0x10] sm:$0xff]
      %v409 = vld [vmem:[%s405 + $0x18] sm:$0xff]
      %v410 = vld [vmem:[%s405 + $0x20] sm:$0xff]
      %v411 = vld [vmem:[%s405 + $0x28] sm:$0xff]
      %v412 = vld [vmem:[%s405 + $0x30] sm:$0xff]
      %v413 = vld [vmem:[%s405 + $0x38] sm:$0xff]
      %v414 = vld [vmem:[%s405 + $0x40] sm:$0xff]
      %v415 = vld [vmem:[%s405 + $0x48] sm:$0xff]
      %v416 = vld [vmem:[%s405 + $0x50] sm:$0xff]
      %v417 = vld [vmem:[%s405 + $0x58] sm:$0xff]
      %v418 = vld [vmem:[%s405 + $0x60] sm:$0xff]
      %v419 = vld [vmem:[%s405 + $0x68] sm:$0xff]
      %v420 = vld [vmem:[%s405 + $0x70] sm:$0xff]
      %v421 = vld [vmem:[%s405 + $0x78] sm:$0xff]
      %v422 = vld [vmem:[%s405 + $0x80] sm:$0xff]
      %v423 = vld [vmem:[%s405 + $0x88] sm:$0xff]
      %v425 = vsel %vm252, %v403, 0
      %v428 = vsel %vm252, %v404, 0
      %430 = vmatpush.msra.mxu0 0.0
      %431 = vmatpush.msra.mxu0 0.0
      %432 = vmatpush.msra.mxu0 0.0
      %433 = vmatpush.msra.mxu0 0.0
      %434 = vmatpush.msra.mxu0 0.0
      %435 = vmatpush.msra.mxu0 0.0
      %436 = vmatpush.msra.mxu0 0.0
      %437 = vmatpush.msra.mxu0 0.0
      %438 = vmatpush.msra.mxu0 0.0
      %439 = vmatpush.msra.mxu0 0.0
      %440 = vmatpush.msra.mxu0 %v421
      %441 = vmatpush.msra.mxu0 %v418
      %442 = vmatpush.msra.mxu0 %v415
      %443 = vmatpush.msra.mxu0 %v412
      %444 = vmatpush.msra.mxu0 %v409
      %445 = vmatpush.msra.mxu0 %v406
      %446 = vmatmul.f32.gmra.mxu0 %v425
      %v447 = vpop.f32.mrf.mxu0
      %v448 = vadd.f32 0.0, %v447
      %449 = vmatmul.f32.gmra.mxu0 %v428
      %v450 = vpop.f32.mrf.mxu0
      %v451 = vadd.f32 0.0, %v450
      %452 = vdwg.mxu0
      %453 = vmatpush.msra.mxu0 0.0
      %454 = vmatpush.msra.mxu0 0.0
      %455 = vmatpush.msra.mxu0 0.0
      %456 = vmatpush.msra.mxu0 0.0
      %457 = vmatpush.msra.mxu0 0.0
      %458 = vmatpush.msra.mxu0 0.0
      %459 = vmatpush.msra.mxu0 0.0
      %460 = vmatpush.msra.mxu0 0.0
      %461 = vmatpush.msra.mxu0 0.0
      %462 = vmatpush.msra.mxu0 0.0
      %463 = vmatpush.msra.mxu0 %v422
      %464 = vmatpush.msra.mxu0 %v419
      %465 = vmatpush.msra.mxu0 %v416
      %466 = vmatpush.msra.mxu0 %v413
      %467 = vmatpush.msra.mxu0 %v410
      %468 = vmatpush.msra.mxu0 %v407
      %469 = vmatmul.f32.gmra.mxu0 %v425
      %v470 = vpop.f32.mrf.mxu0
      %v471 = vadd.f32 0.0, %v470
      %472 = vmatmul.f32.gmra.mxu0 %v428
      %v473 = vpop.f32.mrf.mxu0
      %v474 = vadd.f32 0.0, %v473
      %475 = vdwg.mxu0
      %476 = vmatpush.msra.mxu0 0.0
      %477 = vmatpush.msra.mxu0 0.0
      %478 = vmatpush.msra.mxu0 0.0
      %479 = vmatpush.msra.mxu0 0.0
      %480 = vmatpush.msra.mxu0 0.0
      %481 = vmatpush.msra.mxu0 0.0
      %482 = vmatpush.msra.mxu0 0.0
      %483 = vmatpush.msra.mxu0 0.0
      %484 = vmatpush.msra.mxu0 0.0
      %485 = vmatpush.msra.mxu0 0.0
      %486 = vmatpush.msra.mxu0 %v423
      %487 = vmatpush.msra.mxu0 %v420
      %488 = vmatpush.msra.mxu0 %v417
      %489 = vmatpush.msra.mxu0 %v414
      %490 = vmatpush.msra.mxu0 %v411
      %491 = vmatpush.msra.mxu0 %v408
      %492 = vmatmul.f32.gmra.mxu0 %v425
      %v493 = vpop.f32.mrf.mxu0
      %v494 = vadd.f32 0.0, %v493
      %495 = vmatmul.f32.gmra.mxu0 %v428
      %v496 = vpop.f32.mrf.mxu0
      %v497 = vadd.f32 0.0, %v496
      %498 = vdwg.mxu0
      %v499 = vadd.f32 %v352, %v448
      %v500 = vadd.f32 %v375, %v471
      %v501 = vadd.f32 %v398, %v494
      %v502 = vadd.f32 %v355, %v451
      %v503 = vadd.f32 %v378, %v474
      %v504 = vadd.f32 %v401, %v497
      %v505 = vld [vmem:[%s192 + $0x3] sm:$0xff]
      %v506 = vld [vmem:[%s192 + $0xb] sm:$0xff]
      %s507 = scalar_lea.vmem %s1, 432
      %v508 = vld [vmem:[%s507] sm:$0xff]
      %v509 = vld [vmem:[%s507 + $0x8] sm:$0xff]
      %v510 = vld [vmem:[%s507 + $0x10] sm:$0xff]
      %v511 = vld [vmem:[%s507 + $0x18] sm:$0xff]
      %v512 = vld [vmem:[%s507 + $0x20] sm:$0xff]
      %v513 = vld [vmem:[%s507 + $0x28] sm:$0xff]
      %v514 = vld [vmem:[%s507 + $0x30] sm:$0xff]
      %v515 = vld [vmem:[%s507 + $0x38] sm:$0xff]
      %v516 = vld [vmem:[%s507 + $0x40] sm:$0xff]
      %v517 = vld [vmem:[%s507 + $0x48] sm:$0xff]
      %v518 = vld [vmem:[%s507 + $0x50] sm:$0xff]
      %v519 = vld [vmem:[%s507 + $0x58] sm:$0xff]
      %v520 = vld [vmem:[%s507 + $0x60] sm:$0xff]
      %v521 = vld [vmem:[%s507 + $0x68] sm:$0xff]
      %v522 = vld [vmem:[%s507 + $0x70] sm:$0xff]
      %v523 = vld [vmem:[%s507 + $0x78] sm:$0xff]
      %v524 = vld [vmem:[%s507 + $0x80] sm:$0xff]
      %v525 = vld [vmem:[%s507 + $0x88] sm:$0xff]
      %v527 = vsel %vm252, %v505, 0
      %v530 = vsel %vm252, %v506, 0
      %532 = vmatpush.msra.mxu0 0.0
      %533 = vmatpush.msra.mxu0 0.0
      %534 = vmatpush.msra.mxu0 0.0
      %535 = vmatpush.msra.mxu0 0.0
      %536 = vmatpush.msra.mxu0 0.0
      %537 = vmatpush.msra.mxu0 0.0
      %538 = vmatpush.msra.mxu0 0.0
      %539 = vmatpush.msra.mxu0 0.0
      %540 = vmatpush.msra.mxu0 0.0
      %541 = vmatpush.msra.mxu0 0.0
      %542 = vmatpush.msra.mxu0 %v523
      %543 = vmatpush.msra.mxu0 %v520
      %544 = vmatpush.msra.mxu0 %v517
      %545 = vmatpush.msra.mxu0 %v514
      %546 = vmatpush.msra.mxu0 %v511
      %547 = vmatpush.msra.mxu0 %v508
      %548 = vmatmul.f32.gmra.mxu0 %v527
      %v549 = vpop.f32.mrf.mxu0
      %v550 = vadd.f32 0.0, %v549
      %551 = vmatmul.f32.gmra.mxu0 %v530
      %v552 = vpop.f32.mrf.mxu0
      %v553 = vadd.f32 0.0, %v552
      %554 = vdwg.mxu0
      %555 = vmatpush.msra.mxu0 0.0
      %556 = vmatpush.msra.mxu0 0.0
      %557 = vmatpush.msra.mxu0 0.0
      %558 = vmatpush.msra.mxu0 0.0
      %559 = vmatpush.msra.mxu0 0.0
      %560 = vmatpush.msra.mxu0 0.0
      %561 = vmatpush.msra.mxu0 0.0
      %562 = vmatpush.msra.mxu0 0.0
      %563 = vmatpush.msra.mxu0 0.0
      %564 = vmatpush.msra.mxu0 0.0
      %565 = vmatpush.msra.mxu0 %v524
      %566 = vmatpush.msra.mxu0 %v521
      %567 = vmatpush.msra.mxu0 %v518
      %568 = vmatpush.msra.mxu0 %v515
      %569 = vmatpush.msra.mxu0 %v512
      %570 = vmatpush.msra.mxu0 %v509
      %571 = vmatmul.f32.gmra.mxu0 %v527
      %v572 = vpop.f32.mrf.mxu0
      %v573 = vadd.f32 0.0, %v572
      %574 = vmatmul.f32.gmra.mxu0 %v530
      %v575 = vpop.f32.mrf.mxu0
      %v576 = vadd.f32 0.0, %v575
      %577 = vdwg.mxu0
      %578 = vmatpush.msra.mxu0 0.0
      %579 = vmatpush.msra.mxu0 0.0
      %580 = vmatpush.msra.mxu0 0.0
      %581 = vmatpush.msra.mxu0 0.0
      %582 = vmatpush.msra.mxu0 0.0
      %583 = vmatpush.msra.mxu0 0.0
      %584 = vmatpush.msra.mxu0 0.0
      %585 = vmatpush.msra.mxu0 0.0
      %586 = vmatpush.msra.mxu0 0.0
      %587 = vmatpush.msra.mxu0 0.0
      %588 = vmatpush.msra.mxu0 %v525
      %589 = vmatpush.msra.mxu0 %v522
      %590 = vmatpush.msra.mxu0 %v519
      %591 = vmatpush.msra.mxu0 %v516
      %592 = vmatpush.msra.mxu0 %v513
      %593 = vmatpush.msra.mxu0 %v510
      %594 = vmatmul.f32.gmra.mxu0 %v527
      %v595 = vpop.f32.mrf.mxu0
      %v596 = vadd.f32 0.0, %v595
      %597 = vmatmul.f32.gmra.mxu0 %v530
      %v598 = vpop.f32.mrf.mxu0
      %v599 = vadd.f32 0.0, %v598
      %600 = vdwg.mxu0
      %v601 = vadd.f32 %v499, %v550
      %v602 = vadd.f32 %v500, %v573
      %v603 = vadd.f32 %v501, %v596
      %v604 = vadd.f32 %v502, %v553
      %v605 = vadd.f32 %v503, %v576
      %v606 = vadd.f32 %v504, %v599
      %v607 = vld [vmem:[%s192 + $0x4] sm:$0xff]
      %v608 = vld [vmem:[%s192 + $0xc] sm:$0xff]
      %s609 = scalar_lea.vmem %s1, 576
      %v610 = vld [vmem:[%s609] sm:$0xff]
      %v611 = vld [vmem:[%s609 + $0x8] sm:$0xff]
      %v612 = vld [vmem:[%s609 + $0x10] sm:$0xff]
      %v613 = vld [vmem:[%s609 + $0x18] sm:$0xff]
      %v614 = vld [vmem:[%s609 + $0x20] sm:$0xff]
      %v615 = vld [vmem:[%s609 + $0x28] sm:$0xff]
      %v616 = vld [vmem:[%s609 + $0x30] sm:$0xff]
      %v617 = vld [vmem:[%s609 + $0x38] sm:$0xff]
      %v618 = vld [vmem:[%s609 + $0x40] sm:$0xff]
      %v619 = vld [vmem:[%s609 + $0x48] sm:$0xff]
      %v620 = vld [vmem:[%s609 + $0x50] sm:$0xff]
      %v621 = vld [vmem:[%s609 + $0x58] sm:$0xff]
      %v622 = vld [vmem:[%s609 + $0x60] sm:$0xff]
      %v623 = vld [vmem:[%s609 + $0x68] sm:$0xff]
      %v624 = vld [vmem:[%s609 + $0x70] sm:$0xff]
      %v625 = vld [vmem:[%s609 + $0x78] sm:$0xff]
      %v626 = vld [vmem:[%s609 + $0x80] sm:$0xff]
      %v627 = vld [vmem:[%s609 + $0x88] sm:$0xff]
      %v629 = vsel %vm252, %v607, 0
      %v632 = vsel %vm252, %v608, 0
      %634 = vmatpush.msra.mxu0 0.0
      %635 = vmatpush.msra.mxu0 0.0
      %636 = vmatpush.msra.mxu0 0.0
      %637 = vmatpush.msra.mxu0 0.0
      %638 = vmatpush.msra.mxu0 0.0
      %639 = vmatpush.msra.mxu0 0.0
      %640 = vmatpush.msra.mxu0 0.0
      %641 = vmatpush.msra.mxu0 0.0
      %642 = vmatpush.msra.mxu0 0.0
      %643 = vmatpush.msra.mxu0 0.0
      %644 = vmatpush.msra.mxu0 %v625
      %645 = vmatpush.msra.mxu0 %v622
      %646 = vmatpush.msra.mxu0 %v619
      %647 = vmatpush.msra.mxu0 %v616
      %648 = vmatpush.msra.mxu0 %v613
      %649 = vmatpush.msra.mxu0 %v610
      %650 = vmatmul.f32.gmra.mxu0 %v629
      %v651 = vpop.f32.mrf.mxu0
      %v652 = vadd.f32 0.0, %v651
      %653 = vmatmul.f32.gmra.mxu0 %v632
      %v654 = vpop.f32.mrf.mxu0
      %v655 = vadd.f32 0.0, %v654
      %656 = vdwg.mxu0
      %657 = vmatpush.msra.mxu0 0.0
      %658 = vmatpush.msra.mxu0 0.0
      %659 = vmatpush.msra.mxu0 0.0
      %660 = vmatpush.msra.mxu0 0.0
      %661 = vmatpush.msra.mxu0 0.0
      %662 = vmatpush.msra.mxu0 0.0
      %663 = vmatpush.msra.mxu0 0.0
      %664 = vmatpush.msra.mxu0 0.0
      %665 = vmatpush.msra.mxu0 0.0
      %666 = vmatpush.msra.mxu0 0.0
      %667 = vmatpush.msra.mxu0 %v626
      %668 = vmatpush.msra.mxu0 %v623
      %669 = vmatpush.msra.mxu0 %v620
      %670 = vmatpush.msra.mxu0 %v617
      %671 = vmatpush.msra.mxu0 %v614
      %672 = vmatpush.msra.mxu0 %v611
      %673 = vmatmul.f32.gmra.mxu0 %v629
      %v674 = vpop.f32.mrf.mxu0
      %v675 = vadd.f32 0.0, %v674
      %676 = vmatmul.f32.gmra.mxu0 %v632
      %v677 = vpop.f32.mrf.mxu0
      %v678 = vadd.f32 0.0, %v677
      %679 = vdwg.mxu0
      %680 = vmatpush.msra.mxu0 0.0
      %681 = vmatpush.msra.mxu0 0.0
      %682 = vmatpush.msra.mxu0 0.0
      %683 = vmatpush.msra.mxu0 0.0
      %684 = vmatpush.msra.mxu0 0.0
      %685 = vmatpush.msra.mxu0 0.0
      %686 = vmatpush.msra.mxu0 0.0
      %687 = vmatpush.msra.mxu0 0.0
      %688 = vmatpush.msra.mxu0 0.0
      %689 = vmatpush.msra.mxu0 0.0
      %690 = vmatpush.msra.mxu0 %v627
      %691 = vmatpush.msra.mxu0 %v624
      %692 = vmatpush.msra.mxu0 %v621
      %693 = vmatpush.msra.mxu0 %v618
      %694 = vmatpush.msra.mxu0 %v615
      %695 = vmatpush.msra.mxu0 %v612
      %696 = vmatmul.f32.gmra.mxu0 %v629
      %v697 = vpop.f32.mrf.mxu0
      %v698 = vadd.f32 0.0, %v697
      %699 = vmatmul.f32.gmra.mxu0 %v632
      %v700 = vpop.f32.mrf.mxu0
      %v701 = vadd.f32 0.0, %v700
      %702 = vdwg.mxu0
      %v703 = vadd.f32 %v601, %v652
      %v704 = vadd.f32 %v602, %v675
      %v705 = vadd.f32 %v603, %v698
      %v706 = vadd.f32 %v604, %v655
      %v707 = vadd.f32 %v605, %v678
      %v708 = vadd.f32 %v606, %v701
      %v709 = vld [vmem:[%s192 + $0x5] sm:$0xff]
      %v710 = vld [vmem:[%s192 + $0xd] sm:$0xff]
      %s711 = scalar_lea.vmem %s1, 720
      %v712 = vld [vmem:[%s711] sm:$0xff]
      %v713 = vld [vmem:[%s711 + $0x8] sm:$0xff]
      %v714 = vld [vmem:[%s711 + $0x10] sm:$0xff]
      %v715 = vld [vmem:[%s711 + $0x18] sm:$0xff]
      %v716 = vld [vmem:[%s711 + $0x20] sm:$0xff]
      %v717 = vld [vmem:[%s711 + $0x28] sm:$0xff]
      %v718 = vld [vmem:[%s711 + $0x30] sm:$0xff]
      %v719 = vld [vmem:[%s711 + $0x38] sm:$0xff]
      %v720 = vld [vmem:[%s711 + $0x40] sm:$0xff]
      %v721 = vld [vmem:[%s711 + $0x48] sm:$0xff]
      %v722 = vld [vmem:[%s711 + $0x50] sm:$0xff]
      %v723 = vld [vmem:[%s711 + $0x58] sm:$0xff]
      %v724 = vld [vmem:[%s711 + $0x60] sm:$0xff]
      %v725 = vld [vmem:[%s711 + $0x68] sm:$0xff]
      %v726 = vld [vmem:[%s711 + $0x70] sm:$0xff]
      %v727 = vld [vmem:[%s711 + $0x78] sm:$0xff]
      %v728 = vld [vmem:[%s711 + $0x80] sm:$0xff]
      %v729 = vld [vmem:[%s711 + $0x88] sm:$0xff]
      %v731 = vsel %vm252, %v709, 0
      %v734 = vsel %vm252, %v710, 0
      %736 = vmatpush.msra.mxu0 0.0
      %737 = vmatpush.msra.mxu0 0.0
      %738 = vmatpush.msra.mxu0 0.0
      %739 = vmatpush.msra.mxu0 0.0
      %740 = vmatpush.msra.mxu0 0.0
      %741 = vmatpush.msra.mxu0 0.0
      %742 = vmatpush.msra.mxu0 0.0
      %743 = vmatpush.msra.mxu0 0.0
      %744 = vmatpush.msra.mxu0 0.0
      %745 = vmatpush.msra.mxu0 0.0
      %746 = vmatpush.msra.mxu0 %v727
      %747 = vmatpush.msra.mxu0 %v724
      %748 = vmatpush.msra.mxu0 %v721
      %749 = vmatpush.msra.mxu0 %v718
      %750 = vmatpush.msra.mxu0 %v715
      %751 = vmatpush.msra.mxu0 %v712
      %752 = vmatmul.f32.gmra.mxu0 %v731
      %v753 = vpop.f32.mrf.mxu0
      %v754 = vadd.f32 0.0, %v753
      %755 = vmatmul.f32.gmra.mxu0 %v734
      %v756 = vpop.f32.mrf.mxu0
      %v757 = vadd.f32 0.0, %v756
      %758 = vdwg.mxu0
      %759 = vmatpush.msra.mxu0 0.0
      %760 = vmatpush.msra.mxu0 0.0
      %761 = vmatpush.msra.mxu0 0.0
      %762 = vmatpush.msra.mxu0 0.0
      %763 = vmatpush.msra.mxu0 0.0
      %764 = vmatpush.msra.mxu0 0.0
      %765 = vmatpush.msra.mxu0 0.0
      %766 = vmatpush.msra.mxu0 0.0
      %767 = vmatpush.msra.mxu0 0.0
      %768 = vmatpush.msra.mxu0 0.0
      %769 = vmatpush.msra.mxu0 %v728
      %770 = vmatpush.msra.mxu0 %v725
      %771 = vmatpush.msra.mxu0 %v722
      %772 = vmatpush.msra.mxu0 %v719
      %773 = vmatpush.msra.mxu0 %v716
      %774 = vmatpush.msra.mxu0 %v713
      %775 = vmatmul.f32.gmra.mxu0 %v731
      %v776 = vpop.f32.mrf.mxu0
      %v777 = vadd.f32 0.0, %v776
      %778 = vmatmul.f32.gmra.mxu0 %v734
      %v779 = vpop.f32.mrf.mxu0
      %v780 = vadd.f32 0.0, %v779
      %781 = vdwg.mxu0
      %782 = vmatpush.msra.mxu0 0.0
      %783 = vmatpush.msra.mxu0 0.0
      %784 = vmatpush.msra.mxu0 0.0
      %785 = vmatpush.msra.mxu0 0.0
      %786 = vmatpush.msra.mxu0 0.0
      %787 = vmatpush.msra.mxu0 0.0
      %788 = vmatpush.msra.mxu0 0.0
      %789 = vmatpush.msra.mxu0 0.0
      %790 = vmatpush.msra.mxu0 0.0
      %791 = vmatpush.msra.mxu0 0.0
      %792 = vmatpush.msra.mxu0 %v729
      %793 = vmatpush.msra.mxu0 %v726
      %794 = vmatpush.msra.mxu0 %v723
      %795 = vmatpush.msra.mxu0 %v720
      %796 = vmatpush.msra.mxu0 %v717
      %797 = vmatpush.msra.mxu0 %v714
      %798 = vmatmul.f32.gmra.mxu0 %v731
      %v799 = vpop.f32.mrf.mxu0
      %v800 = vadd.f32 0.0, %v799
      %801 = vmatmul.f32.gmra.mxu0 %v734
      %v802 = vpop.f32.mrf.mxu0
      %v803 = vadd.f32 0.0, %v802
      %804 = vdwg.mxu0
      %v805 = vadd.f32 %v703, %v754
      %v806 = vadd.f32 %v704, %v777
      %v807 = vadd.f32 %v705, %v800
      %v808 = vadd.f32 %v706, %v757
      %v809 = vadd.f32 %v707, %v780
      %v810 = vadd.f32 %v708, %v803
      %v811 = vld [vmem:[%s192 + $0x6] sm:$0xff]
      %v812 = vld [vmem:[%s192 + $0xe] sm:$0xff]
      %s813 = scalar_lea.vmem %s1, 864
      %v814 = vld [vmem:[%s813] sm:$0xff]
      %v815 = vld [vmem:[%s813 + $0x8] sm:$0xff]
      %v816 = vld [vmem:[%s813 + $0x10] sm:$0xff]
      %v817 = vld [vmem:[%s813 + $0x18] sm:$0xff]
      %v818 = vld [vmem:[%s813 + $0x20] sm:$0xff]
      %v819 = vld [vmem:[%s813 + $0x28] sm:$0xff]
      %v820 = vld [vmem:[%s813 + $0x30] sm:$0xff]
      %v821 = vld [vmem:[%s813 + $0x38] sm:$0xff]
      %v822 = vld [vmem:[%s813 + $0x40] sm:$0xff]
      %v823 = vld [vmem:[%s813 + $0x48] sm:$0xff]
      %v824 = vld [vmem:[%s813 + $0x50] sm:$0xff]
      %v825 = vld [vmem:[%s813 + $0x58] sm:$0xff]
      %v826 = vld [vmem:[%s813 + $0x60] sm:$0xff]
      %v827 = vld [vmem:[%s813 + $0x68] sm:$0xff]
      %v828 = vld [vmem:[%s813 + $0x70] sm:$0xff]
      %v829 = vld [vmem:[%s813 + $0x78] sm:$0xff]
      %v830 = vld [vmem:[%s813 + $0x80] sm:$0xff]
      %v831 = vld [vmem:[%s813 + $0x88] sm:$0xff]
      %v833 = vsel %vm252, %v811, 0
      %v836 = vsel %vm252, %v812, 0
      %838 = vmatpush.msra.mxu0 0.0
      %839 = vmatpush.msra.mxu0 0.0
      %840 = vmatpush.msra.mxu0 0.0
      %841 = vmatpush.msra.mxu0 0.0
      %842 = vmatpush.msra.mxu0 0.0
      %843 = vmatpush.msra.mxu0 0.0
      %844 = vmatpush.msra.mxu0 0.0
      %845 = vmatpush.msra.mxu0 0.0
      %846 = vmatpush.msra.mxu0 0.0
      %847 = vmatpush.msra.mxu0 0.0
      %848 = vmatpush.msra.mxu0 %v829
      %849 = vmatpush.msra.mxu0 %v826
      %850 = vmatpush.msra.mxu0 %v823
      %851 = vmatpush.msra.mxu0 %v820
      %852 = vmatpush.msra.mxu0 %v817
      %853 = vmatpush.msra.mxu0 %v814
      %854 = vmatmul.f32.gmra.mxu0 %v833
      %v855 = vpop.f32.mrf.mxu0
      %v856 = vadd.f32 0.0, %v855
      %857 = vmatmul.f32.gmra.mxu0 %v836
      %v858 = vpop.f32.mrf.mxu0
      %v859 = vadd.f32 0.0, %v858
      %860 = vdwg.mxu0
      %861 = vmatpush.msra.mxu0 0.0
      %862 = vmatpush.msra.mxu0 0.0
      %863 = vmatpush.msra.mxu0 0.0
      %864 = vmatpush.msra.mxu0 0.0
      %865 = vmatpush.msra.mxu0 0.0
      %866 = vmatpush.msra.mxu0 0.0
      %867 = vmatpush.msra.mxu0 0.0
      %868 = vmatpush.msra.mxu0 0.0
      %869 = vmatpush.msra.mxu0 0.0
      %870 = vmatpush.msra.mxu0 0.0
      %871 = vmatpush.msra.mxu0 %v830
      %872 = vmatpush.msra.mxu0 %v827
      %873 = vmatpush.msra.mxu0 %v824
      %874 = vmatpush.msra.mxu0 %v821
      %875 = vmatpush.msra.mxu0 %v818
      %876 = vmatpush.msra.mxu0 %v815
      %877 = vmatmul.f32.gmra.mxu0 %v833
      %v878 = vpop.f32.mrf.mxu0
      %v879 = vadd.f32 0.0, %v878
      %880 = vmatmul.f32.gmra.mxu0 %v836
      %v881 = vpop.f32.mrf.mxu0
      %v882 = vadd.f32 0.0, %v881
      %883 = vdwg.mxu0
      %884 = vmatpush.msra.mxu0 0.0
      %885 = vmatpush.msra.mxu0 0.0
      %886 = vmatpush.msra.mxu0 0.0
      %887 = vmatpush.msra.mxu0 0.0
      %888 = vmatpush.msra.mxu0 0.0
      %889 = vmatpush.msra.mxu0 0.0
      %890 = vmatpush.msra.mxu0 0.0
      %891 = vmatpush.msra.mxu0 0.0
      %892 = vmatpush.msra.mxu0 0.0
      %893 = vmatpush.msra.mxu0 0.0
      %894 = vmatpush.msra.mxu0 %v831
      %895 = vmatpush.msra.mxu0 %v828
      %896 = vmatpush.msra.mxu0 %v825
      %897 = vmatpush.msra.mxu0 %v822
      %898 = vmatpush.msra.mxu0 %v819
      %899 = vmatpush.msra.mxu0 %v816
      %900 = vmatmul.f32.gmra.mxu0 %v833
      %v901 = vpop.f32.mrf.mxu0
      %v902 = vadd.f32 0.0, %v901
      %903 = vmatmul.f32.gmra.mxu0 %v836
      %v904 = vpop.f32.mrf.mxu0
      %v905 = vadd.f32 0.0, %v904
      %906 = vdwg.mxu0
      %v907 = vadd.f32 %v805, %v856
      %v908 = vadd.f32 %v806, %v879
      %v909 = vadd.f32 %v807, %v902
      %v910 = vadd.f32 %v808, %v859
      %v911 = vadd.f32 %v809, %v882
      %v912 = vadd.f32 %v810, %v905
      %v913 = vmax.f32 %v907, 0.0
      %v914 = vmax.f32 %v908, 0.0
      %v915 = vmax.f32 %v909, 0.0
      %v916 = vmax.f32 %v910, 0.0
      %v917 = vmax.f32 %v911, 0.0
      %v918 = vmax.f32 %v912, 0.0
      %919 = vst [vmem:[#allocation2 + $0x18] sm:$0xff] %v913
      %920 = vst [vmem:[#allocation2 + $0x20] sm:$0xff] %v914
      %921 = vst.msk [vmem:[#allocation2 + $0x28] sm:$0xff] %vm200, %v915
      %922 = vst [vmem:[#allocation2 + $0x30] sm:$0xff] %v916
      %923 = vst [vmem:[#allocation2 + $0x38] sm:$0xff] %v917
      %924 = vst.msk [vmem:[#allocation2 + $0x40] sm:$0xff] %vm200, %v918
      %v925 = vld [vmem:[#allocation2] sm:$0xe0]
      %v926 = vld [vmem:[#allocation2 + $0x8] sm:$0xe0]
      %v927 = vld [vmem:[#allocation2 + $0x10] sm:$0xe0]
      %v928 = vld [vmem:[#allocation2 + $0x18] sm:$0xff]
      %v929 = vld [vmem:[#allocation2 + $0x20] sm:$0xff]
      %v930 = vld [vmem:[#allocation2 + $0x28] sm:$0xff]
      %v931 = vld [vmem:[#allocation2 + $0x30] sm:$0x1f]
      %v932 = vld [vmem:[#allocation2 + $0x38] sm:$0x1f]
      %v933 = vld [vmem:[#allocation2 + $0x40] sm:$0x1f]
      %v934 = vld [vmem:[%s2] sm:$0xff]
      %v935 = vld [vmem:[%s2 + $0x8] sm:$0xff]
      %v936 = vld [vmem:[%s2 + $0x10] sm:$0xff]
      %v937 = vld [vmem:[%s2 + $0x18] sm:$0xff]
      %v938 = vld [vmem:[%s2 + $0x20] sm:$0xff]
      %v939 = vld [vmem:[%s2 + $0x28] sm:$0xff]
      %v940 = vld [vmem:[%s2 + $0x30] sm:$0xff]
      %v941 = vld [vmem:[%s2 + $0x38] sm:$0xff]
      %v942 = vld [vmem:[%s2 + $0x40] sm:$0xff]
      %v943 = vld [vmem:[%s2 + $0x48] sm:$0xff]
      %v944 = vld [vmem:[%s2 + $0x50] sm:$0xff]
      %v945 = vld [vmem:[%s2 + $0x58] sm:$0xff]
      %v946 = vld [vmem:[%s2 + $0x60] sm:$0xff]
      %v947 = vld [vmem:[%s2 + $0x68] sm:$0xff]
      %v948 = vld [vmem:[%s2 + $0x70] sm:$0xff]
      %v949 = vld [vmem:[%s2 + $0x78] sm:$0xff]
      %v950 = vld [vmem:[%s2 + $0x80] sm:$0xff]
      %v951 = vld [vmem:[%s2 + $0x88] sm:$0xff]
      %v952 = vld [vmem:[%s2 + $0x90] sm:$0xff]
      %v953 = vld [vmem:[%s2 + $0x98] sm:$0xff]
      %v954 = vld [vmem:[%s2 + $0xa0] sm:$0xff]
      %v955 = vld [vmem:[%s2 + $0xa8] sm:$0xff]
      %v956 = vld [vmem:[%s2 + $0xb0] sm:$0xff]
      %v957 = vld [vmem:[%s2 + $0xb8] sm:$0xff]
      %v958 = vld [vmem:[%s2 + $0xc0] sm:$0xff]
      %v959 = vld [vmem:[%s2 + $0xc8] sm:$0xff]
      %v960 = vld [vmem:[%s2 + $0xd0] sm:$0xff]
      %v961 = vld [vmem:[%s2 + $0xd8] sm:$0xff]
      %v962 = vld [vmem:[%s2 + $0xe0] sm:$0xff]
      %v963 = vld [vmem:[%s2 + $0xe8] sm:$0xff]
      %v964 = vld [vmem:[%s2 + $0xf0] sm:$0xff]
      %v965 = vld [vmem:[%s2 + $0xf8] sm:$0xff]
      %v966 = vld [vmem:[%s2 + $0x100] sm:$0xff]
      %v967 = vld [vmem:[%s2 + $0x108] sm:$0xff]
      %v968 = vld [vmem:[%s2 + $0x110] sm:$0xff]
      %v969 = vld [vmem:[%s2 + $0x118] sm:$0xff]
      %v970 = vld [vmem:[%s2 + $0x120] sm:$0xff]
      %v971 = vld [vmem:[%s2 + $0x128] sm:$0xff]
      %v972 = vld [vmem:[%s2 + $0x130] sm:$0xff]
      %v973 = vld [vmem:[%s2 + $0x138] sm:$0xff]
      %v974 = vld [vmem:[%s2 + $0x140] sm:$0xff]
      %v975 = vld [vmem:[%s2 + $0x148] sm:$0xff]
      %v976 = vld [vmem:[%s2 + $0x150] sm:$0xff]
      %v977 = vld [vmem:[%s2 + $0x158] sm:$0xff]
      %v978 = vld [vmem:[%s2 + $0x160] sm:$0xff]
      %v979 = vld [vmem:[%s2 + $0x168] sm:$0xff]
      %v980 = vld [vmem:[%s2 + $0x170] sm:$0xff]
      %v981 = vld [vmem:[%s2 + $0x178] sm:$0xff]
      %v982 = vld [vmem:[%s2 + $0x180] sm:$0xff]
      %v983 = vld [vmem:[%s2 + $0x188] sm:$0xff]
      %v984 = vld [vmem:[%s2 + $0x190] sm:$0xff]
      %v985 = vld [vmem:[%s2 + $0x198] sm:$0xff]
      %v986 = vld [vmem:[%s2 + $0x1a0] sm:$0xff]
      %v987 = vld [vmem:[%s2 + $0x1a8] sm:$0xff]
      %v988 = vld [vmem:[%s2 + $0x1b0] sm:$0xff]
      %v989 = vld [vmem:[%s2 + $0x1b8] sm:$0xff]
      %v990 = vld [vmem:[%s2 + $0x1c0] sm:$0xff]
      %v991 = vld [vmem:[%s2 + $0x1c8] sm:$0xff]
      %v992 = vld [vmem:[%s2 + $0x1d0] sm:$0xff]
      %v993 = vld [vmem:[%s2 + $0x1d8] sm:$0xff]
      %v994 = vld [vmem:[%s2 + $0x1e0] sm:$0xff]
      %v995 = vld [vmem:[%s2 + $0x1e8] sm:$0xff]
      %v996 = vld [vmem:[%s2 + $0x1f0] sm:$0xff]
      %v997 = vld [vmem:[%s2 + $0x1f8] sm:$0xff]
      %v998 = vld [vmem:[%s2 + $0x200] sm:$0xff]
      %v999 = vld [vmem:[%s2 + $0x208] sm:$0xff]
      %v1000 = vld [vmem:[%s2 + $0x210] sm:$0xff]
      %v1001 = vld [vmem:[%s2 + $0x218] sm:$0xff]
      %v1002 = vld [vmem:[%s2 + $0x220] sm:$0xff]
      %v1003 = vld [vmem:[%s2 + $0x228] sm:$0xff]
      %v1004 = vld [vmem:[%s2 + $0x230] sm:$0xff]
      %v1005 = vld [vmem:[%s2 + $0x238] sm:$0xff]
      %v1006 = vld [vmem:[%s2 + $0x240] sm:$0xff]
      %v1007 = vld [vmem:[%s2 + $0x248] sm:$0xff]
      %v1008 = vld [vmem:[%s2 + $0x250] sm:$0xff]
      %v1009 = vld [vmem:[%s2 + $0x258] sm:$0xff]
      %v1010 = vld [vmem:[%s2 + $0x260] sm:$0xff]
      %v1011 = vld [vmem:[%s2 + $0x268] sm:$0xff]
      %v1012 = vld [vmem:[%s2 + $0x270] sm:$0xff]
      %v1013 = vld [vmem:[%s2 + $0x278] sm:$0xff]
      %v1014 = vld [vmem:[%s2 + $0x280] sm:$0xff]
      %v1015 = vld [vmem:[%s2 + $0x288] sm:$0xff]
      %v1016 = vld [vmem:[%s2 + $0x290] sm:$0xff]
      %v1017 = vld [vmem:[%s2 + $0x298] sm:$0xff]
      %v1018 = vld [vmem:[%s2 + $0x2a0] sm:$0xff]
      %v1019 = vld [vmem:[%s2 + $0x2a8] sm:$0xff]
      %v1020 = vld [vmem:[%s2 + $0x2b0] sm:$0xff]
      %v1021 = vld [vmem:[%s2 + $0x2b8] sm:$0xff]
      %v1022 = vld [vmem:[%s2 + $0x2c0] sm:$0xff]
      %v1023 = vld [vmem:[%s2 + $0x2c8] sm:$0xff]
      %v1024 = vld [vmem:[%s2 + $0x2d0] sm:$0xff]
      %v1025 = vld [vmem:[%s2 + $0x2d8] sm:$0xff]
      %v1026 = vld [vmem:[%s2 + $0x2e0] sm:$0xff]
      %v1027 = vld [vmem:[%s2 + $0x2e8] sm:$0xff]
      %v1028 = vld [vmem:[%s2 + $0x2f0] sm:$0xff]
      %v1029 = vld [vmem:[%s2 + $0x2f8] sm:$0xff]
      %v1030 = vld [vmem:[%s2 + $0x300] sm:$0xff]
      %v1031 = vld [vmem:[%s2 + $0x308] sm:$0xff]
      %v1032 = vld [vmem:[%s2 + $0x310] sm:$0xff]
      %v1033 = vld [vmem:[%s2 + $0x318] sm:$0xff]
      %v1034 = vld [vmem:[%s2 + $0x320] sm:$0xff]
      %v1035 = vld [vmem:[%s2 + $0x328] sm:$0xff]
      %v1036 = vld [vmem:[%s2 + $0x330] sm:$0xff]
      %v1037 = vld [vmem:[%s2 + $0x338] sm:$0xff]
      %v1038 = vld [vmem:[%s2 + $0x340] sm:$0xff]
      %v1039 = vld [vmem:[%s2 + $0x348] sm:$0xff]
      %v1040 = vld [vmem:[%s2 + $0x350] sm:$0xff]
      %v1041 = vld [vmem:[%s2 + $0x358] sm:$0xff]
      %v1042 = vld [vmem:[#allocation2] sm:$0xc0]
      %v1043 = vld [vmem:[#allocation2 + $0x8] sm:$0xc0]
      %v1044 = vld [vmem:[#allocation2 + $0x10] sm:$0xc0]
      %v1045 = vld [vmem:[#allocation2 + $0x30] sm:$0x3f]
      %v1046 = vld [vmem:[#allocation2 + $0x38] sm:$0x3f]
      %v1047 = vld [vmem:[#allocation2 + $0x40] sm:$0x3f]
      %s1048 = scalar_lea.vmem %s2, 864
      %v1049 = vld [vmem:[%s1048] sm:$0xff]
      %v1050 = vld [vmem:[%s1048 + $0x8] sm:$0xff]
      %v1051 = vld [vmem:[%s1048 + $0x10] sm:$0xff]
      %v1052 = vld [vmem:[%s1048 + $0x18] sm:$0xff]
      %v1053 = vld [vmem:[%s1048 + $0x20] sm:$0xff]
      %v1054 = vld [vmem:[%s1048 + $0x28] sm:$0xff]
      %v1055 = vld [vmem:[%s1048 + $0x30] sm:$0xff]
      %v1056 = vld [vmem:[%s1048 + $0x38] sm:$0xff]
      %v1057 = vld [vmem:[%s1048 + $0x40] sm:$0xff]
      %v1058 = vld [vmem:[%s1048 + $0x48] sm:$0xff]
      %v1059 = vld [vmem:[%s1048 + $0x50] sm:$0xff]
      %v1060 = vld [vmem:[%s1048 + $0x58] sm:$0xff]
      %v1061 = vld [vmem:[%s1048 + $0x60] sm:$0xff]
      %v1062 = vld [vmem:[%s1048 + $0x68] sm:$0xff]
      %v1063 = vld [vmem:[%s1048 + $0x70] sm:$0xff]
      %v1064 = vld [vmem:[%s1048 + $0x78] sm:$0xff]
      %v1065 = vld [vmem:[%s1048 + $0x80] sm:$0xff]
      %v1066 = vld [vmem:[%s1048 + $0x88] sm:$0xff]
      %v1067 = vld [vmem:[%s1048 + $0x90] sm:$0xff]
      %v1068 = vld [vmem:[%s1048 + $0x98] sm:$0xff]
      %v1069 = vld [vmem:[%s1048 + $0xa0] sm:$0xff]
      %v1070 = vld [vmem:[%s1048 + $0xa8] sm:$0xff]
      %v1071 = vld [vmem:[%s1048 + $0xb0] sm:$0xff]
      %v1072 = vld [vmem:[%s1048 + $0xb8] sm:$0xff]
      %v1073 = vld [vmem:[%s1048 + $0xc0] sm:$0xff]
      %v1074 = vld [vmem:[%s1048 + $0xc8] sm:$0xff]
      %v1075 = vld [vmem:[%s1048 + $0xd0] sm:$0xff]
      %v1076 = vld [vmem:[%s1048 + $0xd8] sm:$0xff]
      %v1077 = vld [vmem:[%s1048 + $0xe0] sm:$0xff]
      %v1078 = vld [vmem:[%s1048 + $0xe8] sm:$0xff]
      %v1079 = vld [vmem:[%s1048 + $0xf0] sm:$0xff]
      %v1080 = vld [vmem:[%s1048 + $0xf8] sm:$0xff]
      %v1081 = vld [vmem:[%s1048 + $0x100] sm:$0xff]
      %v1082 = vld [vmem:[%s1048 + $0x108] sm:$0xff]
      %v1083 = vld [vmem:[%s1048 + $0x110] sm:$0xff]
      %v1084 = vld [vmem:[%s1048 + $0x118] sm:$0xff]
      %v1085 = vld [vmem:[%s1048 + $0x120] sm:$0xff]
      %v1086 = vld [vmem:[%s1048 + $0x128] sm:$0xff]
      %v1087 = vld [vmem:[%s1048 + $0x130] sm:$0xff]
      %v1088 = vld [vmem:[%s1048 + $0x138] sm:$0xff]
      %v1089 = vld [vmem:[%s1048 + $0x140] sm:$0xff]
      %v1090 = vld [vmem:[%s1048 + $0x148] sm:$0xff]
      %v1091 = vld [vmem:[%s1048 + $0x150] sm:$0xff]
      %v1092 = vld [vmem:[%s1048 + $0x158] sm:$0xff]
      %v1093 = vld [vmem:[%s1048 + $0x160] sm:$0xff]
      %v1094 = vld [vmem:[%s1048 + $0x168] sm:$0xff]
      %v1095 = vld [vmem:[%s1048 + $0x170] sm:$0xff]
      %v1096 = vld [vmem:[%s1048 + $0x178] sm:$0xff]
      %v1097 = vld [vmem:[%s1048 + $0x180] sm:$0xff]
      %v1098 = vld [vmem:[%s1048 + $0x188] sm:$0xff]
      %v1099 = vld [vmem:[%s1048 + $0x190] sm:$0xff]
      %v1100 = vld [vmem:[%s1048 + $0x198] sm:$0xff]
      %v1101 = vld [vmem:[%s1048 + $0x1a0] sm:$0xff]
      %v1102 = vld [vmem:[%s1048 + $0x1a8] sm:$0xff]
      %v1103 = vld [vmem:[%s1048 + $0x1b0] sm:$0xff]
      %v1104 = vld [vmem:[%s1048 + $0x1b8] sm:$0xff]
      %v1105 = vld [vmem:[%s1048 + $0x1c0] sm:$0xff]
      %v1106 = vld [vmem:[%s1048 + $0x1c8] sm:$0xff]
      %v1107 = vld [vmem:[%s1048 + $0x1d0] sm:$0xff]
      %v1108 = vld [vmem:[%s1048 + $0x1d8] sm:$0xff]
      %v1109 = vld [vmem:[%s1048 + $0x1e0] sm:$0xff]
      %v1110 = vld [vmem:[%s1048 + $0x1e8] sm:$0xff]
      %v1111 = vld [vmem:[%s1048 + $0x1f0] sm:$0xff]
      %v1112 = vld [vmem:[%s1048 + $0x1f8] sm:$0xff]
      %v1113 = vld [vmem:[%s1048 + $0x200] sm:$0xff]
      %v1114 = vld [vmem:[%s1048 + $0x208] sm:$0xff]
      %v1115 = vld [vmem:[%s1048 + $0x210] sm:$0xff]
      %v1116 = vld [vmem:[%s1048 + $0x218] sm:$0xff]
      %v1117 = vld [vmem:[%s1048 + $0x220] sm:$0xff]
      %v1118 = vld [vmem:[%s1048 + $0x228] sm:$0xff]
      %v1119 = vld [vmem:[%s1048 + $0x230] sm:$0xff]
      %v1120 = vld [vmem:[%s1048 + $0x238] sm:$0xff]
      %v1121 = vld [vmem:[%s1048 + $0x240] sm:$0xff]
      %v1122 = vld [vmem:[%s1048 + $0x248] sm:$0xff]
      %v1123 = vld [vmem:[%s1048 + $0x250] sm:$0xff]
      %v1124 = vld [vmem:[%s1048 + $0x258] sm:$0xff]
      %v1125 = vld [vmem:[%s1048 + $0x260] sm:$0xff]
      %v1126 = vld [vmem:[%s1048 + $0x268] sm:$0xff]
      %v1127 = vld [vmem:[%s1048 + $0x270] sm:$0xff]
      %v1128 = vld [vmem:[%s1048 + $0x278] sm:$0xff]
      %v1129 = vld [vmem:[%s1048 + $0x280] sm:$0xff]
      %v1130 = vld [vmem:[%s1048 + $0x288] sm:$0xff]
      %v1131 = vld [vmem:[%s1048 + $0x290] sm:$0xff]
      %v1132 = vld [vmem:[%s1048 + $0x298] sm:$0xff]
      %v1133 = vld [vmem:[%s1048 + $0x2a0] sm:$0xff]
      %v1134 = vld [vmem:[%s1048 + $0x2a8] sm:$0xff]
      %v1135 = vld [vmem:[%s1048 + $0x2b0] sm:$0xff]
      %v1136 = vld [vmem:[%s1048 + $0x2b8] sm:$0xff]
      %v1137 = vld [vmem:[%s1048 + $0x2c0] sm:$0xff]
      %v1138 = vld [vmem:[%s1048 + $0x2c8] sm:$0xff]
      %v1139 = vld [vmem:[%s1048 + $0x2d0] sm:$0xff]
      %v1140 = vld [vmem:[%s1048 + $0x2d8] sm:$0xff]
      %v1141 = vld [vmem:[%s1048 + $0x2e0] sm:$0xff]
      %v1142 = vld [vmem:[%s1048 + $0x2e8] sm:$0xff]
      %v1143 = vld [vmem:[%s1048 + $0x2f0] sm:$0xff]
      %v1144 = vld [vmem:[%s1048 + $0x2f8] sm:$0xff]
      %v1145 = vld [vmem:[%s1048 + $0x300] sm:$0xff]
      %v1146 = vld [vmem:[%s1048 + $0x308] sm:$0xff]
      %v1147 = vld [vmem:[%s1048 + $0x310] sm:$0xff]
      %v1148 = vld [vmem:[%s1048 + $0x318] sm:$0xff]
      %v1149 = vld [vmem:[%s1048 + $0x320] sm:$0xff]
      %v1150 = vld [vmem:[%s1048 + $0x328] sm:$0xff]
      %v1151 = vld [vmem:[%s1048 + $0x330] sm:$0xff]
      %v1152 = vld [vmem:[%s1048 + $0x338] sm:$0xff]
      %v1153 = vld [vmem:[%s1048 + $0x340] sm:$0xff]
      %v1154 = vld [vmem:[%s1048 + $0x348] sm:$0xff]
      %v1155 = vld [vmem:[%s1048 + $0x350] sm:$0xff]
      %v1156 = vld [vmem:[%s1048 + $0x358] sm:$0xff]
      %vm1166 = vcmask 1041408
      %v1167 = vrot.slane %v1042, 6
      %v1168 = vrot.slane %v928, 6
      %v1169 = vsel %vm1166, %v1167, %v1168
      %v1170 = vrot.slane %v1043, 6
      %v1171 = vrot.slane %v929, 6
      %v1172 = vsel %vm1166, %v1170, %v1171
      %v1173 = vrot.slane %v1044, 6
      %v1174 = vrot.slane %v930, 6
      %v1175 = vsel %vm1166, %v1173, %v1174
      %v1176 = vrot.slane %v1045, 6
      %v1177 = vsel %vm1166, %v1168, %v1176
      %v1178 = vrot.slane %v1046, 6
      %v1179 = vsel %vm1166, %v1171, %v1178
      %v1180 = vrot.slane %v1047, 6
      %v1181 = vsel %vm1166, %v1174, %v1180
      %v1186 = vsel %vm200, %v1175, 0
      %v1188 = vsel %vm200, %v1181, 0
      %1190 = vmatpush.msra.mxu0 %v1094
      %1191 = vmatpush.msra.mxu0 %v1091
      %1192 = vmatpush.msra.mxu0 %v1088
      %1193 = vmatpush.msra.mxu0 %v1085
      %1194 = vmatpush.msra.mxu0 %v1082
      %1195 = vmatpush.msra.mxu0 %v1079
      %1196 = vmatpush.msra.mxu0 %v1076
      %1197 = vmatpush.msra.mxu0 %v1073
      %1198 = vmatpush.msra.mxu0 %v1070
      %1199 = vmatpush.msra.mxu0 %v1067
      %1200 = vmatpush.msra.mxu0 %v1064
      %1201 = vmatpush.msra.mxu0 %v1061
      %1202 = vmatpush.msra.mxu0 %v1058
      %1203 = vmatpush.msra.mxu0 %v1055
      %1204 = vmatpush.msra.mxu0 %v1052
      %1205 = vmatpush.msra.mxu0 %v1049
      %1206 = vmatmul.f32.gmra.mxu0 %v1169
      %v1207 = vpop.f32.mrf.mxu0
      %v1208 = vadd.f32 0.0, %v1207
      %1209 = vmatmul.f32.gmra.mxu0 %v1177
      %v1210 = vpop.f32.mrf.mxu0
      %v1211 = vadd.f32 0.0, %v1210
      %1212 = vdwg.mxu0
      %1213 = vmatpush.msra.mxu0 %v1142
      %1214 = vmatpush.msra.mxu0 %v1139
      %1215 = vmatpush.msra.mxu0 %v1136
      %1216 = vmatpush.msra.mxu0 %v1133
      %1217 = vmatpush.msra.mxu0 %v1130
      %1218 = vmatpush.msra.mxu0 %v1127
      %1219 = vmatpush.msra.mxu0 %v1124
      %1220 = vmatpush.msra.mxu0 %v1121
      %1221 = vmatpush.msra.mxu0 %v1118
      %1222 = vmatpush.msra.mxu0 %v1115
      %1223 = vmatpush.msra.mxu0 %v1112
      %1224 = vmatpush.msra.mxu0 %v1109
      %1225 = vmatpush.msra.mxu0 %v1106
      %1226 = vmatpush.msra.mxu0 %v1103
      %1227 = vmatpush.msra.mxu0 %v1100
      %1228 = vmatpush.msra.mxu0 %v1097
      %1229 = vmatmul.f32.gmra.mxu0 %v1172
      %v1230 = vpop.f32.mrf.mxu0
      %v1231 = vadd.f32 %v1208, %v1230
      %1232 = vmatmul.f32.gmra.mxu0 %v1179
      %v1233 = vpop.f32.mrf.mxu0
      %v1234 = vadd.f32 %v1211, %v1233
      %1235 = vdwg.mxu0
      %1236 = vmatpush.msra.mxu0 0.0
      %1237 = vmatpush.msra.mxu0 0.0
      %1238 = vmatpush.msra.mxu0 0.0
      %1239 = vmatpush.msra.mxu0 0.0
      %1240 = vmatpush.msra.mxu0 0.0
      %1241 = vmatpush.msra.mxu0 0.0
      %1242 = vmatpush.msra.mxu0 0.0
      %1243 = vmatpush.msra.mxu0 0.0
      %1244 = vmatpush.msra.mxu0 0.0
      %1245 = vmatpush.msra.mxu0 0.0
      %1246 = vmatpush.msra.mxu0 0.0
      %1247 = vmatpush.msra.mxu0 0.0
      %1248 = vmatpush.msra.mxu0 %v1154
      %1249 = vmatpush.msra.mxu0 %v1151
      %1250 = vmatpush.msra.mxu0 %v1148
      %1251 = vmatpush.msra.mxu0 %v1145
      %1252 = vmatmul.f32.gmra.mxu0 %v1186
      %v1253 = vpop.f32.mrf.mxu0
      %v1254 = vadd.f32 %v1231, %v1253
      %1255 = vmatmul.f32.gmra.mxu0 %v1188
      %v1256 = vpop.f32.mrf.mxu0
      %v1257 = vadd.f32 %v1234, %v1256
      %1258 = vdwg.mxu0
      %1259 = vmatpush.msra.mxu0 %v1095
      %1260 = vmatpush.msra.mxu0 %v1092
      %1261 = vmatpush.msra.mxu0 %v1089
      %1262 = vmatpush.msra.mxu0 %v1086
      %1263 = vmatpush.msra.mxu0 %v1083
      %1264 = vmatpush.msra.mxu0 %v1080
      %1265 = vmatpush.msra.mxu0 %v1077
      %1266 = vmatpush.msra.mxu0 %v1074
      %1267 = vmatpush.msra.mxu0 %v1071
      %1268 = vmatpush.msra.mxu0 %v1068
      %1269 = vmatpush.msra.mxu0 %v1065
      %1270 = vmatpush.msra.mxu0 %v1062
      %1271 = vmatpush.msra.mxu0 %v1059
      %1272 = vmatpush.msra.mxu0 %v1056
      %1273 = vmatpush.msra.mxu0 %v1053
      %1274 = vmatpush.msra.mxu0 %v1050
      %1275 = vmatmul.f32.gmra.mxu0 %v1169
      %v1276 = vpop.f32.mrf.mxu0
      %v1277 = vadd.f32 0.0, %v1276
      %1278 = vmatmul.f32.gmra.mxu0 %v1177
      %v1279 = vpop.f32.mrf.mxu0
      %v1280 = vadd.f32 0.0, %v1279
      %1281 = vdwg.mxu0
      %1282 = vmatpush.msra.mxu0 %v1143
      %1283 = vmatpush.msra.mxu0 %v1140
      %1284 = vmatpush.msra.mxu0 %v1137
      %1285 = vmatpush.msra.mxu0 %v1134
      %1286 = vmatpush.msra.mxu0 %v1131
      %1287 = vmatpush.msra.mxu0 %v1128
      %1288 = vmatpush.msra.mxu0 %v1125
      %1289 = vmatpush.msra.mxu0 %v1122
      %1290 = vmatpush.msra.mxu0 %v1119
      %1291 = vmatpush.msra.mxu0 %v1116
      %1292 = vmatpush.msra.mxu0 %v1113
      %1293 = vmatpush.msra.mxu0 %v1110
      %1294 = vmatpush.msra.mxu0 %v1107
      %1295 = vmatpush.msra.mxu0 %v1104
      %1296 = vmatpush.msra.mxu0 %v1101
      %1297 = vmatpush.msra.mxu0 %v1098
      %1298 = vmatmul.f32.gmra.mxu0 %v1172
      %v1299 = vpop.f32.mrf.mxu0
      %v1300 = vadd.f32 %v1277, %v1299
      %1301 = vmatmul.f32.gmra.mxu0 %v1179
      %v1302 = vpop.f32.mrf.mxu0
      %v1303 = vadd.f32 %v1280, %v1302
      %1304 = vdwg.mxu0
      %1305 = vmatpush.msra.mxu0 0.0
      %1306 = vmatpush.msra.mxu0 0.0
      %1307 = vmatpush.msra.mxu0 0.0
      %1308 = vmatpush.msra.mxu0 0.0
      %1309 = vmatpush.msra.mxu0 0.0
      %1310 = vmatpush.msra.mxu0 0.0
      %1311 = vmatpush.msra.mxu0 0.0
      %1312 = vmatpush.msra.mxu0 0.0
      %1313 = vmatpush.msra.mxu0 0.0
      %1314 = vmatpush.msra.mxu0 0.0
      %1315 = vmatpush.msra.mxu0 0.0
      %1316 = vmatpush.msra.mxu0 0.0
      %1317 = vmatpush.msra.mxu0 %v1155
      %1318 = vmatpush.msra.mxu0 %v1152
      %1319 = vmatpush.msra.mxu0 %v1149
      %1320 = vmatpush.msra.mxu0 %v1146
      %1321 = vmatmul.f32.gmra.mxu0 %v1186
      %v1322 = vpop.f32.mrf.mxu0
      %v1323 = vadd.f32 %v1300, %v1322
      %1324 = vmatmul.f32.gmra.mxu0 %v1188
      %v1325 = vpop.f32.mrf.mxu0
      %v1326 = vadd.f32 %v1303, %v1325
      %1327 = vdwg.mxu0
      %1328 = vmatpush.msra.mxu0 %v1096
      %1329 = vmatpush.msra.mxu0 %v1093
      %1330 = vmatpush.msra.mxu0 %v1090
      %1331 = vmatpush.msra.mxu0 %v1087
      %1332 = vmatpush.msra.mxu0 %v1084
      %1333 = vmatpush.msra.mxu0 %v1081
      %1334 = vmatpush.msra.mxu0 %v1078
      %1335 = vmatpush.msra.mxu0 %v1075
      %1336 = vmatpush.msra.mxu0 %v1072
      %1337 = vmatpush.msra.mxu0 %v1069
      %1338 = vmatpush.msra.mxu0 %v1066
      %1339 = vmatpush.msra.mxu0 %v1063
      %1340 = vmatpush.msra.mxu0 %v1060
      %1341 = vmatpush.msra.mxu0 %v1057
      %1342 = vmatpush.msra.mxu0 %v1054
      %1343 = vmatpush.msra.mxu0 %v1051
      %1344 = vmatmul.f32.gmra.mxu0 %v1169
      %v1345 = vpop.f32.mrf.mxu0
      %v1346 = vadd.f32 0.0, %v1345
      %1347 = vmatmul.f32.gmra.mxu0 %v1177
      %v1348 = vpop.f32.mrf.mxu0
      %v1349 = vadd.f32 0.0, %v1348
      %1350 = vdwg.mxu0
      %1351 = vmatpush.msra.mxu0 %v1144
      %1352 = vmatpush.msra.mxu0 %v1141
      %1353 = vmatpush.msra.mxu0 %v1138
      %1354 = vmatpush.msra.mxu0 %v1135
      %1355 = vmatpush.msra.mxu0 %v1132
      %1356 = vmatpush.msra.mxu0 %v1129
      %1357 = vmatpush.msra.mxu0 %v1126
      %1358 = vmatpush.msra.mxu0 %v1123
      %1359 = vmatpush.msra.mxu0 %v1120
      %1360 = vmatpush.msra.mxu0 %v1117
      %1361 = vmatpush.msra.mxu0 %v1114
      %1362 = vmatpush.msra.mxu0 %v1111
      %1363 = vmatpush.msra.mxu0 %v1108
      %1364 = vmatpush.msra.mxu0 %v1105
      %1365 = vmatpush.msra.mxu0 %v1102
      %1366 = vmatpush.msra.mxu0 %v1099
      %1367 = vmatmul.f32.gmra.mxu0 %v1172
      %v1368 = vpop.f32.mrf.mxu0
      %v1369 = vadd.f32 %v1346, %v1368
      %1370 = vmatmul.f32.gmra.mxu0 %v1179
      %v1371 = vpop.f32.mrf.mxu0
      %v1372 = vadd.f32 %v1349, %v1371
      %1373 = vdwg.mxu0
      %1374 = vmatpush.msra.mxu0 0.0
      %1375 = vmatpush.msra.mxu0 0.0
      %1376 = vmatpush.msra.mxu0 0.0
      %1377 = vmatpush.msra.mxu0 0.0
      %1378 = vmatpush.msra.mxu0 0.0
      %1379 = vmatpush.msra.mxu0 0.0
      %1380 = vmatpush.msra.mxu0 0.0
      %1381 = vmatpush.msra.mxu0 0.0
      %1382 = vmatpush.msra.mxu0 0.0
      %1383 = vmatpush.msra.mxu0 0.0
      %1384 = vmatpush.msra.mxu0 0.0
      %1385 = vmatpush.msra.mxu0 0.0
      %1386 = vmatpush.msra.mxu0 %v1156
      %1387 = vmatpush.msra.mxu0 %v1153
      %1388 = vmatpush.msra.mxu0 %v1150
      %1389 = vmatpush.msra.mxu0 %v1147
      %1390 = vmatmul.f32.gmra.mxu0 %v1186
      %v1391 = vpop.f32.mrf.mxu0
      %v1392 = vadd.f32 %v1369, %v1391
      %1393 = vmatmul.f32.gmra.mxu0 %v1188
      %v1394 = vpop.f32.mrf.mxu0
      %v1395 = vadd.f32 %v1372, %v1394
      %1396 = vdwg.mxu0
      %vm1403 = vcmask 1042432
      %v1404 = vrot.slane %v925, 5
      %v1405 = vrot.slane %v928, 5
      %v1406 = vsel %vm1403, %v1404, %v1405
      %v1407 = vrot.slane %v926, 5
      %v1408 = vrot.slane %v929, 5
      %v1409 = vsel %vm1403, %v1407, %v1408
      %v1410 = vrot.slane %v927, 5
      %v1411 = vrot.slane %v930, 5
      %v1412 = vsel %vm1403, %v1410, %v1411
      %v1413 = vrot.slane %v931, 5
      %v1414 = vsel %vm1403, %v1405, %v1413
      %v1415 = vrot.slane %v932, 5
      %v1416 = vsel %vm1403, %v1408, %v1415
      %v1417 = vrot.slane %v933, 5
      %v1418 = vsel %vm1403, %v1411, %v1417
      %v1423 = vsel %vm200, %v1412, 0
      %v1425 = vsel %vm200, %v1418, 0
      %1427 = vmatpush.msra.mxu0 %v979
      %1428 = vmatpush.msra.mxu0 %v976
      %1429 = vmatpush.msra.mxu0 %v973
      %1430 = vmatpush.msra.mxu0 %v970
      %1431 = vmatpush.msra.mxu0 %v967
      %1432 = vmatpush.msra.mxu0 %v964
      %1433 = vmatpush.msra.mxu0 %v961
      %1434 = vmatpush.msra.mxu0 %v958
      %1435 = vmatpush.msra.mxu0 %v955
      %1436 = vmatpush.msra.mxu0 %v952
      %1437 = vmatpush.msra.mxu0 %v949
      %1438 = vmatpush.msra.mxu0 %v946
      %1439 = vmatpush.msra.mxu0 %v943
      %1440 = vmatpush.msra.mxu0 %v940
      %1441 = vmatpush.msra.mxu0 %v937
      %1442 = vmatpush.msra.mxu0 %v934
      %1443 = vmatmul.f32.gmra.mxu0 %v1406
      %v1444 = vpop.f32.mrf.mxu0
      %v1445 = vadd.f32 %v1254, %v1444
      %1446 = vmatmul.f32.gmra.mxu0 %v1414
      %v1447 = vpop.f32.mrf.mxu0
      %v1448 = vadd.f32 %v1257, %v1447
      %1449 = vdwg.mxu0
      %1450 = vmatpush.msra.mxu0 %v1027
      %1451 = vmatpush.msra.mxu0 %v1024
      %1452 = vmatpush.msra.mxu0 %v1021
      %1453 = vmatpush.msra.mxu0 %v1018
      %1454 = vmatpush.msra.mxu0 %v1015
      %1455 = vmatpush.msra.mxu0 %v1012
      %1456 = vmatpush.msra.mxu0 %v1009
      %1457 = vmatpush.msra.mxu0 %v1006
      %1458 = vmatpush.msra.mxu0 %v1003
      %1459 = vmatpush.msra.mxu0 %v1000
      %1460 = vmatpush.msra.mxu0 %v997
      %1461 = vmatpush.msra.mxu0 %v994
      %1462 = vmatpush.msra.mxu0 %v991
      %1463 = vmatpush.msra.mxu0 %v988
      %1464 = vmatpush.msra.mxu0 %v985
      %1465 = vmatpush.msra.mxu0 %v982
      %1466 = vmatmul.f32.gmra.mxu0 %v1409
      %v1467 = vpop.f32.mrf.mxu0
      %v1468 = vadd.f32 %v1445, %v1467
      %1469 = vmatmul.f32.gmra.mxu0 %v1416
      %v1470 = vpop.f32.mrf.mxu0
      %v1471 = vadd.f32 %v1448, %v1470
      %1472 = vdwg.mxu0
      %1473 = vmatpush.msra.mxu0 0.0
      %1474 = vmatpush.msra.mxu0 0.0
      %1475 = vmatpush.msra.mxu0 0.0
      %1476 = vmatpush.msra.mxu0 0.0
      %1477 = vmatpush.msra.mxu0 0.0
      %1478 = vmatpush.msra.mxu0 0.0
      %1479 = vmatpush.msra.mxu0 0.0
      %1480 = vmatpush.msra.mxu0 0.0
      %1481 = vmatpush.msra.mxu0 0.0
      %1482 = vmatpush.msra.mxu0 0.0
      %1483 = vmatpush.msra.mxu0 0.0
      %1484 = vmatpush.msra.mxu0 0.0
      %1485 = vmatpush.msra.mxu0 %v1039
      %1486 = vmatpush.msra.mxu0 %v1036
      %1487 = vmatpush.msra.mxu0 %v1033
      %1488 = vmatpush.msra.mxu0 %v1030
      %1489 = vmatmul.f32.gmra.mxu0 %v1423
      %v1490 = vpop.f32.mrf.mxu0
      %v1491 = vadd.f32 %v1468, %v1490
      %1492 = vmatmul.f32.gmra.mxu0 %v1425
      %v1493 = vpop.f32.mrf.mxu0
      %v1494 = vadd.f32 %v1471, %v1493
      %1495 = vdwg.mxu0
      %1496 = vmatpush.msra.mxu0 %v980
      %1497 = vmatpush.msra.mxu0 %v977
      %1498 = vmatpush.msra.mxu0 %v974
      %1499 = vmatpush.msra.mxu0 %v971
      %1500 = vmatpush.msra.mxu0 %v968
      %1501 = vmatpush.msra.mxu0 %v965
      %1502 = vmatpush.msra.mxu0 %v962
      %1503 = vmatpush.msra.mxu0 %v959
      %1504 = vmatpush.msra.mxu0 %v956
      %1505 = vmatpush.msra.mxu0 %v953
      %1506 = vmatpush.msra.mxu0 %v950
      %1507 = vmatpush.msra.mxu0 %v947
      %1508 = vmatpush.msra.mxu0 %v944
      %1509 = vmatpush.msra.mxu0 %v941
      %1510 = vmatpush.msra.mxu0 %v938
      %1511 = vmatpush.msra.mxu0 %v935
      %1512 = vmatmul.f32.gmra.mxu0 %v1406
      %v1513 = vpop.f32.mrf.mxu0
      %v1514 = vadd.f32 %v1323, %v1513
      %1515 = vmatmul.f32.gmra.mxu0 %v1414
      %v1516 = vpop.f32.mrf.mxu0
      %v1517 = vadd.f32 %v1326, %v1516
      %1518 = vdwg.mxu0
      %1519 = vmatpush.msra.mxu0 %v1028
      %1520 = vmatpush.msra.mxu0 %v1025
      %1521 = vmatpush.msra.mxu0 %v1022
      %1522 = vmatpush.msra.mxu0 %v1019
      %1523 = vmatpush.msra.mxu0 %v1016
      %1524 = vmatpush.msra.mxu0 %v1013
      %1525 = vmatpush.msra.mxu0 %v1010
      %1526 = vmatpush.msra.mxu0 %v1007
      %1527 = vmatpush.msra.mxu0 %v1004
      %1528 = vmatpush.msra.mxu0 %v1001
      %1529 = vmatpush.msra.mxu0 %v998
      %1530 = vmatpush.msra.mxu0 %v995
      %1531 = vmatpush.msra.mxu0 %v992
      %1532 = vmatpush.msra.mxu0 %v989
      %1533 = vmatpush.msra.mxu0 %v986
      %1534 = vmatpush.msra.mxu0 %v983
      %1535 = vmatmul.f32.gmra.mxu0 %v1409
      %v1536 = vpop.f32.mrf.mxu0
      %v1537 = vadd.f32 %v1514, %v1536
      %1538 = vmatmul.f32.gmra.mxu0 %v1416
      %v1539 = vpop.f32.mrf.mxu0
      %v1540 = vadd.f32 %v1517, %v1539
      %1541 = vdwg.mxu0
      %1542 = vmatpush.msra.mxu0 0.0
      %1543 = vmatpush.msra.mxu0 0.0
      %1544 = vmatpush.msra.mxu0 0.0
      %1545 = vmatpush.msra.mxu0 0.0
      %1546 = vmatpush.msra.mxu0 0.0
      %1547 = vmatpush.msra.mxu0 0.0
      %1548 = vmatpush.msra.mxu0 0.0
      %1549 = vmatpush.msra.mxu0 0.0
      %1550 = vmatpush.msra.mxu0 0.0
      %1551 = vmatpush.msra.mxu0 0.0
      %1552 = vmatpush.msra.mxu0 0.0
      %1553 = vmatpush.msra.mxu0 0.0
      %1554 = vmatpush.msra.mxu0 %v1040
      %1555 = vmatpush.msra.mxu0 %v1037
      %1556 = vmatpush.msra.mxu0 %v1034
      %1557 = vmatpush.msra.mxu0 %v1031
      %1558 = vmatmul.f32.gmra.mxu0 %v1423
      %v1559 = vpop.f32.mrf.mxu0
      %v1560 = vadd.f32 %v1537, %v1559
      %1561 = vmatmul.f32.gmra.mxu0 %v1425
      %v1562 = vpop.f32.mrf.mxu0
      %v1563 = vadd.f32 %v1540, %v1562
      %1564 = vdwg.mxu0
      %1565 = vmatpush.msra.mxu0 %v981
      %1566 = vmatpush.msra.mxu0 %v978
      %1567 = vmatpush.msra.mxu0 %v975
      %1568 = vmatpush.msra.mxu0 %v972
      %1569 = vmatpush.msra.mxu0 %v969
      %1570 = vmatpush.msra.mxu0 %v966
      %1571 = vmatpush.msra.mxu0 %v963
      %1572 = vmatpush.msra.mxu0 %v960
      %1573 = vmatpush.msra.mxu0 %v957
      %1574 = vmatpush.msra.mxu0 %v954
      %1575 = vmatpush.msra.mxu0 %v951
      %1576 = vmatpush.msra.mxu0 %v948
      %1577 = vmatpush.msra.mxu0 %v945
      %1578 = vmatpush.msra.mxu0 %v942
      %1579 = vmatpush.msra.mxu0 %v939
      %1580 = vmatpush.msra.mxu0 %v936
      %1581 = vmatmul.f32.gmra.mxu0 %v1406
      %v1582 = vpop.f32.mrf.mxu0
      %v1583 = vadd.f32 %v1392, %v1582
      %1584 = vmatmul.f32.gmra.mxu0 %v1414
      %v1585 = vpop.f32.mrf.mxu0
      %v1586 = vadd.f32 %v1395, %v1585
      %1587 = vdwg.mxu0
      %1588 = vmatpush.msra.mxu0 %v1029
      %1589 = vmatpush.msra.mxu0 %v1026
      %1590 = vmatpush.msra.mxu0 %v1023
      %1591 = vmatpush.msra.mxu0 %v1020
      %1592 = vmatpush.msra.mxu0 %v1017
      %1593 = vmatpush.msra.mxu0 %v1014
      %1594 = vmatpush.msra.mxu0 %v1011
      %1595 = vmatpush.msra.mxu0 %v1008
      %1596 = vmatpush.msra.mxu0 %v1005
      %1597 = vmatpush.msra.mxu0 %v1002
      %1598 = vmatpush.msra.mxu0 %v999
      %1599 = vmatpush.msra.mxu0 %v996
      %1600 = vmatpush.msra.mxu0 %v993
      %1601 = vmatpush.msra.mxu0 %v990
      %1602 = vmatpush.msra.mxu0 %v987
      %1603 = vmatpush.msra.mxu0 %v984
      %1604 = vmatmul.f32.gmra.mxu0 %v1409
      %v1605 = vpop.f32.mrf.mxu0
      %v1606 = vadd.f32 %v1583, %v1605
      %1607 = vmatmul.f32.gmra.mxu0 %v1416
      %v1608 = vpop.f32.mrf.mxu0
      %v1609 = vadd.f32 %v1586, %v1608
      %1610 = vdwg.mxu0
      %1611 = vmatpush.msra.mxu0 0.0
      %1612 = vmatpush.msra.mxu0 0.0
      %1613 = vmatpush.msra.mxu0 0.0
      %1614 = vmatpush.msra.mxu0 0.0
      %1615 = vmatpush.msra.mxu0 0.0
      %1616 = vmatpush.msra.mxu0 0.0
      %1617 = vmatpush.msra.mxu0 0.0
      %1618 = vmatpush.msra.mxu0 0.0
      %1619 = vmatpush.msra.mxu0 0.0
      %1620 = vmatpush.msra.mxu0 0.0
      %1621 = vmatpush.msra.mxu0 0.0
      %1622 = vmatpush.msra.mxu0 0.0
      %1623 = vmatpush.msra.mxu0 %v1041
      %1624 = vmatpush.msra.mxu0 %v1038
      %1625 = vmatpush.msra.mxu0 %v1035
      %1626 = vmatpush.msra.mxu0 %v1032
      %1627 = vmatmul.f32.gmra.mxu0 %v1423
      %v1628 = vpop.f32.mrf.mxu0
      %v1629 = vadd.f32 %v1606, %v1628
      %1630 = vmatmul.f32.gmra.mxu0 %v1425
      %v1631 = vpop.f32.mrf.mxu0
      %v1632 = vadd.f32 %v1609, %v1631
      %1633 = vdwg.mxu0
      %v1634 = vld [vmem:[#allocation2] sm:$0x80]
      %v1635 = vld [vmem:[#allocation2 + $0x8] sm:$0x80]
      %v1636 = vld [vmem:[#allocation2 + $0x10] sm:$0x80]
      %v1637 = vld [vmem:[#allocation2 + $0x30] sm:$0x7f]
      %v1638 = vld [vmem:[#allocation2 + $0x38] sm:$0x7f]
      %v1639 = vld [vmem:[#allocation2 + $0x40] sm:$0x7f]
      %s1640 = scalar_lea.vmem %s2, 1728
      %v1641 = vld [vmem:[%s1640] sm:$0xff]
      %v1642 = vld [vmem:[%s1640 + $0x8] sm:$0xff]
      %v1643 = vld [vmem:[%s1640 + $0x10] sm:$0xff]
      %v1644 = vld [vmem:[%s1640 + $0x18] sm:$0xff]
      %v1645 = vld [vmem:[%s1640 + $0x20] sm:$0xff]
      %v1646 = vld [vmem:[%s1640 + $0x28] sm:$0xff]
      %v1647 = vld [vmem:[%s1640 + $0x30] sm:$0xff]
      %v1648 = vld [vmem:[%s1640 + $0x38] sm:$0xff]
      %v1649 = vld [vmem:[%s1640 + $0x40] sm:$0xff]
      %v1650 = vld [vmem:[%s1640 + $0x48] sm:$0xff]
      %v1651 = vld [vmem:[%s1640 + $0x50] sm:$0xff]
      %v1652 = vld [vmem:[%s1640 + $0x58] sm:$0xff]
      %v1653 = vld [vmem:[%s1640 + $0x60] sm:$0xff]
      %v1654 = vld [vmem:[%s1640 + $0x68] sm:$0xff]
      %v1655 = vld [vmem:[%s1640 + $0x70] sm:$0xff]
      %v1656 = vld [vmem:[%s1640 + $0x78] sm:$0xff]
      %v1657 = vld [vmem:[%s1640 + $0x80] sm:$0xff]
      %v1658 = vld [vmem:[%s1640 + $0x88] sm:$0xff]
      %v1659 = vld [vmem:[%s1640 + $0x90] sm:$0xff]
      %v1660 = vld [vmem:[%s1640 + $0x98] sm:$0xff]
      %v1661 = vld [vmem:[%s1640 + $0xa0] sm:$0xff]
      %v1662 = vld [vmem:[%s1640 + $0xa8] sm:$0xff]
      %v1663 = vld [vmem:[%s1640 + $0xb0] sm:$0xff]
      %v1664 = vld [vmem:[%s1640 + $0xb8] sm:$0xff]
      %v1665 = vld [vmem:[%s1640 + $0xc0] sm:$0xff]
      %v1666 = vld [vmem:[%s1640 + $0xc8] sm:$0xff]
      %v1667 = vld [vmem:[%s1640 + $0xd0] sm:$0xff]
      %v1668 = vld [vmem:[%s1640 + $0xd8] sm:$0xff]
      %v1669 = vld [vmem:[%s1640 + $0xe0] sm:$0xff]
      %v1670 = vld [vmem:[%s1640 + $0xe8] sm:$0xff]
      %v1671 = vld [vmem:[%s1640 + $0xf0] sm:$0xff]
      %v1672 = vld [vmem:[%s1640 + $0xf8] sm:$0xff]
      %v1673 = vld [vmem:[%s1640 + $0x100] sm:$0xff]
      %v1674 = vld [vmem:[%s1640 + $0x108] sm:$0xff]
      %v1675 = vld [vmem:[%s1640 + $0x110] sm:$0xff]
      %v1676 = vld [vmem:[%s1640 + $0x118] sm:$0xff]
      %v1677 = vld [vmem:[%s1640 + $0x120] sm:$0xff]
      %v1678 = vld [vmem:[%s1640 + $0x128] sm:$0xff]
      %v1679 = vld [vmem:[%s1640 + $0x130] sm:$0xff]
      %v1680 = vld [vmem:[%s1640 + $0x138] sm:$0xff]
      %v1681 = vld [vmem:[%s1640 + $0x140] sm:$0xff]
      %v1682 = vld [vmem:[%s1640 + $0x148] sm:$0xff]
      %v1683 = vld [vmem:[%s1640 + $0x150] sm:$0xff]
      %v1684 = vld [vmem:[%s1640 + $0x158] sm:$0xff]
      %v1685 = vld [vmem:[%s1640 + $0x160] sm:$0xff]
      %v1686 = vld [vmem:[%s1640 + $0x168] sm:$0xff]
      %v1687 = vld [vmem:[%s1640 + $0x170] sm:$0xff]
      %v1688 = vld [vmem:[%s1640 + $0x178] sm:$0xff]
      %v1689 = vld [vmem:[%s1640 + $0x180] sm:$0xff]
      %v1690 = vld [vmem:[%s1640 + $0x188] sm:$0xff]
      %v1691 = vld [vmem:[%s1640 + $0x190] sm:$0xff]
      %v1692 = vld [vmem:[%s1640 + $0x198] sm:$0xff]
      %v1693 = vld [vmem:[%s1640 + $0x1a0] sm:$0xff]
      %v1694 = vld [vmem:[%s1640 + $0x1a8] sm:$0xff]
      %v1695 = vld [vmem:[%s1640 + $0x1b0] sm:$0xff]
      %v1696 = vld [vmem:[%s1640 + $0x1b8] sm:$0xff]
      %v1697 = vld [vmem:[%s1640 + $0x1c0] sm:$0xff]
      %v1698 = vld [vmem:[%s1640 + $0x1c8] sm:$0xff]
      %v1699 = vld [vmem:[%s1640 + $0x1d0] sm:$0xff]
      %v1700 = vld [vmem:[%s1640 + $0x1d8] sm:$0xff]
      %v1701 = vld [vmem:[%s1640 + $0x1e0] sm:$0xff]
      %v1702 = vld [vmem:[%s1640 + $0x1e8] sm:$0xff]
      %v1703 = vld [vmem:[%s1640 + $0x1f0] sm:$0xff]
      %v1704 = vld [vmem:[%s1640 + $0x1f8] sm:$0xff]
      %v1705 = vld [vmem:[%s1640 + $0x200] sm:$0xff]
      %v1706 = vld [vmem:[%s1640 + $0x208] sm:$0xff]
      %v1707 = vld [vmem:[%s1640 + $0x210] sm:$0xff]
      %v1708 = vld [vmem:[%s1640 + $0x218] sm:$0xff]
      %v1709 = vld [vmem:[%s1640 + $0x220] sm:$0xff]
      %v1710 = vld [vmem:[%s1640 + $0x228] sm:$0xff]
      %v1711 = vld [vmem:[%s1640 + $0x230] sm:$0xff]
      %v1712 = vld [vmem:[%s1640 + $0x238] sm:$0xff]
      %v1713 = vld [vmem:[%s1640 + $0x240] sm:$0xff]
      %v1714 = vld [vmem:[%s1640 + $0x248] sm:$0xff]
      %v1715 = vld [vmem:[%s1640 + $0x250] sm:$0xff]
      %v1716 = vld [vmem:[%s1640 + $0x258] sm:$0xff]
      %v1717 = vld [vmem:[%s1640 + $0x260] sm:$0xff]
      %v1718 = vld [vmem:[%s1640 + $0x268] sm:$0xff]
      %v1719 = vld [vmem:[%s1640 + $0x270] sm:$0xff]
      %v1720 = vld [vmem:[%s1640 + $0x278] sm:$0xff]
      %v1721 = vld [vmem:[%s1640 + $0x280] sm:$0xff]
      %v1722 = vld [vmem:[%s1640 + $0x288] sm:$0xff]
      %v1723 = vld [vmem:[%s1640 + $0x290] sm:$0xff]
      %v1724 = vld [vmem:[%s1640 + $0x298] sm:$0xff]
      %v1725 = vld [vmem:[%s1640 + $0x2a0] sm:$0xff]
      %v1726 = vld [vmem:[%s1640 + $0x2a8] sm:$0xff]
      %v1727 = vld [vmem:[%s1640 + $0x2b0] sm:$0xff]
      %v1728 = vld [vmem:[%s1640 + $0x2b8] sm:$0xff]
      %v1729 = vld [vmem:[%s1640 + $0x2c0] sm:$0xff]
      %v1730 = vld [vmem:[%s1640 + $0x2c8] sm:$0xff]
      %v1731 = vld [vmem:[%s1640 + $0x2d0] sm:$0xff]
      %v1732 = vld [vmem:[%s1640 + $0x2d8] sm:$0xff]
      %v1733 = vld [vmem:[%s1640 + $0x2e0] sm:$0xff]
      %v1734 = vld [vmem:[%s1640 + $0x2e8] sm:$0xff]
      %v1735 = vld [vmem:[%s1640 + $0x2f0] sm:$0xff]
      %v1736 = vld [vmem:[%s1640 + $0x2f8] sm:$0xff]
      %v1737 = vld [vmem:[%s1640 + $0x300] sm:$0xff]
      %v1738 = vld [vmem:[%s1640 + $0x308] sm:$0xff]
      %v1739 = vld [vmem:[%s1640 + $0x310] sm:$0xff]
      %v1740 = vld [vmem:[%s1640 + $0x318] sm:$0xff]
      %v1741 = vld [vmem:[%s1640 + $0x320] sm:$0xff]
      %v1742 = vld [vmem:[%s1640 + $0x328] sm:$0xff]
      %v1743 = vld [vmem:[%s1640 + $0x330] sm:$0xff]
      %v1744 = vld [vmem:[%s1640 + $0x338] sm:$0xff]
      %v1745 = vld [vmem:[%s1640 + $0x340] sm:$0xff]
      %v1746 = vld [vmem:[%s1640 + $0x348] sm:$0xff]
      %v1747 = vld [vmem:[%s1640 + $0x350] sm:$0xff]
      %v1748 = vld [vmem:[%s1640 + $0x358] sm:$0xff]
      %vm1755 = vcmask 1040384
      %v1756 = vrot.slane %v1634, 7
      %v1757 = vrot.slane %v928, 7
      %v1758 = vsel %vm1755, %v1756, %v1757
      %v1759 = vrot.slane %v1635, 7
      %v1760 = vrot.slane %v929, 7
      %v1761 = vsel %vm1755, %v1759, %v1760
      %v1762 = vrot.slane %v1636, 7
      %v1763 = vrot.slane %v930, 7
      %v1764 = vsel %vm1755, %v1762, %v1763
      %v1765 = vrot.slane %v1637, 7
      %v1766 = vsel %vm1755, %v1757, %v1765
      %v1767 = vrot.slane %v1638, 7
      %v1768 = vsel %vm1755, %v1760, %v1767
      %v1769 = vrot.slane %v1639, 7
      %v1770 = vsel %vm1755, %v1763, %v1769
      %v1775 = vsel %vm200, %v1764, 0
      %v1777 = vsel %vm200, %v1770, 0
      %1779 = vmatpush.msra.mxu0 %v1686
      %1780 = vmatpush.msra.mxu0 %v1683
      %1781 = vmatpush.msra.mxu0 %v1680
      %1782 = vmatpush.msra.mxu0 %v1677
      %1783 = vmatpush.msra.mxu0 %v1674
      %1784 = vmatpush.msra.mxu0 %v1671
      %1785 = vmatpush.msra.mxu0 %v1668
      %1786 = vmatpush.msra.mxu0 %v1665
      %1787 = vmatpush.msra.mxu0 %v1662
      %1788 = vmatpush.msra.mxu0 %v1659
      %1789 = vmatpush.msra.mxu0 %v1656
      %1790 = vmatpush.msra.mxu0 %v1653
      %1791 = vmatpush.msra.mxu0 %v1650
      %1792 = vmatpush.msra.mxu0 %v1647
      %1793 = vmatpush.msra.mxu0 %v1644
      %1794 = vmatpush.msra.mxu0 %v1641
      %1795 = vmatmul.f32.gmra.mxu0 %v1758
      %v1796 = vpop.f32.mrf.mxu0
      %v1797 = vadd.f32 0.0, %v1796
      %1798 = vmatmul.f32.gmra.mxu0 %v1766
      %v1799 = vpop.f32.mrf.mxu0
      %v1800 = vadd.f32 0.0, %v1799
      %1801 = vdwg.mxu0
      %1802 = vmatpush.msra.mxu0 %v1734
      %1803 = vmatpush.msra.mxu0 %v1731
      %1804 = vmatpush.msra.mxu0 %v1728
      %1805 = vmatpush.msra.mxu0 %v1725
      %1806 = vmatpush.msra.mxu0 %v1722
      %1807 = vmatpush.msra.mxu0 %v1719
      %1808 = vmatpush.msra.mxu0 %v1716
      %1809 = vmatpush.msra.mxu0 %v1713
      %1810 = vmatpush.msra.mxu0 %v1710
      %1811 = vmatpush.msra.mxu0 %v1707
      %1812 = vmatpush.msra.mxu0 %v1704
      %1813 = vmatpush.msra.mxu0 %v1701
      %1814 = vmatpush.msra.mxu0 %v1698
      %1815 = vmatpush.msra.mxu0 %v1695
      %1816 = vmatpush.msra.mxu0 %v1692
      %1817 = vmatpush.msra.mxu0 %v1689
      %1818 = vmatmul.f32.gmra.mxu0 %v1761
      %v1819 = vpop.f32.mrf.mxu0
      %v1820 = vadd.f32 %v1797, %v1819
      %1821 = vmatmul.f32.gmra.mxu0 %v1768
      %v1822 = vpop.f32.mrf.mxu0
      %v1823 = vadd.f32 %v1800, %v1822
      %1824 = vdwg.mxu0
      %1825 = vmatpush.msra.mxu0 0.0
      %1826 = vmatpush.msra.mxu0 0.0
      %1827 = vmatpush.msra.mxu0 0.0
      %1828 = vmatpush.msra.mxu0 0.0
      %1829 = vmatpush.msra.mxu0 0.0
      %1830 = vmatpush.msra.mxu0 0.0
      %1831 = vmatpush.msra.mxu0 0.0
      %1832 = vmatpush.msra.mxu0 0.0
      %1833 = vmatpush.msra.mxu0 0.0
      %1834 = vmatpush.msra.mxu0 0.0
      %1835 = vmatpush.msra.mxu0 0.0
      %1836 = vmatpush.msra.mxu0 0.0
      %1837 = vmatpush.msra.mxu0 %v1746
      %1838 = vmatpush.msra.mxu0 %v1743
      %1839 = vmatpush.msra.mxu0 %v1740
      %1840 = vmatpush.msra.mxu0 %v1737
      %1841 = vmatmul.f32.gmra.mxu0 %v1775
      %v1842 = vpop.f32.mrf.mxu0
      %v1843 = vadd.f32 %v1820, %v1842
      %1844 = vmatmul.f32.gmra.mxu0 %v1777
      %v1845 = vpop.f32.mrf.mxu0
      %v1846 = vadd.f32 %v1823, %v1845
      %1847 = vdwg.mxu0
      %1848 = vmatpush.msra.mxu0 %v1687
      %1849 = vmatpush.msra.mxu0 %v1684
      %1850 = vmatpush.msra.mxu0 %v1681
      %1851 = vmatpush.msra.mxu0 %v1678
      %1852 = vmatpush.msra.mxu0 %v1675
      %1853 = vmatpush.msra.mxu0 %v1672
      %1854 = vmatpush.msra.mxu0 %v1669
      %1855 = vmatpush.msra.mxu0 %v1666
      %1856 = vmatpush.msra.mxu0 %v1663
      %1857 = vmatpush.msra.mxu0 %v1660
      %1858 = vmatpush.msra.mxu0 %v1657
      %1859 = vmatpush.msra.mxu0 %v1654
      %1860 = vmatpush.msra.mxu0 %v1651
      %1861 = vmatpush.msra.mxu0 %v1648
      %1862 = vmatpush.msra.mxu0 %v1645
      %1863 = vmatpush.msra.mxu0 %v1642
      %1864 = vmatmul.f32.gmra.mxu0 %v1758
      %v1865 = vpop.f32.mrf.mxu0
      %v1866 = vadd.f32 0.0, %v1865
      %1867 = vmatmul.f32.gmra.mxu0 %v1766
      %v1868 = vpop.f32.mrf.mxu0
      %v1869 = vadd.f32 0.0, %v1868
      %1870 = vdwg.mxu0
      %1871 = vmatpush.msra.mxu0 %v1735
      %1872 = vmatpush.msra.mxu0 %v1732
      %1873 = vmatpush.msra.mxu0 %v1729
      %1874 = vmatpush.msra.mxu0 %v1726
      %1875 = vmatpush.msra.mxu0 %v1723
      %1876 = vmatpush.msra.mxu0 %v1720
      %1877 = vmatpush.msra.mxu0 %v1717
      %1878 = vmatpush.msra.mxu0 %v1714
      %1879 = vmatpush.msra.mxu0 %v1711
      %1880 = vmatpush.msra.mxu0 %v1708
      %1881 = vmatpush.msra.mxu0 %v1705
      %1882 = vmatpush.msra.mxu0 %v1702
      %1883 = vmatpush.msra.mxu0 %v1699
      %1884 = vmatpush.msra.mxu0 %v1696
      %1885 = vmatpush.msra.mxu0 %v1693
      %1886 = vmatpush.msra.mxu0 %v1690
      %1887 = vmatmul.f32.gmra.mxu0 %v1761
      %v1888 = vpop.f32.mrf.mxu0
      %v1889 = vadd.f32 %v1866, %v1888
      %1890 = vmatmul.f32.gmra.mxu0 %v1768
      %v1891 = vpop.f32.mrf.mxu0
      %v1892 = vadd.f32 %v1869, %v1891
      %1893 = vdwg.mxu0
      %1894 = vmatpush.msra.mxu0 0.0
      %1895 = vmatpush.msra.mxu0 0.0
      %1896 = vmatpush.msra.mxu0 0.0
      %1897 = vmatpush.msra.mxu0 0.0
      %1898 = vmatpush.msra.mxu0 0.0
      %1899 = vmatpush.msra.mxu0 0.0
      %1900 = vmatpush.msra.mxu0 0.0
      %1901 = vmatpush.msra.mxu0 0.0
      %1902 = vmatpush.msra.mxu0 0.0
      %1903 = vmatpush.msra.mxu0 0.0
      %1904 = vmatpush.msra.mxu0 0.0
      %1905 = vmatpush.msra.mxu0 0.0
      %1906 = vmatpush.msra.mxu0 %v1747
      %1907 = vmatpush.msra.mxu0 %v1744
      %1908 = vmatpush.msra.mxu0 %v1741
      %1909 = vmatpush.msra.mxu0 %v1738
      %1910 = vmatmul.f32.gmra.mxu0 %v1775
      %v1911 = vpop.f32.mrf.mxu0
      %v1912 = vadd.f32 %v1889, %v1911
      %1913 = vmatmul.f32.gmra.mxu0 %v1777
      %v1914 = vpop.f32.mrf.mxu0
      %v1915 = vadd.f32 %v1892, %v1914
      %1916 = vdwg.mxu0
      %1917 = vmatpush.msra.mxu0 %v1688
      %1918 = vmatpush.msra.mxu0 %v1685
      %1919 = vmatpush.msra.mxu0 %v1682
      %1920 = vmatpush.msra.mxu0 %v1679
      %1921 = vmatpush.msra.mxu0 %v1676
      %1922 = vmatpush.msra.mxu0 %v1673
      %1923 = vmatpush.msra.mxu0 %v1670
      %1924 = vmatpush.msra.mxu0 %v1667
      %1925 = vmatpush.msra.mxu0 %v1664
      %1926 = vmatpush.msra.mxu0 %v1661
      %1927 = vmatpush.msra.mxu0 %v1658
      %1928 = vmatpush.msra.mxu0 %v1655
      %1929 = vmatpush.msra.mxu0 %v1652
      %1930 = vmatpush.msra.mxu0 %v1649
      %1931 = vmatpush.msra.mxu0 %v1646
      %1932 = vmatpush.msra.mxu0 %v1643
      %1933 = vmatmul.f32.gmra.mxu0 %v1758
      %v1934 = vpop.f32.mrf.mxu0
      %v1935 = vadd.f32 0.0, %v1934
      %1936 = vmatmul.f32.gmra.mxu0 %v1766
      %v1937 = vpop.f32.mrf.mxu0
      %v1938 = vadd.f32 0.0, %v1937
      %1939 = vdwg.mxu0
      %1940 = vmatpush.msra.mxu0 %v1736
      %1941 = vmatpush.msra.mxu0 %v1733
      %1942 = vmatpush.msra.mxu0 %v1730
      %1943 = vmatpush.msra.mxu0 %v1727
      %1944 = vmatpush.msra.mxu0 %v1724
      %1945 = vmatpush.msra.mxu0 %v1721
      %1946 = vmatpush.msra.mxu0 %v1718
      %1947 = vmatpush.msra.mxu0 %v1715
      %1948 = vmatpush.msra.mxu0 %v1712
      %1949 = vmatpush.msra.mxu0 %v1709
      %1950 = vmatpush.msra.mxu0 %v1706
      %1951 = vmatpush.msra.mxu0 %v1703
      %1952 = vmatpush.msra.mxu0 %v1700
      %1953 = vmatpush.msra.mxu0 %v1697
      %1954 = vmatpush.msra.mxu0 %v1694
      %1955 = vmatpush.msra.mxu0 %v1691
      %1956 = vmatmul.f32.gmra.mxu0 %v1761
      %v1957 = vpop.f32.mrf.mxu0
      %v1958 = vadd.f32 %v1935, %v1957
      %1959 = vmatmul.f32.gmra.mxu0 %v1768
      %v1960 = vpop.f32.mrf.mxu0
      %v1961 = vadd.f32 %v1938, %v1960
      %1962 = vdwg.mxu0
      %1963 = vmatpush.msra.mxu0 0.0
      %1964 = vmatpush.msra.mxu0 0.0
      %1965 = vmatpush.msra.mxu0 0.0
      %1966 = vmatpush.msra.mxu0 0.0
      %1967 = vmatpush.msra.mxu0 0.0
      %1968 = vmatpush.msra.mxu0 0.0
      %1969 = vmatpush.msra.mxu0 0.0
      %1970 = vmatpush.msra.mxu0 0.0
      %1971 = vmatpush.msra.mxu0 0.0
      %1972 = vmatpush.msra.mxu0 0.0
      %1973 = vmatpush.msra.mxu0 0.0
      %1974 = vmatpush.msra.mxu0 0.0
      %1975 = vmatpush.msra.mxu0 %v1748
      %1976 = vmatpush.msra.mxu0 %v1745
      %1977 = vmatpush.msra.mxu0 %v1742
      %1978 = vmatpush.msra.mxu0 %v1739
      %1979 = vmatmul.f32.gmra.mxu0 %v1775
      %v1980 = vpop.f32.mrf.mxu0
      %v1981 = vadd.f32 %v1958, %v1980
      %1982 = vmatmul.f32.gmra.mxu0 %v1777
      %v1983 = vpop.f32.mrf.mxu0
      %v1984 = vadd.f32 %v1961, %v1983
      %1985 = vdwg.mxu0
      %v1986 = vadd.f32 %v1491, %v1843
      %v1987 = vadd.f32 %v1560, %v1912
      %v1988 = vadd.f32 %v1629, %v1981
      %v1989 = vadd.f32 %v1494, %v1846
      %v1990 = vadd.f32 %v1563, %v1915
      %v1991 = vadd.f32 %v1632, %v1984
      %v1992 = vld [vmem:[#allocation2 + $0x30] sm:$0xff]
      %v1993 = vld [vmem:[#allocation2 + $0x38] sm:$0xff]
      %v1994 = vld [vmem:[#allocation2 + $0x40] sm:$0xff]
      %s1995 = scalar_lea.vmem %s2, 2592
      %v1996 = vld [vmem:[%s1995] sm:$0xff]
      %v1997 = vld [vmem:[%s1995 + $0x8] sm:$0xff]
      %v1998 = vld [vmem:[%s1995 + $0x10] sm:$0xff]
      %v1999 = vld [vmem:[%s1995 + $0x18] sm:$0xff]
      %v2000 = vld [vmem:[%s1995 + $0x20] sm:$0xff]
      %v2001 = vld [vmem:[%s1995 + $0x28] sm:$0xff]
      %v2002 = vld [vmem:[%s1995 + $0x30] sm:$0xff]
      %v2003 = vld [vmem:[%s1995 + $0x38] sm:$0xff]
      %v2004 = vld [vmem:[%s1995 + $0x40] sm:$0xff]
      %v2005 = vld [vmem:[%s1995 + $0x48] sm:$0xff]
      %v2006 = vld [vmem:[%s1995 + $0x50] sm:$0xff]
      %v2007 = vld [vmem:[%s1995 + $0x58] sm:$0xff]
      %v2008 = vld [vmem:[%s1995 + $0x60] sm:$0xff]
      %v2009 = vld [vmem:[%s1995 + $0x68] sm:$0xff]
      %v2010 = vld [vmem:[%s1995 + $0x70] sm:$0xff]
      %v2011 = vld [vmem:[%s1995 + $0x78] sm:$0xff]
      %v2012 = vld [vmem:[%s1995 + $0x80] sm:$0xff]
      %v2013 = vld [vmem:[%s1995 + $0x88] sm:$0xff]
      %v2014 = vld [vmem:[%s1995 + $0x90] sm:$0xff]
      %v2015 = vld [vmem:[%s1995 + $0x98] sm:$0xff]
      %v2016 = vld [vmem:[%s1995 + $0xa0] sm:$0xff]
      %v2017 = vld [vmem:[%s1995 + $0xa8] sm:$0xff]
      %v2018 = vld [vmem:[%s1995 + $0xb0] sm:$0xff]
      %v2019 = vld [vmem:[%s1995 + $0xb8] sm:$0xff]
      %v2020 = vld [vmem:[%s1995 + $0xc0] sm:$0xff]
      %v2021 = vld [vmem:[%s1995 + $0xc8] sm:$0xff]
      %v2022 = vld [vmem:[%s1995 + $0xd0] sm:$0xff]
      %v2023 = vld [vmem:[%s1995 + $0xd8] sm:$0xff]
      %v2024 = vld [vmem:[%s1995 + $0xe0] sm:$0xff]
      %v2025 = vld [vmem:[%s1995 + $0xe8] sm:$0xff]
      %v2026 = vld [vmem:[%s1995 + $0xf0] sm:$0xff]
      %v2027 = vld [vmem:[%s1995 + $0xf8] sm:$0xff]
      %v2028 = vld [vmem:[%s1995 + $0x100] sm:$0xff]
      %v2029 = vld [vmem:[%s1995 + $0x108] sm:$0xff]
      %v2030 = vld [vmem:[%s1995 + $0x110] sm:$0xff]
      %v2031 = vld [vmem:[%s1995 + $0x118] sm:$0xff]
      %v2032 = vld [vmem:[%s1995 + $0x120] sm:$0xff]
      %v2033 = vld [vmem:[%s1995 + $0x128] sm:$0xff]
      %v2034 = vld [vmem:[%s1995 + $0x130] sm:$0xff]
      %v2035 = vld [vmem:[%s1995 + $0x138] sm:$0xff]
      %v2036 = vld [vmem:[%s1995 + $0x140] sm:$0xff]
      %v2037 = vld [vmem:[%s1995 + $0x148] sm:$0xff]
      %v2038 = vld [vmem:[%s1995 + $0x150] sm:$0xff]
      %v2039 = vld [vmem:[%s1995 + $0x158] sm:$0xff]
      %v2040 = vld [vmem:[%s1995 + $0x160] sm:$0xff]
      %v2041 = vld [vmem:[%s1995 + $0x168] sm:$0xff]
      %v2042 = vld [vmem:[%s1995 + $0x170] sm:$0xff]
      %v2043 = vld [vmem:[%s1995 + $0x178] sm:$0xff]
      %v2044 = vld [vmem:[%s1995 + $0x180] sm:$0xff]
      %v2045 = vld [vmem:[%s1995 + $0x188] sm:$0xff]
      %v2046 = vld [vmem:[%s1995 + $0x190] sm:$0xff]
      %v2047 = vld [vmem:[%s1995 + $0x198] sm:$0xff]
      %v2048 = vld [vmem:[%s1995 + $0x1a0] sm:$0xff]
      %v2049 = vld [vmem:[%s1995 + $0x1a8] sm:$0xff]
      %v2050 = vld [vmem:[%s1995 + $0x1b0] sm:$0xff]
      %v2051 = vld [vmem:[%s1995 + $0x1b8] sm:$0xff]
      %v2052 = vld [vmem:[%s1995 + $0x1c0] sm:$0xff]
      %v2053 = vld [vmem:[%s1995 + $0x1c8] sm:$0xff]
      %v2054 = vld [vmem:[%s1995 + $0x1d0] sm:$0xff]
      %v2055 = vld [vmem:[%s1995 + $0x1d8] sm:$0xff]
      %v2056 = vld [vmem:[%s1995 + $0x1e0] sm:$0xff]
      %v2057 = vld [vmem:[%s1995 + $0x1e8] sm:$0xff]
      %v2058 = vld [vmem:[%s1995 + $0x1f0] sm:$0xff]
      %v2059 = vld [vmem:[%s1995 + $0x1f8] sm:$0xff]
      %v2060 = vld [vmem:[%s1995 + $0x200] sm:$0xff]
      %v2061 = vld [vmem:[%s1995 + $0x208] sm:$0xff]
      %v2062 = vld [vmem:[%s1995 + $0x210] sm:$0xff]
      %v2063 = vld [vmem:[%s1995 + $0x218] sm:$0xff]
      %v2064 = vld [vmem:[%s1995 + $0x220] sm:$0xff]
      %v2065 = vld [vmem:[%s1995 + $0x228] sm:$0xff]
      %v2066 = vld [vmem:[%s1995 + $0x230] sm:$0xff]
      %v2067 = vld [vmem:[%s1995 + $0x238] sm:$0xff]
      %v2068 = vld [vmem:[%s1995 + $0x240] sm:$0xff]
      %v2069 = vld [vmem:[%s1995 + $0x248] sm:$0xff]
      %v2070 = vld [vmem:[%s1995 + $0x250] sm:$0xff]
      %v2071 = vld [vmem:[%s1995 + $0x258] sm:$0xff]
      %v2072 = vld [vmem:[%s1995 + $0x260] sm:$0xff]
      %v2073 = vld [vmem:[%s1995 + $0x268] sm:$0xff]
      %v2074 = vld [vmem:[%s1995 + $0x270] sm:$0xff]
      %v2075 = vld [vmem:[%s1995 + $0x278] sm:$0xff]
      %v2076 = vld [vmem:[%s1995 + $0x280] sm:$0xff]
      %v2077 = vld [vmem:[%s1995 + $0x288] sm:$0xff]
      %v2078 = vld [vmem:[%s1995 + $0x290] sm:$0xff]
      %v2079 = vld [vmem:[%s1995 + $0x298] sm:$0xff]
      %v2080 = vld [vmem:[%s1995 + $0x2a0] sm:$0xff]
      %v2081 = vld [vmem:[%s1995 + $0x2a8] sm:$0xff]
      %v2082 = vld [vmem:[%s1995 + $0x2b0] sm:$0xff]
      %v2083 = vld [vmem:[%s1995 + $0x2b8] sm:$0xff]
      %v2084 = vld [vmem:[%s1995 + $0x2c0] sm:$0xff]
      %v2085 = vld [vmem:[%s1995 + $0x2c8] sm:$0xff]
      %v2086 = vld [vmem:[%s1995 + $0x2d0] sm:$0xff]
      %v2087 = vld [vmem:[%s1995 + $0x2d8] sm:$0xff]
      %v2088 = vld [vmem:[%s1995 + $0x2e0] sm:$0xff]
      %v2089 = vld [vmem:[%s1995 + $0x2e8] sm:$0xff]
      %v2090 = vld [vmem:[%s1995 + $0x2f0] sm:$0xff]
      %v2091 = vld [vmem:[%s1995 + $0x2f8] sm:$0xff]
      %v2092 = vld [vmem:[%s1995 + $0x300] sm:$0xff]
      %v2093 = vld [vmem:[%s1995 + $0x308] sm:$0xff]
      %v2094 = vld [vmem:[%s1995 + $0x310] sm:$0xff]
      %v2095 = vld [vmem:[%s1995 + $0x318] sm:$0xff]
      %v2096 = vld [vmem:[%s1995 + $0x320] sm:$0xff]
      %v2097 = vld [vmem:[%s1995 + $0x328] sm:$0xff]
      %v2098 = vld [vmem:[%s1995 + $0x330] sm:$0xff]
      %v2099 = vld [vmem:[%s1995 + $0x338] sm:$0xff]
      %v2100 = vld [vmem:[%s1995 + $0x340] sm:$0xff]
      %v2101 = vld [vmem:[%s1995 + $0x348] sm:$0xff]
      %v2102 = vld [vmem:[%s1995 + $0x350] sm:$0xff]
      %v2103 = vld [vmem:[%s1995 + $0x358] sm:$0xff]
      %v2104 = vsel %vm200, %v930, 0
      %v2107 = vsel %vm200, %v1994, 0
      %2109 = vmatpush.msra.mxu0 %v2041
      %2110 = vmatpush.msra.mxu0 %v2038
      %2111 = vmatpush.msra.mxu0 %v2035
      %2112 = vmatpush.msra.mxu0 %v2032
      %2113 = vmatpush.msra.mxu0 %v2029
      %2114 = vmatpush.msra.mxu0 %v2026
      %2115 = vmatpush.msra.mxu0 %v2023
      %2116 = vmatpush.msra.mxu0 %v2020
      %2117 = vmatpush.msra.mxu0 %v2017
      %2118 = vmatpush.msra.mxu0 %v2014
      %2119 = vmatpush.msra.mxu0 %v2011
      %2120 = vmatpush.msra.mxu0 %v2008
      %2121 = vmatpush.msra.mxu0 %v2005
      %2122 = vmatpush.msra.mxu0 %v2002
      %2123 = vmatpush.msra.mxu0 %v1999
      %2124 = vmatpush.msra.mxu0 %v1996
      %2125 = vmatmul.f32.gmra.mxu0 %v928
      %v2126 = vpop.f32.mrf.mxu0
      %v2127 = vadd.f32 0.0, %v2126
      %2128 = vmatmul.f32.gmra.mxu0 %v1992
      %v2129 = vpop.f32.mrf.mxu0
      %v2130 = vadd.f32 0.0, %v2129
      %2131 = vdwg.mxu0
      %2132 = vmatpush.msra.mxu0 %v2089
      %2133 = vmatpush.msra.mxu0 %v2086
      %2134 = vmatpush.msra.mxu0 %v2083
      %2135 = vmatpush.msra.mxu0 %v2080
      %2136 = vmatpush.msra.mxu0 %v2077
      %2137 = vmatpush.msra.mxu0 %v2074
      %2138 = vmatpush.msra.mxu0 %v2071
      %2139 = vmatpush.msra.mxu0 %v2068
      %2140 = vmatpush.msra.mxu0 %v2065
      %2141 = vmatpush.msra.mxu0 %v2062
      %2142 = vmatpush.msra.mxu0 %v2059
      %2143 = vmatpush.msra.mxu0 %v2056
      %2144 = vmatpush.msra.mxu0 %v2053
      %2145 = vmatpush.msra.mxu0 %v2050
      %2146 = vmatpush.msra.mxu0 %v2047
      %2147 = vmatpush.msra.mxu0 %v2044
      %2148 = vmatmul.f32.gmra.mxu0 %v929
      %v2149 = vpop.f32.mrf.mxu0
      %v2150 = vadd.f32 %v2127, %v2149
      %2151 = vmatmul.f32.gmra.mxu0 %v1993
      %v2152 = vpop.f32.mrf.mxu0
      %v2153 = vadd.f32 %v2130, %v2152
      %2154 = vdwg.mxu0
      %2155 = vmatpush.msra.mxu0 0.0
      %2156 = vmatpush.msra.mxu0 0.0
      %2157 = vmatpush.msra.mxu0 0.0
      %2158 = vmatpush.msra.mxu0 0.0
      %2159 = vmatpush.msra.mxu0 0.0
      %2160 = vmatpush.msra.mxu0 0.0
      %2161 = vmatpush.msra.mxu0 0.0
      %2162 = vmatpush.msra.mxu0 0.0
      %2163 = vmatpush.msra.mxu0 0.0
      %2164 = vmatpush.msra.mxu0 0.0
      %2165 = vmatpush.msra.mxu0 0.0
      %2166 = vmatpush.msra.mxu0 0.0
      %2167 = vmatpush.msra.mxu0 %v2101
      %2168 = vmatpush.msra.mxu0 %v2098
      %2169 = vmatpush.msra.mxu0 %v2095
      %2170 = vmatpush.msra.mxu0 %v2092
      %2171 = vmatmul.f32.gmra.mxu0 %v2104
      %v2172 = vpop.f32.mrf.mxu0
      %v2173 = vadd.f32 %v2150, %v2172
      %2174 = vmatmul.f32.gmra.mxu0 %v2107
      %v2175 = vpop.f32.mrf.mxu0
      %v2176 = vadd.f32 %v2153, %v2175
      %2177 = vdwg.mxu0
      %2178 = vmatpush.msra.mxu0 %v2042
      %2179 = vmatpush.msra.mxu0 %v2039
      %2180 = vmatpush.msra.mxu0 %v2036
      %2181 = vmatpush.msra.mxu0 %v2033
      %2182 = vmatpush.msra.mxu0 %v2030
      %2183 = vmatpush.msra.mxu0 %v2027
      %2184 = vmatpush.msra.mxu0 %v2024
      %2185 = vmatpush.msra.mxu0 %v2021
      %2186 = vmatpush.msra.mxu0 %v2018
      %2187 = vmatpush.msra.mxu0 %v2015
      %2188 = vmatpush.msra.mxu0 %v2012
      %2189 = vmatpush.msra.mxu0 %v2009
      %2190 = vmatpush.msra.mxu0 %v2006
      %2191 = vmatpush.msra.mxu0 %v2003
      %2192 = vmatpush.msra.mxu0 %v2000
      %2193 = vmatpush.msra.mxu0 %v1997
      %2194 = vmatmul.f32.gmra.mxu0 %v928
      %v2195 = vpop.f32.mrf.mxu0
      %v2196 = vadd.f32 0.0, %v2195
      %2197 = vmatmul.f32.gmra.mxu0 %v1992
      %v2198 = vpop.f32.mrf.mxu0
      %v2199 = vadd.f32 0.0, %v2198
      %2200 = vdwg.mxu0
      %2201 = vmatpush.msra.mxu0 %v2090
      %2202 = vmatpush.msra.mxu0 %v2087
      %2203 = vmatpush.msra.mxu0 %v2084
      %2204 = vmatpush.msra.mxu0 %v2081
      %2205 = vmatpush.msra.mxu0 %v2078
      %2206 = vmatpush.msra.mxu0 %v2075
      %2207 = vmatpush.msra.mxu0 %v2072
      %2208 = vmatpush.msra.mxu0 %v2069
      %2209 = vmatpush.msra.mxu0 %v2066
      %2210 = vmatpush.msra.mxu0 %v2063
      %2211 = vmatpush.msra.mxu0 %v2060
      %2212 = vmatpush.msra.mxu0 %v2057
      %2213 = vmatpush.msra.mxu0 %v2054
      %2214 = vmatpush.msra.mxu0 %v2051
      %2215 = vmatpush.msra.mxu0 %v2048
      %2216 = vmatpush.msra.mxu0 %v2045
      %2217 = vmatmul.f32.gmra.mxu0 %v929
      %v2218 = vpop.f32.mrf.mxu0
      %v2219 = vadd.f32 %v2196, %v2218
      %2220 = vmatmul.f32.gmra.mxu0 %v1993
      %v2221 = vpop.f32.mrf.mxu0
      %v2222 = vadd.f32 %v2199, %v2221
      %2223 = vdwg.mxu0
      %2224 = vmatpush.msra.mxu0 0.0
      %2225 = vmatpush.msra.mxu0 0.0
      %2226 = vmatpush.msra.mxu0 0.0
      %2227 = vmatpush.msra.mxu0 0.0
      %2228 = vmatpush.msra.mxu0 0.0
      %2229 = vmatpush.msra.mxu0 0.0
      %2230 = vmatpush.msra.mxu0 0.0
      %2231 = vmatpush.msra.mxu0 0.0
      %2232 = vmatpush.msra.mxu0 0.0
      %2233 = vmatpush.msra.mxu0 0.0
      %2234 = vmatpush.msra.mxu0 0.0
      %2235 = vmatpush.msra.mxu0 0.0
      %2236 = vmatpush.msra.mxu0 %v2102
      %2237 = vmatpush.msra.mxu0 %v2099
      %2238 = vmatpush.msra.mxu0 %v2096
      %2239 = vmatpush.msra.mxu0 %v2093
      %2240 = vmatmul.f32.gmra.mxu0 %v2104
      %v2241 = vpop.f32.mrf.mxu0
      %v2242 = vadd.f32 %v2219, %v2241
      %2243 = vmatmul.f32.gmra.mxu0 %v2107
      %v2244 = vpop.f32.mrf.mxu0
      %v2245 = vadd.f32 %v2222, %v2244
      %2246 = vdwg.mxu0
      %2247 = vmatpush.msra.mxu0 %v2043
      %2248 = vmatpush.msra.mxu0 %v2040
      %2249 = vmatpush.msra.mxu0 %v2037
      %2250 = vmatpush.msra.mxu0 %v2034
      %2251 = vmatpush.msra.mxu0 %v2031
      %2252 = vmatpush.msra.mxu0 %v2028
      %2253 = vmatpush.msra.mxu0 %v2025
      %2254 = vmatpush.msra.mxu0 %v2022
      %2255 = vmatpush.msra.mxu0 %v2019
      %2256 = vmatpush.msra.mxu0 %v2016
      %2257 = vmatpush.msra.mxu0 %v2013
      %2258 = vmatpush.msra.mxu0 %v2010
      %2259 = vmatpush.msra.mxu0 %v2007
      %2260 = vmatpush.msra.mxu0 %v2004
      %2261 = vmatpush.msra.mxu0 %v2001
      %2262 = vmatpush.msra.mxu0 %v1998
      %2263 = vmatmul.f32.gmra.mxu0 %v928
      %v2264 = vpop.f32.mrf.mxu0
      %v2265 = vadd.f32 0.0, %v2264
      %2266 = vmatmul.f32.gmra.mxu0 %v1992
      %v2267 = vpop.f32.mrf.mxu0
      %v2268 = vadd.f32 0.0, %v2267
      %2269 = vdwg.mxu0
      %2270 = vmatpush.msra.mxu0 %v2091
      %2271 = vmatpush.msra.mxu0 %v2088
      %2272 = vmatpush.msra.mxu0 %v2085
      %2273 = vmatpush.msra.mxu0 %v2082
      %2274 = vmatpush.msra.mxu0 %v2079
      %2275 = vmatpush.msra.mxu0 %v2076
      %2276 = vmatpush.msra.mxu0 %v2073
      %2277 = vmatpush.msra.mxu0 %v2070
      %2278 = vmatpush.msra.mxu0 %v2067
      %2279 = vmatpush.msra.mxu0 %v2064
      %2280 = vmatpush.msra.mxu0 %v2061
      %2281 = vmatpush.msra.mxu0 %v2058
      %2282 = vmatpush.msra.mxu0 %v2055
      %2283 = vmatpush.msra.mxu0 %v2052
      %2284 = vmatpush.msra.mxu0 %v2049
      %2285 = vmatpush.msra.mxu0 %v2046
      %2286 = vmatmul.f32.gmra.mxu0 %v929
      %v2287 = vpop.f32.mrf.mxu0
      %v2288 = vadd.f32 %v2265, %v2287
      %2289 = vmatmul.f32.gmra.mxu0 %v1993
      %v2290 = vpop.f32.mrf.mxu0
      %v2291 = vadd.f32 %v2268, %v2290
      %2292 = vdwg.mxu0
      %2293 = vmatpush.msra.mxu0 0.0
      %2294 = vmatpush.msra.mxu0 0.0
      %2295 = vmatpush.msra.mxu0 0.0
      %2296 = vmatpush.msra.mxu0 0.0
      %2297 = vmatpush.msra.mxu0 0.0
      %2298 = vmatpush.msra.mxu0 0.0
      %2299 = vmatpush.msra.mxu0 0.0
      %2300 = vmatpush.msra.mxu0 0.0
      %2301 = vmatpush.msra.mxu0 0.0
      %2302 = vmatpush.msra.mxu0 0.0
      %2303 = vmatpush.msra.mxu0 0.0
      %2304 = vmatpush.msra.mxu0 0.0
      %2305 = vmatpush.msra.mxu0 %v2103
      %2306 = vmatpush.msra.mxu0 %v2100
      %2307 = vmatpush.msra.mxu0 %v2097
      %2308 = vmatpush.msra.mxu0 %v2094
      %2309 = vmatmul.f32.gmra.mxu0 %v2104
      %v2310 = vpop.f32.mrf.mxu0
      %v2311 = vadd.f32 %v2288, %v2310
      %2312 = vmatmul.f32.gmra.mxu0 %v2107
      %v2313 = vpop.f32.mrf.mxu0
      %v2314 = vadd.f32 %v2291, %v2313
      %2315 = vdwg.mxu0
      %v2316 = vadd.f32 %v1986, %v2173
      %v2317 = vadd.f32 %v1987, %v2242
      %v2318 = vadd.f32 %v1988, %v2311
      %v2319 = vadd.f32 %v1989, %v2176
      %v2320 = vadd.f32 %v1990, %v2245
      %v2321 = vadd.f32 %v1991, %v2314
      %v2322 = vld [vmem:[#allocation2 + $0x18] sm:$0xfe]
      %v2323 = vld [vmem:[#allocation2 + $0x20] sm:$0xfe]
      %v2324 = vld [vmem:[#allocation2 + $0x28] sm:$0xfe]
      %v2325 = vld [vmem:[#allocation2 + $0x30] sm:$0xff]
      %v2326 = vld [vmem:[#allocation2 + $0x38] sm:$0xff]
      %v2327 = vld [vmem:[#allocation2 + $0x40] sm:$0xff]
      %v2328 = vld [vmem:[#allocation2 + $0x48] sm:$0x1]
      %v2329 = vld [vmem:[#allocation2 + $0x50] sm:$0x1]
      %v2330 = vld [vmem:[#allocation2 + $0x58] sm:$0x1]
      %s2331 = scalar_lea.vmem %s2, 3456
      %v2332 = vld [vmem:[%s2331] sm:$0xff]
      %v2333 = vld [vmem:[%s2331 + $0x8] sm:$0xff]
      %v2334 = vld [vmem:[%s2331 + $0x10] sm:$0xff]
      %v2335 = vld [vmem:[%s2331 + $0x18] sm:$0xff]
      %v2336 = vld [vmem:[%s2331 + $0x20] sm:$0xff]
      %v2337 = vld [vmem:[%s2331 + $0x28] sm:$0xff]
      %v2338 = vld [vmem:[%s2331 + $0x30] sm:$0xff]
      %v2339 = vld [vmem:[%s2331 + $0x38] sm:$0xff]
      %v2340 = vld [vmem:[%s2331 + $0x40] sm:$0xff]
      %v2341 = vld [vmem:[%s2331 + $0x48] sm:$0xff]
      %v2342 = vld [vmem:[%s2331 + $0x50] sm:$0xff]
      %v2343 = vld [vmem:[%s2331 + $0x58] sm:$0xff]
      %v2344 = vld [vmem:[%s2331 + $0x60] sm:$0xff]
      %v2345 = vld [vmem:[%s2331 + $0x68] sm:$0xff]
      %v2346 = vld [vmem:[%s2331 + $0x70] sm:$0xff]
      %v2347 = vld [vmem:[%s2331 + $0x78] sm:$0xff]
      %v2348 = vld [vmem:[%s2331 + $0x80] sm:$0xff]
      %v2349 = vld [vmem:[%s2331 + $0x88] sm:$0xff]
      %v2350 = vld [vmem:[%s2331 + $0x90] sm:$0xff]
      %v2351 = vld [vmem:[%s2331 + $0x98] sm:$0xff]
      %v2352 = vld [vmem:[%s2331 + $0xa0] sm:$0xff]
      %v2353 = vld [vmem:[%s2331 + $0xa8] sm:$0xff]
      %v2354 = vld [vmem:[%s2331 + $0xb0] sm:$0xff]
      %v2355 = vld [vmem:[%s2331 + $0xb8] sm:$0xff]
      %v2356 = vld [vmem:[%s2331 + $0xc0] sm:$0xff]
      %v2357 = vld [vmem:[%s2331 + $0xc8] sm:$0xff]
      %v2358 = vld [vmem:[%s2331 + $0xd0] sm:$0xff]
      %v2359 = vld [vmem:[%s2331 + $0xd8] sm:$0xff]
      %v2360 = vld [vmem:[%s2331 + $0xe0] sm:$0xff]
      %v2361 = vld [vmem:[%s2331 + $0xe8] sm:$0xff]
      %v2362 = vld [vmem:[%s2331 + $0xf0] sm:$0xff]
      %v2363 = vld [vmem:[%s2331 + $0xf8] sm:$0xff]
      %v2364 = vld [vmem:[%s2331 + $0x100] sm:$0xff]
      %v2365 = vld [vmem:[%s2331 + $0x108] sm:$0xff]
      %v2366 = vld [vmem:[%s2331 + $0x110] sm:$0xff]
      %v2367 = vld [vmem:[%s2331 + $0x118] sm:$0xff]
      %v2368 = vld [vmem:[%s2331 + $0x120] sm:$0xff]
      %v2369 = vld [vmem:[%s2331 + $0x128] sm:$0xff]
      %v2370 = vld [vmem:[%s2331 + $0x130] sm:$0xff]
      %v2371 = vld [vmem:[%s2331 + $0x138] sm:$0xff]
      %v2372 = vld [vmem:[%s2331 + $0x140] sm:$0xff]
      %v2373 = vld [vmem:[%s2331 + $0x148] sm:$0xff]
      %v2374 = vld [vmem:[%s2331 + $0x150] sm:$0xff]
      %v2375 = vld [vmem:[%s2331 + $0x158] sm:$0xff]
      %v2376 = vld [vmem:[%s2331 + $0x160] sm:$0xff]
      %v2377 = vld [vmem:[%s2331 + $0x168] sm:$0xff]
      %v2378 = vld [vmem:[%s2331 + $0x170] sm:$0xff]
      %v2379 = vld [vmem:[%s2331 + $0x178] sm:$0xff]
      %v2380 = vld [vmem:[%s2331 + $0x180] sm:$0xff]
      %v2381 = vld [vmem:[%s2331 + $0x188] sm:$0xff]
      %v2382 = vld [vmem:[%s2331 + $0x190] sm:$0xff]
      %v2383 = vld [vmem:[%s2331 + $0x198] sm:$0xff]
      %v2384 = vld [vmem:[%s2331 + $0x1a0] sm:$0xff]
      %v2385 = vld [vmem:[%s2331 + $0x1a8] sm:$0xff]
      %v2386 = vld [vmem:[%s2331 + $0x1b0] sm:$0xff]
      %v2387 = vld [vmem:[%s2331 + $0x1b8] sm:$0xff]
      %v2388 = vld [vmem:[%s2331 + $0x1c0] sm:$0xff]
      %v2389 = vld [vmem:[%s2331 + $0x1c8] sm:$0xff]
      %v2390 = vld [vmem:[%s2331 + $0x1d0] sm:$0xff]
      %v2391 = vld [vmem:[%s2331 + $0x1d8] sm:$0xff]
      %v2392 = vld [vmem:[%s2331 + $0x1e0] sm:$0xff]
      %v2393 = vld [vmem:[%s2331 + $0x1e8] sm:$0xff]
      %v2394 = vld [vmem:[%s2331 + $0x1f0] sm:$0xff]
      %v2395 = vld [vmem:[%s2331 + $0x1f8] sm:$0xff]
      %v2396 = vld [vmem:[%s2331 + $0x200] sm:$0xff]
      %v2397 = vld [vmem:[%s2331 + $0x208] sm:$0xff]
      %v2398 = vld [vmem:[%s2331 + $0x210] sm:$0xff]
      %v2399 = vld [vmem:[%s2331 + $0x218] sm:$0xff]
      %v2400 = vld [vmem:[%s2331 + $0x220] sm:$0xff]
      %v2401 = vld [vmem:[%s2331 + $0x228] sm:$0xff]
      %v2402 = vld [vmem:[%s2331 + $0x230] sm:$0xff]
      %v2403 = vld [vmem:[%s2331 + $0x238] sm:$0xff]
      %v2404 = vld [vmem:[%s2331 + $0x240] sm:$0xff]
      %v2405 = vld [vmem:[%s2331 + $0x248] sm:$0xff]
      %v2406 = vld [vmem:[%s2331 + $0x250] sm:$0xff]
      %v2407 = vld [vmem:[%s2331 + $0x258] sm:$0xff]
      %v2408 = vld [vmem:[%s2331 + $0x260] sm:$0xff]
      %v2409 = vld [vmem:[%s2331 + $0x268] sm:$0xff]
      %v2410 = vld [vmem:[%s2331 + $0x270] sm:$0xff]
      %v2411 = vld [vmem:[%s2331 + $0x278] sm:$0xff]
      %v2412 = vld [vmem:[%s2331 + $0x280] sm:$0xff]
      %v2413 = vld [vmem:[%s2331 + $0x288] sm:$0xff]
      %v2414 = vld [vmem:[%s2331 + $0x290] sm:$0xff]
      %v2415 = vld [vmem:[%s2331 + $0x298] sm:$0xff]
      %v2416 = vld [vmem:[%s2331 + $0x2a0] sm:$0xff]
      %v2417 = vld [vmem:[%s2331 + $0x2a8] sm:$0xff]
      %v2418 = vld [vmem:[%s2331 + $0x2b0] sm:$0xff]
      %v2419 = vld [vmem:[%s2331 + $0x2b8] sm:$0xff]
      %v2420 = vld [vmem:[%s2331 + $0x2c0] sm:$0xff]
      %v2421 = vld [vmem:[%s2331 + $0x2c8] sm:$0xff]
      %v2422 = vld [vmem:[%s2331 + $0x2d0] sm:$0xff]
      %v2423 = vld [vmem:[%s2331 + $0x2d8] sm:$0xff]
      %v2424 = vld [vmem:[%s2331 + $0x2e0] sm:$0xff]
      %v2425 = vld [vmem:[%s2331 + $0x2e8] sm:$0xff]
      %v2426 = vld [vmem:[%s2331 + $0x2f0] sm:$0xff]
      %v2427 = vld [vmem:[%s2331 + $0x2f8] sm:$0xff]
      %v2428 = vld [vmem:[%s2331 + $0x300] sm:$0xff]
      %v2429 = vld [vmem:[%s2331 + $0x308] sm:$0xff]
      %v2430 = vld [vmem:[%s2331 + $0x310] sm:$0xff]
      %v2431 = vld [vmem:[%s2331 + $0x318] sm:$0xff]
      %v2432 = vld [vmem:[%s2331 + $0x320] sm:$0xff]
      %v2433 = vld [vmem:[%s2331 + $0x328] sm:$0xff]
      %v2434 = vld [vmem:[%s2331 + $0x330] sm:$0xff]
      %v2435 = vld [vmem:[%s2331 + $0x338] sm:$0xff]
      %v2436 = vld [vmem:[%s2331 + $0x340] sm:$0xff]
      %v2437 = vld [vmem:[%s2331 + $0x348] sm:$0xff]
      %v2438 = vld [vmem:[%s2331 + $0x350] sm:$0xff]
      %v2439 = vld [vmem:[%s2331 + $0x358] sm:$0xff]
      %vm2449 = vcmask 1046528
      %v2450 = vrot.slane %v2322, 1
      %v2451 = vrot.slane %v2325, 1
      %v2452 = vsel %vm2449, %v2450, %v2451
      %v2453 = vrot.slane %v2323, 1
      %v2454 = vrot.slane %v2326, 1
      %v2455 = vsel %vm2449, %v2453, %v2454
      %v2456 = vrot.slane %v2324, 1
      %v2457 = vrot.slane %v2327, 1
      %v2458 = vsel %vm2449, %v2456, %v2457
      %v2459 = vrot.slane %v2328, 1
      %v2460 = vsel %vm2449, %v2451, %v2459
      %v2461 = vrot.slane %v2329, 1
      %v2462 = vsel %vm2449, %v2454, %v2461
      %v2463 = vrot.slane %v2330, 1
      %v2464 = vsel %vm2449, %v2457, %v2463
      %v2469 = vsel %vm200, %v2458, 0
      %v2471 = vsel %vm200, %v2464, 0
      %2473 = vmatpush.msra.mxu0 %v2377
      %2474 = vmatpush.msra.mxu0 %v2374
      %2475 = vmatpush.msra.mxu0 %v2371
      %2476 = vmatpush.msra.mxu0 %v2368
      %2477 = vmatpush.msra.mxu0 %v2365
      %2478 = vmatpush.msra.mxu0 %v2362
      %2479 = vmatpush.msra.mxu0 %v2359
      %2480 = vmatpush.msra.mxu0 %v2356
      %2481 = vmatpush.msra.mxu0 %v2353
      %2482 = vmatpush.msra.mxu0 %v2350
      %2483 = vmatpush.msra.mxu0 %v2347
      %2484 = vmatpush.msra.mxu0 %v2344
      %2485 = vmatpush.msra.mxu0 %v2341
      %2486 = vmatpush.msra.mxu0 %v2338
      %2487 = vmatpush.msra.mxu0 %v2335
      %2488 = vmatpush.msra.mxu0 %v2332
      %2489 = vmatmul.f32.gmra.mxu0 %v2452
      %v2490 = vpop.f32.mrf.mxu0
      %v2491 = vadd.f32 0.0, %v2490
      %2492 = vmatmul.f32.gmra.mxu0 %v2460
      %v2493 = vpop.f32.mrf.mxu0
      %v2494 = vadd.f32 0.0, %v2493
      %2495 = vdwg.mxu0
      %2496 = vmatpush.msra.mxu0 %v2425
      %2497 = vmatpush.msra.mxu0 %v2422
      %2498 = vmatpush.msra.mxu0 %v2419
      %2499 = vmatpush.msra.mxu0 %v2416
      %2500 = vmatpush.msra.mxu0 %v2413
      %2501 = vmatpush.msra.mxu0 %v2410
      %2502 = vmatpush.msra.mxu0 %v2407
      %2503 = vmatpush.msra.mxu0 %v2404
      %2504 = vmatpush.msra.mxu0 %v2401
      %2505 = vmatpush.msra.mxu0 %v2398
      %2506 = vmatpush.msra.mxu0 %v2395
      %2507 = vmatpush.msra.mxu0 %v2392
      %2508 = vmatpush.msra.mxu0 %v2389
      %2509 = vmatpush.msra.mxu0 %v2386
      %2510 = vmatpush.msra.mxu0 %v2383
      %2511 = vmatpush.msra.mxu0 %v2380
      %2512 = vmatmul.f32.gmra.mxu0 %v2455
      %v2513 = vpop.f32.mrf.mxu0
      %v2514 = vadd.f32 %v2491, %v2513
      %2515 = vmatmul.f32.gmra.mxu0 %v2462
      %v2516 = vpop.f32.mrf.mxu0
      %v2517 = vadd.f32 %v2494, %v2516
      %2518 = vdwg.mxu0
      %2519 = vmatpush.msra.mxu0 0.0
      %2520 = vmatpush.msra.mxu0 0.0
      %2521 = vmatpush.msra.mxu0 0.0
      %2522 = vmatpush.msra.mxu0 0.0
      %2523 = vmatpush.msra.mxu0 0.0
      %2524 = vmatpush.msra.mxu0 0.0
      %2525 = vmatpush.msra.mxu0 0.0
      %2526 = vmatpush.msra.mxu0 0.0
      %2527 = vmatpush.msra.mxu0 0.0
      %2528 = vmatpush.msra.mxu0 0.0
      %2529 = vmatpush.msra.mxu0 0.0
      %2530 = vmatpush.msra.mxu0 0.0
      %2531 = vmatpush.msra.mxu0 %v2437
      %2532 = vmatpush.msra.mxu0 %v2434
      %2533 = vmatpush.msra.mxu0 %v2431
      %2534 = vmatpush.msra.mxu0 %v2428
      %2535 = vmatmul.f32.gmra.mxu0 %v2469
      %v2536 = vpop.f32.mrf.mxu0
      %v2537 = vadd.f32 %v2514, %v2536
      %2538 = vmatmul.f32.gmra.mxu0 %v2471
      %v2539 = vpop.f32.mrf.mxu0
      %v2540 = vadd.f32 %v2517, %v2539
      %2541 = vdwg.mxu0
      %2542 = vmatpush.msra.mxu0 %v2378
      %2543 = vmatpush.msra.mxu0 %v2375
      %2544 = vmatpush.msra.mxu0 %v2372
      %2545 = vmatpush.msra.mxu0 %v2369
      %2546 = vmatpush.msra.mxu0 %v2366
      %2547 = vmatpush.msra.mxu0 %v2363
      %2548 = vmatpush.msra.mxu0 %v2360
      %2549 = vmatpush.msra.mxu0 %v2357
      %2550 = vmatpush.msra.mxu0 %v2354
      %2551 = vmatpush.msra.mxu0 %v2351
      %2552 = vmatpush.msra.mxu0 %v2348
      %2553 = vmatpush.msra.mxu0 %v2345
      %2554 = vmatpush.msra.mxu0 %v2342
      %2555 = vmatpush.msra.mxu0 %v2339
      %2556 = vmatpush.msra.mxu0 %v2336
      %2557 = vmatpush.msra.mxu0 %v2333
      %2558 = vmatmul.f32.gmra.mxu0 %v2452
      %v2559 = vpop.f32.mrf.mxu0
      %v2560 = vadd.f32 0.0, %v2559
      %2561 = vmatmul.f32.gmra.mxu0 %v2460
      %v2562 = vpop.f32.mrf.mxu0
      %v2563 = vadd.f32 0.0, %v2562
      %2564 = vdwg.mxu0
      %2565 = vmatpush.msra.mxu0 %v2426
      %2566 = vmatpush.msra.mxu0 %v2423
      %2567 = vmatpush.msra.mxu0 %v2420
      %2568 = vmatpush.msra.mxu0 %v2417
      %2569 = vmatpush.msra.mxu0 %v2414
      %2570 = vmatpush.msra.mxu0 %v2411
      %2571 = vmatpush.msra.mxu0 %v2408
      %2572 = vmatpush.msra.mxu0 %v2405
      %2573 = vmatpush.msra.mxu0 %v2402
      %2574 = vmatpush.msra.mxu0 %v2399
      %2575 = vmatpush.msra.mxu0 %v2396
      %2576 = vmatpush.msra.mxu0 %v2393
      %2577 = vmatpush.msra.mxu0 %v2390
      %2578 = vmatpush.msra.mxu0 %v2387
      %2579 = vmatpush.msra.mxu0 %v2384
      %2580 = vmatpush.msra.mxu0 %v2381
      %2581 = vmatmul.f32.gmra.mxu0 %v2455
      %v2582 = vpop.f32.mrf.mxu0
      %v2583 = vadd.f32 %v2560, %v2582
      %2584 = vmatmul.f32.gmra.mxu0 %v2462
      %v2585 = vpop.f32.mrf.mxu0
      %v2586 = vadd.f32 %v2563, %v2585
      %2587 = vdwg.mxu0
      %2588 = vmatpush.msra.mxu0 0.0
      %2589 = vmatpush.msra.mxu0 0.0
      %2590 = vmatpush.msra.mxu0 0.0
      %2591 = vmatpush.msra.mxu0 0.0
      %2592 = vmatpush.msra.mxu0 0.0
      %2593 = vmatpush.msra.mxu0 0.0
      %2594 = vmatpush.msra.mxu0 0.0
      %2595 = vmatpush.msra.mxu0 0.0
      %2596 = vmatpush.msra.mxu0 0.0
      %2597 = vmatpush.msra.mxu0 0.0
      %2598 = vmatpush.msra.mxu0 0.0
      %2599 = vmatpush.msra.mxu0 0.0
      %2600 = vmatpush.msra.mxu0 %v2438
      %2601 = vmatpush.msra.mxu0 %v2435
      %2602 = vmatpush.msra.mxu0 %v2432
      %2603 = vmatpush.msra.mxu0 %v2429
      %2604 = vmatmul.f32.gmra.mxu0 %v2469
      %v2605 = vpop.f32.mrf.mxu0
      %v2606 = vadd.f32 %v2583, %v2605
      %2607 = vmatmul.f32.gmra.mxu0 %v2471
      %v2608 = vpop.f32.mrf.mxu0
      %v2609 = vadd.f32 %v2586, %v2608
      %2610 = vdwg.mxu0
      %2611 = vmatpush.msra.mxu0 %v2379
      %2612 = vmatpush.msra.mxu0 %v2376
      %2613 = vmatpush.msra.mxu0 %v2373
      %2614 = vmatpush.msra.mxu0 %v2370
      %2615 = vmatpush.msra.mxu0 %v2367
      %2616 = vmatpush.msra.mxu0 %v2364
      %2617 = vmatpush.msra.mxu0 %v2361
      %2618 = vmatpush.msra.mxu0 %v2358
      %2619 = vmatpush.msra.mxu0 %v2355
      %2620 = vmatpush.msra.mxu0 %v2352
      %2621 = vmatpush.msra.mxu0 %v2349
      %2622 = vmatpush.msra.mxu0 %v2346
      %2623 = vmatpush.msra.mxu0 %v2343
      %2624 = vmatpush.msra.mxu0 %v2340
      %2625 = vmatpush.msra.mxu0 %v2337
      %2626 = vmatpush.msra.mxu0 %v2334
      %2627 = vmatmul.f32.gmra.mxu0 %v2452
      %v2628 = vpop.f32.mrf.mxu0
      %v2629 = vadd.f32 0.0, %v2628
      %2630 = vmatmul.f32.gmra.mxu0 %v2460
      %v2631 = vpop.f32.mrf.mxu0
      %v2632 = vadd.f32 0.0, %v2631
      %2633 = vdwg.mxu0
      %2634 = vmatpush.msra.mxu0 %v2427
      %2635 = vmatpush.msra.mxu0 %v2424
      %2636 = vmatpush.msra.mxu0 %v2421
      %2637 = vmatpush.msra.mxu0 %v2418
      %2638 = vmatpush.msra.mxu0 %v2415
      %2639 = vmatpush.msra.mxu0 %v2412
      %2640 = vmatpush.msra.mxu0 %v2409
      %2641 = vmatpush.msra.mxu0 %v2406
      %2642 = vmatpush.msra.mxu0 %v2403
      %2643 = vmatpush.msra.mxu0 %v2400
      %2644 = vmatpush.msra.mxu0 %v2397
      %2645 = vmatpush.msra.mxu0 %v2394
      %2646 = vmatpush.msra.mxu0 %v2391
      %2647 = vmatpush.msra.mxu0 %v2388
      %2648 = vmatpush.msra.mxu0 %v2385
      %2649 = vmatpush.msra.mxu0 %v2382
      %2650 = vmatmul.f32.gmra.mxu0 %v2455
      %v2651 = vpop.f32.mrf.mxu0
      %v2652 = vadd.f32 %v2629, %v2651
      %2653 = vmatmul.f32.gmra.mxu0 %v2462
      %v2654 = vpop.f32.mrf.mxu0
      %v2655 = vadd.f32 %v2632, %v2654
      %2656 = vdwg.mxu0
      %2657 = vmatpush.msra.mxu0 0.0
      %2658 = vmatpush.msra.mxu0 0.0
      %2659 = vmatpush.msra.mxu0 0.0
      %2660 = vmatpush.msra.mxu0 0.0
      %2661 = vmatpush.msra.mxu0 0.0
      %2662 = vmatpush.msra.mxu0 0.0
      %2663 = vmatpush.msra.mxu0 0.0
      %2664 = vmatpush.msra.mxu0 0.0
      %2665 = vmatpush.msra.mxu0 0.0
      %2666 = vmatpush.msra.mxu0 0.0
      %2667 = vmatpush.msra.mxu0 0.0
      %2668 = vmatpush.msra.mxu0 0.0
      %2669 = vmatpush.msra.mxu0 %v2439
      %2670 = vmatpush.msra.mxu0 %v2436
      %2671 = vmatpush.msra.mxu0 %v2433
      %2672 = vmatpush.msra.mxu0 %v2430
      %2673 = vmatmul.f32.gmra.mxu0 %v2469
      %v2674 = vpop.f32.mrf.mxu0
      %v2675 = vadd.f32 %v2652, %v2674
      %2676 = vmatmul.f32.gmra.mxu0 %v2471
      %v2677 = vpop.f32.mrf.mxu0
      %v2678 = vadd.f32 %v2655, %v2677
      %2679 = vdwg.mxu0
      %v2680 = vadd.f32 %v2316, %v2537
      %v2681 = vadd.f32 %v2317, %v2606
      %v2682 = vadd.f32 %v2318, %v2675
      %v2683 = vadd.f32 %v2319, %v2540
      %v2684 = vadd.f32 %v2320, %v2609
      %v2685 = vadd.f32 %v2321, %v2678
      %v2686 = vld [vmem:[#allocation2 + $0x18] sm:$0xfc]
      %v2687 = vld [vmem:[#allocation2 + $0x20] sm:$0xfc]
      %v2688 = vld [vmem:[#allocation2 + $0x28] sm:$0xfc]
      %v2689 = vld [vmem:[#allocation2 + $0x48] sm:$0x3]
      %v2690 = vld [vmem:[#allocation2 + $0x50] sm:$0x3]
      %v2691 = vld [vmem:[#allocation2 + $0x58] sm:$0x3]
      %s2692 = scalar_lea.vmem %s2, 4320
      %v2693 = vld [vmem:[%s2692] sm:$0xff]
      %v2694 = vld [vmem:[%s2692 + $0x8] sm:$0xff]
      %v2695 = vld [vmem:[%s2692 + $0x10] sm:$0xff]
      %v2696 = vld [vmem:[%s2692 + $0x18] sm:$0xff]
      %v2697 = vld [vmem:[%s2692 + $0x20] sm:$0xff]
      %v2698 = vld [vmem:[%s2692 + $0x28] sm:$0xff]
      %v2699 = vld [vmem:[%s2692 + $0x30] sm:$0xff]
      %v2700 = vld [vmem:[%s2692 + $0x38] sm:$0xff]
      %v2701 = vld [vmem:[%s2692 + $0x40] sm:$0xff]
      %v2702 = vld [vmem:[%s2692 + $0x48] sm:$0xff]
      %v2703 = vld [vmem:[%s2692 + $0x50] sm:$0xff]
      %v2704 = vld [vmem:[%s2692 + $0x58] sm:$0xff]
      %v2705 = vld [vmem:[%s2692 + $0x60] sm:$0xff]
      %v2706 = vld [vmem:[%s2692 + $0x68] sm:$0xff]
      %v2707 = vld [vmem:[%s2692 + $0x70] sm:$0xff]
      %v2708 = vld [vmem:[%s2692 + $0x78] sm:$0xff]
      %v2709 = vld [vmem:[%s2692 + $0x80] sm:$0xff]
      %v2710 = vld [vmem:[%s2692 + $0x88] sm:$0xff]
      %v2711 = vld [vmem:[%s2692 + $0x90] sm:$0xff]
      %v2712 = vld [vmem:[%s2692 + $0x98] sm:$0xff]
      %v2713 = vld [vmem:[%s2692 + $0xa0] sm:$0xff]
      %v2714 = vld [vmem:[%s2692 + $0xa8] sm:$0xff]
      %v2715 = vld [vmem:[%s2692 + $0xb0] sm:$0xff]
      %v2716 = vld [vmem:[%s2692 + $0xb8] sm:$0xff]
      %v2717 = vld [vmem:[%s2692 + $0xc0] sm:$0xff]
      %v2718 = vld [vmem:[%s2692 + $0xc8] sm:$0xff]
      %v2719 = vld [vmem:[%s2692 + $0xd0] sm:$0xff]
      %v2720 = vld [vmem:[%s2692 + $0xd8] sm:$0xff]
      %v2721 = vld [vmem:[%s2692 + $0xe0] sm:$0xff]
      %v2722 = vld [vmem:[%s2692 + $0xe8] sm:$0xff]
      %v2723 = vld [vmem:[%s2692 + $0xf0] sm:$0xff]
      %v2724 = vld [vmem:[%s2692 + $0xf8] sm:$0xff]
      %v2725 = vld [vmem:[%s2692 + $0x100] sm:$0xff]
      %v2726 = vld [vmem:[%s2692 + $0x108] sm:$0xff]
      %v2727 = vld [vmem:[%s2692 + $0x110] sm:$0xff]
      %v2728 = vld [vmem:[%s2692 + $0x118] sm:$0xff]
      %v2729 = vld [vmem:[%s2692 + $0x120] sm:$0xff]
      %v2730 = vld [vmem:[%s2692 + $0x128] sm:$0xff]
      %v2731 = vld [vmem:[%s2692 + $0x130] sm:$0xff]
      %v2732 = vld [vmem:[%s2692 + $0x138] sm:$0xff]
      %v2733 = vld [vmem:[%s2692 + $0x140] sm:$0xff]
      %v2734 = vld [vmem:[%s2692 + $0x148] sm:$0xff]
      %v2735 = vld [vmem:[%s2692 + $0x150] sm:$0xff]
      %v2736 = vld [vmem:[%s2692 + $0x158] sm:$0xff]
      %v2737 = vld [vmem:[%s2692 + $0x160] sm:$0xff]
      %v2738 = vld [vmem:[%s2692 + $0x168] sm:$0xff]
      %v2739 = vld [vmem:[%s2692 + $0x170] sm:$0xff]
      %v2740 = vld [vmem:[%s2692 + $0x178] sm:$0xff]
      %v2741 = vld [vmem:[%s2692 + $0x180] sm:$0xff]
      %v2742 = vld [vmem:[%s2692 + $0x188] sm:$0xff]
      %v2743 = vld [vmem:[%s2692 + $0x190] sm:$0xff]
      %v2744 = vld [vmem:[%s2692 + $0x198] sm:$0xff]
      %v2745 = vld [vmem:[%s2692 + $0x1a0] sm:$0xff]
      %v2746 = vld [vmem:[%s2692 + $0x1a8] sm:$0xff]
      %v2747 = vld [vmem:[%s2692 + $0x1b0] sm:$0xff]
      %v2748 = vld [vmem:[%s2692 + $0x1b8] sm:$0xff]
      %v2749 = vld [vmem:[%s2692 + $0x1c0] sm:$0xff]
      %v2750 = vld [vmem:[%s2692 + $0x1c8] sm:$0xff]
      %v2751 = vld [vmem:[%s2692 + $0x1d0] sm:$0xff]
      %v2752 = vld [vmem:[%s2692 + $0x1d8] sm:$0xff]
      %v2753 = vld [vmem:[%s2692 + $0x1e0] sm:$0xff]
      %v2754 = vld [vmem:[%s2692 + $0x1e8] sm:$0xff]
      %v2755 = vld [vmem:[%s2692 + $0x1f0] sm:$0xff]
      %v2756 = vld [vmem:[%s2692 + $0x1f8] sm:$0xff]
      %v2757 = vld [vmem:[%s2692 + $0x200] sm:$0xff]
      %v2758 = vld [vmem:[%s2692 + $0x208] sm:$0xff]
      %v2759 = vld [vmem:[%s2692 + $0x210] sm:$0xff]
      %v2760 = vld [vmem:[%s2692 + $0x218] sm:$0xff]
      %v2761 = vld [vmem:[%s2692 + $0x220] sm:$0xff]
      %v2762 = vld [vmem:[%s2692 + $0x228] sm:$0xff]
      %v2763 = vld [vmem:[%s2692 + $0x230] sm:$0xff]
      %v2764 = vld [vmem:[%s2692 + $0x238] sm:$0xff]
      %v2765 = vld [vmem:[%s2692 + $0x240] sm:$0xff]
      %v2766 = vld [vmem:[%s2692 + $0x248] sm:$0xff]
      %v2767 = vld [vmem:[%s2692 + $0x250] sm:$0xff]
      %v2768 = vld [vmem:[%s2692 + $0x258] sm:$0xff]
      %v2769 = vld [vmem:[%s2692 + $0x260] sm:$0xff]
      %v2770 = vld [vmem:[%s2692 + $0x268] sm:$0xff]
      %v2771 = vld [vmem:[%s2692 + $0x270] sm:$0xff]
      %v2772 = vld [vmem:[%s2692 + $0x278] sm:$0xff]
      %v2773 = vld [vmem:[%s2692 + $0x280] sm:$0xff]
      %v2774 = vld [vmem:[%s2692 + $0x288] sm:$0xff]
      %v2775 = vld [vmem:[%s2692 + $0x290] sm:$0xff]
      %v2776 = vld [vmem:[%s2692 + $0x298] sm:$0xff]
      %v2777 = vld [vmem:[%s2692 + $0x2a0] sm:$0xff]
      %v2778 = vld [vmem:[%s2692 + $0x2a8] sm:$0xff]
      %v2779 = vld [vmem:[%s2692 + $0x2b0] sm:$0xff]
      %v2780 = vld [vmem:[%s2692 + $0x2b8] sm:$0xff]
      %v2781 = vld [vmem:[%s2692 + $0x2c0] sm:$0xff]
      %v2782 = vld [vmem:[%s2692 + $0x2c8] sm:$0xff]
      %v2783 = vld [vmem:[%s2692 + $0x2d0] sm:$0xff]
      %v2784 = vld [vmem:[%s2692 + $0x2d8] sm:$0xff]
      %v2785 = vld [vmem:[%s2692 + $0x2e0] sm:$0xff]
      %v2786 = vld [vmem:[%s2692 + $0x2e8] sm:$0xff]
      %v2787 = vld [vmem:[%s2692 + $0x2f0] sm:$0xff]
      %v2788 = vld [vmem:[%s2692 + $0x2f8] sm:$0xff]
      %v2789 = vld [vmem:[%s2692 + $0x300] sm:$0xff]
      %v2790 = vld [vmem:[%s2692 + $0x308] sm:$0xff]
      %v2791 = vld [vmem:[%s2692 + $0x310] sm:$0xff]
      %v2792 = vld [vmem:[%s2692 + $0x318] sm:$0xff]
      %v2793 = vld [vmem:[%s2692 + $0x320] sm:$0xff]
      %v2794 = vld [vmem:[%s2692 + $0x328] sm:$0xff]
      %v2795 = vld [vmem:[%s2692 + $0x330] sm:$0xff]
      %v2796 = vld [vmem:[%s2692 + $0x338] sm:$0xff]
      %v2797 = vld [vmem:[%s2692 + $0x340] sm:$0xff]
      %v2798 = vld [vmem:[%s2692 + $0x348] sm:$0xff]
      %v2799 = vld [vmem:[%s2692 + $0x350] sm:$0xff]
      %v2800 = vld [vmem:[%s2692 + $0x358] sm:$0xff]
      %vm2807 = vcmask 1045504
      %v2808 = vrot.slane %v2686, 2
      %v2809 = vrot.slane %v2325, 2
      %v2810 = vsel %vm2807, %v2808, %v2809
      %v2811 = vrot.slane %v2687, 2
      %v2812 = vrot.slane %v2326, 2
      %v2813 = vsel %vm2807, %v2811, %v2812
      %v2814 = vrot.slane %v2688, 2
      %v2815 = vrot.slane %v2327, 2
      %v2816 = vsel %vm2807, %v2814, %v2815
      %v2817 = vrot.slane %v2689, 2
      %v2818 = vsel %vm2807, %v2809, %v2817
      %v2819 = vrot.slane %v2690, 2
      %v2820 = vsel %vm2807, %v2812, %v2819
      %v2821 = vrot.slane %v2691, 2
      %v2822 = vsel %vm2807, %v2815, %v2821
      %v2827 = vsel %vm200, %v2816, 0
      %v2829 = vsel %vm200, %v2822, 0
      %2831 = vmatpush.msra.mxu0 %v2738
      %2832 = vmatpush.msra.mxu0 %v2735
      %2833 = vmatpush.msra.mxu0 %v2732
      %2834 = vmatpush.msra.mxu0 %v2729
      %2835 = vmatpush.msra.mxu0 %v2726
      %2836 = vmatpush.msra.mxu0 %v2723
      %2837 = vmatpush.msra.mxu0 %v2720
      %2838 = vmatpush.msra.mxu0 %v2717
      %2839 = vmatpush.msra.mxu0 %v2714
      %2840 = vmatpush.msra.mxu0 %v2711
      %2841 = vmatpush.msra.mxu0 %v2708
      %2842 = vmatpush.msra.mxu0 %v2705
      %2843 = vmatpush.msra.mxu0 %v2702
      %2844 = vmatpush.msra.mxu0 %v2699
      %2845 = vmatpush.msra.mxu0 %v2696
      %2846 = vmatpush.msra.mxu0 %v2693
      %2847 = vmatmul.f32.gmra.mxu0 %v2810
      %v2848 = vpop.f32.mrf.mxu0
      %v2849 = vadd.f32 0.0, %v2848
      %2850 = vmatmul.f32.gmra.mxu0 %v2818
      %v2851 = vpop.f32.mrf.mxu0
      %v2852 = vadd.f32 0.0, %v2851
      %2853 = vdwg.mxu0
      %2854 = vmatpush.msra.mxu0 %v2786
      %2855 = vmatpush.msra.mxu0 %v2783
      %2856 = vmatpush.msra.mxu0 %v2780
      %2857 = vmatpush.msra.mxu0 %v2777
      %2858 = vmatpush.msra.mxu0 %v2774
      %2859 = vmatpush.msra.mxu0 %v2771
      %2860 = vmatpush.msra.mxu0 %v2768
      %2861 = vmatpush.msra.mxu0 %v2765
      %2862 = vmatpush.msra.mxu0 %v2762
      %2863 = vmatpush.msra.mxu0 %v2759
      %2864 = vmatpush.msra.mxu0 %v2756
      %2865 = vmatpush.msra.mxu0 %v2753
      %2866 = vmatpush.msra.mxu0 %v2750
      %2867 = vmatpush.msra.mxu0 %v2747
      %2868 = vmatpush.msra.mxu0 %v2744
      %2869 = vmatpush.msra.mxu0 %v2741
      %2870 = vmatmul.f32.gmra.mxu0 %v2813
      %v2871 = vpop.f32.mrf.mxu0
      %v2872 = vadd.f32 %v2849, %v2871
      %2873 = vmatmul.f32.gmra.mxu0 %v2820
      %v2874 = vpop.f32.mrf.mxu0
      %v2875 = vadd.f32 %v2852, %v2874
      %2876 = vdwg.mxu0
      %2877 = vmatpush.msra.mxu0 0.0
      %2878 = vmatpush.msra.mxu0 0.0
      %2879 = vmatpush.msra.mxu0 0.0
      %2880 = vmatpush.msra.mxu0 0.0
      %2881 = vmatpush.msra.mxu0 0.0
      %2882 = vmatpush.msra.mxu0 0.0
      %2883 = vmatpush.msra.mxu0 0.0
      %2884 = vmatpush.msra.mxu0 0.0
      %2885 = vmatpush.msra.mxu0 0.0
      %2886 = vmatpush.msra.mxu0 0.0
      %2887 = vmatpush.msra.mxu0 0.0
      %2888 = vmatpush.msra.mxu0 0.0
      %2889 = vmatpush.msra.mxu0 %v2798
      %2890 = vmatpush.msra.mxu0 %v2795
      %2891 = vmatpush.msra.mxu0 %v2792
      %2892 = vmatpush.msra.mxu0 %v2789
      %2893 = vmatmul.f32.gmra.mxu0 %v2827
      %v2894 = vpop.f32.mrf.mxu0
      %v2895 = vadd.f32 %v2872, %v2894
      %2896 = vmatmul.f32.gmra.mxu0 %v2829
      %v2897 = vpop.f32.mrf.mxu0
      %v2898 = vadd.f32 %v2875, %v2897
      %2899 = vdwg.mxu0
      %2900 = vmatpush.msra.mxu0 %v2739
      %2901 = vmatpush.msra.mxu0 %v2736
      %2902 = vmatpush.msra.mxu0 %v2733
      %2903 = vmatpush.msra.mxu0 %v2730
      %2904 = vmatpush.msra.mxu0 %v2727
      %2905 = vmatpush.msra.mxu0 %v2724
      %2906 = vmatpush.msra.mxu0 %v2721
      %2907 = vmatpush.msra.mxu0 %v2718
      %2908 = vmatpush.msra.mxu0 %v2715
      %2909 = vmatpush.msra.mxu0 %v2712
      %2910 = vmatpush.msra.mxu0 %v2709
      %2911 = vmatpush.msra.mxu0 %v2706
      %2912 = vmatpush.msra.mxu0 %v2703
      %2913 = vmatpush.msra.mxu0 %v2700
      %2914 = vmatpush.msra.mxu0 %v2697
      %2915 = vmatpush.msra.mxu0 %v2694
      %2916 = vmatmul.f32.gmra.mxu0 %v2810
      %v2917 = vpop.f32.mrf.mxu0
      %v2918 = vadd.f32 0.0, %v2917
      %2919 = vmatmul.f32.gmra.mxu0 %v2818
      %v2920 = vpop.f32.mrf.mxu0
      %v2921 = vadd.f32 0.0, %v2920
      %2922 = vdwg.mxu0
      %2923 = vmatpush.msra.mxu0 %v2787
      %2924 = vmatpush.msra.mxu0 %v2784
      %2925 = vmatpush.msra.mxu0 %v2781
      %2926 = vmatpush.msra.mxu0 %v2778
      %2927 = vmatpush.msra.mxu0 %v2775
      %2928 = vmatpush.msra.mxu0 %v2772
      %2929 = vmatpush.msra.mxu0 %v2769
      %2930 = vmatpush.msra.mxu0 %v2766
      %2931 = vmatpush.msra.mxu0 %v2763
      %2932 = vmatpush.msra.mxu0 %v2760
      %2933 = vmatpush.msra.mxu0 %v2757
      %2934 = vmatpush.msra.mxu0 %v2754
      %2935 = vmatpush.msra.mxu0 %v2751
      %2936 = vmatpush.msra.mxu0 %v2748
      %2937 = vmatpush.msra.mxu0 %v2745
      %2938 = vmatpush.msra.mxu0 %v2742
      %2939 = vmatmul.f32.gmra.mxu0 %v2813
      %v2940 = vpop.f32.mrf.mxu0
      %v2941 = vadd.f32 %v2918, %v2940
      %2942 = vmatmul.f32.gmra.mxu0 %v2820
      %v2943 = vpop.f32.mrf.mxu0
      %v2944 = vadd.f32 %v2921, %v2943
      %2945 = vdwg.mxu0
      %2946 = vmatpush.msra.mxu0 0.0
      %2947 = vmatpush.msra.mxu0 0.0
      %2948 = vmatpush.msra.mxu0 0.0
      %2949 = vmatpush.msra.mxu0 0.0
      %2950 = vmatpush.msra.mxu0 0.0
      %2951 = vmatpush.msra.mxu0 0.0
      %2952 = vmatpush.msra.mxu0 0.0
      %2953 = vmatpush.msra.mxu0 0.0
      %2954 = vmatpush.msra.mxu0 0.0
      %2955 = vmatpush.msra.mxu0 0.0
      %2956 = vmatpush.msra.mxu0 0.0
      %2957 = vmatpush.msra.mxu0 0.0
      %2958 = vmatpush.msra.mxu0 %v2799
      %2959 = vmatpush.msra.mxu0 %v2796
      %2960 = vmatpush.msra.mxu0 %v2793
      %2961 = vmatpush.msra.mxu0 %v2790
      %2962 = vmatmul.f32.gmra.mxu0 %v2827
      %v2963 = vpop.f32.mrf.mxu0
      %v2964 = vadd.f32 %v2941, %v2963
      %2965 = vmatmul.f32.gmra.mxu0 %v2829
      %v2966 = vpop.f32.mrf.mxu0
      %v2967 = vadd.f32 %v2944, %v2966
      %2968 = vdwg.mxu0
      %2969 = vmatpush.msra.mxu0 %v2740
      %2970 = vmatpush.msra.mxu0 %v2737
      %2971 = vmatpush.msra.mxu0 %v2734
      %2972 = vmatpush.msra.mxu0 %v2731
      %2973 = vmatpush.msra.mxu0 %v2728
      %2974 = vmatpush.msra.mxu0 %v2725
      %2975 = vmatpush.msra.mxu0 %v2722
      %2976 = vmatpush.msra.mxu0 %v2719
      %2977 = vmatpush.msra.mxu0 %v2716
      %2978 = vmatpush.msra.mxu0 %v2713
      %2979 = vmatpush.msra.mxu0 %v2710
      %2980 = vmatpush.msra.mxu0 %v2707
      %2981 = vmatpush.msra.mxu0 %v2704
      %2982 = vmatpush.msra.mxu0 %v2701
      %2983 = vmatpush.msra.mxu0 %v2698
      %2984 = vmatpush.msra.mxu0 %v2695
      %2985 = vmatmul.f32.gmra.mxu0 %v2810
      %v2986 = vpop.f32.mrf.mxu0
      %v2987 = vadd.f32 0.0, %v2986
      %2988 = vmatmul.f32.gmra.mxu0 %v2818
      %v2989 = vpop.f32.mrf.mxu0
      %v2990 = vadd.f32 0.0, %v2989
      %2991 = vdwg.mxu0
      %2992 = vmatpush.msra.mxu0 %v2788
      %2993 = vmatpush.msra.mxu0 %v2785
      %2994 = vmatpush.msra.mxu0 %v2782
      %2995 = vmatpush.msra.mxu0 %v2779
      %2996 = vmatpush.msra.mxu0 %v2776
      %2997 = vmatpush.msra.mxu0 %v2773
      %2998 = vmatpush.msra.mxu0 %v2770
      %2999 = vmatpush.msra.mxu0 %v2767
      %3000 = vmatpush.msra.mxu0 %v2764
      %3001 = vmatpush.msra.mxu0 %v2761
      %3002 = vmatpush.msra.mxu0 %v2758
      %3003 = vmatpush.msra.mxu0 %v2755
      %3004 = vmatpush.msra.mxu0 %v2752
      %3005 = vmatpush.msra.mxu0 %v2749
      %3006 = vmatpush.msra.mxu0 %v2746
      %3007 = vmatpush.msra.mxu0 %v2743
      %3008 = vmatmul.f32.gmra.mxu0 %v2813
      %v3009 = vpop.f32.mrf.mxu0
      %v3010 = vadd.f32 %v2987, %v3009
      %3011 = vmatmul.f32.gmra.mxu0 %v2820
      %v3012 = vpop.f32.mrf.mxu0
      %v3013 = vadd.f32 %v2990, %v3012
      %3014 = vdwg.mxu0
      %3015 = vmatpush.msra.mxu0 0.0
      %3016 = vmatpush.msra.mxu0 0.0
      %3017 = vmatpush.msra.mxu0 0.0
      %3018 = vmatpush.msra.mxu0 0.0
      %3019 = vmatpush.msra.mxu0 0.0
      %3020 = vmatpush.msra.mxu0 0.0
      %3021 = vmatpush.msra.mxu0 0.0
      %3022 = vmatpush.msra.mxu0 0.0
      %3023 = vmatpush.msra.mxu0 0.0
      %3024 = vmatpush.msra.mxu0 0.0
      %3025 = vmatpush.msra.mxu0 0.0
      %3026 = vmatpush.msra.mxu0 0.0
      %3027 = vmatpush.msra.mxu0 %v2800
      %3028 = vmatpush.msra.mxu0 %v2797
      %3029 = vmatpush.msra.mxu0 %v2794
      %3030 = vmatpush.msra.mxu0 %v2791
      %3031 = vmatmul.f32.gmra.mxu0 %v2827
      %v3032 = vpop.f32.mrf.mxu0
      %v3033 = vadd.f32 %v3010, %v3032
      %3034 = vmatmul.f32.gmra.mxu0 %v2829
      %v3035 = vpop.f32.mrf.mxu0
      %v3036 = vadd.f32 %v3013, %v3035
      %3037 = vdwg.mxu0
      %v3038 = vadd.f32 %v2680, %v2895
      %v3039 = vadd.f32 %v2681, %v2964
      %v3040 = vadd.f32 %v2682, %v3033
      %v3041 = vadd.f32 %v2683, %v2898
      %v3042 = vadd.f32 %v2684, %v2967
      %v3043 = vadd.f32 %v2685, %v3036
      %v3044 = vld [vmem:[#allocation2 + $0x18] sm:$0xf8]
      %v3045 = vld [vmem:[#allocation2 + $0x20] sm:$0xf8]
      %v3046 = vld [vmem:[#allocation2 + $0x28] sm:$0xf8]
      %v3047 = vld [vmem:[#allocation2 + $0x48] sm:$0x7]
      %v3048 = vld [vmem:[#allocation2 + $0x50] sm:$0x7]
      %v3049 = vld [vmem:[#allocation2 + $0x58] sm:$0x7]
      %s3050 = scalar_lea.vmem %s2, 5184
      %v3051 = vld [vmem:[%s3050] sm:$0xff]
      %v3052 = vld [vmem:[%s3050 + $0x8] sm:$0xff]
      %v3053 = vld [vmem:[%s3050 + $0x10] sm:$0xff]
      %v3054 = vld [vmem:[%s3050 + $0x18] sm:$0xff]
      %v3055 = vld [vmem:[%s3050 + $0x20] sm:$0xff]
      %v3056 = vld [vmem:[%s3050 + $0x28] sm:$0xff]
      %v3057 = vld [vmem:[%s3050 + $0x30] sm:$0xff]
      %v3058 = vld [vmem:[%s3050 + $0x38] sm:$0xff]
      %v3059 = vld [vmem:[%s3050 + $0x40] sm:$0xff]
      %v3060 = vld [vmem:[%s3050 + $0x48] sm:$0xff]
      %v3061 = vld [vmem:[%s3050 + $0x50] sm:$0xff]
      %v3062 = vld [vmem:[%s3050 + $0x58] sm:$0xff]
      %v3063 = vld [vmem:[%s3050 + $0x60] sm:$0xff]
      %v3064 = vld [vmem:[%s3050 + $0x68] sm:$0xff]
      %v3065 = vld [vmem:[%s3050 + $0x70] sm:$0xff]
      %v3066 = vld [vmem:[%s3050 + $0x78] sm:$0xff]
      %v3067 = vld [vmem:[%s3050 + $0x80] sm:$0xff]
      %v3068 = vld [vmem:[%s3050 + $0x88] sm:$0xff]
      %v3069 = vld [vmem:[%s3050 + $0x90] sm:$0xff]
      %v3070 = vld [vmem:[%s3050 + $0x98] sm:$0xff]
      %v3071 = vld [vmem:[%s3050 + $0xa0] sm:$0xff]
      %v3072 = vld [vmem:[%s3050 + $0xa8] sm:$0xff]
      %v3073 = vld [vmem:[%s3050 + $0xb0] sm:$0xff]
      %v3074 = vld [vmem:[%s3050 + $0xb8] sm:$0xff]
      %v3075 = vld [vmem:[%s3050 + $0xc0] sm:$0xff]
      %v3076 = vld [vmem:[%s3050 + $0xc8] sm:$0xff]
      %v3077 = vld [vmem:[%s3050 + $0xd0] sm:$0xff]
      %v3078 = vld [vmem:[%s3050 + $0xd8] sm:$0xff]
      %v3079 = vld [vmem:[%s3050 + $0xe0] sm:$0xff]
      %v3080 = vld [vmem:[%s3050 + $0xe8] sm:$0xff]
      %v3081 = vld [vmem:[%s3050 + $0xf0] sm:$0xff]
      %v3082 = vld [vmem:[%s3050 + $0xf8] sm:$0xff]
      %v3083 = vld [vmem:[%s3050 + $0x100] sm:$0xff]
      %v3084 = vld [vmem:[%s3050 + $0x108] sm:$0xff]
      %v3085 = vld [vmem:[%s3050 + $0x110] sm:$0xff]
      %v3086 = vld [vmem:[%s3050 + $0x118] sm:$0xff]
      %v3087 = vld [vmem:[%s3050 + $0x120] sm:$0xff]
      %v3088 = vld [vmem:[%s3050 + $0x128] sm:$0xff]
      %v3089 = vld [vmem:[%s3050 + $0x130] sm:$0xff]
      %v3090 = vld [vmem:[%s3050 + $0x138] sm:$0xff]
      %v3091 = vld [vmem:[%s3050 + $0x140] sm:$0xff]
      %v3092 = vld [vmem:[%s3050 + $0x148] sm:$0xff]
      %v3093 = vld [vmem:[%s3050 + $0x150] sm:$0xff]
      %v3094 = vld [vmem:[%s3050 + $0x158] sm:$0xff]
      %v3095 = vld [vmem:[%s3050 + $0x160] sm:$0xff]
      %v3096 = vld [vmem:[%s3050 + $0x168] sm:$0xff]
      %v3097 = vld [vmem:[%s3050 + $0x170] sm:$0xff]
      %v3098 = vld [vmem:[%s3050 + $0x178] sm:$0xff]
      %v3099 = vld [vmem:[%s3050 + $0x180] sm:$0xff]
      %v3100 = vld [vmem:[%s3050 + $0x188] sm:$0xff]
      %v3101 = vld [vmem:[%s3050 + $0x190] sm:$0xff]
      %v3102 = vld [vmem:[%s3050 + $0x198] sm:$0xff]
      %v3103 = vld [vmem:[%s3050 + $0x1a0] sm:$0xff]
      %v3104 = vld [vmem:[%s3050 + $0x1a8] sm:$0xff]
      %v3105 = vld [vmem:[%s3050 + $0x1b0] sm:$0xff]
      %v3106 = vld [vmem:[%s3050 + $0x1b8] sm:$0xff]
      %v3107 = vld [vmem:[%s3050 + $0x1c0] sm:$0xff]
      %v3108 = vld [vmem:[%s3050 + $0x1c8] sm:$0xff]
      %v3109 = vld [vmem:[%s3050 + $0x1d0] sm:$0xff]
      %v3110 = vld [vmem:[%s3050 + $0x1d8] sm:$0xff]
      %v3111 = vld [vmem:[%s3050 + $0x1e0] sm:$0xff]
      %v3112 = vld [vmem:[%s3050 + $0x1e8] sm:$0xff]
      %v3113 = vld [vmem:[%s3050 + $0x1f0] sm:$0xff]
      %v3114 = vld [vmem:[%s3050 + $0x1f8] sm:$0xff]
      %v3115 = vld [vmem:[%s3050 + $0x200] sm:$0xff]
      %v3116 = vld [vmem:[%s3050 + $0x208] sm:$0xff]
      %v3117 = vld [vmem:[%s3050 + $0x210] sm:$0xff]
      %v3118 = vld [vmem:[%s3050 + $0x218] sm:$0xff]
      %v3119 = vld [vmem:[%s3050 + $0x220] sm:$0xff]
      %v3120 = vld [vmem:[%s3050 + $0x228] sm:$0xff]
      %v3121 = vld [vmem:[%s3050 + $0x230] sm:$0xff]
      %v3122 = vld [vmem:[%s3050 + $0x238] sm:$0xff]
      %v3123 = vld [vmem:[%s3050 + $0x240] sm:$0xff]
      %v3124 = vld [vmem:[%s3050 + $0x248] sm:$0xff]
      %v3125 = vld [vmem:[%s3050 + $0x250] sm:$0xff]
      %v3126 = vld [vmem:[%s3050 + $0x258] sm:$0xff]
      %v3127 = vld [vmem:[%s3050 + $0x260] sm:$0xff]
      %v3128 = vld [vmem:[%s3050 + $0x268] sm:$0xff]
      %v3129 = vld [vmem:[%s3050 + $0x270] sm:$0xff]
      %v3130 = vld [vmem:[%s3050 + $0x278] sm:$0xff]
      %v3131 = vld [vmem:[%s3050 + $0x280] sm:$0xff]
      %v3132 = vld [vmem:[%s3050 + $0x288] sm:$0xff]
      %v3133 = vld [vmem:[%s3050 + $0x290] sm:$0xff]
      %v3134 = vld [vmem:[%s3050 + $0x298] sm:$0xff]
      %v3135 = vld [vmem:[%s3050 + $0x2a0] sm:$0xff]
      %v3136 = vld [vmem:[%s3050 + $0x2a8] sm:$0xff]
      %v3137 = vld [vmem:[%s3050 + $0x2b0] sm:$0xff]
      %v3138 = vld [vmem:[%s3050 + $0x2b8] sm:$0xff]
      %v3139 = vld [vmem:[%s3050 + $0x2c0] sm:$0xff]
      %v3140 = vld [vmem:[%s3050 + $0x2c8] sm:$0xff]
      %v3141 = vld [vmem:[%s3050 + $0x2d0] sm:$0xff]
      %v3142 = vld [vmem:[%s3050 + $0x2d8] sm:$0xff]
      %v3143 = vld [vmem:[%s3050 + $0x2e0] sm:$0xff]
      %v3144 = vld [vmem:[%s3050 + $0x2e8] sm:$0xff]
      %v3145 = vld [vmem:[%s3050 + $0x2f0] sm:$0xff]
      %v3146 = vld [vmem:[%s3050 + $0x2f8] sm:$0xff]
      %v3147 = vld [vmem:[%s3050 + $0x300] sm:$0xff]
      %v3148 = vld [vmem:[%s3050 + $0x308] sm:$0xff]
      %v3149 = vld [vmem:[%s3050 + $0x310] sm:$0xff]
      %v3150 = vld [vmem:[%s3050 + $0x318] sm:$0xff]
      %v3151 = vld [vmem:[%s3050 + $0x320] sm:$0xff]
      %v3152 = vld [vmem:[%s3050 + $0x328] sm:$0xff]
      %v3153 = vld [vmem:[%s3050 + $0x330] sm:$0xff]
      %v3154 = vld [vmem:[%s3050 + $0x338] sm:$0xff]
      %v3155 = vld [vmem:[%s3050 + $0x340] sm:$0xff]
      %v3156 = vld [vmem:[%s3050 + $0x348] sm:$0xff]
      %v3157 = vld [vmem:[%s3050 + $0x350] sm:$0xff]
      %v3158 = vld [vmem:[%s3050 + $0x358] sm:$0xff]
      %vm3165 = vcmask 1044480
      %v3166 = vrot.slane %v3044, 3
      %v3167 = vrot.slane %v2325, 3
      %v3168 = vsel %vm3165, %v3166, %v3167
      %v3169 = vrot.slane %v3045, 3
      %v3170 = vrot.slane %v2326, 3
      %v3171 = vsel %vm3165, %v3169, %v3170
      %v3172 = vrot.slane %v3046, 3
      %v3173 = vrot.slane %v2327, 3
      %v3174 = vsel %vm3165, %v3172, %v3173
      %v3175 = vrot.slane %v3047, 3
      %v3176 = vsel %vm3165, %v3167, %v3175
      %v3177 = vrot.slane %v3048, 3
      %v3178 = vsel %vm3165, %v3170, %v3177
      %v3179 = vrot.slane %v3049, 3
      %v3180 = vsel %vm3165, %v3173, %v3179
      %v3185 = vsel %vm200, %v3174, 0
      %v3187 = vsel %vm200, %v3180, 0
      %3189 = vmatpush.msra.mxu0 %v3096
      %3190 = vmatpush.msra.mxu0 %v3093
      %3191 = vmatpush.msra.mxu0 %v3090
      %3192 = vmatpush.msra.mxu0 %v3087
      %3193 = vmatpush.msra.mxu0 %v3084
      %3194 = vmatpush.msra.mxu0 %v3081
      %3195 = vmatpush.msra.mxu0 %v3078
      %3196 = vmatpush.msra.mxu0 %v3075
      %3197 = vmatpush.msra.mxu0 %v3072
      %3198 = vmatpush.msra.mxu0 %v3069
      %3199 = vmatpush.msra.mxu0 %v3066
      %3200 = vmatpush.msra.mxu0 %v3063
      %3201 = vmatpush.msra.mxu0 %v3060
      %3202 = vmatpush.msra.mxu0 %v3057
      %3203 = vmatpush.msra.mxu0 %v3054
      %3204 = vmatpush.msra.mxu0 %v3051
      %3205 = vmatmul.f32.gmra.mxu0 %v3168
      %v3206 = vpop.f32.mrf.mxu0
      %v3207 = vadd.f32 0.0, %v3206
      %3208 = vmatmul.f32.gmra.mxu0 %v3176
      %v3209 = vpop.f32.mrf.mxu0
      %v3210 = vadd.f32 0.0, %v3209
      %3211 = vdwg.mxu0
      %3212 = vmatpush.msra.mxu0 %v3144
      %3213 = vmatpush.msra.mxu0 %v3141
      %3214 = vmatpush.msra.mxu0 %v3138
      %3215 = vmatpush.msra.mxu0 %v3135
      %3216 = vmatpush.msra.mxu0 %v3132
      %3217 = vmatpush.msra.mxu0 %v3129
      %3218 = vmatpush.msra.mxu0 %v3126
      %3219 = vmatpush.msra.mxu0 %v3123
      %3220 = vmatpush.msra.mxu0 %v3120
      %3221 = vmatpush.msra.mxu0 %v3117
      %3222 = vmatpush.msra.mxu0 %v3114
      %3223 = vmatpush.msra.mxu0 %v3111
      %3224 = vmatpush.msra.mxu0 %v3108
      %3225 = vmatpush.msra.mxu0 %v3105
      %3226 = vmatpush.msra.mxu0 %v3102
      %3227 = vmatpush.msra.mxu0 %v3099
      %3228 = vmatmul.f32.gmra.mxu0 %v3171
      %v3229 = vpop.f32.mrf.mxu0
      %v3230 = vadd.f32 %v3207, %v3229
      %3231 = vmatmul.f32.gmra.mxu0 %v3178
      %v3232 = vpop.f32.mrf.mxu0
      %v3233 = vadd.f32 %v3210, %v3232
      %3234 = vdwg.mxu0
      %3235 = vmatpush.msra.mxu0 0.0
      %3236 = vmatpush.msra.mxu0 0.0
      %3237 = vmatpush.msra.mxu0 0.0
      %3238 = vmatpush.msra.mxu0 0.0
      %3239 = vmatpush.msra.mxu0 0.0
      %3240 = vmatpush.msra.mxu0 0.0
      %3241 = vmatpush.msra.mxu0 0.0
      %3242 = vmatpush.msra.mxu0 0.0
      %3243 = vmatpush.msra.mxu0 0.0
      %3244 = vmatpush.msra.mxu0 0.0
      %3245 = vmatpush.msra.mxu0 0.0
      %3246 = vmatpush.msra.mxu0 0.0
      %3247 = vmatpush.msra.mxu0 %v3156
      %3248 = vmatpush.msra.mxu0 %v3153
      %3249 = vmatpush.msra.mxu0 %v3150
      %3250 = vmatpush.msra.mxu0 %v3147
      %3251 = vmatmul.f32.gmra.mxu0 %v3185
      %v3252 = vpop.f32.mrf.mxu0
      %v3253 = vadd.f32 %v3230, %v3252
      %3254 = vmatmul.f32.gmra.mxu0 %v3187
      %v3255 = vpop.f32.mrf.mxu0
      %v3256 = vadd.f32 %v3233, %v3255
      %3257 = vdwg.mxu0
      %3258 = vmatpush.msra.mxu0 %v3097
      %3259 = vmatpush.msra.mxu0 %v3094
      %3260 = vmatpush.msra.mxu0 %v3091
      %3261 = vmatpush.msra.mxu0 %v3088
      %3262 = vmatpush.msra.mxu0 %v3085
      %3263 = vmatpush.msra.mxu0 %v3082
      %3264 = vmatpush.msra.mxu0 %v3079
      %3265 = vmatpush.msra.mxu0 %v3076
      %3266 = vmatpush.msra.mxu0 %v3073
      %3267 = vmatpush.msra.mxu0 %v3070
      %3268 = vmatpush.msra.mxu0 %v3067
      %3269 = vmatpush.msra.mxu0 %v3064
      %3270 = vmatpush.msra.mxu0 %v3061
      %3271 = vmatpush.msra.mxu0 %v3058
      %3272 = vmatpush.msra.mxu0 %v3055
      %3273 = vmatpush.msra.mxu0 %v3052
      %3274 = vmatmul.f32.gmra.mxu0 %v3168
      %v3275 = vpop.f32.mrf.mxu0
      %v3276 = vadd.f32 0.0, %v3275
      %3277 = vmatmul.f32.gmra.mxu0 %v3176
      %v3278 = vpop.f32.mrf.mxu0
      %v3279 = vadd.f32 0.0, %v3278
      %3280 = vdwg.mxu0
      %3281 = vmatpush.msra.mxu0 %v3145
      %3282 = vmatpush.msra.mxu0 %v3142
      %3283 = vmatpush.msra.mxu0 %v3139
      %3284 = vmatpush.msra.mxu0 %v3136
      %3285 = vmatpush.msra.mxu0 %v3133
      %3286 = vmatpush.msra.mxu0 %v3130
      %3287 = vmatpush.msra.mxu0 %v3127
      %3288 = vmatpush.msra.mxu0 %v3124
      %3289 = vmatpush.msra.mxu0 %v3121
      %3290 = vmatpush.msra.mxu0 %v3118
      %3291 = vmatpush.msra.mxu0 %v3115
      %3292 = vmatpush.msra.mxu0 %v3112
      %3293 = vmatpush.msra.mxu0 %v3109
      %3294 = vmatpush.msra.mxu0 %v3106
      %3295 = vmatpush.msra.mxu0 %v3103
      %3296 = vmatpush.msra.mxu0 %v3100
      %3297 = vmatmul.f32.gmra.mxu0 %v3171
      %v3298 = vpop.f32.mrf.mxu0
      %v3299 = vadd.f32 %v3276, %v3298
      %3300 = vmatmul.f32.gmra.mxu0 %v3178
      %v3301 = vpop.f32.mrf.mxu0
      %v3302 = vadd.f32 %v3279, %v3301
      %3303 = vdwg.mxu0
      %3304 = vmatpush.msra.mxu0 0.0
      %3305 = vmatpush.msra.mxu0 0.0
      %3306 = vmatpush.msra.mxu0 0.0
      %3307 = vmatpush.msra.mxu0 0.0
      %3308 = vmatpush.msra.mxu0 0.0
      %3309 = vmatpush.msra.mxu0 0.0
      %3310 = vmatpush.msra.mxu0 0.0
      %3311 = vmatpush.msra.mxu0 0.0
      %3312 = vmatpush.msra.mxu0 0.0
      %3313 = vmatpush.msra.mxu0 0.0
      %3314 = vmatpush.msra.mxu0 0.0
      %3315 = vmatpush.msra.mxu0 0.0
      %3316 = vmatpush.msra.mxu0 %v3157
      %3317 = vmatpush.msra.mxu0 %v3154
      %3318 = vmatpush.msra.mxu0 %v3151
      %3319 = vmatpush.msra.mxu0 %v3148
      %3320 = vmatmul.f32.gmra.mxu0 %v3185
      %v3321 = vpop.f32.mrf.mxu0
      %v3322 = vadd.f32 %v3299, %v3321
      %3323 = vmatmul.f32.gmra.mxu0 %v3187
      %v3324 = vpop.f32.mrf.mxu0
      %v3325 = vadd.f32 %v3302, %v3324
      %3326 = vdwg.mxu0
      %3327 = vmatpush.msra.mxu0 %v3098
      %3328 = vmatpush.msra.mxu0 %v3095
      %3329 = vmatpush.msra.mxu0 %v3092
      %3330 = vmatpush.msra.mxu0 %v3089
      %3331 = vmatpush.msra.mxu0 %v3086
      %3332 = vmatpush.msra.mxu0 %v3083
      %3333 = vmatpush.msra.mxu0 %v3080
      %3334 = vmatpush.msra.mxu0 %v3077
      %3335 = vmatpush.msra.mxu0 %v3074
      %3336 = vmatpush.msra.mxu0 %v3071
      %3337 = vmatpush.msra.mxu0 %v3068
      %3338 = vmatpush.msra.mxu0 %v3065
      %3339 = vmatpush.msra.mxu0 %v3062
      %3340 = vmatpush.msra.mxu0 %v3059
      %3341 = vmatpush.msra.mxu0 %v3056
      %3342 = vmatpush.msra.mxu0 %v3053
      %3343 = vmatmul.f32.gmra.mxu0 %v3168
      %v3344 = vpop.f32.mrf.mxu0
      %v3345 = vadd.f32 0.0, %v3344
      %3346 = vmatmul.f32.gmra.mxu0 %v3176
      %v3347 = vpop.f32.mrf.mxu0
      %v3348 = vadd.f32 0.0, %v3347
      %3349 = vdwg.mxu0
      %3350 = vmatpush.msra.mxu0 %v3146
      %3351 = vmatpush.msra.mxu0 %v3143
      %3352 = vmatpush.msra.mxu0 %v3140
      %3353 = vmatpush.msra.mxu0 %v3137
      %3354 = vmatpush.msra.mxu0 %v3134
      %3355 = vmatpush.msra.mxu0 %v3131
      %3356 = vmatpush.msra.mxu0 %v3128
      %3357 = vmatpush.msra.mxu0 %v3125
      %3358 = vmatpush.msra.mxu0 %v3122
      %3359 = vmatpush.msra.mxu0 %v3119
      %3360 = vmatpush.msra.mxu0 %v3116
      %3361 = vmatpush.msra.mxu0 %v3113
      %3362 = vmatpush.msra.mxu0 %v3110
      %3363 = vmatpush.msra.mxu0 %v3107
      %3364 = vmatpush.msra.mxu0 %v3104
      %3365 = vmatpush.msra.mxu0 %v3101
      %3366 = vmatmul.f32.gmra.mxu0 %v3171
      %v3367 = vpop.f32.mrf.mxu0
      %v3368 = vadd.f32 %v3345, %v3367
      %3369 = vmatmul.f32.gmra.mxu0 %v3178
      %v3370 = vpop.f32.mrf.mxu0
      %v3371 = vadd.f32 %v3348, %v3370
      %3372 = vdwg.mxu0
      %3373 = vmatpush.msra.mxu0 0.0
      %3374 = vmatpush.msra.mxu0 0.0
      %3375 = vmatpush.msra.mxu0 0.0
      %3376 = vmatpush.msra.mxu0 0.0
      %3377 = vmatpush.msra.mxu0 0.0
      %3378 = vmatpush.msra.mxu0 0.0
      %3379 = vmatpush.msra.mxu0 0.0
      %3380 = vmatpush.msra.mxu0 0.0
      %3381 = vmatpush.msra.mxu0 0.0
      %3382 = vmatpush.msra.mxu0 0.0
      %3383 = vmatpush.msra.mxu0 0.0
      %3384 = vmatpush.msra.mxu0 0.0
      %3385 = vmatpush.msra.mxu0 %v3158
      %3386 = vmatpush.msra.mxu0 %v3155
      %3387 = vmatpush.msra.mxu0 %v3152
      %3388 = vmatpush.msra.mxu0 %v3149
      %3389 = vmatmul.f32.gmra.mxu0 %v3185
      %v3390 = vpop.f32.mrf.mxu0
      %v3391 = vadd.f32 %v3368, %v3390
      %3392 = vmatmul.f32.gmra.mxu0 %v3187
      %v3393 = vpop.f32.mrf.mxu0
      %v3394 = vadd.f32 %v3371, %v3393
      %3395 = vdwg.mxu0
      %v3396 = vadd.f32 %v3038, %v3253
      %v3397 = vadd.f32 %v3039, %v3322
      %v3398 = vadd.f32 %v3040, %v3391
      %v3399 = vadd.f32 %v3041, %v3256
      %v3400 = vadd.f32 %v3042, %v3325
      %v3401 = vadd.f32 %v3043, %v3394
      %v3402 = vmax.f32 %v3396, 0.0
      %v3403 = vmax.f32 %v3397, 0.0
      %v3404 = vmax.f32 %v3398, 0.0
      %v3405 = vmax.f32 %v3399, 0.0
      %v3406 = vmax.f32 %v3400, 0.0
      %v3407 = vmax.f32 %v3401, 0.0
      %3408 = vst [vmem:[#allocation3 + $0x18] sm:$0xff] %v3402
      %3409 = vst [vmem:[#allocation3 + $0x20] sm:$0xff] %v3403
      %3410 = vst.msk [vmem:[#allocation3 + $0x28] sm:$0xff] %vm200, %v3404
      %3411 = vst [vmem:[#allocation3 + $0x30] sm:$0xff] %v3405
      %3412 = vst [vmem:[#allocation3 + $0x38] sm:$0xff] %v3406
      %3413 = vst.msk [vmem:[#allocation3 + $0x40] sm:$0xff] %vm200, %v3407
      %v3414 = vld [vmem:[#allocation3] sm:$0xfc]
      %v3415 = vld [vmem:[#allocation3 + $0x8] sm:$0xfc]
      %v3416 = vld [vmem:[#allocation3 + $0x10] sm:$0xfc]
      %v3417 = vld [vmem:[#allocation3 + $0x18] sm:$0xff]
      %v3418 = vld [vmem:[#allocation3 + $0x20] sm:$0xff]
      %v3419 = vld [vmem:[#allocation3 + $0x28] sm:$0xff]
      %v3420 = vld [vmem:[#allocation3 + $0x30] sm:$0x3]
      %v3421 = vld [vmem:[#allocation3 + $0x38] sm:$0x3]
      %v3422 = vld [vmem:[#allocation3 + $0x40] sm:$0x3]
      %v3423 = vld [vmem:[%s3] sm:$0xff]
      %v3424 = vld [vmem:[%s3 + $0x8] sm:$0xff]
      %v3425 = vld [vmem:[%s3 + $0x10] sm:$0xff]
      %v3426 = vld [vmem:[%s3 + $0x18] sm:$0xff]
      %v3427 = vld [vmem:[%s3 + $0x20] sm:$0xff]
      %v3428 = vld [vmem:[%s3 + $0x28] sm:$0xff]
      %v3429 = vld [vmem:[%s3 + $0x30] sm:$0xff]
      %v3430 = vld [vmem:[%s3 + $0x38] sm:$0xff]
      %v3431 = vld [vmem:[%s3 + $0x40] sm:$0xff]
      %v3432 = vld [vmem:[%s3 + $0x48] sm:$0xff]
      %v3433 = vld [vmem:[%s3 + $0x50] sm:$0xff]
      %v3434 = vld [vmem:[%s3 + $0x58] sm:$0xff]
      %v3435 = vld [vmem:[%s3 + $0x60] sm:$0xff]
      %v3436 = vld [vmem:[%s3 + $0x68] sm:$0xff]
      %v3437 = vld [vmem:[%s3 + $0x70] sm:$0xff]
      %v3438 = vld [vmem:[%s3 + $0x78] sm:$0xff]
      %v3439 = vld [vmem:[%s3 + $0x80] sm:$0xff]
      %v3440 = vld [vmem:[%s3 + $0x88] sm:$0xff]
      %v3441 = vld [vmem:[%s3 + $0x90] sm:$0xff]
      %v3442 = vld [vmem:[%s3 + $0x98] sm:$0xff]
      %v3443 = vld [vmem:[%s3 + $0xa0] sm:$0xff]
      %v3444 = vld [vmem:[%s3 + $0xa8] sm:$0xff]
      %v3445 = vld [vmem:[%s3 + $0xb0] sm:$0xff]
      %v3446 = vld [vmem:[%s3 + $0xb8] sm:$0xff]
      %v3447 = vld [vmem:[%s3 + $0xc0] sm:$0xff]
      %v3448 = vld [vmem:[%s3 + $0xc8] sm:$0xff]
      %v3449 = vld [vmem:[%s3 + $0xd0] sm:$0xff]
      %v3450 = vld [vmem:[%s3 + $0xd8] sm:$0xff]
      %v3451 = vld [vmem:[%s3 + $0xe0] sm:$0xff]
      %v3452 = vld [vmem:[%s3 + $0xe8] sm:$0xff]
      %v3453 = vld [vmem:[%s3 + $0xf0] sm:$0xff]
      %v3454 = vld [vmem:[%s3 + $0xf8] sm:$0xff]
      %v3455 = vld [vmem:[%s3 + $0x100] sm:$0xff]
      %v3456 = vld [vmem:[%s3 + $0x108] sm:$0xff]
      %v3457 = vld [vmem:[%s3 + $0x110] sm:$0xff]
      %v3458 = vld [vmem:[%s3 + $0x118] sm:$0xff]
      %v3459 = vld [vmem:[%s3 + $0x120] sm:$0xff]
      %v3460 = vld [vmem:[%s3 + $0x128] sm:$0xff]
      %v3461 = vld [vmem:[%s3 + $0x130] sm:$0xff]
      %v3462 = vld [vmem:[%s3 + $0x138] sm:$0xff]
      %v3463 = vld [vmem:[%s3 + $0x140] sm:$0xff]
      %v3464 = vld [vmem:[%s3 + $0x148] sm:$0xff]
      %v3465 = vld [vmem:[%s3 + $0x150] sm:$0xff]
      %v3466 = vld [vmem:[%s3 + $0x158] sm:$0xff]
      %v3467 = vld [vmem:[%s3 + $0x160] sm:$0xff]
      %v3468 = vld [vmem:[%s3 + $0x168] sm:$0xff]
      %v3469 = vld [vmem:[%s3 + $0x170] sm:$0xff]
      %v3470 = vld [vmem:[%s3 + $0x178] sm:$0xff]
      %v3471 = vld [vmem:[%s3 + $0x180] sm:$0xff]
      %v3472 = vld [vmem:[%s3 + $0x188] sm:$0xff]
      %v3473 = vld [vmem:[%s3 + $0x190] sm:$0xff]
      %v3474 = vld [vmem:[%s3 + $0x198] sm:$0xff]
      %v3475 = vld [vmem:[%s3 + $0x1a0] sm:$0xff]
      %v3476 = vld [vmem:[%s3 + $0x1a8] sm:$0xff]
      %v3477 = vld [vmem:[%s3 + $0x1b0] sm:$0xff]
      %v3478 = vld [vmem:[%s3 + $0x1b8] sm:$0xff]
      %v3479 = vld [vmem:[%s3 + $0x1c0] sm:$0xff]
      %v3480 = vld [vmem:[%s3 + $0x1c8] sm:$0xff]
      %v3481 = vld [vmem:[%s3 + $0x1d0] sm:$0xff]
      %v3482 = vld [vmem:[%s3 + $0x1d8] sm:$0xff]
      %v3483 = vld [vmem:[%s3 + $0x1e0] sm:$0xff]
      %v3484 = vld [vmem:[%s3 + $0x1e8] sm:$0xff]
      %v3485 = vld [vmem:[%s3 + $0x1f0] sm:$0xff]
      %v3486 = vld [vmem:[%s3 + $0x1f8] sm:$0xff]
      %v3487 = vld [vmem:[%s3 + $0x200] sm:$0xff]
      %v3488 = vld [vmem:[%s3 + $0x208] sm:$0xff]
      %v3489 = vld [vmem:[%s3 + $0x210] sm:$0xff]
      %v3490 = vld [vmem:[%s3 + $0x218] sm:$0xff]
      %v3491 = vld [vmem:[%s3 + $0x220] sm:$0xff]
      %v3492 = vld [vmem:[%s3 + $0x228] sm:$0xff]
      %v3493 = vld [vmem:[%s3 + $0x230] sm:$0xff]
      %v3494 = vld [vmem:[%s3 + $0x238] sm:$0xff]
      %v3495 = vld [vmem:[%s3 + $0x240] sm:$0xff]
      %v3496 = vld [vmem:[%s3 + $0x248] sm:$0xff]
      %v3497 = vld [vmem:[%s3 + $0x250] sm:$0xff]
      %v3498 = vld [vmem:[%s3 + $0x258] sm:$0xff]
      %v3499 = vld [vmem:[%s3 + $0x260] sm:$0xff]
      %v3500 = vld [vmem:[%s3 + $0x268] sm:$0xff]
      %v3501 = vld [vmem:[%s3 + $0x270] sm:$0xff]
      %v3502 = vld [vmem:[%s3 + $0x278] sm:$0xff]
      %v3503 = vld [vmem:[%s3 + $0x280] sm:$0xff]
      %v3504 = vld [vmem:[%s3 + $0x288] sm:$0xff]
      %v3505 = vld [vmem:[%s3 + $0x290] sm:$0xff]
      %v3506 = vld [vmem:[%s3 + $0x298] sm:$0xff]
      %v3507 = vld [vmem:[%s3 + $0x2a0] sm:$0xff]
      %v3508 = vld [vmem:[%s3 + $0x2a8] sm:$0xff]
      %v3509 = vld [vmem:[%s3 + $0x2b0] sm:$0xff]
      %v3510 = vld [vmem:[%s3 + $0x2b8] sm:$0xff]
      %v3511 = vld [vmem:[%s3 + $0x2c0] sm:$0xff]
      %v3512 = vld [vmem:[%s3 + $0x2c8] sm:$0xff]
      %v3513 = vld [vmem:[%s3 + $0x2d0] sm:$0xff]
      %v3514 = vld [vmem:[%s3 + $0x2d8] sm:$0xff]
      %v3515 = vld [vmem:[%s3 + $0x2e0] sm:$0xff]
      %v3516 = vld [vmem:[%s3 + $0x2e8] sm:$0xff]
      %v3517 = vld [vmem:[%s3 + $0x2f0] sm:$0xff]
      %v3518 = vld [vmem:[%s3 + $0x2f8] sm:$0xff]
      %v3519 = vld [vmem:[%s3 + $0x300] sm:$0xff]
      %v3520 = vld [vmem:[%s3 + $0x308] sm:$0xff]
      %v3521 = vld [vmem:[%s3 + $0x310] sm:$0xff]
      %v3522 = vld [vmem:[%s3 + $0x318] sm:$0xff]
      %v3523 = vld [vmem:[%s3 + $0x320] sm:$0xff]
      %v3524 = vld [vmem:[%s3 + $0x328] sm:$0xff]
      %v3525 = vld [vmem:[%s3 + $0x330] sm:$0xff]
      %v3526 = vld [vmem:[%s3 + $0x338] sm:$0xff]
      %v3527 = vld [vmem:[%s3 + $0x340] sm:$0xff]
      %v3528 = vld [vmem:[%s3 + $0x348] sm:$0xff]
      %v3529 = vld [vmem:[%s3 + $0x350] sm:$0xff]
      %v3530 = vld [vmem:[%s3 + $0x358] sm:$0xff]
      %v3531 = vld [vmem:[#allocation3] sm:$0xf0]
      %v3532 = vld [vmem:[#allocation3 + $0x8] sm:$0xf0]
      %v3533 = vld [vmem:[#allocation3 + $0x10] sm:$0xf0]
      %v3534 = vld [vmem:[#allocation3 + $0x30] sm:$0xf]
      %v3535 = vld [vmem:[#allocation3 + $0x38] sm:$0xf]
      %v3536 = vld [vmem:[#allocation3 + $0x40] sm:$0xf]
      %s3537 = scalar_lea.vmem %s3, 864
      %v3538 = vld [vmem:[%s3537] sm:$0xff]
      %v3539 = vld [vmem:[%s3537 + $0x8] sm:$0xff]
      %v3540 = vld [vmem:[%s3537 + $0x10] sm:$0xff]
      %v3541 = vld [vmem:[%s3537 + $0x18] sm:$0xff]
      %v3542 = vld [vmem:[%s3537 + $0x20] sm:$0xff]
      %v3543 = vld [vmem:[%s3537 + $0x28] sm:$0xff]
      %v3544 = vld [vmem:[%s3537 + $0x30] sm:$0xff]
      %v3545 = vld [vmem:[%s3537 + $0x38] sm:$0xff]
      %v3546 = vld [vmem:[%s3537 + $0x40] sm:$0xff]
      %v3547 = vld [vmem:[%s3537 + $0x48] sm:$0xff]
      %v3548 = vld [vmem:[%s3537 + $0x50] sm:$0xff]
      %v3549 = vld [vmem:[%s3537 + $0x58] sm:$0xff]
      %v3550 = vld [vmem:[%s3537 + $0x60] sm:$0xff]
      %v3551 = vld [vmem:[%s3537 + $0x68] sm:$0xff]
      %v3552 = vld [vmem:[%s3537 + $0x70] sm:$0xff]
      %v3553 = vld [vmem:[%s3537 + $0x78] sm:$0xff]
      %v3554 = vld [vmem:[%s3537 + $0x80] sm:$0xff]
      %v3555 = vld [vmem:[%s3537 + $0x88] sm:$0xff]
      %v3556 = vld [vmem:[%s3537 + $0x90] sm:$0xff]
      %v3557 = vld [vmem:[%s3537 + $0x98] sm:$0xff]
      %v3558 = vld [vmem:[%s3537 + $0xa0] sm:$0xff]
      %v3559 = vld [vmem:[%s3537 + $0xa8] sm:$0xff]
      %v3560 = vld [vmem:[%s3537 + $0xb0] sm:$0xff]
      %v3561 = vld [vmem:[%s3537 + $0xb8] sm:$0xff]
      %v3562 = vld [vmem:[%s3537 + $0xc0] sm:$0xff]
      %v3563 = vld [vmem:[%s3537 + $0xc8] sm:$0xff]
      %v3564 = vld [vmem:[%s3537 + $0xd0] sm:$0xff]
      %v3565 = vld [vmem:[%s3537 + $0xd8] sm:$0xff]
      %v3566 = vld [vmem:[%s3537 + $0xe0] sm:$0xff]
      %v3567 = vld [vmem:[%s3537 + $0xe8] sm:$0xff]
      %v3568 = vld [vmem:[%s3537 + $0xf0] sm:$0xff]
      %v3569 = vld [vmem:[%s3537 + $0xf8] sm:$0xff]
      %v3570 = vld [vmem:[%s3537 + $0x100] sm:$0xff]
      %v3571 = vld [vmem:[%s3537 + $0x108] sm:$0xff]
      %v3572 = vld [vmem:[%s3537 + $0x110] sm:$0xff]
      %v3573 = vld [vmem:[%s3537 + $0x118] sm:$0xff]
      %v3574 = vld [vmem:[%s3537 + $0x120] sm:$0xff]
      %v3575 = vld [vmem:[%s3537 + $0x128] sm:$0xff]
      %v3576 = vld [vmem:[%s3537 + $0x130] sm:$0xff]
      %v3577 = vld [vmem:[%s3537 + $0x138] sm:$0xff]
      %v3578 = vld [vmem:[%s3537 + $0x140] sm:$0xff]
      %v3579 = vld [vmem:[%s3537 + $0x148] sm:$0xff]
      %v3580 = vld [vmem:[%s3537 + $0x150] sm:$0xff]
      %v3581 = vld [vmem:[%s3537 + $0x158] sm:$0xff]
      %v3582 = vld [vmem:[%s3537 + $0x160] sm:$0xff]
      %v3583 = vld [vmem:[%s3537 + $0x168] sm:$0xff]
      %v3584 = vld [vmem:[%s3537 + $0x170] sm:$0xff]
      %v3585 = vld [vmem:[%s3537 + $0x178] sm:$0xff]
      %v3586 = vld [vmem:[%s3537 + $0x180] sm:$0xff]
      %v3587 = vld [vmem:[%s3537 + $0x188] sm:$0xff]
      %v3588 = vld [vmem:[%s3537 + $0x190] sm:$0xff]
      %v3589 = vld [vmem:[%s3537 + $0x198] sm:$0xff]
      %v3590 = vld [vmem:[%s3537 + $0x1a0] sm:$0xff]
      %v3591 = vld [vmem:[%s3537 + $0x1a8] sm:$0xff]
      %v3592 = vld [vmem:[%s3537 + $0x1b0] sm:$0xff]
      %v3593 = vld [vmem:[%s3537 + $0x1b8] sm:$0xff]
      %v3594 = vld [vmem:[%s3537 + $0x1c0] sm:$0xff]
      %v3595 = vld [vmem:[%s3537 + $0x1c8] sm:$0xff]
      %v3596 = vld [vmem:[%s3537 + $0x1d0] sm:$0xff]
      %v3597 = vld [vmem:[%s3537 + $0x1d8] sm:$0xff]
      %v3598 = vld [vmem:[%s3537 + $0x1e0] sm:$0xff]
      %v3599 = vld [vmem:[%s3537 + $0x1e8] sm:$0xff]
      %v3600 = vld [vmem:[%s3537 + $0x1f0] sm:$0xff]
      %v3601 = vld [vmem:[%s3537 + $0x1f8] sm:$0xff]
      %v3602 = vld [vmem:[%s3537 + $0x200] sm:$0xff]
      %v3603 = vld [vmem:[%s3537 + $0x208] sm:$0xff]
      %v3604 = vld [vmem:[%s3537 + $0x210] sm:$0xff]
      %v3605 = vld [vmem:[%s3537 + $0x218] sm:$0xff]
      %v3606 = vld [vmem:[%s3537 + $0x220] sm:$0xff]
      %v3607 = vld [vmem:[%s3537 + $0x228] sm:$0xff]
      %v3608 = vld [vmem:[%s3537 + $0x230] sm:$0xff]
      %v3609 = vld [vmem:[%s3537 + $0x238] sm:$0xff]
      %v3610 = vld [vmem:[%s3537 + $0x240] sm:$0xff]
      %v3611 = vld [vmem:[%s3537 + $0x248] sm:$0xff]
      %v3612 = vld [vmem:[%s3537 + $0x250] sm:$0xff]
      %v3613 = vld [vmem:[%s3537 + $0x258] sm:$0xff]
      %v3614 = vld [vmem:[%s3537 + $0x260] sm:$0xff]
      %v3615 = vld [vmem:[%s3537 + $0x268] sm:$0xff]
      %v3616 = vld [vmem:[%s3537 + $0x270] sm:$0xff]
      %v3617 = vld [vmem:[%s3537 + $0x278] sm:$0xff]
      %v3618 = vld [vmem:[%s3537 + $0x280] sm:$0xff]
      %v3619 = vld [vmem:[%s3537 + $0x288] sm:$0xff]
      %v3620 = vld [vmem:[%s3537 + $0x290] sm:$0xff]
      %v3621 = vld [vmem:[%s3537 + $0x298] sm:$0xff]
      %v3622 = vld [vmem:[%s3537 + $0x2a0] sm:$0xff]
      %v3623 = vld [vmem:[%s3537 + $0x2a8] sm:$0xff]
      %v3624 = vld [vmem:[%s3537 + $0x2b0] sm:$0xff]
      %v3625 = vld [vmem:[%s3537 + $0x2b8] sm:$0xff]
      %v3626 = vld [vmem:[%s3537 + $0x2c0] sm:$0xff]
      %v3627 = vld [vmem:[%s3537 + $0x2c8] sm:$0xff]
      %v3628 = vld [vmem:[%s3537 + $0x2d0] sm:$0xff]
      %v3629 = vld [vmem:[%s3537 + $0x2d8] sm:$0xff]
      %v3630 = vld [vmem:[%s3537 + $0x2e0] sm:$0xff]
      %v3631 = vld [vmem:[%s3537 + $0x2e8] sm:$0xff]
      %v3632 = vld [vmem:[%s3537 + $0x2f0] sm:$0xff]
      %v3633 = vld [vmem:[%s3537 + $0x2f8] sm:$0xff]
      %v3634 = vld [vmem:[%s3537 + $0x300] sm:$0xff]
      %v3635 = vld [vmem:[%s3537 + $0x308] sm:$0xff]
      %v3636 = vld [vmem:[%s3537 + $0x310] sm:$0xff]
      %v3637 = vld [vmem:[%s3537 + $0x318] sm:$0xff]
      %v3638 = vld [vmem:[%s3537 + $0x320] sm:$0xff]
      %v3639 = vld [vmem:[%s3537 + $0x328] sm:$0xff]
      %v3640 = vld [vmem:[%s3537 + $0x330] sm:$0xff]
      %v3641 = vld [vmem:[%s3537 + $0x338] sm:$0xff]
      %v3642 = vld [vmem:[%s3537 + $0x340] sm:$0xff]
      %v3643 = vld [vmem:[%s3537 + $0x348] sm:$0xff]
      %v3644 = vld [vmem:[%s3537 + $0x350] sm:$0xff]
      %v3645 = vld [vmem:[%s3537 + $0x358] sm:$0xff]
      %vm3655 = vcmask 1043456
      %v3656 = vrot.slane %v3531, 4
      %v3657 = vrot.slane %v3417, 4
      %v3658 = vsel %vm3655, %v3656, %v3657
      %v3659 = vrot.slane %v3532, 4
      %v3660 = vrot.slane %v3418, 4
      %v3661 = vsel %vm3655, %v3659, %v3660
      %v3662 = vrot.slane %v3533, 4
      %v3663 = vrot.slane %v3419, 4
      %v3664 = vsel %vm3655, %v3662, %v3663
      %v3665 = vrot.slane %v3534, 4
      %v3666 = vsel %vm3655, %v3657, %v3665
      %v3667 = vrot.slane %v3535, 4
      %v3668 = vsel %vm3655, %v3660, %v3667
      %v3669 = vrot.slane %v3536, 4
      %v3670 = vsel %vm3655, %v3663, %v3669
      %v3675 = vsel %vm200, %v3664, 0
      %v3677 = vsel %vm200, %v3670, 0
      %3679 = vmatpush.msra.mxu0 %v3583
      %3680 = vmatpush.msra.mxu0 %v3580
      %3681 = vmatpush.msra.mxu0 %v3577
      %3682 = vmatpush.msra.mxu0 %v3574
      %3683 = vmatpush.msra.mxu0 %v3571
      %3684 = vmatpush.msra.mxu0 %v3568
      %3685 = vmatpush.msra.mxu0 %v3565
      %3686 = vmatpush.msra.mxu0 %v3562
      %3687 = vmatpush.msra.mxu0 %v3559
      %3688 = vmatpush.msra.mxu0 %v3556
      %3689 = vmatpush.msra.mxu0 %v3553
      %3690 = vmatpush.msra.mxu0 %v3550
      %3691 = vmatpush.msra.mxu0 %v3547
      %3692 = vmatpush.msra.mxu0 %v3544
      %3693 = vmatpush.msra.mxu0 %v3541
      %3694 = vmatpush.msra.mxu0 %v3538
      %3695 = vmatmul.f32.gmra.mxu0 %v3658
      %v3696 = vpop.f32.mrf.mxu0
      %v3697 = vadd.f32 0.0, %v3696
      %3698 = vmatmul.f32.gmra.mxu0 %v3666
      %v3699 = vpop.f32.mrf.mxu0
      %v3700 = vadd.f32 0.0, %v3699
      %3701 = vdwg.mxu0
      %3702 = vmatpush.msra.mxu0 %v3631
      %3703 = vmatpush.msra.mxu0 %v3628
      %3704 = vmatpush.msra.mxu0 %v3625
      %3705 = vmatpush.msra.mxu0 %v3622
      %3706 = vmatpush.msra.mxu0 %v3619
      %3707 = vmatpush.msra.mxu0 %v3616
      %3708 = vmatpush.msra.mxu0 %v3613
      %3709 = vmatpush.msra.mxu0 %v3610
      %3710 = vmatpush.msra.mxu0 %v3607
      %3711 = vmatpush.msra.mxu0 %v3604
      %3712 = vmatpush.msra.mxu0 %v3601
      %3713 = vmatpush.msra.mxu0 %v3598
      %3714 = vmatpush.msra.mxu0 %v3595
      %3715 = vmatpush.msra.mxu0 %v3592
      %3716 = vmatpush.msra.mxu0 %v3589
      %3717 = vmatpush.msra.mxu0 %v3586
      %3718 = vmatmul.f32.gmra.mxu0 %v3661
      %v3719 = vpop.f32.mrf.mxu0
      %v3720 = vadd.f32 %v3697, %v3719
      %3721 = vmatmul.f32.gmra.mxu0 %v3668
      %v3722 = vpop.f32.mrf.mxu0
      %v3723 = vadd.f32 %v3700, %v3722
      %3724 = vdwg.mxu0
      %3725 = vmatpush.msra.mxu0 0.0
      %3726 = vmatpush.msra.mxu0 0.0
      %3727 = vmatpush.msra.mxu0 0.0
      %3728 = vmatpush.msra.mxu0 0.0
      %3729 = vmatpush.msra.mxu0 0.0
      %3730 = vmatpush.msra.mxu0 0.0
      %3731 = vmatpush.msra.mxu0 0.0
      %3732 = vmatpush.msra.mxu0 0.0
      %3733 = vmatpush.msra.mxu0 0.0
      %3734 = vmatpush.msra.mxu0 0.0
      %3735 = vmatpush.msra.mxu0 0.0
      %3736 = vmatpush.msra.mxu0 0.0
      %3737 = vmatpush.msra.mxu0 %v3643
      %3738 = vmatpush.msra.mxu0 %v3640
      %3739 = vmatpush.msra.mxu0 %v3637
      %3740 = vmatpush.msra.mxu0 %v3634
      %3741 = vmatmul.f32.gmra.mxu0 %v3675
      %v3742 = vpop.f32.mrf.mxu0
      %v3743 = vadd.f32 %v3720, %v3742
      %3744 = vmatmul.f32.gmra.mxu0 %v3677
      %v3745 = vpop.f32.mrf.mxu0
      %v3746 = vadd.f32 %v3723, %v3745
      %3747 = vdwg.mxu0
      %3748 = vmatpush.msra.mxu0 %v3584
      %3749 = vmatpush.msra.mxu0 %v3581
      %3750 = vmatpush.msra.mxu0 %v3578
      %3751 = vmatpush.msra.mxu0 %v3575
      %3752 = vmatpush.msra.mxu0 %v3572
      %3753 = vmatpush.msra.mxu0 %v3569
      %3754 = vmatpush.msra.mxu0 %v3566
      %3755 = vmatpush.msra.mxu0 %v3563
      %3756 = vmatpush.msra.mxu0 %v3560
      %3757 = vmatpush.msra.mxu0 %v3557
      %3758 = vmatpush.msra.mxu0 %v3554
      %3759 = vmatpush.msra.mxu0 %v3551
      %3760 = vmatpush.msra.mxu0 %v3548
      %3761 = vmatpush.msra.mxu0 %v3545
      %3762 = vmatpush.msra.mxu0 %v3542
      %3763 = vmatpush.msra.mxu0 %v3539
      %3764 = vmatmul.f32.gmra.mxu0 %v3658
      %v3765 = vpop.f32.mrf.mxu0
      %v3766 = vadd.f32 0.0, %v3765
      %3767 = vmatmul.f32.gmra.mxu0 %v3666
      %v3768 = vpop.f32.mrf.mxu0
      %v3769 = vadd.f32 0.0, %v3768
      %3770 = vdwg.mxu0
      %3771 = vmatpush.msra.mxu0 %v3632
      %3772 = vmatpush.msra.mxu0 %v3629
      %3773 = vmatpush.msra.mxu0 %v3626
      %3774 = vmatpush.msra.mxu0 %v3623
      %3775 = vmatpush.msra.mxu0 %v3620
      %3776 = vmatpush.msra.mxu0 %v3617
      %3777 = vmatpush.msra.mxu0 %v3614
      %3778 = vmatpush.msra.mxu0 %v3611
      %3779 = vmatpush.msra.mxu0 %v3608
      %3780 = vmatpush.msra.mxu0 %v3605
      %3781 = vmatpush.msra.mxu0 %v3602
      %3782 = vmatpush.msra.mxu0 %v3599
      %3783 = vmatpush.msra.mxu0 %v3596
      %3784 = vmatpush.msra.mxu0 %v3593
      %3785 = vmatpush.msra.mxu0 %v3590
      %3786 = vmatpush.msra.mxu0 %v3587
      %3787 = vmatmul.f32.gmra.mxu0 %v3661
      %v3788 = vpop.f32.mrf.mxu0
      %v3789 = vadd.f32 %v3766, %v3788
      %3790 = vmatmul.f32.gmra.mxu0 %v3668
      %v3791 = vpop.f32.mrf.mxu0
      %v3792 = vadd.f32 %v3769, %v3791
      %3793 = vdwg.mxu0
      %3794 = vmatpush.msra.mxu0 0.0
      %3795 = vmatpush.msra.mxu0 0.0
      %3796 = vmatpush.msra.mxu0 0.0
      %3797 = vmatpush.msra.mxu0 0.0
      %3798 = vmatpush.msra.mxu0 0.0
      %3799 = vmatpush.msra.mxu0 0.0
      %3800 = vmatpush.msra.mxu0 0.0
      %3801 = vmatpush.msra.mxu0 0.0
      %3802 = vmatpush.msra.mxu0 0.0
      %3803 = vmatpush.msra.mxu0 0.0
      %3804 = vmatpush.msra.mxu0 0.0
      %3805 = vmatpush.msra.mxu0 0.0
      %3806 = vmatpush.msra.mxu0 %v3644
      %3807 = vmatpush.msra.mxu0 %v3641
      %3808 = vmatpush.msra.mxu0 %v3638
      %3809 = vmatpush.msra.mxu0 %v3635
      %3810 = vmatmul.f32.gmra.mxu0 %v3675
      %v3811 = vpop.f32.mrf.mxu0
      %v3812 = vadd.f32 %v3789, %v3811
      %3813 = vmatmul.f32.gmra.mxu0 %v3677
      %v3814 = vpop.f32.mrf.mxu0
      %v3815 = vadd.f32 %v3792, %v3814
      %3816 = vdwg.mxu0
      %3817 = vmatpush.msra.mxu0 %v3585
      %3818 = vmatpush.msra.mxu0 %v3582
      %3819 = vmatpush.msra.mxu0 %v3579
      %3820 = vmatpush.msra.mxu0 %v3576
      %3821 = vmatpush.msra.mxu0 %v3573
      %3822 = vmatpush.msra.mxu0 %v3570
      %3823 = vmatpush.msra.mxu0 %v3567
      %3824 = vmatpush.msra.mxu0 %v3564
      %3825 = vmatpush.msra.mxu0 %v3561
      %3826 = vmatpush.msra.mxu0 %v3558
      %3827 = vmatpush.msra.mxu0 %v3555
      %3828 = vmatpush.msra.mxu0 %v3552
      %3829 = vmatpush.msra.mxu0 %v3549
      %3830 = vmatpush.msra.mxu0 %v3546
      %3831 = vmatpush.msra.mxu0 %v3543
      %3832 = vmatpush.msra.mxu0 %v3540
      %3833 = vmatmul.f32.gmra.mxu0 %v3658
      %v3834 = vpop.f32.mrf.mxu0
      %v3835 = vadd.f32 0.0, %v3834
      %3836 = vmatmul.f32.gmra.mxu0 %v3666
      %v3837 = vpop.f32.mrf.mxu0
      %v3838 = vadd.f32 0.0, %v3837
      %3839 = vdwg.mxu0
      %3840 = vmatpush.msra.mxu0 %v3633
      %3841 = vmatpush.msra.mxu0 %v3630
      %3842 = vmatpush.msra.mxu0 %v3627
      %3843 = vmatpush.msra.mxu0 %v3624
      %3844 = vmatpush.msra.mxu0 %v3621
      %3845 = vmatpush.msra.mxu0 %v3618
      %3846 = vmatpush.msra.mxu0 %v3615
      %3847 = vmatpush.msra.mxu0 %v3612
      %3848 = vmatpush.msra.mxu0 %v3609
      %3849 = vmatpush.msra.mxu0 %v3606
      %3850 = vmatpush.msra.mxu0 %v3603
      %3851 = vmatpush.msra.mxu0 %v3600
      %3852 = vmatpush.msra.mxu0 %v3597
      %3853 = vmatpush.msra.mxu0 %v3594
      %3854 = vmatpush.msra.mxu0 %v3591
      %3855 = vmatpush.msra.mxu0 %v3588
      %3856 = vmatmul.f32.gmra.mxu0 %v3661
      %v3857 = vpop.f32.mrf.mxu0
      %v3858 = vadd.f32 %v3835, %v3857
      %3859 = vmatmul.f32.gmra.mxu0 %v3668
      %v3860 = vpop.f32.mrf.mxu0
      %v3861 = vadd.f32 %v3838, %v3860
      %3862 = vdwg.mxu0
      %3863 = vmatpush.msra.mxu0 0.0
      %3864 = vmatpush.msra.mxu0 0.0
      %3865 = vmatpush.msra.mxu0 0.0
      %3866 = vmatpush.msra.mxu0 0.0
      %3867 = vmatpush.msra.mxu0 0.0
      %3868 = vmatpush.msra.mxu0 0.0
      %3869 = vmatpush.msra.mxu0 0.0
      %3870 = vmatpush.msra.mxu0 0.0
      %3871 = vmatpush.msra.mxu0 0.0
      %3872 = vmatpush.msra.mxu0 0.0
      %3873 = vmatpush.msra.mxu0 0.0
      %3874 = vmatpush.msra.mxu0 0.0
      %3875 = vmatpush.msra.mxu0 %v3645
      %3876 = vmatpush.msra.mxu0 %v3642
      %3877 = vmatpush.msra.mxu0 %v3639
      %3878 = vmatpush.msra.mxu0 %v3636
      %3879 = vmatmul.f32.gmra.mxu0 %v3675
      %v3880 = vpop.f32.mrf.mxu0
      %v3881 = vadd.f32 %v3858, %v3880
      %3882 = vmatmul.f32.gmra.mxu0 %v3677
      %v3883 = vpop.f32.mrf.mxu0
      %v3884 = vadd.f32 %v3861, %v3883
      %3885 = vdwg.mxu0
      %v3892 = vrot.slane %v3414, 2
      %v3893 = vrot.slane %v3417, 2
      %v3894 = vsel %vm2807, %v3892, %v3893
      %v3895 = vrot.slane %v3415, 2
      %v3896 = vrot.slane %v3418, 2
      %v3897 = vsel %vm2807, %v3895, %v3896
      %v3898 = vrot.slane %v3416, 2
      %v3899 = vrot.slane %v3419, 2
      %v3900 = vsel %vm2807, %v3898, %v3899
      %v3901 = vrot.slane %v3420, 2
      %v3902 = vsel %vm2807, %v3893, %v3901
      %v3903 = vrot.slane %v3421, 2
      %v3904 = vsel %vm2807, %v3896, %v3903
      %v3905 = vrot.slane %v3422, 2
      %v3906 = vsel %vm2807, %v3899, %v3905
      %v3911 = vsel %vm200, %v3900, 0
      %v3913 = vsel %vm200, %v3906, 0
      %3915 = vmatpush.msra.mxu0 %v3468
      %3916 = vmatpush.msra.mxu0 %v3465
      %3917 = vmatpush.msra.mxu0 %v3462
      %3918 = vmatpush.msra.mxu0 %v3459
      %3919 = vmatpush.msra.mxu0 %v3456
      %3920 = vmatpush.msra.mxu0 %v3453
      %3921 = vmatpush.msra.mxu0 %v3450
      %3922 = vmatpush.msra.mxu0 %v3447
      %3923 = vmatpush.msra.mxu0 %v3444
      %3924 = vmatpush.msra.mxu0 %v3441
      %3925 = vmatpush.msra.mxu0 %v3438
      %3926 = vmatpush.msra.mxu0 %v3435
      %3927 = vmatpush.msra.mxu0 %v3432
      %3928 = vmatpush.msra.mxu0 %v3429
      %3929 = vmatpush.msra.mxu0 %v3426
      %3930 = vmatpush.msra.mxu0 %v3423
      %3931 = vmatmul.f32.gmra.mxu0 %v3894
      %v3932 = vpop.f32.mrf.mxu0
      %v3933 = vadd.f32 %v3743, %v3932
      %3934 = vmatmul.f32.gmra.mxu0 %v3902
      %v3935 = vpop.f32.mrf.mxu0
      %v3936 = vadd.f32 %v3746, %v3935
      %3937 = vdwg.mxu0
      %3938 = vmatpush.msra.mxu0 %v3516
      %3939 = vmatpush.msra.mxu0 %v3513
      %3940 = vmatpush.msra.mxu0 %v3510
      %3941 = vmatpush.msra.mxu0 %v3507
      %3942 = vmatpush.msra.mxu0 %v3504
      %3943 = vmatpush.msra.mxu0 %v3501
      %3944 = vmatpush.msra.mxu0 %v3498
      %3945 = vmatpush.msra.mxu0 %v3495
      %3946 = vmatpush.msra.mxu0 %v3492
      %3947 = vmatpush.msra.mxu0 %v3489
      %3948 = vmatpush.msra.mxu0 %v3486
      %3949 = vmatpush.msra.mxu0 %v3483
      %3950 = vmatpush.msra.mxu0 %v3480
      %3951 = vmatpush.msra.mxu0 %v3477
      %3952 = vmatpush.msra.mxu0 %v3474
      %3953 = vmatpush.msra.mxu0 %v3471
      %3954 = vmatmul.f32.gmra.mxu0 %v3897
      %v3955 = vpop.f32.mrf.mxu0
      %v3956 = vadd.f32 %v3933, %v3955
      %3957 = vmatmul.f32.gmra.mxu0 %v3904
      %v3958 = vpop.f32.mrf.mxu0
      %v3959 = vadd.f32 %v3936, %v3958
      %3960 = vdwg.mxu0
      %3961 = vmatpush.msra.mxu0 0.0
      %3962 = vmatpush.msra.mxu0 0.0
      %3963 = vmatpush.msra.mxu0 0.0
      %3964 = vmatpush.msra.mxu0 0.0
      %3965 = vmatpush.msra.mxu0 0.0
      %3966 = vmatpush.msra.mxu0 0.0
      %3967 = vmatpush.msra.mxu0 0.0
      %3968 = vmatpush.msra.mxu0 0.0
      %3969 = vmatpush.msra.mxu0 0.0
      %3970 = vmatpush.msra.mxu0 0.0
      %3971 = vmatpush.msra.mxu0 0.0
      %3972 = vmatpush.msra.mxu0 0.0
      %3973 = vmatpush.msra.mxu0 %v3528
      %3974 = vmatpush.msra.mxu0 %v3525
      %3975 = vmatpush.msra.mxu0 %v3522
      %3976 = vmatpush.msra.mxu0 %v3519
      %3977 = vmatmul.f32.gmra.mxu0 %v3911
      %v3978 = vpop.f32.mrf.mxu0
      %v3979 = vadd.f32 %v3956, %v3978
      %3980 = vmatmul.f32.gmra.mxu0 %v3913
      %v3981 = vpop.f32.mrf.mxu0
      %v3982 = vadd.f32 %v3959, %v3981
      %3983 = vdwg.mxu0
      %3984 = vmatpush.msra.mxu0 %v3469
      %3985 = vmatpush.msra.mxu0 %v3466
      %3986 = vmatpush.msra.mxu0 %v3463
      %3987 = vmatpush.msra.mxu0 %v3460
      %3988 = vmatpush.msra.mxu0 %v3457
      %3989 = vmatpush.msra.mxu0 %v3454
      %3990 = vmatpush.msra.mxu0 %v3451
      %3991 = vmatpush.msra.mxu0 %v3448
      %3992 = vmatpush.msra.mxu0 %v3445
      %3993 = vmatpush.msra.mxu0 %v3442
      %3994 = vmatpush.msra.mxu0 %v3439
      %3995 = vmatpush.msra.mxu0 %v3436
      %3996 = vmatpush.msra.mxu0 %v3433
      %3997 = vmatpush.msra.mxu0 %v3430
      %3998 = vmatpush.msra.mxu0 %v3427
      %3999 = vmatpush.msra.mxu0 %v3424
      %4000 = vmatmul.f32.gmra.mxu0 %v3894
      %v4001 = vpop.f32.mrf.mxu0
      %v4002 = vadd.f32 %v3812, %v4001
      %4003 = vmatmul.f32.gmra.mxu0 %v3902
      %v4004 = vpop.f32.mrf.mxu0
      %v4005 = vadd.f32 %v3815, %v4004
      %4006 = vdwg.mxu0
      %4007 = vmatpush.msra.mxu0 %v3517
      %4008 = vmatpush.msra.mxu0 %v3514
      %4009 = vmatpush.msra.mxu0 %v3511
      %4010 = vmatpush.msra.mxu0 %v3508
      %4011 = vmatpush.msra.mxu0 %v3505
      %4012 = vmatpush.msra.mxu0 %v3502
      %4013 = vmatpush.msra.mxu0 %v3499
      %4014 = vmatpush.msra.mxu0 %v3496
      %4015 = vmatpush.msra.mxu0 %v3493
      %4016 = vmatpush.msra.mxu0 %v3490
      %4017 = vmatpush.msra.mxu0 %v3487
      %4018 = vmatpush.msra.mxu0 %v3484
      %4019 = vmatpush.msra.mxu0 %v3481
      %4020 = vmatpush.msra.mxu0 %v3478
      %4021 = vmatpush.msra.mxu0 %v3475
      %4022 = vmatpush.msra.mxu0 %v3472
      %4023 = vmatmul.f32.gmra.mxu0 %v3897
      %v4024 = vpop.f32.mrf.mxu0
      %v4025 = vadd.f32 %v4002, %v4024
      %4026 = vmatmul.f32.gmra.mxu0 %v3904
      %v4027 = vpop.f32.mrf.mxu0
      %v4028 = vadd.f32 %v4005, %v4027
      %4029 = vdwg.mxu0
      %4030 = vmatpush.msra.mxu0 0.0
      %4031 = vmatpush.msra.mxu0 0.0
      %4032 = vmatpush.msra.mxu0 0.0
      %4033 = vmatpush.msra.mxu0 0.0
      %4034 = vmatpush.msra.mxu0 0.0
      %4035 = vmatpush.msra.mxu0 0.0
      %4036 = vmatpush.msra.mxu0 0.0
      %4037 = vmatpush.msra.mxu0 0.0
      %4038 = vmatpush.msra.mxu0 0.0
      %4039 = vmatpush.msra.mxu0 0.0
      %4040 = vmatpush.msra.mxu0 0.0
      %4041 = vmatpush.msra.mxu0 0.0
      %4042 = vmatpush.msra.mxu0 %v3529
      %4043 = vmatpush.msra.mxu0 %v3526
      %4044 = vmatpush.msra.mxu0 %v3523
      %4045 = vmatpush.msra.mxu0 %v3520
      %4046 = vmatmul.f32.gmra.mxu0 %v3911
      %v4047 = vpop.f32.mrf.mxu0
      %v4048 = vadd.f32 %v4025, %v4047
      %4049 = vmatmul.f32.gmra.mxu0 %v3913
      %v4050 = vpop.f32.mrf.mxu0
      %v4051 = vadd.f32 %v4028, %v4050
      %4052 = vdwg.mxu0
      %4053 = vmatpush.msra.mxu0 %v3470
      %4054 = vmatpush.msra.mxu0 %v3467
      %4055 = vmatpush.msra.mxu0 %v3464
      %4056 = vmatpush.msra.mxu0 %v3461
      %4057 = vmatpush.msra.mxu0 %v3458
      %4058 = vmatpush.msra.mxu0 %v3455
      %4059 = vmatpush.msra.mxu0 %v3452
      %4060 = vmatpush.msra.mxu0 %v3449
      %4061 = vmatpush.msra.mxu0 %v3446
      %4062 = vmatpush.msra.mxu0 %v3443
      %4063 = vmatpush.msra.mxu0 %v3440
      %4064 = vmatpush.msra.mxu0 %v3437
      %4065 = vmatpush.msra.mxu0 %v3434
      %4066 = vmatpush.msra.mxu0 %v3431
      %4067 = vmatpush.msra.mxu0 %v3428
      %4068 = vmatpush.msra.mxu0 %v3425
      %4069 = vmatmul.f32.gmra.mxu0 %v3894
      %v4070 = vpop.f32.mrf.mxu0
      %v4071 = vadd.f32 %v3881, %v4070
      %4072 = vmatmul.f32.gmra.mxu0 %v3902
      %v4073 = vpop.f32.mrf.mxu0
      %v4074 = vadd.f32 %v3884, %v4073
      %4075 = vdwg.mxu0
      %4076 = vmatpush.msra.mxu0 %v3518
      %4077 = vmatpush.msra.mxu0 %v3515
      %4078 = vmatpush.msra.mxu0 %v3512
      %4079 = vmatpush.msra.mxu0 %v3509
      %4080 = vmatpush.msra.mxu0 %v3506
      %4081 = vmatpush.msra.mxu0 %v3503
      %4082 = vmatpush.msra.mxu0 %v3500
      %4083 = vmatpush.msra.mxu0 %v3497
      %4084 = vmatpush.msra.mxu0 %v3494
      %4085 = vmatpush.msra.mxu0 %v3491
      %4086 = vmatpush.msra.mxu0 %v3488
      %4087 = vmatpush.msra.mxu0 %v3485
      %4088 = vmatpush.msra.mxu0 %v3482
      %4089 = vmatpush.msra.mxu0 %v3479
      %4090 = vmatpush.msra.mxu0 %v3476
      %4091 = vmatpush.msra.mxu0 %v3473
      %4092 = vmatmul.f32.gmra.mxu0 %v3897
      %v4093 = vpop.f32.mrf.mxu0
      %v4094 = vadd.f32 %v4071, %v4093
      %4095 = vmatmul.f32.gmra.mxu0 %v3904
      %v4096 = vpop.f32.mrf.mxu0
      %v4097 = vadd.f32 %v4074, %v4096
      %4098 = vdwg.mxu0
      %4099 = vmatpush.msra.mxu0 0.0
      %4100 = vmatpush.msra.mxu0 0.0
      %4101 = vmatpush.msra.mxu0 0.0
      %4102 = vmatpush.msra.mxu0 0.0
      %4103 = vmatpush.msra.mxu0 0.0
      %4104 = vmatpush.msra.mxu0 0.0
      %4105 = vmatpush.msra.mxu0 0.0
      %4106 = vmatpush.msra.mxu0 0.0
      %4107 = vmatpush.msra.mxu0 0.0
      %4108 = vmatpush.msra.mxu0 0.0
      %4109 = vmatpush.msra.mxu0 0.0
      %4110 = vmatpush.msra.mxu0 0.0
      %4111 = vmatpush.msra.mxu0 %v3530
      %4112 = vmatpush.msra.mxu0 %v3527
      %4113 = vmatpush.msra.mxu0 %v3524
      %4114 = vmatpush.msra.mxu0 %v3521
      %4115 = vmatmul.f32.gmra.mxu0 %v3911
      %v4116 = vpop.f32.mrf.mxu0
      %v4117 = vadd.f32 %v4094, %v4116
      %4118 = vmatmul.f32.gmra.mxu0 %v3913
      %v4119 = vpop.f32.mrf.mxu0
      %v4120 = vadd.f32 %v4097, %v4119
      %4121 = vdwg.mxu0
      %v4122 = vld [vmem:[#allocation3] sm:$0xc0]
      %v4123 = vld [vmem:[#allocation3 + $0x8] sm:$0xc0]
      %v4124 = vld [vmem:[#allocation3 + $0x10] sm:$0xc0]
      %v4125 = vld [vmem:[#allocation3 + $0x30] sm:$0x3f]
      %v4126 = vld [vmem:[#allocation3 + $0x38] sm:$0x3f]
      %v4127 = vld [vmem:[#allocation3 + $0x40] sm:$0x3f]
      %s4128 = scalar_lea.vmem %s3, 1728
      %v4129 = vld [vmem:[%s4128] sm:$0xff]
      %v4130 = vld [vmem:[%s4128 + $0x8] sm:$0xff]
      %v4131 = vld [vmem:[%s4128 + $0x10] sm:$0xff]
      %v4132 = vld [vmem:[%s4128 + $0x18] sm:$0xff]
      %v4133 = vld [vmem:[%s4128 + $0x20] sm:$0xff]
      %v4134 = vld [vmem:[%s4128 + $0x28] sm:$0xff]
      %v4135 = vld [vmem:[%s4128 + $0x30] sm:$0xff]
      %v4136 = vld [vmem:[%s4128 + $0x38] sm:$0xff]
      %v4137 = vld [vmem:[%s4128 + $0x40] sm:$0xff]
      %v4138 = vld [vmem:[%s4128 + $0x48] sm:$0xff]
      %v4139 = vld [vmem:[%s4128 + $0x50] sm:$0xff]
      %v4140 = vld [vmem:[%s4128 + $0x58] sm:$0xff]
      %v4141 = vld [vmem:[%s4128 + $0x60] sm:$0xff]
      %v4142 = vld [vmem:[%s4128 + $0x68] sm:$0xff]
      %v4143 = vld [vmem:[%s4128 + $0x70] sm:$0xff]
      %v4144 = vld [vmem:[%s4128 + $0x78] sm:$0xff]
      %v4145 = vld [vmem:[%s4128 + $0x80] sm:$0xff]
      %v4146 = vld [vmem:[%s4128 + $0x88] sm:$0xff]
      %v4147 = vld [vmem:[%s4128 + $0x90] sm:$0xff]
      %v4148 = vld [vmem:[%s4128 + $0x98] sm:$0xff]
      %v4149 = vld [vmem:[%s4128 + $0xa0] sm:$0xff]
      %v4150 = vld [vmem:[%s4128 + $0xa8] sm:$0xff]
      %v4151 = vld [vmem:[%s4128 + $0xb0] sm:$0xff]
      %v4152 = vld [vmem:[%s4128 + $0xb8] sm:$0xff]
      %v4153 = vld [vmem:[%s4128 + $0xc0] sm:$0xff]
      %v4154 = vld [vmem:[%s4128 + $0xc8] sm:$0xff]
      %v4155 = vld [vmem:[%s4128 + $0xd0] sm:$0xff]
      %v4156 = vld [vmem:[%s4128 + $0xd8] sm:$0xff]
      %v4157 = vld [vmem:[%s4128 + $0xe0] sm:$0xff]
      %v4158 = vld [vmem:[%s4128 + $0xe8] sm:$0xff]
      %v4159 = vld [vmem:[%s4128 + $0xf0] sm:$0xff]
      %v4160 = vld [vmem:[%s4128 + $0xf8] sm:$0xff]
      %v4161 = vld [vmem:[%s4128 + $0x100] sm:$0xff]
      %v4162 = vld [vmem:[%s4128 + $0x108] sm:$0xff]
      %v4163 = vld [vmem:[%s4128 + $0x110] sm:$0xff]
      %v4164 = vld [vmem:[%s4128 + $0x118] sm:$0xff]
      %v4165 = vld [vmem:[%s4128 + $0x120] sm:$0xff]
      %v4166 = vld [vmem:[%s4128 + $0x128] sm:$0xff]
      %v4167 = vld [vmem:[%s4128 + $0x130] sm:$0xff]
      %v4168 = vld [vmem:[%s4128 + $0x138] sm:$0xff]
      %v4169 = vld [vmem:[%s4128 + $0x140] sm:$0xff]
      %v4170 = vld [vmem:[%s4128 + $0x148] sm:$0xff]
      %v4171 = vld [vmem:[%s4128 + $0x150] sm:$0xff]
      %v4172 = vld [vmem:[%s4128 + $0x158] sm:$0xff]
      %v4173 = vld [vmem:[%s4128 + $0x160] sm:$0xff]
      %v4174 = vld [vmem:[%s4128 + $0x168] sm:$0xff]
      %v4175 = vld [vmem:[%s4128 + $0x170] sm:$0xff]
      %v4176 = vld [vmem:[%s4128 + $0x178] sm:$0xff]
      %v4177 = vld [vmem:[%s4128 + $0x180] sm:$0xff]
      %v4178 = vld [vmem:[%s4128 + $0x188] sm:$0xff]
      %v4179 = vld [vmem:[%s4128 + $0x190] sm:$0xff]
      %v4180 = vld [vmem:[%s4128 + $0x198] sm:$0xff]
      %v4181 = vld [vmem:[%s4128 + $0x1a0] sm:$0xff]
      %v4182 = vld [vmem:[%s4128 + $0x1a8] sm:$0xff]
      %v4183 = vld [vmem:[%s4128 + $0x1b0] sm:$0xff]
      %v4184 = vld [vmem:[%s4128 + $0x1b8] sm:$0xff]
      %v4185 = vld [vmem:[%s4128 + $0x1c0] sm:$0xff]
      %v4186 = vld [vmem:[%s4128 + $0x1c8] sm:$0xff]
      %v4187 = vld [vmem:[%s4128 + $0x1d0] sm:$0xff]
      %v4188 = vld [vmem:[%s4128 + $0x1d8] sm:$0xff]
      %v4189 = vld [vmem:[%s4128 + $0x1e0] sm:$0xff]
      %v4190 = vld [vmem:[%s4128 + $0x1e8] sm:$0xff]
      %v4191 = vld [vmem:[%s4128 + $0x1f0] sm:$0xff]
      %v4192 = vld [vmem:[%s4128 + $0x1f8] sm:$0xff]
      %v4193 = vld [vmem:[%s4128 + $0x200] sm:$0xff]
      %v4194 = vld [vmem:[%s4128 + $0x208] sm:$0xff]
      %v4195 = vld [vmem:[%s4128 + $0x210] sm:$0xff]
      %v4196 = vld [vmem:[%s4128 + $0x218] sm:$0xff]
      %v4197 = vld [vmem:[%s4128 + $0x220] sm:$0xff]
      %v4198 = vld [vmem:[%s4128 + $0x228] sm:$0xff]
      %v4199 = vld [vmem:[%s4128 + $0x230] sm:$0xff]
      %v4200 = vld [vmem:[%s4128 + $0x238] sm:$0xff]
      %v4201 = vld [vmem:[%s4128 + $0x240] sm:$0xff]
      %v4202 = vld [vmem:[%s4128 + $0x248] sm:$0xff]
      %v4203 = vld [vmem:[%s4128 + $0x250] sm:$0xff]
      %v4204 = vld [vmem:[%s4128 + $0x258] sm:$0xff]
      %v4205 = vld [vmem:[%s4128 + $0x260] sm:$0xff]
      %v4206 = vld [vmem:[%s4128 + $0x268] sm:$0xff]
      %v4207 = vld [vmem:[%s4128 + $0x270] sm:$0xff]
      %v4208 = vld [vmem:[%s4128 + $0x278] sm:$0xff]
      %v4209 = vld [vmem:[%s4128 + $0x280] sm:$0xff]
      %v4210 = vld [vmem:[%s4128 + $0x288] sm:$0xff]
      %v4211 = vld [vmem:[%s4128 + $0x290] sm:$0xff]
      %v4212 = vld [vmem:[%s4128 + $0x298] sm:$0xff]
      %v4213 = vld [vmem:[%s4128 + $0x2a0] sm:$0xff]
      %v4214 = vld [vmem:[%s4128 + $0x2a8] sm:$0xff]
      %v4215 = vld [vmem:[%s4128 + $0x2b0] sm:$0xff]
      %v4216 = vld [vmem:[%s4128 + $0x2b8] sm:$0xff]
      %v4217 = vld [vmem:[%s4128 + $0x2c0] sm:$0xff]
      %v4218 = vld [vmem:[%s4128 + $0x2c8] sm:$0xff]
      %v4219 = vld [vmem:[%s4128 + $0x2d0] sm:$0xff]
      %v4220 = vld [vmem:[%s4128 + $0x2d8] sm:$0xff]
      %v4221 = vld [vmem:[%s4128 + $0x2e0] sm:$0xff]
      %v4222 = vld [vmem:[%s4128 + $0x2e8] sm:$0xff]
      %v4223 = vld [vmem:[%s4128 + $0x2f0] sm:$0xff]
      %v4224 = vld [vmem:[%s4128 + $0x2f8] sm:$0xff]
      %v4225 = vld [vmem:[%s4128 + $0x300] sm:$0xff]
      %v4226 = vld [vmem:[%s4128 + $0x308] sm:$0xff]
      %v4227 = vld [vmem:[%s4128 + $0x310] sm:$0xff]
      %v4228 = vld [vmem:[%s4128 + $0x318] sm:$0xff]
      %v4229 = vld [vmem:[%s4128 + $0x320] sm:$0xff]
      %v4230 = vld [vmem:[%s4128 + $0x328] sm:$0xff]
      %v4231 = vld [vmem:[%s4128 + $0x330] sm:$0xff]
      %v4232 = vld [vmem:[%s4128 + $0x338] sm:$0xff]
      %v4233 = vld [vmem:[%s4128 + $0x340] sm:$0xff]
      %v4234 = vld [vmem:[%s4128 + $0x348] sm:$0xff]
      %v4235 = vld [vmem:[%s4128 + $0x350] sm:$0xff]
      %v4236 = vld [vmem:[%s4128 + $0x358] sm:$0xff]
      %v4243 = vrot.slane %v4122, 6
      %v4244 = vrot.slane %v3417, 6
      %v4245 = vsel %vm1166, %v4243, %v4244
      %v4246 = vrot.slane %v4123, 6
      %v4247 = vrot.slane %v3418, 6
      %v4248 = vsel %vm1166, %v4246, %v4247
      %v4249 = vrot.slane %v4124, 6
      %v4250 = vrot.slane %v3419, 6
      %v4251 = vsel %vm1166, %v4249, %v4250
      %v4252 = vrot.slane %v4125, 6
      %v4253 = vsel %vm1166, %v4244, %v4252
      %v4254 = vrot.slane %v4126, 6
      %v4255 = vsel %vm1166, %v4247, %v4254
      %v4256 = vrot.slane %v4127, 6
      %v4257 = vsel %vm1166, %v4250, %v4256
      %v4262 = vsel %vm200, %v4251, 0
      %v4264 = vsel %vm200, %v4257, 0
      %4266 = vmatpush.msra.mxu0 %v4174
      %4267 = vmatpush.msra.mxu0 %v4171
      %4268 = vmatpush.msra.mxu0 %v4168
      %4269 = vmatpush.msra.mxu0 %v4165
      %4270 = vmatpush.msra.mxu0 %v4162
      %4271 = vmatpush.msra.mxu0 %v4159
      %4272 = vmatpush.msra.mxu0 %v4156
      %4273 = vmatpush.msra.mxu0 %v4153
      %4274 = vmatpush.msra.mxu0 %v4150
      %4275 = vmatpush.msra.mxu0 %v4147
      %4276 = vmatpush.msra.mxu0 %v4144
      %4277 = vmatpush.msra.mxu0 %v4141
      %4278 = vmatpush.msra.mxu0 %v4138
      %4279 = vmatpush.msra.mxu0 %v4135
      %4280 = vmatpush.msra.mxu0 %v4132
      %4281 = vmatpush.msra.mxu0 %v4129
      %4282 = vmatmul.f32.gmra.mxu0 %v4245
      %v4283 = vpop.f32.mrf.mxu0
      %v4284 = vadd.f32 0.0, %v4283
      %4285 = vmatmul.f32.gmra.mxu0 %v4253
      %v4286 = vpop.f32.mrf.mxu0
      %v4287 = vadd.f32 0.0, %v4286
      %4288 = vdwg.mxu0
      %4289 = vmatpush.msra.mxu0 %v4222
      %4290 = vmatpush.msra.mxu0 %v4219
      %4291 = vmatpush.msra.mxu0 %v4216
      %4292 = vmatpush.msra.mxu0 %v4213
      %4293 = vmatpush.msra.mxu0 %v4210
      %4294 = vmatpush.msra.mxu0 %v4207
      %4295 = vmatpush.msra.mxu0 %v4204
      %4296 = vmatpush.msra.mxu0 %v4201
      %4297 = vmatpush.msra.mxu0 %v4198
      %4298 = vmatpush.msra.mxu0 %v4195
      %4299 = vmatpush.msra.mxu0 %v4192
      %4300 = vmatpush.msra.mxu0 %v4189
      %4301 = vmatpush.msra.mxu0 %v4186
      %4302 = vmatpush.msra.mxu0 %v4183
      %4303 = vmatpush.msra.mxu0 %v4180
      %4304 = vmatpush.msra.mxu0 %v4177
      %4305 = vmatmul.f32.gmra.mxu0 %v4248
      %v4306 = vpop.f32.mrf.mxu0
      %v4307 = vadd.f32 %v4284, %v4306
      %4308 = vmatmul.f32.gmra.mxu0 %v4255
      %v4309 = vpop.f32.mrf.mxu0
      %v4310 = vadd.f32 %v4287, %v4309
      %4311 = vdwg.mxu0
      %4312 = vmatpush.msra.mxu0 0.0
      %4313 = vmatpush.msra.mxu0 0.0
      %4314 = vmatpush.msra.mxu0 0.0
      %4315 = vmatpush.msra.mxu0 0.0
      %4316 = vmatpush.msra.mxu0 0.0
      %4317 = vmatpush.msra.mxu0 0.0
      %4318 = vmatpush.msra.mxu0 0.0
      %4319 = vmatpush.msra.mxu0 0.0
      %4320 = vmatpush.msra.mxu0 0.0
      %4321 = vmatpush.msra.mxu0 0.0
      %4322 = vmatpush.msra.mxu0 0.0
      %4323 = vmatpush.msra.mxu0 0.0
      %4324 = vmatpush.msra.mxu0 %v4234
      %4325 = vmatpush.msra.mxu0 %v4231
      %4326 = vmatpush.msra.mxu0 %v4228
      %4327 = vmatpush.msra.mxu0 %v4225
      %4328 = vmatmul.f32.gmra.mxu0 %v4262
      %v4329 = vpop.f32.mrf.mxu0
      %v4330 = vadd.f32 %v4307, %v4329
      %4331 = vmatmul.f32.gmra.mxu0 %v4264
      %v4332 = vpop.f32.mrf.mxu0
      %v4333 = vadd.f32 %v4310, %v4332
      %4334 = vdwg.mxu0
      %4335 = vmatpush.msra.mxu0 %v4175
      %4336 = vmatpush.msra.mxu0 %v4172
      %4337 = vmatpush.msra.mxu0 %v4169
      %4338 = vmatpush.msra.mxu0 %v4166
      %4339 = vmatpush.msra.mxu0 %v4163
      %4340 = vmatpush.msra.mxu0 %v4160
      %4341 = vmatpush.msra.mxu0 %v4157
      %4342 = vmatpush.msra.mxu0 %v4154
      %4343 = vmatpush.msra.mxu0 %v4151
      %4344 = vmatpush.msra.mxu0 %v4148
      %4345 = vmatpush.msra.mxu0 %v4145
      %4346 = vmatpush.msra.mxu0 %v4142
      %4347 = vmatpush.msra.mxu0 %v4139
      %4348 = vmatpush.msra.mxu0 %v4136
      %4349 = vmatpush.msra.mxu0 %v4133
      %4350 = vmatpush.msra.mxu0 %v4130
      %4351 = vmatmul.f32.gmra.mxu0 %v4245
      %v4352 = vpop.f32.mrf.mxu0
      %v4353 = vadd.f32 0.0, %v4352
      %4354 = vmatmul.f32.gmra.mxu0 %v4253
      %v4355 = vpop.f32.mrf.mxu0
      %v4356 = vadd.f32 0.0, %v4355
      %4357 = vdwg.mxu0
      %4358 = vmatpush.msra.mxu0 %v4223
      %4359 = vmatpush.msra.mxu0 %v4220
      %4360 = vmatpush.msra.mxu0 %v4217
      %4361 = vmatpush.msra.mxu0 %v4214
      %4362 = vmatpush.msra.mxu0 %v4211
      %4363 = vmatpush.msra.mxu0 %v4208
      %4364 = vmatpush.msra.mxu0 %v4205
      %4365 = vmatpush.msra.mxu0 %v4202
      %4366 = vmatpush.msra.mxu0 %v4199
      %4367 = vmatpush.msra.mxu0 %v4196
      %4368 = vmatpush.msra.mxu0 %v4193
      %4369 = vmatpush.msra.mxu0 %v4190
      %4370 = vmatpush.msra.mxu0 %v4187
      %4371 = vmatpush.msra.mxu0 %v4184
      %4372 = vmatpush.msra.mxu0 %v4181
      %4373 = vmatpush.msra.mxu0 %v4178
      %4374 = vmatmul.f32.gmra.mxu0 %v4248
      %v4375 = vpop.f32.mrf.mxu0
      %v4376 = vadd.f32 %v4353, %v4375
      %4377 = vmatmul.f32.gmra.mxu0 %v4255
      %v4378 = vpop.f32.mrf.mxu0
      %v4379 = vadd.f32 %v4356, %v4378
      %4380 = vdwg.mxu0
      %4381 = vmatpush.msra.mxu0 0.0
      %4382 = vmatpush.msra.mxu0 0.0
      %4383 = vmatpush.msra.mxu0 0.0
      %4384 = vmatpush.msra.mxu0 0.0
      %4385 = vmatpush.msra.mxu0 0.0
      %4386 = vmatpush.msra.mxu0 0.0
      %4387 = vmatpush.msra.mxu0 0.0
      %4388 = vmatpush.msra.mxu0 0.0
      %4389 = vmatpush.msra.mxu0 0.0
      %4390 = vmatpush.msra.mxu0 0.0
      %4391 = vmatpush.msra.mxu0 0.0
      %4392 = vmatpush.msra.mxu0 0.0
      %4393 = vmatpush.msra.mxu0 %v4235
      %4394 = vmatpush.msra.mxu0 %v4232
      %4395 = vmatpush.msra.mxu0 %v4229
      %4396 = vmatpush.msra.mxu0 %v4226
      %4397 = vmatmul.f32.gmra.mxu0 %v4262
      %v4398 = vpop.f32.mrf.mxu0
      %v4399 = vadd.f32 %v4376, %v4398
      %4400 = vmatmul.f32.gmra.mxu0 %v4264
      %v4401 = vpop.f32.mrf.mxu0
      %v4402 = vadd.f32 %v4379, %v4401
      %4403 = vdwg.mxu0
      %4404 = vmatpush.msra.mxu0 %v4176
      %4405 = vmatpush.msra.mxu0 %v4173
      %4406 = vmatpush.msra.mxu0 %v4170
      %4407 = vmatpush.msra.mxu0 %v4167
      %4408 = vmatpush.msra.mxu0 %v4164
      %4409 = vmatpush.msra.mxu0 %v4161
      %4410 = vmatpush.msra.mxu0 %v4158
      %4411 = vmatpush.msra.mxu0 %v4155
      %4412 = vmatpush.msra.mxu0 %v4152
      %4413 = vmatpush.msra.mxu0 %v4149
      %4414 = vmatpush.msra.mxu0 %v4146
      %4415 = vmatpush.msra.mxu0 %v4143
      %4416 = vmatpush.msra.mxu0 %v4140
      %4417 = vmatpush.msra.mxu0 %v4137
      %4418 = vmatpush.msra.mxu0 %v4134
      %4419 = vmatpush.msra.mxu0 %v4131
      %4420 = vmatmul.f32.gmra.mxu0 %v4245
      %v4421 = vpop.f32.mrf.mxu0
      %v4422 = vadd.f32 0.0, %v4421
      %4423 = vmatmul.f32.gmra.mxu0 %v4253
      %v4424 = vpop.f32.mrf.mxu0
      %v4425 = vadd.f32 0.0, %v4424
      %4426 = vdwg.mxu0
      %4427 = vmatpush.msra.mxu0 %v4224
      %4428 = vmatpush.msra.mxu0 %v4221
      %4429 = vmatpush.msra.mxu0 %v4218
      %4430 = vmatpush.msra.mxu0 %v4215
      %4431 = vmatpush.msra.mxu0 %v4212
      %4432 = vmatpush.msra.mxu0 %v4209
      %4433 = vmatpush.msra.mxu0 %v4206
      %4434 = vmatpush.msra.mxu0 %v4203
      %4435 = vmatpush.msra.mxu0 %v4200
      %4436 = vmatpush.msra.mxu0 %v4197
      %4437 = vmatpush.msra.mxu0 %v4194
      %4438 = vmatpush.msra.mxu0 %v4191
      %4439 = vmatpush.msra.mxu0 %v4188
      %4440 = vmatpush.msra.mxu0 %v4185
      %4441 = vmatpush.msra.mxu0 %v4182
      %4442 = vmatpush.msra.mxu0 %v4179
      %4443 = vmatmul.f32.gmra.mxu0 %v4248
      %v4444 = vpop.f32.mrf.mxu0
      %v4445 = vadd.f32 %v4422, %v4444
      %4446 = vmatmul.f32.gmra.mxu0 %v4255
      %v4447 = vpop.f32.mrf.mxu0
      %v4448 = vadd.f32 %v4425, %v4447
      %4449 = vdwg.mxu0
      %4450 = vmatpush.msra.mxu0 0.0
      %4451 = vmatpush.msra.mxu0 0.0
      %4452 = vmatpush.msra.mxu0 0.0
      %4453 = vmatpush.msra.mxu0 0.0
      %4454 = vmatpush.msra.mxu0 0.0
      %4455 = vmatpush.msra.mxu0 0.0
      %4456 = vmatpush.msra.mxu0 0.0
      %4457 = vmatpush.msra.mxu0 0.0
      %4458 = vmatpush.msra.mxu0 0.0
      %4459 = vmatpush.msra.mxu0 0.0
      %4460 = vmatpush.msra.mxu0 0.0
      %4461 = vmatpush.msra.mxu0 0.0
      %4462 = vmatpush.msra.mxu0 %v4236
      %4463 = vmatpush.msra.mxu0 %v4233
      %4464 = vmatpush.msra.mxu0 %v4230
      %4465 = vmatpush.msra.mxu0 %v4227
      %4466 = vmatmul.f32.gmra.mxu0 %v4262
      %v4467 = vpop.f32.mrf.mxu0
      %v4468 = vadd.f32 %v4445, %v4467
      %4469 = vmatmul.f32.gmra.mxu0 %v4264
      %v4470 = vpop.f32.mrf.mxu0
      %v4471 = vadd.f32 %v4448, %v4470
      %4472 = vdwg.mxu0
      %v4473 = vadd.f32 %v3979, %v4330
      %v4474 = vadd.f32 %v4048, %v4399
      %v4475 = vadd.f32 %v4117, %v4468
      %v4476 = vadd.f32 %v3982, %v4333
      %v4477 = vadd.f32 %v4051, %v4402
      %v4478 = vadd.f32 %v4120, %v4471
      %v4479 = vld [vmem:[#allocation3 + $0x30] sm:$0xff]
      %v4480 = vld [vmem:[#allocation3 + $0x38] sm:$0xff]
      %v4481 = vld [vmem:[#allocation3 + $0x40] sm:$0xff]
      %s4482 = scalar_lea.vmem %s3, 2592
      %v4483 = vld [vmem:[%s4482] sm:$0xff]
      %v4484 = vld [vmem:[%s4482 + $0x8] sm:$0xff]
      %v4485 = vld [vmem:[%s4482 + $0x10] sm:$0xff]
      %v4486 = vld [vmem:[%s4482 + $0x18] sm:$0xff]
      %v4487 = vld [vmem:[%s4482 + $0x20] sm:$0xff]
      %v4488 = vld [vmem:[%s4482 + $0x28] sm:$0xff]
      %v4489 = vld [vmem:[%s4482 + $0x30] sm:$0xff]
      %v4490 = vld [vmem:[%s4482 + $0x38] sm:$0xff]
      %v4491 = vld [vmem:[%s4482 + $0x40] sm:$0xff]
      %v4492 = vld [vmem:[%s4482 + $0x48] sm:$0xff]
      %v4493 = vld [vmem:[%s4482 + $0x50] sm:$0xff]
      %v4494 = vld [vmem:[%s4482 + $0x58] sm:$0xff]
      %v4495 = vld [vmem:[%s4482 + $0x60] sm:$0xff]
      %v4496 = vld [vmem:[%s4482 + $0x68] sm:$0xff]
      %v4497 = vld [vmem:[%s4482 + $0x70] sm:$0xff]
      %v4498 = vld [vmem:[%s4482 + $0x78] sm:$0xff]
      %v4499 = vld [vmem:[%s4482 + $0x80] sm:$0xff]
      %v4500 = vld [vmem:[%s4482 + $0x88] sm:$0xff]
      %v4501 = vld [vmem:[%s4482 + $0x90] sm:$0xff]
      %v4502 = vld [vmem:[%s4482 + $0x98] sm:$0xff]
      %v4503 = vld [vmem:[%s4482 + $0xa0] sm:$0xff]
      %v4504 = vld [vmem:[%s4482 + $0xa8] sm:$0xff]
      %v4505 = vld [vmem:[%s4482 + $0xb0] sm:$0xff]
      %v4506 = vld [vmem:[%s4482 + $0xb8] sm:$0xff]
      %v4507 = vld [vmem:[%s4482 + $0xc0] sm:$0xff]
      %v4508 = vld [vmem:[%s4482 + $0xc8] sm:$0xff]
      %v4509 = vld [vmem:[%s4482 + $0xd0] sm:$0xff]
      %v4510 = vld [vmem:[%s4482 + $0xd8] sm:$0xff]
      %v4511 = vld [vmem:[%s4482 + $0xe0] sm:$0xff]
      %v4512 = vld [vmem:[%s4482 + $0xe8] sm:$0xff]
      %v4513 = vld [vmem:[%s4482 + $0xf0] sm:$0xff]
      %v4514 = vld [vmem:[%s4482 + $0xf8] sm:$0xff]
      %v4515 = vld [vmem:[%s4482 + $0x100] sm:$0xff]
      %v4516 = vld [vmem:[%s4482 + $0x108] sm:$0xff]
      %v4517 = vld [vmem:[%s4482 + $0x110] sm:$0xff]
      %v4518 = vld [vmem:[%s4482 + $0x118] sm:$0xff]
      %v4519 = vld [vmem:[%s4482 + $0x120] sm:$0xff]
      %v4520 = vld [vmem:[%s4482 + $0x128] sm:$0xff]
      %v4521 = vld [vmem:[%s4482 + $0x130] sm:$0xff]
      %v4522 = vld [vmem:[%s4482 + $0x138] sm:$0xff]
      %v4523 = vld [vmem:[%s4482 + $0x140] sm:$0xff]
      %v4524 = vld [vmem:[%s4482 + $0x148] sm:$0xff]
      %v4525 = vld [vmem:[%s4482 + $0x150] sm:$0xff]
      %v4526 = vld [vmem:[%s4482 + $0x158] sm:$0xff]
      %v4527 = vld [vmem:[%s4482 + $0x160] sm:$0xff]
      %v4528 = vld [vmem:[%s4482 + $0x168] sm:$0xff]
      %v4529 = vld [vmem:[%s4482 + $0x170] sm:$0xff]
      %v4530 = vld [vmem:[%s4482 + $0x178] sm:$0xff]
      %v4531 = vld [vmem:[%s4482 + $0x180] sm:$0xff]
      %v4532 = vld [vmem:[%s4482 + $0x188] sm:$0xff]
      %v4533 = vld [vmem:[%s4482 + $0x190] sm:$0xff]
      %v4534 = vld [vmem:[%s4482 + $0x198] sm:$0xff]
      %v4535 = vld [vmem:[%s4482 + $0x1a0] sm:$0xff]
      %v4536 = vld [vmem:[%s4482 + $0x1a8] sm:$0xff]
      %v4537 = vld [vmem:[%s4482 + $0x1b0] sm:$0xff]
      %v4538 = vld [vmem:[%s4482 + $0x1b8] sm:$0xff]
      %v4539 = vld [vmem:[%s4482 + $0x1c0] sm:$0xff]
      %v4540 = vld [vmem:[%s4482 + $0x1c8] sm:$0xff]
      %v4541 = vld [vmem:[%s4482 + $0x1d0] sm:$0xff]
      %v4542 = vld [vmem:[%s4482 + $0x1d8] sm:$0xff]
      %v4543 = vld [vmem:[%s4482 + $0x1e0] sm:$0xff]
      %v4544 = vld [vmem:[%s4482 + $0x1e8] sm:$0xff]
      %v4545 = vld [vmem:[%s4482 + $0x1f0] sm:$0xff]
      %v4546 = vld [vmem:[%s4482 + $0x1f8] sm:$0xff]
      %v4547 = vld [vmem:[%s4482 + $0x200] sm:$0xff]
      %v4548 = vld [vmem:[%s4482 + $0x208] sm:$0xff]
      %v4549 = vld [vmem:[%s4482 + $0x210] sm:$0xff]
      %v4550 = vld [vmem:[%s4482 + $0x218] sm:$0xff]
      %v4551 = vld [vmem:[%s4482 + $0x220] sm:$0xff]
      %v4552 = vld [vmem:[%s4482 + $0x228] sm:$0xff]
      %v4553 = vld [vmem:[%s4482 + $0x230] sm:$0xff]
      %v4554 = vld [vmem:[%s4482 + $0x238] sm:$0xff]
      %v4555 = vld [vmem:[%s4482 + $0x240] sm:$0xff]
      %v4556 = vld [vmem:[%s4482 + $0x248] sm:$0xff]
      %v4557 = vld [vmem:[%s4482 + $0x250] sm:$0xff]
      %v4558 = vld [vmem:[%s4482 + $0x258] sm:$0xff]
      %v4559 = vld [vmem:[%s4482 + $0x260] sm:$0xff]
      %v4560 = vld [vmem:[%s4482 + $0x268] sm:$0xff]
      %v4561 = vld [vmem:[%s4482 + $0x270] sm:$0xff]
      %v4562 = vld [vmem:[%s4482 + $0x278] sm:$0xff]
      %v4563 = vld [vmem:[%s4482 + $0x280] sm:$0xff]
      %v4564 = vld [vmem:[%s4482 + $0x288] sm:$0xff]
      %v4565 = vld [vmem:[%s4482 + $0x290] sm:$0xff]
      %v4566 = vld [vmem:[%s4482 + $0x298] sm:$0xff]
      %v4567 = vld [vmem:[%s4482 + $0x2a0] sm:$0xff]
      %v4568 = vld [vmem:[%s4482 + $0x2a8] sm:$0xff]
      %v4569 = vld [vmem:[%s4482 + $0x2b0] sm:$0xff]
      %v4570 = vld [vmem:[%s4482 + $0x2b8] sm:$0xff]
      %v4571 = vld [vmem:[%s4482 + $0x2c0] sm:$0xff]
      %v4572 = vld [vmem:[%s4482 + $0x2c8] sm:$0xff]
      %v4573 = vld [vmem:[%s4482 + $0x2d0] sm:$0xff]
      %v4574 = vld [vmem:[%s4482 + $0x2d8] sm:$0xff]
      %v4575 = vld [vmem:[%s4482 + $0x2e0] sm:$0xff]
      %v4576 = vld [vmem:[%s4482 + $0x2e8] sm:$0xff]
      %v4577 = vld [vmem:[%s4482 + $0x2f0] sm:$0xff]
      %v4578 = vld [vmem:[%s4482 + $0x2f8] sm:$0xff]
      %v4579 = vld [vmem:[%s4482 + $0x300] sm:$0xff]
      %v4580 = vld [vmem:[%s4482 + $0x308] sm:$0xff]
      %v4581 = vld [vmem:[%s4482 + $0x310] sm:$0xff]
      %v4582 = vld [vmem:[%s4482 + $0x318] sm:$0xff]
      %v4583 = vld [vmem:[%s4482 + $0x320] sm:$0xff]
      %v4584 = vld [vmem:[%s4482 + $0x328] sm:$0xff]
      %v4585 = vld [vmem:[%s4482 + $0x330] sm:$0xff]
      %v4586 = vld [vmem:[%s4482 + $0x338] sm:$0xff]
      %v4587 = vld [vmem:[%s4482 + $0x340] sm:$0xff]
      %v4588 = vld [vmem:[%s4482 + $0x348] sm:$0xff]
      %v4589 = vld [vmem:[%s4482 + $0x350] sm:$0xff]
      %v4590 = vld [vmem:[%s4482 + $0x358] sm:$0xff]
      %v4591 = vsel %vm200, %v3419, 0
      %v4594 = vsel %vm200, %v4481, 0
      %4596 = vmatpush.msra.mxu0 %v4528
      %4597 = vmatpush.msra.mxu0 %v4525
      %4598 = vmatpush.msra.mxu0 %v4522
      %4599 = vmatpush.msra.mxu0 %v4519
      %4600 = vmatpush.msra.mxu0 %v4516
      %4601 = vmatpush.msra.mxu0 %v4513
      %4602 = vmatpush.msra.mxu0 %v4510
      %4603 = vmatpush.msra.mxu0 %v4507
      %4604 = vmatpush.msra.mxu0 %v4504
      %4605 = vmatpush.msra.mxu0 %v4501
      %4606 = vmatpush.msra.mxu0 %v4498
      %4607 = vmatpush.msra.mxu0 %v4495
      %4608 = vmatpush.msra.mxu0 %v4492
      %4609 = vmatpush.msra.mxu0 %v4489
      %4610 = vmatpush.msra.mxu0 %v4486
      %4611 = vmatpush.msra.mxu0 %v4483
      %4612 = vmatmul.f32.gmra.mxu0 %v3417
      %v4613 = vpop.f32.mrf.mxu0
      %v4614 = vadd.f32 0.0, %v4613
      %4615 = vmatmul.f32.gmra.mxu0 %v4479
      %v4616 = vpop.f32.mrf.mxu0
      %v4617 = vadd.f32 0.0, %v4616
      %4618 = vdwg.mxu0
      %4619 = vmatpush.msra.mxu0 %v4576
      %4620 = vmatpush.msra.mxu0 %v4573
      %4621 = vmatpush.msra.mxu0 %v4570
      %4622 = vmatpush.msra.mxu0 %v4567
      %4623 = vmatpush.msra.mxu0 %v4564
      %4624 = vmatpush.msra.mxu0 %v4561
      %4625 = vmatpush.msra.mxu0 %v4558
      %4626 = vmatpush.msra.mxu0 %v4555
      %4627 = vmatpush.msra.mxu0 %v4552
      %4628 = vmatpush.msra.mxu0 %v4549
      %4629 = vmatpush.msra.mxu0 %v4546
      %4630 = vmatpush.msra.mxu0 %v4543
      %4631 = vmatpush.msra.mxu0 %v4540
      %4632 = vmatpush.msra.mxu0 %v4537
      %4633 = vmatpush.msra.mxu0 %v4534
      %4634 = vmatpush.msra.mxu0 %v4531
      %4635 = vmatmul.f32.gmra.mxu0 %v3418
      %v4636 = vpop.f32.mrf.mxu0
      %v4637 = vadd.f32 %v4614, %v4636
      %4638 = vmatmul.f32.gmra.mxu0 %v4480
      %v4639 = vpop.f32.mrf.mxu0
      %v4640 = vadd.f32 %v4617, %v4639
      %4641 = vdwg.mxu0
      %4642 = vmatpush.msra.mxu0 0.0
      %4643 = vmatpush.msra.mxu0 0.0
      %4644 = vmatpush.msra.mxu0 0.0
      %4645 = vmatpush.msra.mxu0 0.0
      %4646 = vmatpush.msra.mxu0 0.0
      %4647 = vmatpush.msra.mxu0 0.0
      %4648 = vmatpush.msra.mxu0 0.0
      %4649 = vmatpush.msra.mxu0 0.0
      %4650 = vmatpush.msra.mxu0 0.0
      %4651 = vmatpush.msra.mxu0 0.0
      %4652 = vmatpush.msra.mxu0 0.0
      %4653 = vmatpush.msra.mxu0 0.0
      %4654 = vmatpush.msra.mxu0 %v4588
      %4655 = vmatpush.msra.mxu0 %v4585
      %4656 = vmatpush.msra.mxu0 %v4582
      %4657 = vmatpush.msra.mxu0 %v4579
      %4658 = vmatmul.f32.gmra.mxu0 %v4591
      %v4659 = vpop.f32.mrf.mxu0
      %v4660 = vadd.f32 %v4637, %v4659
      %4661 = vmatmul.f32.gmra.mxu0 %v4594
      %v4662 = vpop.f32.mrf.mxu0
      %v4663 = vadd.f32 %v4640, %v4662
      %4664 = vdwg.mxu0
      %4665 = vmatpush.msra.mxu0 %v4529
      %4666 = vmatpush.msra.mxu0 %v4526
      %4667 = vmatpush.msra.mxu0 %v4523
      %4668 = vmatpush.msra.mxu0 %v4520
      %4669 = vmatpush.msra.mxu0 %v4517
      %4670 = vmatpush.msra.mxu0 %v4514
      %4671 = vmatpush.msra.mxu0 %v4511
      %4672 = vmatpush.msra.mxu0 %v4508
      %4673 = vmatpush.msra.mxu0 %v4505
      %4674 = vmatpush.msra.mxu0 %v4502
      %4675 = vmatpush.msra.mxu0 %v4499
      %4676 = vmatpush.msra.mxu0 %v4496
      %4677 = vmatpush.msra.mxu0 %v4493
      %4678 = vmatpush.msra.mxu0 %v4490
      %4679 = vmatpush.msra.mxu0 %v4487
      %4680 = vmatpush.msra.mxu0 %v4484
      %4681 = vmatmul.f32.gmra.mxu0 %v3417
      %v4682 = vpop.f32.mrf.mxu0
      %v4683 = vadd.f32 0.0, %v4682
      %4684 = vmatmul.f32.gmra.mxu0 %v4479
      %v4685 = vpop.f32.mrf.mxu0
      %v4686 = vadd.f32 0.0, %v4685
      %4687 = vdwg.mxu0
      %4688 = vmatpush.msra.mxu0 %v4577
      %4689 = vmatpush.msra.mxu0 %v4574
      %4690 = vmatpush.msra.mxu0 %v4571
      %4691 = vmatpush.msra.mxu0 %v4568
      %4692 = vmatpush.msra.mxu0 %v4565
      %4693 = vmatpush.msra.mxu0 %v4562
      %4694 = vmatpush.msra.mxu0 %v4559
      %4695 = vmatpush.msra.mxu0 %v4556
      %4696 = vmatpush.msra.mxu0 %v4553
      %4697 = vmatpush.msra.mxu0 %v4550
      %4698 = vmatpush.msra.mxu0 %v4547
      %4699 = vmatpush.msra.mxu0 %v4544
      %4700 = vmatpush.msra.mxu0 %v4541
      %4701 = vmatpush.msra.mxu0 %v4538
      %4702 = vmatpush.msra.mxu0 %v4535
      %4703 = vmatpush.msra.mxu0 %v4532
      %4704 = vmatmul.f32.gmra.mxu0 %v3418
      %v4705 = vpop.f32.mrf.mxu0
      %v4706 = vadd.f32 %v4683, %v4705
      %4707 = vmatmul.f32.gmra.mxu0 %v4480
      %v4708 = vpop.f32.mrf.mxu0
      %v4709 = vadd.f32 %v4686, %v4708
      %4710 = vdwg.mxu0
      %4711 = vmatpush.msra.mxu0 0.0
      %4712 = vmatpush.msra.mxu0 0.0
      %4713 = vmatpush.msra.mxu0 0.0
      %4714 = vmatpush.msra.mxu0 0.0
      %4715 = vmatpush.msra.mxu0 0.0
      %4716 = vmatpush.msra.mxu0 0.0
      %4717 = vmatpush.msra.mxu0 0.0
      %4718 = vmatpush.msra.mxu0 0.0
      %4719 = vmatpush.msra.mxu0 0.0
      %4720 = vmatpush.msra.mxu0 0.0
      %4721 = vmatpush.msra.mxu0 0.0
      %4722 = vmatpush.msra.mxu0 0.0
      %4723 = vmatpush.msra.mxu0 %v4589
      %4724 = vmatpush.msra.mxu0 %v4586
      %4725 = vmatpush.msra.mxu0 %v4583
      %4726 = vmatpush.msra.mxu0 %v4580
      %4727 = vmatmul.f32.gmra.mxu0 %v4591
      %v4728 = vpop.f32.mrf.mxu0
      %v4729 = vadd.f32 %v4706, %v4728
      %4730 = vmatmul.f32.gmra.mxu0 %v4594
      %v4731 = vpop.f32.mrf.mxu0
      %v4732 = vadd.f32 %v4709, %v4731
      %4733 = vdwg.mxu0
      %4734 = vmatpush.msra.mxu0 %v4530
      %4735 = vmatpush.msra.mxu0 %v4527
      %4736 = vmatpush.msra.mxu0 %v4524
      %4737 = vmatpush.msra.mxu0 %v4521
      %4738 = vmatpush.msra.mxu0 %v4518
      %4739 = vmatpush.msra.mxu0 %v4515
      %4740 = vmatpush.msra.mxu0 %v4512
      %4741 = vmatpush.msra.mxu0 %v4509
      %4742 = vmatpush.msra.mxu0 %v4506
      %4743 = vmatpush.msra.mxu0 %v4503
      %4744 = vmatpush.msra.mxu0 %v4500
      %4745 = vmatpush.msra.mxu0 %v4497
      %4746 = vmatpush.msra.mxu0 %v4494
      %4747 = vmatpush.msra.mxu0 %v4491
      %4748 = vmatpush.msra.mxu0 %v4488
      %4749 = vmatpush.msra.mxu0 %v4485
      %4750 = vmatmul.f32.gmra.mxu0 %v3417
      %v4751 = vpop.f32.mrf.mxu0
      %v4752 = vadd.f32 0.0, %v4751
      %4753 = vmatmul.f32.gmra.mxu0 %v4479
      %v4754 = vpop.f32.mrf.mxu0
      %v4755 = vadd.f32 0.0, %v4754
      %4756 = vdwg.mxu0
      %4757 = vmatpush.msra.mxu0 %v4578
      %4758 = vmatpush.msra.mxu0 %v4575
      %4759 = vmatpush.msra.mxu0 %v4572
      %4760 = vmatpush.msra.mxu0 %v4569
      %4761 = vmatpush.msra.mxu0 %v4566
      %4762 = vmatpush.msra.mxu0 %v4563
      %4763 = vmatpush.msra.mxu0 %v4560
      %4764 = vmatpush.msra.mxu0 %v4557
      %4765 = vmatpush.msra.mxu0 %v4554
      %4766 = vmatpush.msra.mxu0 %v4551
      %4767 = vmatpush.msra.mxu0 %v4548
      %4768 = vmatpush.msra.mxu0 %v4545
      %4769 = vmatpush.msra.mxu0 %v4542
      %4770 = vmatpush.msra.mxu0 %v4539
      %4771 = vmatpush.msra.mxu0 %v4536
      %4772 = vmatpush.msra.mxu0 %v4533
      %4773 = vmatmul.f32.gmra.mxu0 %v3418
      %v4774 = vpop.f32.mrf.mxu0
      %v4775 = vadd.f32 %v4752, %v4774
      %4776 = vmatmul.f32.gmra.mxu0 %v4480
      %v4777 = vpop.f32.mrf.mxu0
      %v4778 = vadd.f32 %v4755, %v4777
      %4779 = vdwg.mxu0
      %4780 = vmatpush.msra.mxu0 0.0
      %4781 = vmatpush.msra.mxu0 0.0
      %4782 = vmatpush.msra.mxu0 0.0
      %4783 = vmatpush.msra.mxu0 0.0
      %4784 = vmatpush.msra.mxu0 0.0
      %4785 = vmatpush.msra.mxu0 0.0
      %4786 = vmatpush.msra.mxu0 0.0
      %4787 = vmatpush.msra.mxu0 0.0
      %4788 = vmatpush.msra.mxu0 0.0
      %4789 = vmatpush.msra.mxu0 0.0
      %4790 = vmatpush.msra.mxu0 0.0
      %4791 = vmatpush.msra.mxu0 0.0
      %4792 = vmatpush.msra.mxu0 %v4590
      %4793 = vmatpush.msra.mxu0 %v4587
      %4794 = vmatpush.msra.mxu0 %v4584
      %4795 = vmatpush.msra.mxu0 %v4581
      %4796 = vmatmul.f32.gmra.mxu0 %v4591
      %v4797 = vpop.f32.mrf.mxu0
      %v4798 = vadd.f32 %v4775, %v4797
      %4799 = vmatmul.f32.gmra.mxu0 %v4594
      %v4800 = vpop.f32.mrf.mxu0
      %v4801 = vadd.f32 %v4778, %v4800
      %4802 = vdwg.mxu0
      %v4803 = vadd.f32 %v4473, %v4660
      %v4804 = vadd.f32 %v4474, %v4729
      %v4805 = vadd.f32 %v4475, %v4798
      %v4806 = vadd.f32 %v4476, %v4663
      %v4807 = vadd.f32 %v4477, %v4732
      %v4808 = vadd.f32 %v4478, %v4801
      %v4809 = vld [vmem:[#allocation3 + $0x18] sm:$0xfc]
      %v4810 = vld [vmem:[#allocation3 + $0x20] sm:$0xfc]
      %v4811 = vld [vmem:[#allocation3 + $0x28] sm:$0xfc]
      %v4812 = vld [vmem:[#allocation3 + $0x30] sm:$0xff]
      %v4813 = vld [vmem:[#allocation3 + $0x38] sm:$0xff]
      %v4814 = vld [vmem:[#allocation3 + $0x40] sm:$0xff]
      %v4815 = vld [vmem:[#allocation3 + $0x48] sm:$0x3]
      %v4816 = vld [vmem:[#allocation3 + $0x50] sm:$0x3]
      %v4817 = vld [vmem:[#allocation3 + $0x58] sm:$0x3]
      %s4818 = scalar_lea.vmem %s3, 3456
      %v4819 = vld [vmem:[%s4818] sm:$0xff]
      %v4820 = vld [vmem:[%s4818 + $0x8] sm:$0xff]
      %v4821 = vld [vmem:[%s4818 + $0x10] sm:$0xff]
      %v4822 = vld [vmem:[%s4818 + $0x18] sm:$0xff]
      %v4823 = vld [vmem:[%s4818 + $0x20] sm:$0xff]
      %v4824 = vld [vmem:[%s4818 + $0x28] sm:$0xff]
      %v4825 = vld [vmem:[%s4818 + $0x30] sm:$0xff]
      %v4826 = vld [vmem:[%s4818 + $0x38] sm:$0xff]
      %v4827 = vld [vmem:[%s4818 + $0x40] sm:$0xff]
      %v4828 = vld [vmem:[%s4818 + $0x48] sm:$0xff]
      %v4829 = vld [vmem:[%s4818 + $0x50] sm:$0xff]
      %v4830 = vld [vmem:[%s4818 + $0x58] sm:$0xff]
      %v4831 = vld [vmem:[%s4818 + $0x60] sm:$0xff]
      %v4832 = vld [vmem:[%s4818 + $0x68] sm:$0xff]
      %v4833 = vld [vmem:[%s4818 + $0x70] sm:$0xff]
      %v4834 = vld [vmem:[%s4818 + $0x78] sm:$0xff]
      %v4835 = vld [vmem:[%s4818 + $0x80] sm:$0xff]
      %v4836 = vld [vmem:[%s4818 + $0x88] sm:$0xff]
      %v4837 = vld [vmem:[%s4818 + $0x90] sm:$0xff]
      %v4838 = vld [vmem:[%s4818 + $0x98] sm:$0xff]
      %v4839 = vld [vmem:[%s4818 + $0xa0] sm:$0xff]
      %v4840 = vld [vmem:[%s4818 + $0xa8] sm:$0xff]
      %v4841 = vld [vmem:[%s4818 + $0xb0] sm:$0xff]
      %v4842 = vld [vmem:[%s4818 + $0xb8] sm:$0xff]
      %v4843 = vld [vmem:[%s4818 + $0xc0] sm:$0xff]
      %v4844 = vld [vmem:[%s4818 + $0xc8] sm:$0xff]
      %v4845 = vld [vmem:[%s4818 + $0xd0] sm:$0xff]
      %v4846 = vld [vmem:[%s4818 + $0xd8] sm:$0xff]
      %v4847 = vld [vmem:[%s4818 + $0xe0] sm:$0xff]
      %v4848 = vld [vmem:[%s4818 + $0xe8] sm:$0xff]
      %v4849 = vld [vmem:[%s4818 + $0xf0] sm:$0xff]
      %v4850 = vld [vmem:[%s4818 + $0xf8] sm:$0xff]
      %v4851 = vld [vmem:[%s4818 + $0x100] sm:$0xff]
      %v4852 = vld [vmem:[%s4818 + $0x108] sm:$0xff]
      %v4853 = vld [vmem:[%s4818 + $0x110] sm:$0xff]
      %v4854 = vld [vmem:[%s4818 + $0x118] sm:$0xff]
      %v4855 = vld [vmem:[%s4818 + $0x120] sm:$0xff]
      %v4856 = vld [vmem:[%s4818 + $0x128] sm:$0xff]
      %v4857 = vld [vmem:[%s4818 + $0x130] sm:$0xff]
      %v4858 = vld [vmem:[%s4818 + $0x138] sm:$0xff]
      %v4859 = vld [vmem:[%s4818 + $0x140] sm:$0xff]
      %v4860 = vld [vmem:[%s4818 + $0x148] sm:$0xff]
      %v4861 = vld [vmem:[%s4818 + $0x150] sm:$0xff]
      %v4862 = vld [vmem:[%s4818 + $0x158] sm:$0xff]
      %v4863 = vld [vmem:[%s4818 + $0x160] sm:$0xff]
      %v4864 = vld [vmem:[%s4818 + $0x168] sm:$0xff]
      %v4865 = vld [vmem:[%s4818 + $0x170] sm:$0xff]
      %v4866 = vld [vmem:[%s4818 + $0x178] sm:$0xff]
      %v4867 = vld [vmem:[%s4818 + $0x180] sm:$0xff]
      %v4868 = vld [vmem:[%s4818 + $0x188] sm:$0xff]
      %v4869 = vld [vmem:[%s4818 + $0x190] sm:$0xff]
      %v4870 = vld [vmem:[%s4818 + $0x198] sm:$0xff]
      %v4871 = vld [vmem:[%s4818 + $0x1a0] sm:$0xff]
      %v4872 = vld [vmem:[%s4818 + $0x1a8] sm:$0xff]
      %v4873 = vld [vmem:[%s4818 + $0x1b0] sm:$0xff]
      %v4874 = vld [vmem:[%s4818 + $0x1b8] sm:$0xff]
      %v4875 = vld [vmem:[%s4818 + $0x1c0] sm:$0xff]
      %v4876 = vld [vmem:[%s4818 + $0x1c8] sm:$0xff]
      %v4877 = vld [vmem:[%s4818 + $0x1d0] sm:$0xff]
      %v4878 = vld [vmem:[%s4818 + $0x1d8] sm:$0xff]
      %v4879 = vld [vmem:[%s4818 + $0x1e0] sm:$0xff]
      %v4880 = vld [vmem:[%s4818 + $0x1e8] sm:$0xff]
      %v4881 = vld [vmem:[%s4818 + $0x1f0] sm:$0xff]
      %v4882 = vld [vmem:[%s4818 + $0x1f8] sm:$0xff]
      %v4883 = vld [vmem:[%s4818 + $0x200] sm:$0xff]
      %v4884 = vld [vmem:[%s4818 + $0x208] sm:$0xff]
      %v4885 = vld [vmem:[%s4818 + $0x210] sm:$0xff]
      %v4886 = vld [vmem:[%s4818 + $0x218] sm:$0xff]
      %v4887 = vld [vmem:[%s4818 + $0x220] sm:$0xff]
      %v4888 = vld [vmem:[%s4818 + $0x228] sm:$0xff]
      %v4889 = vld [vmem:[%s4818 + $0x230] sm:$0xff]
      %v4890 = vld [vmem:[%s4818 + $0x238] sm:$0xff]
      %v4891 = vld [vmem:[%s4818 + $0x240] sm:$0xff]
      %v4892 = vld [vmem:[%s4818 + $0x248] sm:$0xff]
      %v4893 = vld [vmem:[%s4818 + $0x250] sm:$0xff]
      %v4894 = vld [vmem:[%s4818 + $0x258] sm:$0xff]
      %v4895 = vld [vmem:[%s4818 + $0x260] sm:$0xff]
      %v4896 = vld [vmem:[%s4818 + $0x268] sm:$0xff]
      %v4897 = vld [vmem:[%s4818 + $0x270] sm:$0xff]
      %v4898 = vld [vmem:[%s4818 + $0x278] sm:$0xff]
      %v4899 = vld [vmem:[%s4818 + $0x280] sm:$0xff]
      %v4900 = vld [vmem:[%s4818 + $0x288] sm:$0xff]
      %v4901 = vld [vmem:[%s4818 + $0x290] sm:$0xff]
      %v4902 = vld [vmem:[%s4818 + $0x298] sm:$0xff]
      %v4903 = vld [vmem:[%s4818 + $0x2a0] sm:$0xff]
      %v4904 = vld [vmem:[%s4818 + $0x2a8] sm:$0xff]
      %v4905 = vld [vmem:[%s4818 + $0x2b0] sm:$0xff]
      %v4906 = vld [vmem:[%s4818 + $0x2b8] sm:$0xff]
      %v4907 = vld [vmem:[%s4818 + $0x2c0] sm:$0xff]
      %v4908 = vld [vmem:[%s4818 + $0x2c8] sm:$0xff]
      %v4909 = vld [vmem:[%s4818 + $0x2d0] sm:$0xff]
      %v4910 = vld [vmem:[%s4818 + $0x2d8] sm:$0xff]
      %v4911 = vld [vmem:[%s4818 + $0x2e0] sm:$0xff]
      %v4912 = vld [vmem:[%s4818 + $0x2e8] sm:$0xff]
      %v4913 = vld [vmem:[%s4818 + $0x2f0] sm:$0xff]
      %v4914 = vld [vmem:[%s4818 + $0x2f8] sm:$0xff]
      %v4915 = vld [vmem:[%s4818 + $0x300] sm:$0xff]
      %v4916 = vld [vmem:[%s4818 + $0x308] sm:$0xff]
      %v4917 = vld [vmem:[%s4818 + $0x310] sm:$0xff]
      %v4918 = vld [vmem:[%s4818 + $0x318] sm:$0xff]
      %v4919 = vld [vmem:[%s4818 + $0x320] sm:$0xff]
      %v4920 = vld [vmem:[%s4818 + $0x328] sm:$0xff]
      %v4921 = vld [vmem:[%s4818 + $0x330] sm:$0xff]
      %v4922 = vld [vmem:[%s4818 + $0x338] sm:$0xff]
      %v4923 = vld [vmem:[%s4818 + $0x340] sm:$0xff]
      %v4924 = vld [vmem:[%s4818 + $0x348] sm:$0xff]
      %v4925 = vld [vmem:[%s4818 + $0x350] sm:$0xff]
      %v4926 = vld [vmem:[%s4818 + $0x358] sm:$0xff]
      %v4936 = vrot.slane %v4809, 2
      %v4937 = vrot.slane %v4812, 2
      %v4938 = vsel %vm2807, %v4936, %v4937
      %v4939 = vrot.slane %v4810, 2
      %v4940 = vrot.slane %v4813, 2
      %v4941 = vsel %vm2807, %v4939, %v4940
      %v4942 = vrot.slane %v4811, 2
      %v4943 = vrot.slane %v4814, 2
      %v4944 = vsel %vm2807, %v4942, %v4943
      %v4945 = vrot.slane %v4815, 2
      %v4946 = vsel %vm2807, %v4937, %v4945
      %v4947 = vrot.slane %v4816, 2
      %v4948 = vsel %vm2807, %v4940, %v4947
      %v4949 = vrot.slane %v4817, 2
      %v4950 = vsel %vm2807, %v4943, %v4949
      %v4955 = vsel %vm200, %v4944, 0
      %v4957 = vsel %vm200, %v4950, 0
      %4959 = vmatpush.msra.mxu0 %v4864
      %4960 = vmatpush.msra.mxu0 %v4861
      %4961 = vmatpush.msra.mxu0 %v4858
      %4962 = vmatpush.msra.mxu0 %v4855
      %4963 = vmatpush.msra.mxu0 %v4852
      %4964 = vmatpush.msra.mxu0 %v4849
      %4965 = vmatpush.msra.mxu0 %v4846
      %4966 = vmatpush.msra.mxu0 %v4843
      %4967 = vmatpush.msra.mxu0 %v4840
      %4968 = vmatpush.msra.mxu0 %v4837
      %4969 = vmatpush.msra.mxu0 %v4834
      %4970 = vmatpush.msra.mxu0 %v4831
      %4971 = vmatpush.msra.mxu0 %v4828
      %4972 = vmatpush.msra.mxu0 %v4825
      %4973 = vmatpush.msra.mxu0 %v4822
      %4974 = vmatpush.msra.mxu0 %v4819
      %4975 = vmatmul.f32.gmra.mxu0 %v4938
      %v4976 = vpop.f32.mrf.mxu0
      %v4977 = vadd.f32 0.0, %v4976
      %4978 = vmatmul.f32.gmra.mxu0 %v4946
      %v4979 = vpop.f32.mrf.mxu0
      %v4980 = vadd.f32 0.0, %v4979
      %4981 = vdwg.mxu0
      %4982 = vmatpush.msra.mxu0 %v4912
      %4983 = vmatpush.msra.mxu0 %v4909
      %4984 = vmatpush.msra.mxu0 %v4906
      %4985 = vmatpush.msra.mxu0 %v4903
      %4986 = vmatpush.msra.mxu0 %v4900
      %4987 = vmatpush.msra.mxu0 %v4897
      %4988 = vmatpush.msra.mxu0 %v4894
      %4989 = vmatpush.msra.mxu0 %v4891
      %4990 = vmatpush.msra.mxu0 %v4888
      %4991 = vmatpush.msra.mxu0 %v4885
      %4992 = vmatpush.msra.mxu0 %v4882
      %4993 = vmatpush.msra.mxu0 %v4879
      %4994 = vmatpush.msra.mxu0 %v4876
      %4995 = vmatpush.msra.mxu0 %v4873
      %4996 = vmatpush.msra.mxu0 %v4870
      %4997 = vmatpush.msra.mxu0 %v4867
      %4998 = vmatmul.f32.gmra.mxu0 %v4941
      %v4999 = vpop.f32.mrf.mxu0
      %v5000 = vadd.f32 %v4977, %v4999
      %5001 = vmatmul.f32.gmra.mxu0 %v4948
      %v5002 = vpop.f32.mrf.mxu0
      %v5003 = vadd.f32 %v4980, %v5002
      %5004 = vdwg.mxu0
      %5005 = vmatpush.msra.mxu0 0.0
      %5006 = vmatpush.msra.mxu0 0.0
      %5007 = vmatpush.msra.mxu0 0.0
      %5008 = vmatpush.msra.mxu0 0.0
      %5009 = vmatpush.msra.mxu0 0.0
      %5010 = vmatpush.msra.mxu0 0.0
      %5011 = vmatpush.msra.mxu0 0.0
      %5012 = vmatpush.msra.mxu0 0.0
      %5013 = vmatpush.msra.mxu0 0.0
      %5014 = vmatpush.msra.mxu0 0.0
      %5015 = vmatpush.msra.mxu0 0.0
      %5016 = vmatpush.msra.mxu0 0.0
      %5017 = vmatpush.msra.mxu0 %v4924
      %5018 = vmatpush.msra.mxu0 %v4921
      %5019 = vmatpush.msra.mxu0 %v4918
      %5020 = vmatpush.msra.mxu0 %v4915
      %5021 = vmatmul.f32.gmra.mxu0 %v4955
      %v5022 = vpop.f32.mrf.mxu0
      %v5023 = vadd.f32 %v5000, %v5022
      %5024 = vmatmul.f32.gmra.mxu0 %v4957
      %v5025 = vpop.f32.mrf.mxu0
      %v5026 = vadd.f32 %v5003, %v5025
      %5027 = vdwg.mxu0
      %5028 = vmatpush.msra.mxu0 %v4865
      %5029 = vmatpush.msra.mxu0 %v4862
      %5030 = vmatpush.msra.mxu0 %v4859
      %5031 = vmatpush.msra.mxu0 %v4856
      %5032 = vmatpush.msra.mxu0 %v4853
      %5033 = vmatpush.msra.mxu0 %v4850
      %5034 = vmatpush.msra.mxu0 %v4847
      %5035 = vmatpush.msra.mxu0 %v4844
      %5036 = vmatpush.msra.mxu0 %v4841
      %5037 = vmatpush.msra.mxu0 %v4838
      %5038 = vmatpush.msra.mxu0 %v4835
      %5039 = vmatpush.msra.mxu0 %v4832
      %5040 = vmatpush.msra.mxu0 %v4829
      %5041 = vmatpush.msra.mxu0 %v4826
      %5042 = vmatpush.msra.mxu0 %v4823
      %5043 = vmatpush.msra.mxu0 %v4820
      %5044 = vmatmul.f32.gmra.mxu0 %v4938
      %v5045 = vpop.f32.mrf.mxu0
      %v5046 = vadd.f32 0.0, %v5045
      %5047 = vmatmul.f32.gmra.mxu0 %v4946
      %v5048 = vpop.f32.mrf.mxu0
      %v5049 = vadd.f32 0.0, %v5048
      %5050 = vdwg.mxu0
      %5051 = vmatpush.msra.mxu0 %v4913
      %5052 = vmatpush.msra.mxu0 %v4910
      %5053 = vmatpush.msra.mxu0 %v4907
      %5054 = vmatpush.msra.mxu0 %v4904
      %5055 = vmatpush.msra.mxu0 %v4901
      %5056 = vmatpush.msra.mxu0 %v4898
      %5057 = vmatpush.msra.mxu0 %v4895
      %5058 = vmatpush.msra.mxu0 %v4892
      %5059 = vmatpush.msra.mxu0 %v4889
      %5060 = vmatpush.msra.mxu0 %v4886
      %5061 = vmatpush.msra.mxu0 %v4883
      %5062 = vmatpush.msra.mxu0 %v4880
      %5063 = vmatpush.msra.mxu0 %v4877
      %5064 = vmatpush.msra.mxu0 %v4874
      %5065 = vmatpush.msra.mxu0 %v4871
      %5066 = vmatpush.msra.mxu0 %v4868
      %5067 = vmatmul.f32.gmra.mxu0 %v4941
      %v5068 = vpop.f32.mrf.mxu0
      %v5069 = vadd.f32 %v5046, %v5068
      %5070 = vmatmul.f32.gmra.mxu0 %v4948
      %v5071 = vpop.f32.mrf.mxu0
      %v5072 = vadd.f32 %v5049, %v5071
      %5073 = vdwg.mxu0
      %5074 = vmatpush.msra.mxu0 0.0
      %5075 = vmatpush.msra.mxu0 0.0
      %5076 = vmatpush.msra.mxu0 0.0
      %5077 = vmatpush.msra.mxu0 0.0
      %5078 = vmatpush.msra.mxu0 0.0
      %5079 = vmatpush.msra.mxu0 0.0
      %5080 = vmatpush.msra.mxu0 0.0
      %5081 = vmatpush.msra.mxu0 0.0
      %5082 = vmatpush.msra.mxu0 0.0
      %5083 = vmatpush.msra.mxu0 0.0
      %5084 = vmatpush.msra.mxu0 0.0
      %5085 = vmatpush.msra.mxu0 0.0
      %5086 = vmatpush.msra.mxu0 %v4925
      %5087 = vmatpush.msra.mxu0 %v4922
      %5088 = vmatpush.msra.mxu0 %v4919
      %5089 = vmatpush.msra.mxu0 %v4916
      %5090 = vmatmul.f32.gmra.mxu0 %v4955
      %v5091 = vpop.f32.mrf.mxu0
      %v5092 = vadd.f32 %v5069, %v5091
      %5093 = vmatmul.f32.gmra.mxu0 %v4957
      %v5094 = vpop.f32.mrf.mxu0
      %v5095 = vadd.f32 %v5072, %v5094
      %5096 = vdwg.mxu0
      %5097 = vmatpush.msra.mxu0 %v4866
      %5098 = vmatpush.msra.mxu0 %v4863
      %5099 = vmatpush.msra.mxu0 %v4860
      %5100 = vmatpush.msra.mxu0 %v4857
      %5101 = vmatpush.msra.mxu0 %v4854
      %5102 = vmatpush.msra.mxu0 %v4851
      %5103 = vmatpush.msra.mxu0 %v4848
      %5104 = vmatpush.msra.mxu0 %v4845
      %5105 = vmatpush.msra.mxu0 %v4842
      %5106 = vmatpush.msra.mxu0 %v4839
      %5107 = vmatpush.msra.mxu0 %v4836
      %5108 = vmatpush.msra.mxu0 %v4833
      %5109 = vmatpush.msra.mxu0 %v4830
      %5110 = vmatpush.msra.mxu0 %v4827
      %5111 = vmatpush.msra.mxu0 %v4824
      %5112 = vmatpush.msra.mxu0 %v4821
      %5113 = vmatmul.f32.gmra.mxu0 %v4938
      %v5114 = vpop.f32.mrf.mxu0
      %v5115 = vadd.f32 0.0, %v5114
      %5116 = vmatmul.f32.gmra.mxu0 %v4946
      %v5117 = vpop.f32.mrf.mxu0
      %v5118 = vadd.f32 0.0, %v5117
      %5119 = vdwg.mxu0
      %5120 = vmatpush.msra.mxu0 %v4914
      %5121 = vmatpush.msra.mxu0 %v4911
      %5122 = vmatpush.msra.mxu0 %v4908
      %5123 = vmatpush.msra.mxu0 %v4905
      %5124 = vmatpush.msra.mxu0 %v4902
      %5125 = vmatpush.msra.mxu0 %v4899
      %5126 = vmatpush.msra.mxu0 %v4896
      %5127 = vmatpush.msra.mxu0 %v4893
      %5128 = vmatpush.msra.mxu0 %v4890
      %5129 = vmatpush.msra.mxu0 %v4887
      %5130 = vmatpush.msra.mxu0 %v4884
      %5131 = vmatpush.msra.mxu0 %v4881
      %5132 = vmatpush.msra.mxu0 %v4878
      %5133 = vmatpush.msra.mxu0 %v4875
      %5134 = vmatpush.msra.mxu0 %v4872
      %5135 = vmatpush.msra.mxu0 %v4869
      %5136 = vmatmul.f32.gmra.mxu0 %v4941
      %v5137 = vpop.f32.mrf.mxu0
      %v5138 = vadd.f32 %v5115, %v5137
      %5139 = vmatmul.f32.gmra.mxu0 %v4948
      %v5140 = vpop.f32.mrf.mxu0
      %v5141 = vadd.f32 %v5118, %v5140
      %5142 = vdwg.mxu0
      %5143 = vmatpush.msra.mxu0 0.0
      %5144 = vmatpush.msra.mxu0 0.0
      %5145 = vmatpush.msra.mxu0 0.0
      %5146 = vmatpush.msra.mxu0 0.0
      %5147 = vmatpush.msra.mxu0 0.0
      %5148 = vmatpush.msra.mxu0 0.0
      %5149 = vmatpush.msra.mxu0 0.0
      %5150 = vmatpush.msra.mxu0 0.0
      %5151 = vmatpush.msra.mxu0 0.0
      %5152 = vmatpush.msra.mxu0 0.0
      %5153 = vmatpush.msra.mxu0 0.0
      %5154 = vmatpush.msra.mxu0 0.0
      %5155 = vmatpush.msra.mxu0 %v4926
      %5156 = vmatpush.msra.mxu0 %v4923
      %5157 = vmatpush.msra.mxu0 %v4920
      %5158 = vmatpush.msra.mxu0 %v4917
      %5159 = vmatmul.f32.gmra.mxu0 %v4955
      %v5160 = vpop.f32.mrf.mxu0
      %v5161 = vadd.f32 %v5138, %v5160
      %5162 = vmatmul.f32.gmra.mxu0 %v4957
      %v5163 = vpop.f32.mrf.mxu0
      %v5164 = vadd.f32 %v5141, %v5163
      %5165 = vdwg.mxu0
      %v5166 = vadd.f32 %v4803, %v5023
      %v5167 = vadd.f32 %v4804, %v5092
      %v5168 = vadd.f32 %v4805, %v5161
      %v5169 = vadd.f32 %v4806, %v5026
      %v5170 = vadd.f32 %v4807, %v5095
      %v5171 = vadd.f32 %v4808, %v5164
      %v5172 = vld [vmem:[#allocation3 + $0x18] sm:$0xf0]
      %v5173 = vld [vmem:[#allocation3 + $0x20] sm:$0xf0]
      %v5174 = vld [vmem:[#allocation3 + $0x28] sm:$0xf0]
      %v5175 = vld [vmem:[#allocation3 + $0x48] sm:$0xf]
      %v5176 = vld [vmem:[#allocation3 + $0x50] sm:$0xf]
      %v5177 = vld [vmem:[#allocation3 + $0x58] sm:$0xf]
      %s5178 = scalar_lea.vmem %s3, 4320
      %v5179 = vld [vmem:[%s5178] sm:$0xff]
      %v5180 = vld [vmem:[%s5178 + $0x8] sm:$0xff]
      %v5181 = vld [vmem:[%s5178 + $0x10] sm:$0xff]
      %v5182 = vld [vmem:[%s5178 + $0x18] sm:$0xff]
      %v5183 = vld [vmem:[%s5178 + $0x20] sm:$0xff]
      %v5184 = vld [vmem:[%s5178 + $0x28] sm:$0xff]
      %v5185 = vld [vmem:[%s5178 + $0x30] sm:$0xff]
      %v5186 = vld [vmem:[%s5178 + $0x38] sm:$0xff]
      %v5187 = vld [vmem:[%s5178 + $0x40] sm:$0xff]
      %v5188 = vld [vmem:[%s5178 + $0x48] sm:$0xff]
      %v5189 = vld [vmem:[%s5178 + $0x50] sm:$0xff]
      %v5190 = vld [vmem:[%s5178 + $0x58] sm:$0xff]
      %v5191 = vld [vmem:[%s5178 + $0x60] sm:$0xff]
      %v5192 = vld [vmem:[%s5178 + $0x68] sm:$0xff]
      %v5193 = vld [vmem:[%s5178 + $0x70] sm:$0xff]
      %v5194 = vld [vmem:[%s5178 + $0x78] sm:$0xff]
      %v5195 = vld [vmem:[%s5178 + $0x80] sm:$0xff]
      %v5196 = vld [vmem:[%s5178 + $0x88] sm:$0xff]
      %v5197 = vld [vmem:[%s5178 + $0x90] sm:$0xff]
      %v5198 = vld [vmem:[%s5178 + $0x98] sm:$0xff]
      %v5199 = vld [vmem:[%s5178 + $0xa0] sm:$0xff]
      %v5200 = vld [vmem:[%s5178 + $0xa8] sm:$0xff]
      %v5201 = vld [vmem:[%s5178 + $0xb0] sm:$0xff]
      %v5202 = vld [vmem:[%s5178 + $0xb8] sm:$0xff]
      %v5203 = vld [vmem:[%s5178 + $0xc0] sm:$0xff]
      %v5204 = vld [vmem:[%s5178 + $0xc8] sm:$0xff]
      %v5205 = vld [vmem:[%s5178 + $0xd0] sm:$0xff]
      %v5206 = vld [vmem:[%s5178 + $0xd8] sm:$0xff]
      %v5207 = vld [vmem:[%s5178 + $0xe0] sm:$0xff]
      %v5208 = vld [vmem:[%s5178 + $0xe8] sm:$0xff]
      %v5209 = vld [vmem:[%s5178 + $0xf0] sm:$0xff]
      %v5210 = vld [vmem:[%s5178 + $0xf8] sm:$0xff]
      %v5211 = vld [vmem:[%s5178 + $0x100] sm:$0xff]
      %v5212 = vld [vmem:[%s5178 + $0x108] sm:$0xff]
      %v5213 = vld [vmem:[%s5178 + $0x110] sm:$0xff]
      %v5214 = vld [vmem:[%s5178 + $0x118] sm:$0xff]
      %v5215 = vld [vmem:[%s5178 + $0x120] sm:$0xff]
      %v5216 = vld [vmem:[%s5178 + $0x128] sm:$0xff]
      %v5217 = vld [vmem:[%s5178 + $0x130] sm:$0xff]
      %v5218 = vld [vmem:[%s5178 + $0x138] sm:$0xff]
      %v5219 = vld [vmem:[%s5178 + $0x140] sm:$0xff]
      %v5220 = vld [vmem:[%s5178 + $0x148] sm:$0xff]
      %v5221 = vld [vmem:[%s5178 + $0x150] sm:$0xff]
      %v5222 = vld [vmem:[%s5178 + $0x158] sm:$0xff]
      %v5223 = vld [vmem:[%s5178 + $0x160] sm:$0xff]
      %v5224 = vld [vmem:[%s5178 + $0x168] sm:$0xff]
      %v5225 = vld [vmem:[%s5178 + $0x170] sm:$0xff]
      %v5226 = vld [vmem:[%s5178 + $0x178] sm:$0xff]
      %v5227 = vld [vmem:[%s5178 + $0x180] sm:$0xff]
      %v5228 = vld [vmem:[%s5178 + $0x188] sm:$0xff]
      %v5229 = vld [vmem:[%s5178 + $0x190] sm:$0xff]
      %v5230 = vld [vmem:[%s5178 + $0x198] sm:$0xff]
      %v5231 = vld [vmem:[%s5178 + $0x1a0] sm:$0xff]
      %v5232 = vld [vmem:[%s5178 + $0x1a8] sm:$0xff]
      %v5233 = vld [vmem:[%s5178 + $0x1b0] sm:$0xff]
      %v5234 = vld [vmem:[%s5178 + $0x1b8] sm:$0xff]
      %v5235 = vld [vmem:[%s5178 + $0x1c0] sm:$0xff]
      %v5236 = vld [vmem:[%s5178 + $0x1c8] sm:$0xff]
      %v5237 = vld [vmem:[%s5178 + $0x1d0] sm:$0xff]
      %v5238 = vld [vmem:[%s5178 + $0x1d8] sm:$0xff]
      %v5239 = vld [vmem:[%s5178 + $0x1e0] sm:$0xff]
      %v5240 = vld [vmem:[%s5178 + $0x1e8] sm:$0xff]
      %v5241 = vld [vmem:[%s5178 + $0x1f0] sm:$0xff]
      %v5242 = vld [vmem:[%s5178 + $0x1f8] sm:$0xff]
      %v5243 = vld [vmem:[%s5178 + $0x200] sm:$0xff]
      %v5244 = vld [vmem:[%s5178 + $0x208] sm:$0xff]
      %v5245 = vld [vmem:[%s5178 + $0x210] sm:$0xff]
      %v5246 = vld [vmem:[%s5178 + $0x218] sm:$0xff]
      %v5247 = vld [vmem:[%s5178 + $0x220] sm:$0xff]
      %v5248 = vld [vmem:[%s5178 + $0x228] sm:$0xff]
      %v5249 = vld [vmem:[%s5178 + $0x230] sm:$0xff]
      %v5250 = vld [vmem:[%s5178 + $0x238] sm:$0xff]
      %v5251 = vld [vmem:[%s5178 + $0x240] sm:$0xff]
      %v5252 = vld [vmem:[%s5178 + $0x248] sm:$0xff]
      %v5253 = vld [vmem:[%s5178 + $0x250] sm:$0xff]
      %v5254 = vld [vmem:[%s5178 + $0x258] sm:$0xff]
      %v5255 = vld [vmem:[%s5178 + $0x260] sm:$0xff]
      %v5256 = vld [vmem:[%s5178 + $0x268] sm:$0xff]
      %v5257 = vld [vmem:[%s5178 + $0x270] sm:$0xff]
      %v5258 = vld [vmem:[%s5178 + $0x278] sm:$0xff]
      %v5259 = vld [vmem:[%s5178 + $0x280] sm:$0xff]
      %v5260 = vld [vmem:[%s5178 + $0x288] sm:$0xff]
      %v5261 = vld [vmem:[%s5178 + $0x290] sm:$0xff]
      %v5262 = vld [vmem:[%s5178 + $0x298] sm:$0xff]
      %v5263 = vld [vmem:[%s5178 + $0x2a0] sm:$0xff]
      %v5264 = vld [vmem:[%s5178 + $0x2a8] sm:$0xff]
      %v5265 = vld [vmem:[%s5178 + $0x2b0] sm:$0xff]
      %v5266 = vld [vmem:[%s5178 + $0x2b8] sm:$0xff]
      %v5267 = vld [vmem:[%s5178 + $0x2c0] sm:$0xff]
      %v5268 = vld [vmem:[%s5178 + $0x2c8] sm:$0xff]
      %v5269 = vld [vmem:[%s5178 + $0x2d0] sm:$0xff]
      %v5270 = vld [vmem:[%s5178 + $0x2d8] sm:$0xff]
      %v5271 = vld [vmem:[%s5178 + $0x2e0] sm:$0xff]
      %v5272 = vld [vmem:[%s5178 + $0x2e8] sm:$0xff]
      %v5273 = vld [vmem:[%s5178 + $0x2f0] sm:$0xff]
      %v5274 = vld [vmem:[%s5178 + $0x2f8] sm:$0xff]
      %v5275 = vld [vmem:[%s5178 + $0x300] sm:$0xff]
      %v5276 = vld [vmem:[%s5178 + $0x308] sm:$0xff]
      %v5277 = vld [vmem:[%s5178 + $0x310] sm:$0xff]
      %v5278 = vld [vmem:[%s5178 + $0x318] sm:$0xff]
      %v5279 = vld [vmem:[%s5178 + $0x320] sm:$0xff]
      %v5280 = vld [vmem:[%s5178 + $0x328] sm:$0xff]
      %v5281 = vld [vmem:[%s5178 + $0x330] sm:$0xff]
      %v5282 = vld [vmem:[%s5178 + $0x338] sm:$0xff]
      %v5283 = vld [vmem:[%s5178 + $0x340] sm:$0xff]
      %v5284 = vld [vmem:[%s5178 + $0x348] sm:$0xff]
      %v5285 = vld [vmem:[%s5178 + $0x350] sm:$0xff]
      %v5286 = vld [vmem:[%s5178 + $0x358] sm:$0xff]
      %v5293 = vrot.slane %v5172, 4
      %v5294 = vrot.slane %v4812, 4
      %v5295 = vsel %vm3655, %v5293, %v5294
      %v5296 = vrot.slane %v5173, 4
      %v5297 = vrot.slane %v4813, 4
      %v5298 = vsel %vm3655, %v5296, %v5297
      %v5299 = vrot.slane %v5174, 4
      %v5300 = vrot.slane %v4814, 4
      %v5301 = vsel %vm3655, %v5299, %v5300
      %v5302 = vrot.slane %v5175, 4
      %v5303 = vsel %vm3655, %v5294, %v5302
      %v5304 = vrot.slane %v5176, 4
      %v5305 = vsel %vm3655, %v5297, %v5304
      %v5306 = vrot.slane %v5177, 4
      %v5307 = vsel %vm3655, %v5300, %v5306
      %v5312 = vsel %vm200, %v5301, 0
      %v5314 = vsel %vm200, %v5307, 0
      %5316 = vmatpush.msra.mxu0 %v5224
      %5317 = vmatpush.msra.mxu0 %v5221
      %5318 = vmatpush.msra.mxu0 %v5218
      %5319 = vmatpush.msra.mxu0 %v5215
      %5320 = vmatpush.msra.mxu0 %v5212
      %5321 = vmatpush.msra.mxu0 %v5209
      %5322 = vmatpush.msra.mxu0 %v5206
      %5323 = vmatpush.msra.mxu0 %v5203
      %5324 = vmatpush.msra.mxu0 %v5200
      %5325 = vmatpush.msra.mxu0 %v5197
      %5326 = vmatpush.msra.mxu0 %v5194
      %5327 = vmatpush.msra.mxu0 %v5191
      %5328 = vmatpush.msra.mxu0 %v5188
      %5329 = vmatpush.msra.mxu0 %v5185
      %5330 = vmatpush.msra.mxu0 %v5182
      %5331 = vmatpush.msra.mxu0 %v5179
      %5332 = vmatmul.f32.gmra.mxu0 %v5295
      %v5333 = vpop.f32.mrf.mxu0
      %v5334 = vadd.f32 0.0, %v5333
      %5335 = vmatmul.f32.gmra.mxu0 %v5303
      %v5336 = vpop.f32.mrf.mxu0
      %v5337 = vadd.f32 0.0, %v5336
      %5338 = vdwg.mxu0
      %5339 = vmatpush.msra.mxu0 %v5272
      %5340 = vmatpush.msra.mxu0 %v5269
      %5341 = vmatpush.msra.mxu0 %v5266
      %5342 = vmatpush.msra.mxu0 %v5263
      %5343 = vmatpush.msra.mxu0 %v5260
      %5344 = vmatpush.msra.mxu0 %v5257
      %5345 = vmatpush.msra.mxu0 %v5254
      %5346 = vmatpush.msra.mxu0 %v5251
      %5347 = vmatpush.msra.mxu0 %v5248
      %5348 = vmatpush.msra.mxu0 %v5245
      %5349 = vmatpush.msra.mxu0 %v5242
      %5350 = vmatpush.msra.mxu0 %v5239
      %5351 = vmatpush.msra.mxu0 %v5236
      %5352 = vmatpush.msra.mxu0 %v5233
      %5353 = vmatpush.msra.mxu0 %v5230
      %5354 = vmatpush.msra.mxu0 %v5227
      %5355 = vmatmul.f32.gmra.mxu0 %v5298
      %v5356 = vpop.f32.mrf.mxu0
      %v5357 = vadd.f32 %v5334, %v5356
      %5358 = vmatmul.f32.gmra.mxu0 %v5305
      %v5359 = vpop.f32.mrf.mxu0
      %v5360 = vadd.f32 %v5337, %v5359
      %5361 = vdwg.mxu0
      %5362 = vmatpush.msra.mxu0 0.0
      %5363 = vmatpush.msra.mxu0 0.0
      %5364 = vmatpush.msra.mxu0 0.0
      %5365 = vmatpush.msra.mxu0 0.0
      %5366 = vmatpush.msra.mxu0 0.0
      %5367 = vmatpush.msra.mxu0 0.0
      %5368 = vmatpush.msra.mxu0 0.0
      %5369 = vmatpush.msra.mxu0 0.0
      %5370 = vmatpush.msra.mxu0 0.0
      %5371 = vmatpush.msra.mxu0 0.0
      %5372 = vmatpush.msra.mxu0 0.0
      %5373 = vmatpush.msra.mxu0 0.0
      %5374 = vmatpush.msra.mxu0 %v5284
      %5375 = vmatpush.msra.mxu0 %v5281
      %5376 = vmatpush.msra.mxu0 %v5278
      %5377 = vmatpush.msra.mxu0 %v5275
      %5378 = vmatmul.f32.gmra.mxu0 %v5312
      %v5379 = vpop.f32.mrf.mxu0
      %v5380 = vadd.f32 %v5357, %v5379
      %5381 = vmatmul.f32.gmra.mxu0 %v5314
      %v5382 = vpop.f32.mrf.mxu0
      %v5383 = vadd.f32 %v5360, %v5382
      %5384 = vdwg.mxu0
      %5385 = vmatpush.msra.mxu0 %v5225
      %5386 = vmatpush.msra.mxu0 %v5222
      %5387 = vmatpush.msra.mxu0 %v5219
      %5388 = vmatpush.msra.mxu0 %v5216
      %5389 = vmatpush.msra.mxu0 %v5213
      %5390 = vmatpush.msra.mxu0 %v5210
      %5391 = vmatpush.msra.mxu0 %v5207
      %5392 = vmatpush.msra.mxu0 %v5204
      %5393 = vmatpush.msra.mxu0 %v5201
      %5394 = vmatpush.msra.mxu0 %v5198
      %5395 = vmatpush.msra.mxu0 %v5195
      %5396 = vmatpush.msra.mxu0 %v5192
      %5397 = vmatpush.msra.mxu0 %v5189
      %5398 = vmatpush.msra.mxu0 %v5186
      %5399 = vmatpush.msra.mxu0 %v5183
      %5400 = vmatpush.msra.mxu0 %v5180
      %5401 = vmatmul.f32.gmra.mxu0 %v5295
      %v5402 = vpop.f32.mrf.mxu0
      %v5403 = vadd.f32 0.0, %v5402
      %5404 = vmatmul.f32.gmra.mxu0 %v5303
      %v5405 = vpop.f32.mrf.mxu0
      %v5406 = vadd.f32 0.0, %v5405
      %5407 = vdwg.mxu0
      %5408 = vmatpush.msra.mxu0 %v5273
      %5409 = vmatpush.msra.mxu0 %v5270
      %5410 = vmatpush.msra.mxu0 %v5267
      %5411 = vmatpush.msra.mxu0 %v5264
      %5412 = vmatpush.msra.mxu0 %v5261
      %5413 = vmatpush.msra.mxu0 %v5258
      %5414 = vmatpush.msra.mxu0 %v5255
      %5415 = vmatpush.msra.mxu0 %v5252
      %5416 = vmatpush.msra.mxu0 %v5249
      %5417 = vmatpush.msra.mxu0 %v5246
      %5418 = vmatpush.msra.mxu0 %v5243
      %5419 = vmatpush.msra.mxu0 %v5240
      %5420 = vmatpush.msra.mxu0 %v5237
      %5421 = vmatpush.msra.mxu0 %v5234
      %5422 = vmatpush.msra.mxu0 %v5231
      %5423 = vmatpush.msra.mxu0 %v5228
      %5424 = vmatmul.f32.gmra.mxu0 %v5298
      %v5425 = vpop.f32.mrf.mxu0
      %v5426 = vadd.f32 %v5403, %v5425
      %5427 = vmatmul.f32.gmra.mxu0 %v5305
      %v5428 = vpop.f32.mrf.mxu0
      %v5429 = vadd.f32 %v5406, %v5428
      %5430 = vdwg.mxu0
      %5431 = vmatpush.msra.mxu0 0.0
      %5432 = vmatpush.msra.mxu0 0.0
      %5433 = vmatpush.msra.mxu0 0.0
      %5434 = vmatpush.msra.mxu0 0.0
      %5435 = vmatpush.msra.mxu0 0.0
      %5436 = vmatpush.msra.mxu0 0.0
      %5437 = vmatpush.msra.mxu0 0.0
      %5438 = vmatpush.msra.mxu0 0.0
      %5439 = vmatpush.msra.mxu0 0.0
      %5440 = vmatpush.msra.mxu0 0.0
      %5441 = vmatpush.msra.mxu0 0.0
      %5442 = vmatpush.msra.mxu0 0.0
      %5443 = vmatpush.msra.mxu0 %v5285
      %5444 = vmatpush.msra.mxu0 %v5282
      %5445 = vmatpush.msra.mxu0 %v5279
      %5446 = vmatpush.msra.mxu0 %v5276
      %5447 = vmatmul.f32.gmra.mxu0 %v5312
      %v5448 = vpop.f32.mrf.mxu0
      %v5449 = vadd.f32 %v5426, %v5448
      %5450 = vmatmul.f32.gmra.mxu0 %v5314
      %v5451 = vpop.f32.mrf.mxu0
      %v5452 = vadd.f32 %v5429, %v5451
      %5453 = vdwg.mxu0
      %5454 = vmatpush.msra.mxu0 %v5226
      %5455 = vmatpush.msra.mxu0 %v5223
      %5456 = vmatpush.msra.mxu0 %v5220
      %5457 = vmatpush.msra.mxu0 %v5217
      %5458 = vmatpush.msra.mxu0 %v5214
      %5459 = vmatpush.msra.mxu0 %v5211
      %5460 = vmatpush.msra.mxu0 %v5208
      %5461 = vmatpush.msra.mxu0 %v5205
      %5462 = vmatpush.msra.mxu0 %v5202
      %5463 = vmatpush.msra.mxu0 %v5199
      %5464 = vmatpush.msra.mxu0 %v5196
      %5465 = vmatpush.msra.mxu0 %v5193
      %5466 = vmatpush.msra.mxu0 %v5190
      %5467 = vmatpush.msra.mxu0 %v5187
      %5468 = vmatpush.msra.mxu0 %v5184
      %5469 = vmatpush.msra.mxu0 %v5181
      %5470 = vmatmul.f32.gmra.mxu0 %v5295
      %v5471 = vpop.f32.mrf.mxu0
      %v5472 = vadd.f32 0.0, %v5471
      %5473 = vmatmul.f32.gmra.mxu0 %v5303
      %v5474 = vpop.f32.mrf.mxu0
      %v5475 = vadd.f32 0.0, %v5474
      %5476 = vdwg.mxu0
      %5477 = vmatpush.msra.mxu0 %v5274
      %5478 = vmatpush.msra.mxu0 %v5271
      %5479 = vmatpush.msra.mxu0 %v5268
      %5480 = vmatpush.msra.mxu0 %v5265
      %5481 = vmatpush.msra.mxu0 %v5262
      %5482 = vmatpush.msra.mxu0 %v5259
      %5483 = vmatpush.msra.mxu0 %v5256
      %5484 = vmatpush.msra.mxu0 %v5253
      %5485 = vmatpush.msra.mxu0 %v5250
      %5486 = vmatpush.msra.mxu0 %v5247
      %5487 = vmatpush.msra.mxu0 %v5244
      %5488 = vmatpush.msra.mxu0 %v5241
      %5489 = vmatpush.msra.mxu0 %v5238
      %5490 = vmatpush.msra.mxu0 %v5235
      %5491 = vmatpush.msra.mxu0 %v5232
      %5492 = vmatpush.msra.mxu0 %v5229
      %5493 = vmatmul.f32.gmra.mxu0 %v5298
      %v5494 = vpop.f32.mrf.mxu0
      %v5495 = vadd.f32 %v5472, %v5494
      %5496 = vmatmul.f32.gmra.mxu0 %v5305
      %v5497 = vpop.f32.mrf.mxu0
      %v5498 = vadd.f32 %v5475, %v5497
      %5499 = vdwg.mxu0
      %5500 = vmatpush.msra.mxu0 0.0
      %5501 = vmatpush.msra.mxu0 0.0
      %5502 = vmatpush.msra.mxu0 0.0
      %5503 = vmatpush.msra.mxu0 0.0
      %5504 = vmatpush.msra.mxu0 0.0
      %5505 = vmatpush.msra.mxu0 0.0
      %5506 = vmatpush.msra.mxu0 0.0
      %5507 = vmatpush.msra.mxu0 0.0
      %5508 = vmatpush.msra.mxu0 0.0
      %5509 = vmatpush.msra.mxu0 0.0
      %5510 = vmatpush.msra.mxu0 0.0
      %5511 = vmatpush.msra.mxu0 0.0
      %5512 = vmatpush.msra.mxu0 %v5286
      %5513 = vmatpush.msra.mxu0 %v5283
      %5514 = vmatpush.msra.mxu0 %v5280
      %5515 = vmatpush.msra.mxu0 %v5277
      %5516 = vmatmul.f32.gmra.mxu0 %v5312
      %v5517 = vpop.f32.mrf.mxu0
      %v5518 = vadd.f32 %v5495, %v5517
      %5519 = vmatmul.f32.gmra.mxu0 %v5314
      %v5520 = vpop.f32.mrf.mxu0
      %v5521 = vadd.f32 %v5498, %v5520
      %5522 = vdwg.mxu0
      %v5523 = vadd.f32 %v5166, %v5380
      %v5524 = vadd.f32 %v5167, %v5449
      %v5525 = vadd.f32 %v5168, %v5518
      %v5526 = vadd.f32 %v5169, %v5383
      %v5527 = vadd.f32 %v5170, %v5452
      %v5528 = vadd.f32 %v5171, %v5521
      %v5529 = vld [vmem:[#allocation3 + $0x18] sm:$0xc0]
      %v5530 = vld [vmem:[#allocation3 + $0x20] sm:$0xc0]
      %v5531 = vld [vmem:[#allocation3 + $0x28] sm:$0xc0]
      %v5532 = vld [vmem:[#allocation3 + $0x48] sm:$0x3f]
      %v5533 = vld [vmem:[#allocation3 + $0x50] sm:$0x3f]
      %v5534 = vld [vmem:[#allocation3 + $0x58] sm:$0x3f]
      %s5535 = scalar_lea.vmem %s3, 5184
      %v5536 = vld [vmem:[%s5535] sm:$0xff]
      %v5537 = vld [vmem:[%s5535 + $0x8] sm:$0xff]
      %v5538 = vld [vmem:[%s5535 + $0x10] sm:$0xff]
      %v5539 = vld [vmem:[%s5535 + $0x18] sm:$0xff]
      %v5540 = vld [vmem:[%s5535 + $0x20] sm:$0xff]
      %v5541 = vld [vmem:[%s5535 + $0x28] sm:$0xff]
      %v5542 = vld [vmem:[%s5535 + $0x30] sm:$0xff]
      %v5543 = vld [vmem:[%s5535 + $0x38] sm:$0xff]
      %v5544 = vld [vmem:[%s5535 + $0x40] sm:$0xff]
      %v5545 = vld [vmem:[%s5535 + $0x48] sm:$0xff]
      %v5546 = vld [vmem:[%s5535 + $0x50] sm:$0xff]
      %v5547 = vld [vmem:[%s5535 + $0x58] sm:$0xff]
      %v5548 = vld [vmem:[%s5535 + $0x60] sm:$0xff]
      %v5549 = vld [vmem:[%s5535 + $0x68] sm:$0xff]
      %v5550 = vld [vmem:[%s5535 + $0x70] sm:$0xff]
      %v5551 = vld [vmem:[%s5535 + $0x78] sm:$0xff]
      %v5552 = vld [vmem:[%s5535 + $0x80] sm:$0xff]
      %v5553 = vld [vmem:[%s5535 + $0x88] sm:$0xff]
      %v5554 = vld [vmem:[%s5535 + $0x90] sm:$0xff]
      %v5555 = vld [vmem:[%s5535 + $0x98] sm:$0xff]
      %v5556 = vld [vmem:[%s5535 + $0xa0] sm:$0xff]
      %v5557 = vld [vmem:[%s5535 + $0xa8] sm:$0xff]
      %v5558 = vld [vmem:[%s5535 + $0xb0] sm:$0xff]
      %v5559 = vld [vmem:[%s5535 + $0xb8] sm:$0xff]
      %v5560 = vld [vmem:[%s5535 + $0xc0] sm:$0xff]
      %v5561 = vld [vmem:[%s5535 + $0xc8] sm:$0xff]
      %v5562 = vld [vmem:[%s5535 + $0xd0] sm:$0xff]
      %v5563 = vld [vmem:[%s5535 + $0xd8] sm:$0xff]
      %v5564 = vld [vmem:[%s5535 + $0xe0] sm:$0xff]
      %v5565 = vld [vmem:[%s5535 + $0xe8] sm:$0xff]
      %v5566 = vld [vmem:[%s5535 + $0xf0] sm:$0xff]
      %v5567 = vld [vmem:[%s5535 + $0xf8] sm:$0xff]
      %v5568 = vld [vmem:[%s5535 + $0x100] sm:$0xff]
      %v5569 = vld [vmem:[%s5535 + $0x108] sm:$0xff]
      %v5570 = vld [vmem:[%s5535 + $0x110] sm:$0xff]
      %v5571 = vld [vmem:[%s5535 + $0x118] sm:$0xff]
      %v5572 = vld [vmem:[%s5535 + $0x120] sm:$0xff]
      %v5573 = vld [vmem:[%s5535 + $0x128] sm:$0xff]
      %v5574 = vld [vmem:[%s5535 + $0x130] sm:$0xff]
      %v5575 = vld [vmem:[%s5535 + $0x138] sm:$0xff]
      %v5576 = vld [vmem:[%s5535 + $0x140] sm:$0xff]
      %v5577 = vld [vmem:[%s5535 + $0x148] sm:$0xff]
      %v5578 = vld [vmem:[%s5535 + $0x150] sm:$0xff]
      %v5579 = vld [vmem:[%s5535 + $0x158] sm:$0xff]
      %v5580 = vld [vmem:[%s5535 + $0x160] sm:$0xff]
      %v5581 = vld [vmem:[%s5535 + $0x168] sm:$0xff]
      %v5582 = vld [vmem:[%s5535 + $0x170] sm:$0xff]
      %v5583 = vld [vmem:[%s5535 + $0x178] sm:$0xff]
      %v5584 = vld [vmem:[%s5535 + $0x180] sm:$0xff]
      %v5585 = vld [vmem:[%s5535 + $0x188] sm:$0xff]
      %v5586 = vld [vmem:[%s5535 + $0x190] sm:$0xff]
      %v5587 = vld [vmem:[%s5535 + $0x198] sm:$0xff]
      %v5588 = vld [vmem:[%s5535 + $0x1a0] sm:$0xff]
      %v5589 = vld [vmem:[%s5535 + $0x1a8] sm:$0xff]
      %v5590 = vld [vmem:[%s5535 + $0x1b0] sm:$0xff]
      %v5591 = vld [vmem:[%s5535 + $0x1b8] sm:$0xff]
      %v5592 = vld [vmem:[%s5535 + $0x1c0] sm:$0xff]
      %v5593 = vld [vmem:[%s5535 + $0x1c8] sm:$0xff]
      %v5594 = vld [vmem:[%s5535 + $0x1d0] sm:$0xff]
      %v5595 = vld [vmem:[%s5535 + $0x1d8] sm:$0xff]
      %v5596 = vld [vmem:[%s5535 + $0x1e0] sm:$0xff]
      %v5597 = vld [vmem:[%s5535 + $0x1e8] sm:$0xff]
      %v5598 = vld [vmem:[%s5535 + $0x1f0] sm:$0xff]
      %v5599 = vld [vmem:[%s5535 + $0x1f8] sm:$0xff]
      %v5600 = vld [vmem:[%s5535 + $0x200] sm:$0xff]
      %v5601 = vld [vmem:[%s5535 + $0x208] sm:$0xff]
      %v5602 = vld [vmem:[%s5535 + $0x210] sm:$0xff]
      %v5603 = vld [vmem:[%s5535 + $0x218] sm:$0xff]
      %v5604 = vld [vmem:[%s5535 + $0x220] sm:$0xff]
      %v5605 = vld [vmem:[%s5535 + $0x228] sm:$0xff]
      %v5606 = vld [vmem:[%s5535 + $0x230] sm:$0xff]
      %v5607 = vld [vmem:[%s5535 + $0x238] sm:$0xff]
      %v5608 = vld [vmem:[%s5535 + $0x240] sm:$0xff]
      %v5609 = vld [vmem:[%s5535 + $0x248] sm:$0xff]
      %v5610 = vld [vmem:[%s5535 + $0x250] sm:$0xff]
      %v5611 = vld [vmem:[%s5535 + $0x258] sm:$0xff]
      %v5612 = vld [vmem:[%s5535 + $0x260] sm:$0xff]
      %v5613 = vld [vmem:[%s5535 + $0x268] sm:$0xff]
      %v5614 = vld [vmem:[%s5535 + $0x270] sm:$0xff]
      %v5615 = vld [vmem:[%s5535 + $0x278] sm:$0xff]
      %v5616 = vld [vmem:[%s5535 + $0x280] sm:$0xff]
      %v5617 = vld [vmem:[%s5535 + $0x288] sm:$0xff]
      %v5618 = vld [vmem:[%s5535 + $0x290] sm:$0xff]
      %v5619 = vld [vmem:[%s5535 + $0x298] sm:$0xff]
      %v5620 = vld [vmem:[%s5535 + $0x2a0] sm:$0xff]
      %v5621 = vld [vmem:[%s5535 + $0x2a8] sm:$0xff]
      %v5622 = vld [vmem:[%s5535 + $0x2b0] sm:$0xff]
      %v5623 = vld [vmem:[%s5535 + $0x2b8] sm:$0xff]
      %v5624 = vld [vmem:[%s5535 + $0x2c0] sm:$0xff]
      %v5625 = vld [vmem:[%s5535 + $0x2c8] sm:$0xff]
      %v5626 = vld [vmem:[%s5535 + $0x2d0] sm:$0xff]
      %v5627 = vld [vmem:[%s5535 + $0x2d8] sm:$0xff]
      %v5628 = vld [vmem:[%s5535 + $0x2e0] sm:$0xff]
      %v5629 = vld [vmem:[%s5535 + $0x2e8] sm:$0xff]
      %v5630 = vld [vmem:[%s5535 + $0x2f0] sm:$0xff]
      %v5631 = vld [vmem:[%s5535 + $0x2f8] sm:$0xff]
      %v5632 = vld [vmem:[%s5535 + $0x300] sm:$0xff]
      %v5633 = vld [vmem:[%s5535 + $0x308] sm:$0xff]
      %v5634 = vld [vmem:[%s5535 + $0x310] sm:$0xff]
      %v5635 = vld [vmem:[%s5535 + $0x318] sm:$0xff]
      %v5636 = vld [vmem:[%s5535 + $0x320] sm:$0xff]
      %v5637 = vld [vmem:[%s5535 + $0x328] sm:$0xff]
      %v5638 = vld [vmem:[%s5535 + $0x330] sm:$0xff]
      %v5639 = vld [vmem:[%s5535 + $0x338] sm:$0xff]
      %v5640 = vld [vmem:[%s5535 + $0x340] sm:$0xff]
      %v5641 = vld [vmem:[%s5535 + $0x348] sm:$0xff]
      %v5642 = vld [vmem:[%s5535 + $0x350] sm:$0xff]
      %v5643 = vld [vmem:[%s5535 + $0x358] sm:$0xff]
      %v5650 = vrot.slane %v5529, 6
      %v5651 = vrot.slane %v4812, 6
      %v5652 = vsel %vm1166, %v5650, %v5651
      %v5653 = vrot.slane %v5530, 6
      %v5654 = vrot.slane %v4813, 6
      %v5655 = vsel %vm1166, %v5653, %v5654
      %v5656 = vrot.slane %v5531, 6
      %v5657 = vrot.slane %v4814, 6
      %v5658 = vsel %vm1166, %v5656, %v5657
      %v5659 = vrot.slane %v5532, 6
      %v5660 = vsel %vm1166, %v5651, %v5659
      %v5661 = vrot.slane %v5533, 6
      %v5662 = vsel %vm1166, %v5654, %v5661
      %v5663 = vrot.slane %v5534, 6
      %v5664 = vsel %vm1166, %v5657, %v5663
      %v5669 = vsel %vm200, %v5658, 0
      %v5671 = vsel %vm200, %v5664, 0
      %5673 = vmatpush.msra.mxu0 %v5581
      %5674 = vmatpush.msra.mxu0 %v5578
      %5675 = vmatpush.msra.mxu0 %v5575
      %5676 = vmatpush.msra.mxu0 %v5572
      %5677 = vmatpush.msra.mxu0 %v5569
      %5678 = vmatpush.msra.mxu0 %v5566
      %5679 = vmatpush.msra.mxu0 %v5563
      %5680 = vmatpush.msra.mxu0 %v5560
      %5681 = vmatpush.msra.mxu0 %v5557
      %5682 = vmatpush.msra.mxu0 %v5554
      %5683 = vmatpush.msra.mxu0 %v5551
      %5684 = vmatpush.msra.mxu0 %v5548
      %5685 = vmatpush.msra.mxu0 %v5545
      %5686 = vmatpush.msra.mxu0 %v5542
      %5687 = vmatpush.msra.mxu0 %v5539
      %5688 = vmatpush.msra.mxu0 %v5536
      %5689 = vmatmul.f32.gmra.mxu0 %v5652
      %v5690 = vpop.f32.mrf.mxu0
      %v5691 = vadd.f32 0.0, %v5690
      %5692 = vmatmul.f32.gmra.mxu0 %v5660
      %v5693 = vpop.f32.mrf.mxu0
      %v5694 = vadd.f32 0.0, %v5693
      %5695 = vdwg.mxu0
      %5696 = vmatpush.msra.mxu0 %v5629
      %5697 = vmatpush.msra.mxu0 %v5626
      %5698 = vmatpush.msra.mxu0 %v5623
      %5699 = vmatpush.msra.mxu0 %v5620
      %5700 = vmatpush.msra.mxu0 %v5617
      %5701 = vmatpush.msra.mxu0 %v5614
      %5702 = vmatpush.msra.mxu0 %v5611
      %5703 = vmatpush.msra.mxu0 %v5608
      %5704 = vmatpush.msra.mxu0 %v5605
      %5705 = vmatpush.msra.mxu0 %v5602
      %5706 = vmatpush.msra.mxu0 %v5599
      %5707 = vmatpush.msra.mxu0 %v5596
      %5708 = vmatpush.msra.mxu0 %v5593
      %5709 = vmatpush.msra.mxu0 %v5590
      %5710 = vmatpush.msra.mxu0 %v5587
      %5711 = vmatpush.msra.mxu0 %v5584
      %5712 = vmatmul.f32.gmra.mxu0 %v5655
      %v5713 = vpop.f32.mrf.mxu0
      %v5714 = vadd.f32 %v5691, %v5713
      %5715 = vmatmul.f32.gmra.mxu0 %v5662
      %v5716 = vpop.f32.mrf.mxu0
      %v5717 = vadd.f32 %v5694, %v5716
      %5718 = vdwg.mxu0
      %5719 = vmatpush.msra.mxu0 0.0
      %5720 = vmatpush.msra.mxu0 0.0
      %5721 = vmatpush.msra.mxu0 0.0
      %5722 = vmatpush.msra.mxu0 0.0
      %5723 = vmatpush.msra.mxu0 0.0
      %5724 = vmatpush.msra.mxu0 0.0
      %5725 = vmatpush.msra.mxu0 0.0
      %5726 = vmatpush.msra.mxu0 0.0
      %5727 = vmatpush.msra.mxu0 0.0
      %5728 = vmatpush.msra.mxu0 0.0
      %5729 = vmatpush.msra.mxu0 0.0
      %5730 = vmatpush.msra.mxu0 0.0
      %5731 = vmatpush.msra.mxu0 %v5641
      %5732 = vmatpush.msra.mxu0 %v5638
      %5733 = vmatpush.msra.mxu0 %v5635
      %5734 = vmatpush.msra.mxu0 %v5632
      %5735 = vmatmul.f32.gmra.mxu0 %v5669
      %v5736 = vpop.f32.mrf.mxu0
      %v5737 = vadd.f32 %v5714, %v5736
      %5738 = vmatmul.f32.gmra.mxu0 %v5671
      %v5739 = vpop.f32.mrf.mxu0
      %v5740 = vadd.f32 %v5717, %v5739
      %5741 = vdwg.mxu0
      %5742 = vmatpush.msra.mxu0 %v5582
      %5743 = vmatpush.msra.mxu0 %v5579
      %5744 = vmatpush.msra.mxu0 %v5576
      %5745 = vmatpush.msra.mxu0 %v5573
      %5746 = vmatpush.msra.mxu0 %v5570
      %5747 = vmatpush.msra.mxu0 %v5567
      %5748 = vmatpush.msra.mxu0 %v5564
      %5749 = vmatpush.msra.mxu0 %v5561
      %5750 = vmatpush.msra.mxu0 %v5558
      %5751 = vmatpush.msra.mxu0 %v5555
      %5752 = vmatpush.msra.mxu0 %v5552
      %5753 = vmatpush.msra.mxu0 %v5549
      %5754 = vmatpush.msra.mxu0 %v5546
      %5755 = vmatpush.msra.mxu0 %v5543
      %5756 = vmatpush.msra.mxu0 %v5540
      %5757 = vmatpush.msra.mxu0 %v5537
      %5758 = vmatmul.f32.gmra.mxu0 %v5652
      %v5759 = vpop.f32.mrf.mxu0
      %v5760 = vadd.f32 0.0, %v5759
      %5761 = vmatmul.f32.gmra.mxu0 %v5660
      %v5762 = vpop.f32.mrf.mxu0
      %v5763 = vadd.f32 0.0, %v5762
      %5764 = vdwg.mxu0
      %5765 = vmatpush.msra.mxu0 %v5630
      %5766 = vmatpush.msra.mxu0 %v5627
      %5767 = vmatpush.msra.mxu0 %v5624
      %5768 = vmatpush.msra.mxu0 %v5621
      %5769 = vmatpush.msra.mxu0 %v5618
      %5770 = vmatpush.msra.mxu0 %v5615
      %5771 = vmatpush.msra.mxu0 %v5612
      %5772 = vmatpush.msra.mxu0 %v5609
      %5773 = vmatpush.msra.mxu0 %v5606
      %5774 = vmatpush.msra.mxu0 %v5603
      %5775 = vmatpush.msra.mxu0 %v5600
      %5776 = vmatpush.msra.mxu0 %v5597
      %5777 = vmatpush.msra.mxu0 %v5594
      %5778 = vmatpush.msra.mxu0 %v5591
      %5779 = vmatpush.msra.mxu0 %v5588
      %5780 = vmatpush.msra.mxu0 %v5585
      %5781 = vmatmul.f32.gmra.mxu0 %v5655
      %v5782 = vpop.f32.mrf.mxu0
      %v5783 = vadd.f32 %v5760, %v5782
      %5784 = vmatmul.f32.gmra.mxu0 %v5662
      %v5785 = vpop.f32.mrf.mxu0
      %v5786 = vadd.f32 %v5763, %v5785
      %5787 = vdwg.mxu0
      %5788 = vmatpush.msra.mxu0 0.0
      %5789 = vmatpush.msra.mxu0 0.0
      %5790 = vmatpush.msra.mxu0 0.0
      %5791 = vmatpush.msra.mxu0 0.0
      %5792 = vmatpush.msra.mxu0 0.0
      %5793 = vmatpush.msra.mxu0 0.0
      %5794 = vmatpush.msra.mxu0 0.0
      %5795 = vmatpush.msra.mxu0 0.0
      %5796 = vmatpush.msra.mxu0 0.0
      %5797 = vmatpush.msra.mxu0 0.0
      %5798 = vmatpush.msra.mxu0 0.0
      %5799 = vmatpush.msra.mxu0 0.0
      %5800 = vmatpush.msra.mxu0 %v5642
      %5801 = vmatpush.msra.mxu0 %v5639
      %5802 = vmatpush.msra.mxu0 %v5636
      %5803 = vmatpush.msra.mxu0 %v5633
      %5804 = vmatmul.f32.gmra.mxu0 %v5669
      %v5805 = vpop.f32.mrf.mxu0
      %v5806 = vadd.f32 %v5783, %v5805
      %5807 = vmatmul.f32.gmra.mxu0 %v5671
      %v5808 = vpop.f32.mrf.mxu0
      %v5809 = vadd.f32 %v5786, %v5808
      %5810 = vdwg.mxu0
      %5811 = vmatpush.msra.mxu0 %v5583
      %5812 = vmatpush.msra.mxu0 %v5580
      %5813 = vmatpush.msra.mxu0 %v5577
      %5814 = vmatpush.msra.mxu0 %v5574
      %5815 = vmatpush.msra.mxu0 %v5571
      %5816 = vmatpush.msra.mxu0 %v5568
      %5817 = vmatpush.msra.mxu0 %v5565
      %5818 = vmatpush.msra.mxu0 %v5562
      %5819 = vmatpush.msra.mxu0 %v5559
      %5820 = vmatpush.msra.mxu0 %v5556
      %5821 = vmatpush.msra.mxu0 %v5553
      %5822 = vmatpush.msra.mxu0 %v5550
      %5823 = vmatpush.msra.mxu0 %v5547
      %5824 = vmatpush.msra.mxu0 %v5544
      %5825 = vmatpush.msra.mxu0 %v5541
      %5826 = vmatpush.msra.mxu0 %v5538
      %5827 = vmatmul.f32.gmra.mxu0 %v5652
      %v5828 = vpop.f32.mrf.mxu0
      %v5829 = vadd.f32 0.0, %v5828
      %5830 = vmatmul.f32.gmra.mxu0 %v5660
      %v5831 = vpop.f32.mrf.mxu0
      %v5832 = vadd.f32 0.0, %v5831
      %5833 = vdwg.mxu0
      %5834 = vmatpush.msra.mxu0 %v5631
      %5835 = vmatpush.msra.mxu0 %v5628
      %5836 = vmatpush.msra.mxu0 %v5625
      %5837 = vmatpush.msra.mxu0 %v5622
      %5838 = vmatpush.msra.mxu0 %v5619
      %5839 = vmatpush.msra.mxu0 %v5616
      %5840 = vmatpush.msra.mxu0 %v5613
      %5841 = vmatpush.msra.mxu0 %v5610
      %5842 = vmatpush.msra.mxu0 %v5607
      %5843 = vmatpush.msra.mxu0 %v5604
      %5844 = vmatpush.msra.mxu0 %v5601
      %5845 = vmatpush.msra.mxu0 %v5598
      %5846 = vmatpush.msra.mxu0 %v5595
      %5847 = vmatpush.msra.mxu0 %v5592
      %5848 = vmatpush.msra.mxu0 %v5589
      %5849 = vmatpush.msra.mxu0 %v5586
      %5850 = vmatmul.f32.gmra.mxu0 %v5655
      %v5851 = vpop.f32.mrf.mxu0
      %v5852 = vadd.f32 %v5829, %v5851
      %5853 = vmatmul.f32.gmra.mxu0 %v5662
      %v5854 = vpop.f32.mrf.mxu0
      %v5855 = vadd.f32 %v5832, %v5854
      %5856 = vdwg.mxu0
      %5857 = vmatpush.msra.mxu0 0.0
      %5858 = vmatpush.msra.mxu0 0.0
      %5859 = vmatpush.msra.mxu0 0.0
      %5860 = vmatpush.msra.mxu0 0.0
      %5861 = vmatpush.msra.mxu0 0.0
      %5862 = vmatpush.msra.mxu0 0.0
      %5863 = vmatpush.msra.mxu0 0.0
      %5864 = vmatpush.msra.mxu0 0.0
      %5865 = vmatpush.msra.mxu0 0.0
      %5866 = vmatpush.msra.mxu0 0.0
      %5867 = vmatpush.msra.mxu0 0.0
      %5868 = vmatpush.msra.mxu0 0.0
      %5869 = vmatpush.msra.mxu0 %v5643
      %5870 = vmatpush.msra.mxu0 %v5640
      %5871 = vmatpush.msra.mxu0 %v5637
      %5872 = vmatpush.msra.mxu0 %v5634
      %5873 = vmatmul.f32.gmra.mxu0 %v5669
      %v5874 = vpop.f32.mrf.mxu0
      %v5875 = vadd.f32 %v5852, %v5874
      %5876 = vmatmul.f32.gmra.mxu0 %v5671
      %v5877 = vpop.f32.mrf.mxu0
      %v5878 = vadd.f32 %v5855, %v5877
      %5879 = vdwg.mxu0
      %v5880 = vadd.f32 %v5523, %v5737
      %v5881 = vadd.f32 %v5524, %v5806
      %v5882 = vadd.f32 %v5525, %v5875
      %v5883 = vadd.f32 %v5526, %v5740
      %v5884 = vadd.f32 %v5527, %v5809
      %v5885 = vadd.f32 %v5528, %v5878
      %v5886 = vmax.f32 %v5880, 0.0
      %v5887 = vmax.f32 %v5881, 0.0
      %v5888 = vmax.f32 %v5882, 0.0
      %v5889 = vmax.f32 %v5883, 0.0
      %v5890 = vmax.f32 %v5884, 0.0
      %v5891 = vmax.f32 %v5885, 0.0
      %5892 = vst [vmem:[%s197] sm:$0xff] %v5886
      %5893 = vst [vmem:[%s197 + $0x8] sm:$0xff] %v5887
      %5894 = vst.msk [vmem:[%s197 + $0x10] sm:$0xff] %vm200, %v5888
      %5895 = vst [vmem:[%s197 + $0x18] sm:$0xff] %v5889
      %5896 = vst [vmem:[%s197 + $0x20] sm:$0xff] %v5890
      %5897 = vst.msk [vmem:[%s197 + $0x28] sm:$0xff] %vm200, %v5891
      %p5898 = scmp.lt.s32.totalorder %s15, 1
      %s5899 = scalar_select %p5898, %s15, 1
      %s5900 = smul.addr %s5899, 6
      %s5901 = smul.addr %s5900, 8
      %s5902 = scalar_lea.vmem %s4, %s5901
      // Predicated region
      $region37: #{sfcn_forward.1} parent=35 // pred_check
        %p5903 = pneg %p122
      $region38: #{sfcn_forward.1} parent=35 // pred_check_branch
        %5905 = sbr.rel (%p5903) target = $region40
      $region39: #{sfcn_forward.1} parent=35 // pred_region
        _
      $region40: #{sfcn_forward.1} parent=35 // pred_fallthru
        _
    $region36: #{sfcn_forward.1} parent=5 // pred_fallthru
      _
    %p5906 = scmp.le.s32.totalorder 2, %s10
    // Predicated region
    $region41: #{sfcn_forward.1} parent=5 // pred_check
      %p5907 = pneg %p5906
    $region42: #{sfcn_forward.1} parent=5 // pred_check_branch
      %5909 = sbr.rel (%p5907) target = $region44
    $region43: #{sfcn_forward.1} parent=5 // pred_region
      %s5910 = ssub.s32 %s10, 2
      // Predicated region
      $region45: #{sfcn_forward.1} parent=43 // pred_check
        %p5911 = pneg %p128
      $region46: #{sfcn_forward.1} parent=43 // pred_check_branch
        %5913 = sbr.rel (%p5911) target = $region48
      $region47: #{sfcn_forward.1} parent=43 // pred_region
        %p5914 = scmp.lt.s32.totalorder %s16, 1
        %s5915 = scalar_select %p5914, %s16, 1
        %s5916 = smul.addr %s5915, 6
        %s5917 = smul.addr %s5916, 8
        %s5918 = scalar_lea.vmem %s4, %s5917
      $region48: #{sfcn_forward.1} parent=43 // pred_fallthru
        _
    $region44: #{sfcn_forward.1} parent=5 // pred_fallthru
      _
  $region6: #{sfcn_forward.1} parent=0 // loop_footer
    %s14 = sadd.s32 1, %s10
  $region7: #{sfcn_forward.1} parent=0 // loop_footer_branch
    %9 = sbr.rel target = $region3
  $region8: #{sfcn_forward.1} parent=0 // loop_exit
    _

</llo_original>
